<compile_context>
chip_gen: v7x
topology: tpu7x:2x2x1
jax: 0.10.0
libtpu: 0.0.40
codegen_flags: <defaults>
</compile_context>

<pallas_src>
import functools

import numpy as np

import jax
import jax.numpy as jnp
from jax.experimental import pallas as pl
from jax.experimental.pallas import tpu as pltpu

C1, C2, C3, C4 = 32, 64, 128, 256   # conv stage widths (fixed by the PyTorch module)
K0 = 32                             # layer-0 im2col contraction dim (27 padded to 32)
NCP = 128                           # lane-padded classifier output width


# ----------------------------------------------------------------------------- helpers

def _pad_rows(H, B):
    """Zero-halo rows on each side of a stage's flat (W*H*B, C) activation buffer."""
    return ((H * B + B + 7) // 8) * 8


def _h_index(H, W, B):
    """f32 column with the spatial row index h of every flat activation row.

    Flat rows are ordered (w, h, b): r = w*(H*B) + h*B + b.
    """
    r = np.arange(W * H * B)
    return ((r // B) % H).astype(np.float32).reshape(-1, 1)


def _pool_pieces(y, H, W, B):
    """2x2/stride-2 max-pool of y ((W*H*B, C), rows ordered (w, h, b)).

    Returns a list of (wo, ho, (B, C) pooled block) — pure block slices + maxes,
    no per-pixel work.
    """
    HB = H * B
    pieces = []
    for wo in range(W // 2):
        col = jnp.maximum(y[(2 * wo) * HB:(2 * wo + 1) * HB],
                          y[(2 * wo + 1) * HB:(2 * wo + 2) * HB])        # (H*B, C)
        for ho in range(H // 2):
            pix = jnp.maximum(col[(2 * ho) * B:(2 * ho + 1) * B],
                              col[(2 * ho + 1) * B:(2 * ho + 2) * B])    # (B, C)
            pieces.append((wo, ho, pix))
    return pieces


def _pool_store(y, H, W, B, dst_ref, pad):
    """Pool y and write the pooled rows into dst_ref's interior ((w', h', b) order)."""
    Hh = H // 2
    for wo, ho, pix in _pool_pieces(y, H, W, B):
        base = pad + (wo * Hh + ho) * B
        dst_ref[base:base + B, :] = pix


def _conv_stage(a_ref, hx, w_ref, s_ref, b_ref, H, W, B, pad, cin, cout):
    """3x3 SAME conv + folded BN + ReLU on a flat activation buffer.

    a_ref : (2*pad + W*H*B, cin) f32 scratch; rows [pad, pad+W*H*B) hold the input in
            (w, h, b) order, the `pad` halo rows on each side are zero.
    hx    : (W*H*B, 1) f32, spatial row index h per flat row (for the h-edge mask).
    w_ref : (9*cin, cout) bf16, taps stacked along rows in (kh, kw) order.
    Returns y = relu(conv * scale + bias), shape (W*H*B, cout), f32.
    """
    M = W * H * B
    HB = H * B
    acc = jnp.zeros((M, cout), jnp.float32)
    for kh in range(3):
        dh = kh - 1
        for kw in range(3):
            dw = kw - 1
            tap = kh * 3 + kw
            shift = dw * HB + dh * B
            # One shifted full-buffer read per tap.  w-edge overflow lands in the zero
            # halo (correct SAME padding); h-edge overflow lands in the neighbouring
            # w-column and is killed by the h mask below.
            raw = a_ref[pad + shift:pad + shift + M, :]
            if dh == -1:
                lhs = jnp.where(hx >= 1.0, raw, 0.0)
            elif dh == 1:
                lhs = jnp.where(hx <= float(H - 2), raw, 0.0)
            else:
                lhs = raw
            acc = acc + jnp.dot(lhs.astype(jnp.bfloat16),
                                w_ref[tap * cin:(tap + 1) * cin, :],
                                preferred_element_type=jnp.float32)
    return jnp.maximum(acc * s_ref[...] + b_ref[...], 0.0)


# ----------------------------------------------------------------------------- kernel

def _fused_cnn_kernel(p_ref,
                      w0_ref, s0_ref, b0_ref,
                      hx1_ref, w1_ref, s1_ref, b1_ref,
                      hx2_ref, w2_ref, s2_ref, b2_ref,
                      hx3_ref, w3_ref, s3_ref, b3_ref,
                      fw1_ref, fb1_ref, fw2_ref, fb2_ref,
                      o_ref,
                      a1_ref, a2_ref, a3_ref,
                      *, H0, W0, B):
    H1, W1 = H0 // 2, W0 // 2
    H2, W2 = H1 // 2, W1 // 2
    H3, W3 = H2 // 2, W2 // 2
    P1, P2, P3 = _pad_rows(H1, B), _pad_rows(H2, B), _pad_rows(H3, B)
    M1, M2, M3 = W1 * H1 * B, W2 * H2 * B, W3 * H3 * B

    # Zero only the halo rows (interiors are fully rewritten below).  Done every grid step
    # so the kernel has no cross-iteration dependency and stays valid under "parallel"
    # (megacore) grid sharding.
    a1_ref[0:P1, :] = jnp.zeros((P1, C1), jnp.float32)
    a1_ref[P1 + M1:2 * P1 + M1, :] = jnp.zeros((P1, C1), jnp.float32)
    a2_ref[0:P2, :] = jnp.zeros((P2, C2), jnp.float32)
    a2_ref[P2 + M2:2 * P2 + M2, :] = jnp.zeros((P2, C2), jnp.float32)
    a3_ref[0:P3, :] = jnp.zeros((P3, C3), jnp.float32)
    a3_ref[P3 + M3:2 * P3 + M3, :] = jnp.zeros((P3, C3), jnp.float32)

    # ---- stage 0: single im2col GEMM + BN + ReLU + fused 2x2 max-pool -> a1 interior ----
    acc0 = jnp.dot(p_ref[...], w0_ref[...], preferred_element_type=jnp.float32)
    y0 = jnp.maximum(acc0 * s0_ref[...] + b0_ref[...], 0.0)          # (W0*H0*B, C1)
    _pool_store(y0, H0, W0, B, a1_ref, P1)

    # ---- stage 1 -> a2 -------------------------------------------------------------------
    y1 = _conv_stage(a1_ref, hx1_ref[...], w1_ref, s1_ref, b1_ref, H1, W1, B, P1, C1, C2)
    _pool_store(y1, H1, W1, B, a2_ref, P2)

    # ---- stage 2 -> a3 -------------------------------------------------------------------
    y2 = _conv_stage(a2_ref, hx2_ref[...], w2_ref, s2_ref, b2_ref, H2, W2, B, P2, C2, C3)
    _pool_store(y2, H2, W2, B, a3_ref, P3)

    # ---- stage 3 -> max-pool + global average pool ----------------------------------------
    y3 = _conv_stage(a3_ref, hx3_ref[...], w3_ref, s3_ref, b3_ref, H3, W3, B, P3, C3, C4)
    pieces = _pool_pieces(y3, H3, W3, B)
    feat = pieces[0][2]
    for _, _, pix in pieces[1:]:
        feat = feat + pix
    feat = feat * (1.0 / float(len(pieces)))          # AdaptiveAvgPool2d((1,1)) -> (B, C4)

    # ---- classifier head (Dropout = identity in eval mode) --------------------------------
    hid = jnp.maximum(
        jnp.dot(feat.astype(jnp.bfloat16), fw1_ref[...],
                preferred_element_type=jnp.float32) + fb1_ref[...], 0.0)
    logits = jnp.dot(hid.astype(jnp.bfloat16), fw2_ref[...],
                     preferred_element_type=jnp.float32) + fb2_ref[...]
    o_ref[...] = logits.astype(o_ref.dtype)


# ----------------------------------------------------------------------------- wrapper

def simple_cnn_forward(x_nchw, params, block_b=None):
    N, Cin, H0, W0 = x_nchw.shape
    assert Cin == 3 and H0 % 16 == 0 and W0 % 16 == 0, (Cin, H0, W0)
    nc = params["w2"].shape[1]
    assert nc <= NCP, nc

    # Batch block size: fattens the GEMM M dimension (biggest MXU-occupancy lever).
    B = int(block_b) if block_b else min(N, 8)
    G = -(-N // B)                     # cdiv
    Np = G * B

    H1, W1 = H0 // 2, W0 // 2
    H2, W2 = H1 // 2, W1 // 2
    H3, W3 = H2 // 2, W2 // 2
    M0 = W0 * H0 * B
    M1, M2, M3 = W1 * H1 * B, W2 * H2 * B, W3 * H3 * B
    P1, P2, P3 = _pad_rows(H1, B), _pad_rows(H2, B), _pad_rows(H3, B)

    # ---- layer-0 im2col (tiny at these sizes), rows ordered (block, w0, h0, b) ----
    x = jnp.transpose(x_nchw, (0, 2, 3, 1))                      # NCHW -> NHWC
    if Np != N:
        x = jnp.pad(x, ((0, Np - N), (0, 0), (0, 0), (0, 0)))
    xp = jnp.pad(x, ((0, 0), (1, 1), (1, 1), (0, 0)))
    cols = [xp[:, kh:kh + H0, kw:kw + W0, :] for kh in range(3) for kw in range(3)]
    patches = jnp.concatenate(cols, axis=-1)                     # (Np, H0, W0, 27)
    patches = jnp.pad(patches, ((0, 0), (0, 0), (0, 0), (0, K0 - 9 * Cin)))
    patches = patches.reshape(G, B, H0, W0, K0)
    patches = jnp.transpose(patches, (0, 3, 2, 1, 4))            # (G, W0, H0, B, K0)
    patches = patches.reshape(G * M0, K0).astype(jnp.bfloat16)

    f0, f1, f2, f3 = params["features"]
    w0 = jnp.pad(f0["w"].reshape(9 * Cin, C1),
                 ((0, K0 - 9 * Cin), (0, 0))).astype(jnp.bfloat16)       # (32, 32)
    w1 = f1["w"].reshape(9 * C1, C2).astype(jnp.bfloat16)                # (288, 64)
    w2 = f2["w"].reshape(9 * C2, C3).astype(jnp.bfloat16)                # (576, 128)
    w3 = f3["w"].reshape(9 * C3, C4).astype(jnp.bfloat16)                # (1152, 256)
    fw1 = params["w1"].astype(jnp.bfloat16)
    fw2 = jnp.pad(params["w2"], ((0, 0), (0, NCP - nc))).astype(jnp.bfloat16)
    fb2 = jnp.pad(params["b2"], ((0, 0), (0, NCP - nc)))

    # Per-stage spatial-row index (for the h-edge masks); precomputed host-side.
    hx1 = jnp.asarray(_h_index(H1, W1, B))
    hx2 = jnp.asarray(_h_index(H2, W2, B))
    hx3 = jnp.asarray(_h_index(H3, W3, B))

    kernel = functools.partial(_fused_cnn_kernel, H0=H0, W0=W0, B=B)
    grid_spec = pltpu.PrefetchScalarGridSpec(
        num_scalar_prefetch=0,
        grid=(G,),
        in_specs=[
            pl.BlockSpec((M0, K0), lambda g: (g, 0)),            # layer-0 im2col patches
            pl.BlockSpec((K0, C1), lambda g: (0, 0)),            # layer-0 weight
            pl.BlockSpec((1, C1), lambda g: (0, 0)),
            pl.BlockSpec((1, C1), lambda g: (0, 0)),
            pl.BlockSpec((M1, 1), lambda g: (0, 0)),             # stage-1 h index
            pl.BlockSpec((9 * C1, C2), lambda g: (0, 0)),        # stage-1 weight
            pl.BlockSpec((1, C2), lambda g: (0, 0)),
            pl.BlockSpec((1, C2), lambda g: (0, 0)),
            pl.BlockSpec((M2, 1), lambda g: (0, 0)),             # stage-2 h index
            pl.BlockSpec((9 * C2, C3), lambda g: (0, 0)),        # stage-2 weight
            pl.BlockSpec((1, C3), lambda g: (0, 0)),
            pl.BlockSpec((1, C3), lambda g: (0, 0)),
            pl.BlockSpec((M3, 1), lambda g: (0, 0)),             # stage-3 h index
            pl.BlockSpec((9 * C3, C4), lambda g: (0, 0)),        # stage-3 weight
            pl.BlockSpec((1, C4), lambda g: (0, 0)),
            pl.BlockSpec((1, C4), lambda g: (0, 0)),
            pl.BlockSpec((C4, 128), lambda g: (0, 0)),           # fc1
            pl.BlockSpec((1, 128), lambda g: (0, 0)),
            pl.BlockSpec((128, NCP), lambda g: (0, 0)),          # fc2 (lane padded)
            pl.BlockSpec((1, NCP), lambda g: (0, 0)),
        ],
        out_specs=pl.BlockSpec((B, NCP), lambda g: (g, 0)),
        scratch_shapes=[
            pltpu.VMEM((2 * P1 + M1, C1), jnp.float32),          # stage-1 input (flat + halo)
            pltpu.VMEM((2 * P2 + M2, C2), jnp.float32),          # stage-2 input
            pltpu.VMEM((2 * P3 + M3, C3), jnp.float32),          # stage-3 input
        ],
    )
    out = pl.pallas_call(
        kernel,
        out_shape=jax.ShapeDtypeStruct((Np, NCP), jnp.float32),
        grid_spec=grid_spec,
        compiler_params=pltpu.CompilerParams(dimension_semantics=("parallel",)),
    )(patches, w0, f0["scale"], f0["bias"],
      hx1, w1, f1["scale"], f1["bias"],
      hx2, w2, f2["scale"], f2["bias"],
      hx3, w3, f3["scale"], f3["bias"],
      fw1, params["b1"], fw2, fb2)
    return out[:N, :nc]


# ----------------------------------------------------------------------------- params / reference

def init_params(key, num_classes):
    eps = 1e-5
    cins = [3, 32, 64, 128]
    couts = [32, 64, 128, 256]
    features = []
    for cin, cout in zip(cins, couts):
        key, k1, k2, k3, k4, k5, k6 = jax.random.split(key, 7)
        w = jax.random.normal(k1, (3, 3, cin, cout), jnp.float32) * ((9 * cin) ** -0.5)
        b = jax.random.normal(k2, (cout,), jnp.float32) * 0.05
        gamma = 1.0 + 0.1 * jax.random.normal(k3, (cout,), jnp.float32)
        beta = 0.1 * jax.random.normal(k4, (cout,), jnp.float32)
        mean = 0.05 * jax.random.normal(k5, (cout,), jnp.float32)
        var = 0.9 + 0.1 * jnp.abs(jax.random.normal(k6, (cout,), jnp.float32))
        scale = gamma * jax.lax.rsqrt(var + eps)
        bias = beta + (b - mean) * scale
        features.append(dict(w=w, b=b, gamma=gamma, beta=beta, mean=mean, var=var,
                             scale=scale.reshape(1, cout), bias=bias.reshape(1, cout)))
    key, k1, k2, k3, k4 = jax.random.split(key, 5)
    w1 = jax.random.normal(k1, (256, 128), jnp.float32) * (256 ** -0.5)
    b1 = (jax.random.normal(k2, (128,), jnp.float32) * 0.05).reshape(1, 128)
    w2 = jax.random.normal(k3, (128, num_classes), jnp.float32) * (128 ** -0.5)
    b2 = (jax.random.normal(k4, (num_classes,), jnp.float32) * 0.05).reshape(1, num_classes)
    return dict(features=features, w1=w1, b1=b1, w2=w2, b2=b2)


def reference_forward(x_nchw, params):
    """Pure-JAX f32 reference mirroring the PyTorch forward (eval mode)."""
    eps = 1e-5
    x = jnp.transpose(x_nchw, (0, 2, 3, 1))
    for layer in params["features"]:
        y = jax.lax.conv_general_dilated(
            x, layer["w"], window_strides=(1, 1), padding="SAME",
            dimension_numbers=("NHWC", "HWIO", "NHWC"))
        y = y + layer["b"]
        y = (y - layer["mean"]) * jax.lax.rsqrt(layer["var"] + eps) * layer["gamma"] + layer["beta"]
        y = jnp.maximum(y, 0.0)
        x = jax.lax.reduce_window(y, -jnp.inf, jax.lax.max,
                                  (1, 2, 2, 1), (1, 2, 2, 1), "VALID")
    f = jnp.mean(x, axis=(1, 2))
    h = jnp.maximum(f @ params["w1"] + params["b1"][0], 0.0)
    return h @ params["w2"] + params["b2"][0]


# ----------------------------------------------------------------------------- main

if __name__ == "__main__":
    num_classes = 10
    key = jax.random.PRNGKey(0)
    key, kx = jax.random.split(key)
    # PyTorch-convention NCHW input: batch=2, channels=3, spatial=16x16.
    x = jax.random.normal(kx, (2, 3, 16, 16), jnp.float32)
    params = init_params(key, num_classes)

    out = simple_cnn_forward(x, params)
    out = jax.block_until_ready(out)
    assert out.shape == (2, num_classes), out.shape

    ref = reference_forward(x, params)
    err = float(jnp.max(jnp.abs(out - ref)))
    # bf16 matmul operands with f32 accumulation: expect ~1e-2 worst-case on O(1) logits.
    assert err < 5e-2, f"max abs error vs reference: {err}"

    print("KERNEL_OK")
</pallas_src>

<mosaic_0001>
module attributes {stable_mosaic.version = 11 : i64} {
  func.func @_fused_cnn_kernel(%arg0: i32, %arg1: memref<512x32xbf16, #tpu.memory_space<vmem>>, %arg2: memref<32x32xbf16, #tpu.memory_space<vmem>>, %arg3: memref<1x32xf32, #tpu.memory_space<vmem>>, %arg4: memref<1x32xf32, #tpu.memory_space<vmem>>, %arg5: memref<128x1xf32, #tpu.memory_space<vmem>>, %arg6: memref<288x64xbf16, #tpu.memory_space<vmem>>, %arg7: memref<1x64xf32, #tpu.memory_space<vmem>>, %arg8: memref<1x64xf32, #tpu.memory_space<vmem>>, %arg9: memref<32x1xf32, #tpu.memory_space<vmem>>, %arg10: memref<576x128xbf16, #tpu.memory_space<vmem>>, %arg11: memref<1x128xf32, #tpu.memory_space<vmem>>, %arg12: memref<1x128xf32, #tpu.memory_space<vmem>>, %arg13: memref<8x1xf32, #tpu.memory_space<vmem>>, %arg14: memref<1152x256xbf16, #tpu.memory_space<vmem>>, %arg15: memref<1x256xf32, #tpu.memory_space<vmem>>, %arg16: memref<1x256xf32, #tpu.memory_space<vmem>>, %arg17: memref<256x128xbf16, #tpu.memory_space<vmem>>, %arg18: memref<1x128xf32, #tpu.memory_space<vmem>>, %arg19: memref<128x128xbf16, #tpu.memory_space<vmem>>, %arg20: memref<1x128xf32, #tpu.memory_space<vmem>>, %arg21: memref<2x128xf32, #tpu.memory_space<vmem>>, %arg22: memref<176x32xf32, #tpu.memory_space<vmem>>, %arg23: memref<64x64xf32, #tpu.memory_space<vmem>>, %arg24: memref<24x128xf32, #tpu.memory_space<vmem>>) attributes {dimension_semantics = [#tpu.dimension_semantics<parallel>], iteration_bounds = array<i64: 1>, scalar_prefetch = 0 : i64, scratch_operands = 3 : i64, tpu.core_type = #tpu.core_type<tc>, window_params = [{transform_indices = @transform_0, window_bounds = array<i64: 512, 32>}, {pipeline_mode = #tpu.pipeline_mode<synchronous>, transform_indices = @transform_1, window_bounds = array<i64: 32, 32>}, {pipeline_mode = #tpu.pipeline_mode<synchronous>, transform_indices = @transform_2, window_bounds = array<i64: 1, 32>}, {pipeline_mode = #tpu.pipeline_mode<synchronous>, transform_indices = @transform_3, window_bounds = array<i64: 1, 32>}, {pipeline_mode = #tpu.pipeline_mode<synchronous>, transform_indices = @transform_4, window_bounds = array<i64: 128, 1>}, {pipeline_mode = #tpu.pipeline_mode<synchronous>, transform_indices = @transform_5, window_bounds = array<i64: 288, 64>}, {pipeline_mode = #tpu.pipeline_mode<synchronous>, transform_indices = @transform_6, window_bounds = array<i64: 1, 64>}, {pipeline_mode = #tpu.pipeline_mode<synchronous>, transform_indices = @transform_7, window_bounds = array<i64: 1, 64>}, {pipeline_mode = #tpu.pipeline_mode<synchronous>, transform_indices = @transform_8, window_bounds = array<i64: 32, 1>}, {pipeline_mode = #tpu.pipeline_mode<synchronous>, transform_indices = @transform_9, window_bounds = array<i64: 576, 128>}, {pipeline_mode = #tpu.pipeline_mode<synchronous>, transform_indices = @transform_10, window_bounds = array<i64: 1, 128>}, {pipeline_mode = #tpu.pipeline_mode<synchronous>, transform_indices = @transform_11, window_bounds = array<i64: 1, 128>}, {pipeline_mode = #tpu.pipeline_mode<synchronous>, transform_indices = @transform_12, window_bounds = array<i64: 8, 1>}, {pipeline_mode = #tpu.pipeline_mode<synchronous>, transform_indices = @transform_13, window_bounds = array<i64: 1152, 256>}, {pipeline_mode = #tpu.pipeline_mode<synchronous>, transform_indices = @transform_14, window_bounds = array<i64: 1, 256>}, {pipeline_mode = #tpu.pipeline_mode<synchronous>, transform_indices = @transform_15, window_bounds = array<i64: 1, 256>}, {pipeline_mode = #tpu.pipeline_mode<synchronous>, transform_indices = @transform_16, window_bounds = array<i64: 256, 128>}, {pipeline_mode = #tpu.pipeline_mode<synchronous>, transform_indices = @transform_17, window_bounds = array<i64: 1, 128>}, {pipeline_mode = #tpu.pipeline_mode<synchronous>, transform_indices = @transform_18, window_bounds = array<i64: 128, 128>}, {pipeline_mode = #tpu.pipeline_mode<synchronous>, transform_indices = @transform_19, window_bounds = array<i64: 1, 128>}, {transform_indices = @transform_20, window_bounds = array<i64: 2, 128>}]} {
    %cst = arith.constant 0.000000e+00 : f32
    %0 = vector.broadcast %cst : f32 to vector<24x32xf32>
    %c0 = arith.constant 0 : index
    %c0_0 = arith.constant 0 : index
    %1 = vector.load %arg22[%c0, %c0_0] : memref<176x32xf32, #tpu.memory_space<vmem>>, vector<24x32xf32>
    tpu.vector_store %arg22[%c0, %c0_0], %0 {strides = array<i32>} : memref<176x32xf32, #tpu.memory_space<vmem>>, vector<24x32xf32>,
    %cst_1 = arith.constant 0.000000e+00 : f32
    %2 = vector.broadcast %cst_1 : f32 to vector<24x32xf32>
    %c152 = arith.constant 152 : index
    %c0_2 = arith.constant 0 : index
    %3 = vector.load %arg22[%c152, %c0_2] : memref<176x32xf32, #tpu.memory_space<vmem>>, vector<24x32xf32>
    tpu.vector_store %arg22[%c152, %c0_2], %2 {strides = array<i32>} : memref<176x32xf32, #tpu.memory_space<vmem>>, vector<24x32xf32>,
    %cst_3 = arith.constant 0.000000e+00 : f32
    %4 = vector.broadcast %cst_3 : f32 to vector<16x64xf32>
    %c0_4 = arith.constant 0 : index
    %c0_5 = arith.constant 0 : index
    %5 = vector.load %arg23[%c0_4, %c0_5] : memref<64x64xf32, #tpu.memory_space<vmem>>, vector<16x64xf32>
    tpu.vector_store %arg23[%c0_4, %c0_5], %4 {strides = array<i32>} : memref<64x64xf32, #tpu.memory_space<vmem>>, vector<16x64xf32>,
    %cst_6 = arith.constant 0.000000e+00 : f32
    %6 = vector.broadcast %cst_6 : f32 to vector<16x64xf32>
    %c48 = arith.constant 48 : index
    %c0_7 = arith.constant 0 : index
    %7 = vector.load %arg23[%c48, %c0_7] : memref<64x64xf32, #tpu.memory_space<vmem>>, vector<16x64xf32>
    tpu.vector_store %arg23[%c48, %c0_7], %6 {strides = array<i32>} : memref<64x64xf32, #tpu.memory_space<vmem>>, vector<16x64xf32>,
    %cst_8 = arith.constant 0.000000e+00 : f32
    %8 = vector.broadcast %cst_8 : f32 to vector<8x128xf32>
    %c0_9 = arith.constant 0 : index
    %c0_10 = arith.constant 0 : index
    %9 = vector.load %arg24[%c0_9, %c0_10] : memref<24x128xf32, #tpu.memory_space<vmem>>, vector<8x128xf32>
    tpu.vector_store %arg24[%c0_9, %c0_10], %8 {strides = array<i32>} : memref<24x128xf32, #tpu.memory_space<vmem>>, vector<8x128xf32>,
    %cst_11 = arith.constant 0.000000e+00 : f32
    %10 = vector.broadcast %cst_11 : f32 to vector<8x128xf32>
    %c16 = arith.constant 16 : index
    %c0_12 = arith.constant 0 : index
    %11 = vector.load %arg24[%c16, %c0_12] : memref<24x128xf32, #tpu.memory_space<vmem>>, vector<8x128xf32>
    tpu.vector_store %arg24[%c16, %c0_12], %10 {strides = array<i32>} : memref<24x128xf32, #tpu.memory_space<vmem>>, vector<8x128xf32>,
    %c0_13 = arith.constant 0 : index
    %c0_14 = arith.constant 0 : index
    %12 = vector.load %arg1[%c0_13, %c0_14] : memref<512x32xbf16, #tpu.memory_space<vmem>>, vector<512x32xbf16>
    %c0_15 = arith.constant 0 : index
    %c0_16 = arith.constant 0 : index
    %13 = vector.load %arg2[%c0_15, %c0_16] : memref<32x32xbf16, #tpu.memory_space<vmem>>, vector<32x32xbf16>
    %cst_17 = arith.constant dense<0.000000e+00> : vector<512x32xf32>
    %14 = tpu.matmul %12, %13, %cst_17 {dimension_numbers = #tpu.dot_dimension_numbers<[1], [0], [0], [1], [0, 0, 1, 1], [], []>} : vector<512x32xbf16>, vector<32x32xbf16>, vector<512x32xf32> -> vector<512x32xf32>
    %c0_18 = arith.constant 0 : index
    %c0_19 = arith.constant 0 : index
    %15 = vector.load %arg3[%c0_18, %c0_19] : memref<1x32xf32, #tpu.memory_space<vmem>>, vector<1x32xf32>
    %16 = vector.broadcast %15 : vector<1x32xf32> to vector<512x32xf32>
    %17 = arith.mulf %14, %16 : vector<512x32xf32>
    %c0_20 = arith.constant 0 : index
    %c0_21 = arith.constant 0 : index
    %18 = vector.load %arg4[%c0_20, %c0_21] : memref<1x32xf32, #tpu.memory_space<vmem>>, vector<1x32xf32>
    %19 = vector.broadcast %18 : vector<1x32xf32> to vector<512x32xf32>
    %20 = arith.addf %17, %19 : vector<512x32xf32>
    %cst_22 = arith.constant 0.000000e+00 : f32
    %21 = vector.broadcast %cst_22 : f32 to vector<512x32xf32>
    %22 = arith.maximumf %20, %21 : vector<512x32xf32>
    %23 = vector.extract_strided_slice %22 {offsets = [0, 0], sizes = [32, 32], strides = [1, 1]} : vector<512x32xf32> to vector<32x32xf32>
    %24 = vector.extract_strided_slice %22 {offsets = [32, 0], sizes = [32, 32], strides = [1, 1]} : vector<512x32xf32> to vector<32x32xf32>
    %25 = arith.maximumf %23, %24 : vector<32x32xf32>
    %26 = vector.extract_strided_slice %25 {offsets = [0, 0], sizes = [2, 32], strides = [1, 1]} : vector<32x32xf32> to vector<2x32xf32>
    %27 = vector.extract_strided_slice %25 {offsets = [2, 0], sizes = [2, 32], strides = [1, 1]} : vector<32x32xf32> to vector<2x32xf32>
    %28 = arith.maximumf %26, %27 : vector<2x32xf32>
    %29 = vector.extract_strided_slice %25 {offsets = [4, 0], sizes = [2, 32], strides = [1, 1]} : vector<32x32xf32> to vector<2x32xf32>
    %30 = vector.extract_strided_slice %25 {offsets = [6, 0], sizes = [2, 32], strides = [1, 1]} : vector<32x32xf32> to vector<2x32xf32>
    %31 = arith.maximumf %29, %30 : vector<2x32xf32>
    %32 = vector.extract_strided_slice %25 {offsets = [8, 0], sizes = [2, 32], strides = [1, 1]} : vector<32x32xf32> to vector<2x32xf32>
    %33 = vector.extract_strided_slice %25 {offsets = [10, 0], sizes = [2, 32], strides = [1, 1]} : vector<32x32xf32> to vector<2x32xf32>
    %34 = arith.maximumf %32, %33 : vector<2x32xf32>
    %35 = vector.extract_strided_slice %25 {offsets = [12, 0], sizes = [2, 32], strides = [1, 1]} : vector<32x32xf32> to vector<2x32xf32>
    %36 = vector.extract_strided_slice %25 {offsets = [14, 0], sizes = [2, 32], strides = [1, 1]} : vector<32x32xf32> to vector<2x32xf32>
    %37 = arith.maximumf %35, %36 : vector<2x32xf32>
    %38 = vector.extract_strided_slice %25 {offsets = [16, 0], sizes = [2, 32], strides = [1, 1]} : vector<32x32xf32> to vector<2x32xf32>
    %39 = vector.extract_strided_slice %25 {offsets = [18, 0], sizes = [2, 32], strides = [1, 1]} : vector<32x32xf32> to vector<2x32xf32>
    %40 = arith.maximumf %38, %39 : vector<2x32xf32>
    %41 = vector.extract_strided_slice %25 {offsets = [20, 0], sizes = [2, 32], strides = [1, 1]} : vector<32x32xf32> to vector<2x32xf32>
    %42 = vector.extract_strided_slice %25 {offsets = [22, 0], sizes = [2, 32], strides = [1, 1]} : vector<32x32xf32> to vector<2x32xf32>
    %43 = arith.maximumf %41, %42 : vector<2x32xf32>
    %44 = vector.extract_strided_slice %25 {offsets = [24, 0], sizes = [2, 32], strides = [1, 1]} : vector<32x32xf32> to vector<2x32xf32>
    %45 = vector.extract_strided_slice %25 {offsets = [26, 0], sizes = [2, 32], strides = [1, 1]} : vector<32x32xf32> to vector<2x32xf32>
    %46 = arith.maximumf %44, %45 : vector<2x32xf32>
    %47 = vector.extract_strided_slice %25 {offsets = [28, 0], sizes = [2, 32], strides = [1, 1]} : vector<32x32xf32> to vector<2x32xf32>
    %48 = vector.extract_strided_slice %25 {offsets = [30, 0], sizes = [2, 32], strides = [1, 1]} : vector<32x32xf32> to vector<2x32xf32>
    %49 = arith.maximumf %47, %48 : vector<2x32xf32>
    %50 = vector.extract_strided_slice %22 {offsets = [64, 0], sizes = [32, 32], strides = [1, 1]} : vector<512x32xf32> to vector<32x32xf32>
    %51 = vector.extract_strided_slice %22 {offsets = [96, 0], sizes = [32, 32], strides = [1, 1]} : vector<512x32xf32> to vector<32x32xf32>
    %52 = arith.maximumf %50, %51 : vector<32x32xf32>
    %53 = vector.extract_strided_slice %52 {offsets = [0, 0], sizes = [2, 32], strides = [1, 1]} : vector<32x32xf32> to vector<2x32xf32>
    %54 = vector.extract_strided_slice %52 {offsets = [2, 0], sizes = [2, 32], strides = [1, 1]} : vector<32x32xf32> to vector<2x32xf32>
    %55 = arith.maximumf %53, %54 : vector<2x32xf32>
    %56 = vector.extract_strided_slice %52 {offsets = [4, 0], sizes = [2, 32], strides = [1, 1]} : vector<32x32xf32> to vector<2x32xf32>
    %57 = vector.extract_strided_slice %52 {offsets = [6, 0], sizes = [2, 32], strides = [1, 1]} : vector<32x32xf32> to vector<2x32xf32>
    %58 = arith.maximumf %56, %57 : vector<2x32xf32>
    %59 = vector.extract_strided_slice %52 {offsets = [8, 0], sizes = [2, 32], strides = [1, 1]} : vector<32x32xf32> to vector<2x32xf32>
    %60 = vector.extract_strided_slice %52 {offsets = [10, 0], sizes = [2, 32], strides = [1, 1]} : vector<32x32xf32> to vector<2x32xf32>
    %61 = arith.maximumf %59, %60 : vector<2x32xf32>
    %62 = vector.extract_strided_slice %52 {offsets = [12, 0], sizes = [2, 32], strides = [1, 1]} : vector<32x32xf32> to vector<2x32xf32>
    %63 = vector.extract_strided_slice %52 {offsets = [14, 0], sizes = [2, 32], strides = [1, 1]} : vector<32x32xf32> to vector<2x32xf32>
    %64 = arith.maximumf %62, %63 : vector<2x32xf32>
    %65 = vector.extract_strided_slice %52 {offsets = [16, 0], sizes = [2, 32], strides = [1, 1]} : vector<32x32xf32> to vector<2x32xf32>
    %66 = vector.extract_strided_slice %52 {offsets = [18, 0], sizes = [2, 32], strides = [1, 1]} : vector<32x32xf32> to vector<2x32xf32>
    %67 = arith.maximumf %65, %66 : vector<2x32xf32>
    %68 = vector.extract_strided_slice %52 {offsets = [20, 0], sizes = [2, 32], strides = [1, 1]} : vector<32x32xf32> to vector<2x32xf32>
    %69 = vector.extract_strided_slice %52 {offsets = [22, 0], sizes = [2, 32], strides = [1, 1]} : vector<32x32xf32> to vector<2x32xf32>
    %70 = arith.maximumf %68, %69 : vector<2x32xf32>
    %71 = vector.extract_strided_slice %52 {offsets = [24, 0], sizes = [2, 32], strides = [1, 1]} : vector<32x32xf32> to vector<2x32xf32>
    %72 = vector.extract_strided_slice %52 {offsets = [26, 0], sizes = [2, 32], strides = [1, 1]} : vector<32x32xf32> to vector<2x32xf32>
    %73 = arith.maximumf %71, %72 : vector<2x32xf32>
    %74 = vector.extract_strided_slice %52 {offsets = [28, 0], sizes = [2, 32], strides = [1, 1]} : vector<32x32xf32> to vector<2x32xf32>
    %75 = vector.extract_strided_slice %52 {offsets = [30, 0], sizes = [2, 32], strides = [1, 1]} : vector<32x32xf32> to vector<2x32xf32>
    %76 = arith.maximumf %74, %75 : vector<2x32xf32>
    %77 = vector.extract_strided_slice %22 {offsets = [128, 0], sizes = [32, 32], strides = [1, 1]} : vector<512x32xf32> to vector<32x32xf32>
    %78 = vector.extract_strided_slice %22 {offsets = [160, 0], sizes = [32, 32], strides = [1, 1]} : vector<512x32xf32> to vector<32x32xf32>
    %79 = arith.maximumf %77, %78 : vector<32x32xf32>
    %80 = vector.extract_strided_slice %79 {offsets = [0, 0], sizes = [2, 32], strides = [1, 1]} : vector<32x32xf32> to vector<2x32xf32>
    %81 = vector.extract_strided_slice %79 {offsets = [2, 0], sizes = [2, 32], strides = [1, 1]} : vector<32x32xf32> to vector<2x32xf32>
    %82 = arith.maximumf %80, %81 : vector<2x32xf32>
    %83 = vector.extract_strided_slice %79 {offsets = [4, 0], sizes = [2, 32], strides = [1, 1]} : vector<32x32xf32> to vector<2x32xf32>
    %84 = vector.extract_strided_slice %79 {offsets = [6, 0], sizes = [2, 32], strides = [1, 1]} : vector<32x32xf32> to vector<2x32xf32>
    %85 = arith.maximumf %83, %84 : vector<2x32xf32>
    %86 = vector.extract_strided_slice %79 {offsets = [8, 0], sizes = [2, 32], strides = [1, 1]} : vector<32x32xf32> to vector<2x32xf32>
    %87 = vector.extract_strided_slice %79 {offsets = [10, 0], sizes = [2, 32], strides = [1, 1]} : vector<32x32xf32> to vector<2x32xf32>
    %88 = arith.maximumf %86, %87 : vector<2x32xf32>
    %89 = vector.extract_strided_slice %79 {offsets = [12, 0], sizes = [2, 32], strides = [1, 1]} : vector<32x32xf32> to vector<2x32xf32>
    %90 = vector.extract_strided_slice %79 {offsets = [14, 0], sizes = [2, 32], strides = [1, 1]} : vector<32x32xf32> to vector<2x32xf32>
    %91 = arith.maximumf %89, %90 : vector<2x32xf32>
    %92 = vector.extract_strided_slice %79 {offsets = [16, 0], sizes = [2, 32], strides = [1, 1]} : vector<32x32xf32> to vector<2x32xf32>
    %93 = vector.extract_strided_slice %79 {offsets = [18, 0], sizes = [2, 32], strides = [1, 1]} : vector<32x32xf32> to vector<2x32xf32>
    %94 = arith.maximumf %92, %93 : vector<2x32xf32>
    %95 = vector.extract_strided_slice %79 {offsets = [20, 0], sizes = [2, 32], strides = [1, 1]} : vector<32x32xf32> to vector<2x32xf32>
    %96 = vector.extract_strided_slice %79 {offsets = [22, 0], sizes = [2, 32], strides = [1, 1]} : vector<32x32xf32> to vector<2x32xf32>
    %97 = arith.maximumf %95, %96 : vector<2x32xf32>
    %98 = vector.extract_strided_slice %79 {offsets = [24, 0], sizes = [2, 32], strides = [1, 1]} : vector<32x32xf32> to vector<2x32xf32>
    %99 = vector.extract_strided_slice %79 {offsets = [26, 0], sizes = [2, 32], strides = [1, 1]} : vector<32x32xf32> to vector<2x32xf32>
    %100 = arith.maximumf %98, %99 : vector<2x32xf32>
    %101 = vector.extract_strided_slice %79 {offsets = [28, 0], sizes = [2, 32], strides = [1, 1]} : vector<32x32xf32> to vector<2x32xf32>
    %102 = vector.extract_strided_slice %79 {offsets = [30, 0], sizes = [2, 32], strides = [1, 1]} : vector<32x32xf32> to vector<2x32xf32>
    %103 = arith.maximumf %101, %102 : vector<2x32xf32>
    %104 = vector.extract_strided_slice %22 {offsets = [192, 0], sizes = [32, 32], strides = [1, 1]} : vector<512x32xf32> to vector<32x32xf32>
    %105 = vector.extract_strided_slice %22 {offsets = [224, 0], sizes = [32, 32], strides = [1, 1]} : vector<512x32xf32> to vector<32x32xf32>
    %106 = arith.maximumf %104, %105 : vector<32x32xf32>
    %107 = vector.extract_strided_slice %106 {offsets = [0, 0], sizes = [2, 32], strides = [1, 1]} : vector<32x32xf32> to vector<2x32xf32>
    %108 = vector.extract_strided_slice %106 {offsets = [2, 0], sizes = [2, 32], strides = [1, 1]} : vector<32x32xf32> to vector<2x32xf32>
    %109 = arith.maximumf %107, %108 : vector<2x32xf32>
    %110 = vector.extract_strided_slice %106 {offsets = [4, 0], sizes = [2, 32], strides = [1, 1]} : vector<32x32xf32> to vector<2x32xf32>
    %111 = vector.extract_strided_slice %106 {offsets = [6, 0], sizes = [2, 32], strides = [1, 1]} : vector<32x32xf32> to vector<2x32xf32>
    %112 = arith.maximumf %110, %111 : vector<2x32xf32>
    %113 = vector.extract_strided_slice %106 {offsets = [8, 0], sizes = [2, 32], strides = [1, 1]} : vector<32x32xf32> to vector<2x32xf32>
    %114 = vector.extract_strided_slice %106 {offsets = [10, 0], sizes = [2, 32], strides = [1, 1]} : vector<32x32xf32> to vector<2x32xf32>
    %115 = arith.maximumf %113, %114 : vector<2x32xf32>
    %116 = vector.extract_strided_slice %106 {offsets = [12, 0], sizes = [2, 32], strides = [1, 1]} : vector<32x32xf32> to vector<2x32xf32>
    %117 = vector.extract_strided_slice %106 {offsets = [14, 0], sizes = [2, 32], strides = [1, 1]} : vector<32x32xf32> to vector<2x32xf32>
    %118 = arith.maximumf %116, %117 : vector<2x32xf32>
    %119 = vector.extract_strided_slice %106 {offsets = [16, 0], sizes = [2, 32], strides = [1, 1]} : vector<32x32xf32> to vector<2x32xf32>
    %120 = vector.extract_strided_slice %106 {offsets = [18, 0], sizes = [2, 32], strides = [1, 1]} : vector<32x32xf32> to vector<2x32xf32>
    %121 = arith.maximumf %119, %120 : vector<2x32xf32>
    %122 = vector.extract_strided_slice %106 {offsets = [20, 0], sizes = [2, 32], strides = [1, 1]} : vector<32x32xf32> to vector<2x32xf32>
    %123 = vector.extract_strided_slice %106 {offsets = [22, 0], sizes = [2, 32], strides = [1, 1]} : vector<32x32xf32> to vector<2x32xf32>
    %124 = arith.maximumf %122, %123 : vector<2x32xf32>
    %125 = vector.extract_strided_slice %106 {offsets = [24, 0], sizes = [2, 32], strides = [1, 1]} : vector<32x32xf32> to vector<2x32xf32>
    %126 = vector.extract_strided_slice %106 {offsets = [26, 0], sizes = [2, 32], strides = [1, 1]} : vector<32x32xf32> to vector<2x32xf32>
    %127 = arith.maximumf %125, %126 : vector<2x32xf32>
    %128 = vector.extract_strided_slice %106 {offsets = [28, 0], sizes = [2, 32], strides = [1, 1]} : vector<32x32xf32> to vector<2x32xf32>
    %129 = vector.extract_strided_slice %106 {offsets = [30, 0], sizes = [2, 32], strides = [1, 1]} : vector<32x32xf32> to vector<2x32xf32>
    %130 = arith.maximumf %128, %129 : vector<2x32xf32>
    %131 = vector.extract_strided_slice %22 {offsets = [256, 0], sizes = [32, 32], strides = [1, 1]} : vector<512x32xf32> to vector<32x32xf32>
    %132 = vector.extract_strided_slice %22 {offsets = [288, 0], sizes = [32, 32], strides = [1, 1]} : vector<512x32xf32> to vector<32x32xf32>
    %133 = arith.maximumf %131, %132 : vector<32x32xf32>
    %134 = vector.extract_strided_slice %133 {offsets = [0, 0], sizes = [2, 32], strides = [1, 1]} : vector<32x32xf32> to vector<2x32xf32>
    %135 = vector.extract_strided_slice %133 {offsets = [2, 0], sizes = [2, 32], strides = [1, 1]} : vector<32x32xf32> to vector<2x32xf32>
    %136 = arith.maximumf %134, %135 : vector<2x32xf32>
    %137 = vector.extract_strided_slice %133 {offsets = [4, 0], sizes = [2, 32], strides = [1, 1]} : vector<32x32xf32> to vector<2x32xf32>
    %138 = vector.extract_strided_slice %133 {offsets = [6, 0], sizes = [2, 32], strides = [1, 1]} : vector<32x32xf32> to vector<2x32xf32>
    %139 = arith.maximumf %137, %138 : vector<2x32xf32>
    %140 = vector.extract_strided_slice %133 {offsets = [8, 0], sizes = [2, 32], strides = [1, 1]} : vector<32x32xf32> to vector<2x32xf32>
    %141 = vector.extract_strided_slice %133 {offsets = [10, 0], sizes = [2, 32], strides = [1, 1]} : vector<32x32xf32> to vector<2x32xf32>
    %142 = arith.maximumf %140, %141 : vector<2x32xf32>
    %143 = vector.extract_strided_slice %133 {offsets = [12, 0], sizes = [2, 32], strides = [1, 1]} : vector<32x32xf32> to vector<2x32xf32>
    %144 = vector.extract_strided_slice %133 {offsets = [14, 0], sizes = [2, 32], strides = [1, 1]} : vector<32x32xf32> to vector<2x32xf32>
    %145 = arith.maximumf %143, %144 : vector<2x32xf32>
    %146 = vector.extract_strided_slice %133 {offsets = [16, 0], sizes = [2, 32], strides = [1, 1]} : vector<32x32xf32> to vector<2x32xf32>
    %147 = vector.extract_strided_slice %133 {offsets = [18, 0], sizes = [2, 32], strides = [1, 1]} : vector<32x32xf32> to vector<2x32xf32>
    %148 = arith.maximumf %146, %147 : vector<2x32xf32>
    %149 = vector.extract_strided_slice %133 {offsets = [20, 0], sizes = [2, 32], strides = [1, 1]} : vector<32x32xf32> to vector<2x32xf32>
    %150 = vector.extract_strided_slice %133 {offsets = [22, 0], sizes = [2, 32], strides = [1, 1]} : vector<32x32xf32> to vector<2x32xf32>
    %151 = arith.maximumf %149, %150 : vector<2x32xf32>
    %152 = vector.extract_strided_slice %133 {offsets = [24, 0], sizes = [2, 32], strides = [1, 1]} : vector<32x32xf32> to vector<2x32xf32>
    %153 = vector.extract_strided_slice %133 {offsets = [26, 0], sizes = [2, 32], strides = [1, 1]} : vector<32x32xf32> to vector<2x32xf32>
    %154 = arith.maximumf %152, %153 : vector<2x32xf32>
    %155 = vector.extract_strided_slice %133 {offsets = [28, 0], sizes = [2, 32], strides = [1, 1]} : vector<32x32xf32> to vector<2x32xf32>
    %156 = vector.extract_strided_slice %133 {offsets = [30, 0], sizes = [2, 32], strides = [1, 1]} : vector<32x32xf32> to vector<2x32xf32>
    %157 = arith.maximumf %155, %156 : vector<2x32xf32>
    %158 = vector.extract_strided_slice %22 {offsets = [320, 0], sizes = [32, 32], strides = [1, 1]} : vector<512x32xf32> to vector<32x32xf32>
    %159 = vector.extract_strided_slice %22 {offsets = [352, 0], sizes = [32, 32], strides = [1, 1]} : vector<512x32xf32> to vector<32x32xf32>
    %160 = arith.maximumf %158, %159 : vector<32x32xf32>
    %161 = vector.extract_strided_slice %160 {offsets = [0, 0], sizes = [2, 32], strides = [1, 1]} : vector<32x32xf32> to vector<2x32xf32>
    %162 = vector.extract_strided_slice %160 {offsets = [2, 0], sizes = [2, 32], strides = [1, 1]} : vector<32x32xf32> to vector<2x32xf32>
    %163 = arith.maximumf %161, %162 : vector<2x32xf32>
    %164 = vector.extract_strided_slice %160 {offsets = [4, 0], sizes = [2, 32], strides = [1, 1]} : vector<32x32xf32> to vector<2x32xf32>
    %165 = vector.extract_strided_slice %160 {offsets = [6, 0], sizes = [2, 32], strides = [1, 1]} : vector<32x32xf32> to vector<2x32xf32>
    %166 = arith.maximumf %164, %165 : vector<2x32xf32>
    %167 = vector.extract_strided_slice %160 {offsets = [8, 0], sizes = [2, 32], strides = [1, 1]} : vector<32x32xf32> to vector<2x32xf32>
    %168 = vector.extract_strided_slice %160 {offsets = [10, 0], sizes = [2, 32], strides = [1, 1]} : vector<32x32xf32> to vector<2x32xf32>
    %169 = arith.maximumf %167, %168 : vector<2x32xf32>
    %170 = vector.extract_strided_slice %160 {offsets = [12, 0], sizes = [2, 32], strides = [1, 1]} : vector<32x32xf32> to vector<2x32xf32>
    %171 = vector.extract_strided_slice %160 {offsets = [14, 0], sizes = [2, 32], strides = [1, 1]} : vector<32x32xf32> to vector<2x32xf32>
    %172 = arith.maximumf %170, %171 : vector<2x32xf32>
    %173 = vector.extract_strided_slice %160 {offsets = [16, 0], sizes = [2, 32], strides = [1, 1]} : vector<32x32xf32> to vector<2x32xf32>
    %174 = vector.extract_strided_slice %160 {offsets = [18, 0], sizes = [2, 32], strides = [1, 1]} : vector<32x32xf32> to vector<2x32xf32>
    %175 = arith.maximumf %173, %174 : vector<2x32xf32>
    %176 = vector.extract_strided_slice %160 {offsets = [20, 0], sizes = [2, 32], strides = [1, 1]} : vector<32x32xf32> to vector<2x32xf32>
    %177 = vector.extract_strided_slice %160 {offsets = [22, 0], sizes = [2, 32], strides = [1, 1]} : vector<32x32xf32> to vector<2x32xf32>
    %178 = arith.maximumf %176, %177 : vector<2x32xf32>
    %179 = vector.extract_strided_slice %160 {offsets = [24, 0], sizes = [2, 32], strides = [1, 1]} : vector<32x32xf32> to vector<2x32xf32>
    %180 = vector.extract_strided_slice %160 {offsets = [26, 0], sizes = [2, 32], strides = [1, 1]} : vector<32x32xf32> to vector<2x32xf32>
    %181 = arith.maximumf %179, %180 : vector<2x32xf32>
    %182 = vector.extract_strided_slice %160 {offsets = [28, 0], sizes = [2, 32], strides = [1, 1]} : vector<32x32xf32> to vector<2x32xf32>
    %183 = vector.extract_strided_slice %160 {offsets = [30, 0], sizes = [2, 32], strides = [1, 1]} : vector<32x32xf32> to vector<2x32xf32>
    %184 = arith.maximumf %182, %183 : vector<2x32xf32>
    %185 = vector.extract_strided_slice %22 {offsets = [384, 0], sizes = [32, 32], strides = [1, 1]} : vector<512x32xf32> to vector<32x32xf32>
    %186 = vector.extract_strided_slice %22 {offsets = [416, 0], sizes = [32, 32], strides = [1, 1]} : vector<512x32xf32> to vector<32x32xf32>
    %187 = arith.maximumf %185, %186 : vector<32x32xf32>
    %188 = vector.extract_strided_slice %187 {offsets = [0, 0], sizes = [2, 32], strides = [1, 1]} : vector<32x32xf32> to vector<2x32xf32>
    %189 = vector.extract_strided_slice %187 {offsets = [2, 0], sizes = [2, 32], strides = [1, 1]} : vector<32x32xf32> to vector<2x32xf32>
    %190 = arith.maximumf %188, %189 : vector<2x32xf32>
    %191 = vector.extract_strided_slice %187 {offsets = [4, 0], sizes = [2, 32], strides = [1, 1]} : vector<32x32xf32> to vector<2x32xf32>
    %192 = vector.extract_strided_slice %187 {offsets = [6, 0], sizes = [2, 32], strides = [1, 1]} : vector<32x32xf32> to vector<2x32xf32>
    %193 = arith.maximumf %191, %192 : vector<2x32xf32>
    %194 = vector.extract_strided_slice %187 {offsets = [8, 0], sizes = [2, 32], strides = [1, 1]} : vector<32x32xf32> to vector<2x32xf32>
    %195 = vector.extract_strided_slice %187 {offsets = [10, 0], sizes = [2, 32], strides = [1, 1]} : vector<32x32xf32> to vector<2x32xf32>
    %196 = arith.maximumf %194, %195 : vector<2x32xf32>
    %197 = vector.extract_strided_slice %187 {offsets = [12, 0], sizes = [2, 32], strides = [1, 1]} : vector<32x32xf32> to vector<2x32xf32>
    %198 = vector.extract_strided_slice %187 {offsets = [14, 0], sizes = [2, 32], strides = [1, 1]} : vector<32x32xf32> to vector<2x32xf32>
    %199 = arith.maximumf %197, %198 : vector<2x32xf32>
    %200 = vector.extract_strided_slice %187 {offsets = [16, 0], sizes = [2, 32], strides = [1, 1]} : vector<32x32xf32> to vector<2x32xf32>
    %201 = vector.extract_strided_slice %187 {offsets = [18, 0], sizes = [2, 32], strides = [1, 1]} : vector<32x32xf32> to vector<2x32xf32>
    %202 = arith.maximumf %200, %201 : vector<2x32xf32>
    %203 = vector.extract_strided_slice %187 {offsets = [20, 0], sizes = [2, 32], strides = [1, 1]} : vector<32x32xf32> to vector<2x32xf32>
    %204 = vector.extract_strided_slice %187 {offsets = [22, 0], sizes = [2, 32], strides = [1, 1]} : vector<32x32xf32> to vector<2x32xf32>
    %205 = arith.maximumf %203, %204 : vector<2x32xf32>
    %206 = vector.extract_strided_slice %187 {offsets = [24, 0], sizes = [2, 32], strides = [1, 1]} : vector<32x32xf32> to vector<2x32xf32>
    %207 = vector.extract_strided_slice %187 {offsets = [26, 0], sizes = [2, 32], strides = [1, 1]} : vector<32x32xf32> to vector<2x32xf32>
    %208 = arith.maximumf %206, %207 : vector<2x32xf32>
    %209 = vector.extract_strided_slice %187 {offsets = [28, 0], sizes = [2, 32], strides = [1, 1]} : vector<32x32xf32> to vector<2x32xf32>
    %210 = vector.extract_strided_slice %187 {offsets = [30, 0], sizes = [2, 32], strides = [1, 1]} : vector<32x32xf32> to vector<2x32xf32>
    %211 = arith.maximumf %209, %210 : vector<2x32xf32>
    %212 = vector.extract_strided_slice %22 {offsets = [448, 0], sizes = [32, 32], strides = [1, 1]} : vector<512x32xf32> to vector<32x32xf32>
    %213 = vector.extract_strided_slice %22 {offsets = [480, 0], sizes = [32, 32], strides = [1, 1]} : vector<512x32xf32> to vector<32x32xf32>
    %214 = arith.maximumf %212, %213 : vector<32x32xf32>
    %215 = vector.extract_strided_slice %214 {offsets = [0, 0], sizes = [2, 32], strides = [1, 1]} : vector<32x32xf32> to vector<2x32xf32>
    %216 = vector.extract_strided_slice %214 {offsets = [2, 0], sizes = [2, 32], strides = [1, 1]} : vector<32x32xf32> to vector<2x32xf32>
    %217 = arith.maximumf %215, %216 : vector<2x32xf32>
    %218 = vector.extract_strided_slice %214 {offsets = [4, 0], sizes = [2, 32], strides = [1, 1]} : vector<32x32xf32> to vector<2x32xf32>
    %219 = vector.extract_strided_slice %214 {offsets = [6, 0], sizes = [2, 32], strides = [1, 1]} : vector<32x32xf32> to vector<2x32xf32>
    %220 = arith.maximumf %218, %219 : vector<2x32xf32>
    %221 = vector.extract_strided_slice %214 {offsets = [8, 0], sizes = [2, 32], strides = [1, 1]} : vector<32x32xf32> to vector<2x32xf32>
    %222 = vector.extract_strided_slice %214 {offsets = [10, 0], sizes = [2, 32], strides = [1, 1]} : vector<32x32xf32> to vector<2x32xf32>
    %223 = arith.maximumf %221, %222 : vector<2x32xf32>
    %224 = vector.extract_strided_slice %214 {offsets = [12, 0], sizes = [2, 32], strides = [1, 1]} : vector<32x32xf32> to vector<2x32xf32>
    %225 = vector.extract_strided_slice %214 {offsets = [14, 0], sizes = [2, 32], strides = [1, 1]} : vector<32x32xf32> to vector<2x32xf32>
    %226 = arith.maximumf %224, %225 : vector<2x32xf32>
    %227 = vector.extract_strided_slice %214 {offsets = [16, 0], sizes = [2, 32], strides = [1, 1]} : vector<32x32xf32> to vector<2x32xf32>
    %228 = vector.extract_strided_slice %214 {offsets = [18, 0], sizes = [2, 32], strides = [1, 1]} : vector<32x32xf32> to vector<2x32xf32>
    %229 = arith.maximumf %227, %228 : vector<2x32xf32>
    %230 = vector.extract_strided_slice %214 {offsets = [20, 0], sizes = [2, 32], strides = [1, 1]} : vector<32x32xf32> to vector<2x32xf32>
    %231 = vector.extract_strided_slice %214 {offsets = [22, 0], sizes = [2, 32], strides = [1, 1]} : vector<32x32xf32> to vector<2x32xf32>
    %232 = arith.maximumf %230, %231 : vector<2x32xf32>
    %233 = vector.extract_strided_slice %214 {offsets = [24, 0], sizes = [2, 32], strides = [1, 1]} : vector<32x32xf32> to vector<2x32xf32>
    %234 = vector.extract_strided_slice %214 {offsets = [26, 0], sizes = [2, 32], strides = [1, 1]} : vector<32x32xf32> to vector<2x32xf32>
    %235 = arith.maximumf %233, %234 : vector<2x32xf32>
    %236 = vector.extract_strided_slice %214 {offsets = [28, 0], sizes = [2, 32], strides = [1, 1]} : vector<32x32xf32> to vector<2x32xf32>
    %237 = vector.extract_strided_slice %214 {offsets = [30, 0], sizes = [2, 32], strides = [1, 1]} : vector<32x32xf32> to vector<2x32xf32>
    %238 = arith.maximumf %236, %237 : vector<2x32xf32>
    %c24 = arith.constant 24 : index
    %c0_23 = arith.constant 0 : index
    %239 = vector.load %arg22[%c24, %c0_23] : memref<176x32xf32, #tpu.memory_space<vmem>>, vector<2x32xf32>
    tpu.vector_store %arg22[%c24, %c0_23], %28 {strides = array<i32>} : memref<176x32xf32, #tpu.memory_space<vmem>>, vector<2x32xf32>,
    %c26 = arith.constant 26 : index
    %c0_24 = arith.constant 0 : index
    %240 = vector.load %arg22[%c26, %c0_24] : memref<176x32xf32, #tpu.memory_space<vmem>>, vector<2x32xf32>
    tpu.vector_store %arg22[%c26, %c0_24], %31 {strides = array<i32>} : memref<176x32xf32, #tpu.memory_space<vmem>>, vector<2x32xf32>,
    %c28 = arith.constant 28 : index
    %c0_25 = arith.constant 0 : index
    %241 = vector.load %arg22[%c28, %c0_25] : memref<176x32xf32, #tpu.memory_space<vmem>>, vector<2x32xf32>
    tpu.vector_store %arg22[%c28, %c0_25], %34 {strides = array<i32>} : memref<176x32xf32, #tpu.memory_space<vmem>>, vector<2x32xf32>,
    %c30 = arith.constant 30 : index
    %c0_26 = arith.constant 0 : index
    %242 = vector.load %arg22[%c30, %c0_26] : memref<176x32xf32, #tpu.memory_space<vmem>>, vector<2x32xf32>
    tpu.vector_store %arg22[%c30, %c0_26], %37 {strides = array<i32>} : memref<176x32xf32, #tpu.memory_space<vmem>>, vector<2x32xf32>,
    %c32 = arith.constant 32 : index
    %c0_27 = arith.constant 0 : index
    %243 = vector.load %arg22[%c32, %c0_27] : memref<176x32xf32, #tpu.memory_space<vmem>>, vector<2x32xf32>
    tpu.vector_store %arg22[%c32, %c0_27], %40 {strides = array<i32>} : memref<176x32xf32, #tpu.memory_space<vmem>>, vector<2x32xf32>,
    %c34 = arith.constant 34 : index
    %c0_28 = arith.constant 0 : index
    %244 = vector.load %arg22[%c34, %c0_28] : memref<176x32xf32, #tpu.memory_space<vmem>>, vector<2x32xf32>
    tpu.vector_store %arg22[%c34, %c0_28], %43 {strides = array<i32>} : memref<176x32xf32, #tpu.memory_space<vmem>>, vector<2x32xf32>,
    %c36 = arith.constant 36 : index
    %c0_29 = arith.constant 0 : index
    %245 = vector.load %arg22[%c36, %c0_29] : memref<176x32xf32, #tpu.memory_space<vmem>>, vector<2x32xf32>
    tpu.vector_store %arg22[%c36, %c0_29], %46 {strides = array<i32>} : memref<176x32xf32, #tpu.memory_space<vmem>>, vector<2x32xf32>,
    %c38 = arith.constant 38 : index
    %c0_30 = arith.constant 0 : index
    %246 = vector.load %arg22[%c38, %c0_30] : memref<176x32xf32, #tpu.memory_space<vmem>>, vector<2x32xf32>
    tpu.vector_store %arg22[%c38, %c0_30], %49 {strides = array<i32>} : memref<176x32xf32, #tpu.memory_space<vmem>>, vector<2x32xf32>,
    %c40 = arith.constant 40 : index
    %c0_31 = arith.constant 0 : index
    %247 = vector.load %arg22[%c40, %c0_31] : memref<176x32xf32, #tpu.memory_space<vmem>>, vector<2x32xf32>
    tpu.vector_store %arg22[%c40, %c0_31], %55 {strides = array<i32>} : memref<176x32xf32, #tpu.memory_space<vmem>>, vector<2x32xf32>,
    %c42 = arith.constant 42 : index
    %c0_32 = arith.constant 0 : index
    %248 = vector.load %arg22[%c42, %c0_32] : memref<176x32xf32, #tpu.memory_space<vmem>>, vector<2x32xf32>
    tpu.vector_store %arg22[%c42, %c0_32], %58 {strides = array<i32>} : memref<176x32xf32, #tpu.memory_space<vmem>>, vector<2x32xf32>,
    %c44 = arith.constant 44 : index
    %c0_33 = arith.constant 0 : index
    %249 = vector.load %arg22[%c44, %c0_33] : memref<176x32xf32, #tpu.memory_space<vmem>>, vector<2x32xf32>
    tpu.vector_store %arg22[%c44, %c0_33], %61 {strides = array<i32>} : memref<176x32xf32, #tpu.memory_space<vmem>>, vector<2x32xf32>,
    %c46 = arith.constant 46 : index
    %c0_34 = arith.constant 0 : index
    %250 = vector.load %arg22[%c46, %c0_34] : memref<176x32xf32, #tpu.memory_space<vmem>>, vector<2x32xf32>
    tpu.vector_store %arg22[%c46, %c0_34], %64 {strides = array<i32>} : memref<176x32xf32, #tpu.memory_space<vmem>>, vector<2x32xf32>,
    %c48_35 = arith.constant 48 : index
    %c0_36 = arith.constant 0 : index
    %251 = vector.load %arg22[%c48_35, %c0_36] : memref<176x32xf32, #tpu.memory_space<vmem>>, vector<2x32xf32>
    tpu.vector_store %arg22[%c48_35, %c0_36], %67 {strides = array<i32>} : memref<176x32xf32, #tpu.memory_space<vmem>>, vector<2x32xf32>,
    %c50 = arith.constant 50 : index
    %c0_37 = arith.constant 0 : index
    %252 = vector.load %arg22[%c50, %c0_37] : memref<176x32xf32, #tpu.memory_space<vmem>>, vector<2x32xf32>
    tpu.vector_store %arg22[%c50, %c0_37], %70 {strides = array<i32>} : memref<176x32xf32, #tpu.memory_space<vmem>>, vector<2x32xf32>,
    %c52 = arith.constant 52 : index
    %c0_38 = arith.constant 0 : index
    %253 = vector.load %arg22[%c52, %c0_38] : memref<176x32xf32, #tpu.memory_space<vmem>>, vector<2x32xf32>
    tpu.vector_store %arg22[%c52, %c0_38], %73 {strides = array<i32>} : memref<176x32xf32, #tpu.memory_space<vmem>>, vector<2x32xf32>,
    %c54 = arith.constant 54 : index
    %c0_39 = arith.constant 0 : index
    %254 = vector.load %arg22[%c54, %c0_39] : memref<176x32xf32, #tpu.memory_space<vmem>>, vector<2x32xf32>
    tpu.vector_store %arg22[%c54, %c0_39], %76 {strides = array<i32>} : memref<176x32xf32, #tpu.memory_space<vmem>>, vector<2x32xf32>,
    %c56 = arith.constant 56 : index
    %c0_40 = arith.constant 0 : index
    %255 = vector.load %arg22[%c56, %c0_40] : memref<176x32xf32, #tpu.memory_space<vmem>>, vector<2x32xf32>
    tpu.vector_store %arg22[%c56, %c0_40], %82 {strides = array<i32>} : memref<176x32xf32, #tpu.memory_space<vmem>>, vector<2x32xf32>,
    %c58 = arith.constant 58 : index
    %c0_41 = arith.constant 0 : index
    %256 = vector.load %arg22[%c58, %c0_41] : memref<176x32xf32, #tpu.memory_space<vmem>>, vector<2x32xf32>
    tpu.vector_store %arg22[%c58, %c0_41], %85 {strides = array<i32>} : memref<176x32xf32, #tpu.memory_space<vmem>>, vector<2x32xf32>,
    %c60 = arith.constant 60 : index
    %c0_42 = arith.constant 0 : index
    %257 = vector.load %arg22[%c60, %c0_42] : memref<176x32xf32, #tpu.memory_space<vmem>>, vector<2x32xf32>
    tpu.vector_store %arg22[%c60, %c0_42], %88 {strides = array<i32>} : memref<176x32xf32, #tpu.memory_space<vmem>>, vector<2x32xf32>,
    %c62 = arith.constant 62 : index
    %c0_43 = arith.constant 0 : index
    %258 = vector.load %arg22[%c62, %c0_43] : memref<176x32xf32, #tpu.memory_space<vmem>>, vector<2x32xf32>
    tpu.vector_store %arg22[%c62, %c0_43], %91 {strides = array<i32>} : memref<176x32xf32, #tpu.memory_space<vmem>>, vector<2x32xf32>,
    %c64 = arith.constant 64 : index
    %c0_44 = arith.constant 0 : index
    %259 = vector.load %arg22[%c64, %c0_44] : memref<176x32xf32, #tpu.memory_space<vmem>>, vector<2x32xf32>
    tpu.vector_store %arg22[%c64, %c0_44], %94 {strides = array<i32>} : memref<176x32xf32, #tpu.memory_space<vmem>>, vector<2x32xf32>,
    %c66 = arith.constant 66 : index
    %c0_45 = arith.constant 0 : index
    %260 = vector.load %arg22[%c66, %c0_45] : memref<176x32xf32, #tpu.memory_space<vmem>>, vector<2x32xf32>
    tpu.vector_store %arg22[%c66, %c0_45], %97 {strides = array<i32>} : memref<176x32xf32, #tpu.memory_space<vmem>>, vector<2x32xf32>,
    %c68 = arith.constant 68 : index
    %c0_46 = arith.constant 0 : index
    %261 = vector.load %arg22[%c68, %c0_46] : memref<176x32xf32, #tpu.memory_space<vmem>>, vector<2x32xf32>
    tpu.vector_store %arg22[%c68, %c0_46], %100 {strides = array<i32>} : memref<176x32xf32, #tpu.memory_space<vmem>>, vector<2x32xf32>,
    %c70 = arith.constant 70 : index
    %c0_47 = arith.constant 0 : index
    %262 = vector.load %arg22[%c70, %c0_47] : memref<176x32xf32, #tpu.memory_space<vmem>>, vector<2x32xf32>
    tpu.vector_store %arg22[%c70, %c0_47], %103 {strides = array<i32>} : memref<176x32xf32, #tpu.memory_space<vmem>>, vector<2x32xf32>,
    %c72 = arith.constant 72 : index
    %c0_48 = arith.constant 0 : index
    %263 = vector.load %arg22[%c72, %c0_48] : memref<176x32xf32, #tpu.memory_space<vmem>>, vector<2x32xf32>
    tpu.vector_store %arg22[%c72, %c0_48], %109 {strides = array<i32>} : memref<176x32xf32, #tpu.memory_space<vmem>>, vector<2x32xf32>,
    %c74 = arith.constant 74 : index
    %c0_49 = arith.constant 0 : index
    %264 = vector.load %arg22[%c74, %c0_49] : memref<176x32xf32, #tpu.memory_space<vmem>>, vector<2x32xf32>
    tpu.vector_store %arg22[%c74, %c0_49], %112 {strides = array<i32>} : memref<176x32xf32, #tpu.memory_space<vmem>>, vector<2x32xf32>,
    %c76 = arith.constant 76 : index
    %c0_50 = arith.constant 0 : index
    %265 = vector.load %arg22[%c76, %c0_50] : memref<176x32xf32, #tpu.memory_space<vmem>>, vector<2x32xf32>
    tpu.vector_store %arg22[%c76, %c0_50], %115 {strides = array<i32>} : memref<176x32xf32, #tpu.memory_space<vmem>>, vector<2x32xf32>,
    %c78 = arith.constant 78 : index
    %c0_51 = arith.constant 0 : index
    %266 = vector.load %arg22[%c78, %c0_51] : memref<176x32xf32, #tpu.memory_space<vmem>>, vector<2x32xf32>
    tpu.vector_store %arg22[%c78, %c0_51], %118 {strides = array<i32>} : memref<176x32xf32, #tpu.memory_space<vmem>>, vector<2x32xf32>,
    %c80 = arith.constant 80 : index
    %c0_52 = arith.constant 0 : index
    %267 = vector.load %arg22[%c80, %c0_52] : memref<176x32xf32, #tpu.memory_space<vmem>>, vector<2x32xf32>
    tpu.vector_store %arg22[%c80, %c0_52], %121 {strides = array<i32>} : memref<176x32xf32, #tpu.memory_space<vmem>>, vector<2x32xf32>,
    %c82 = arith.constant 82 : index
    %c0_53 = arith.constant 0 : index
    %268 = vector.load %arg22[%c82, %c0_53] : memref<176x32xf32, #tpu.memory_space<vmem>>, vector<2x32xf32>
    tpu.vector_store %arg22[%c82, %c0_53], %124 {strides = array<i32>} : memref<176x32xf32, #tpu.memory_space<vmem>>, vector<2x32xf32>,
    %c84 = arith.constant 84 : index
    %c0_54 = arith.constant 0 : index
    %269 = vector.load %arg22[%c84, %c0_54] : memref<176x32xf32, #tpu.memory_space<vmem>>, vector<2x32xf32>
    tpu.vector_store %arg22[%c84, %c0_54], %127 {strides = array<i32>} : memref<176x32xf32, #tpu.memory_space<vmem>>, vector<2x32xf32>,
    %c86 = arith.constant 86 : index
    %c0_55 = arith.constant 0 : index
    %270 = vector.load %arg22[%c86, %c0_55] : memref<176x32xf32, #tpu.memory_space<vmem>>, vector<2x32xf32>
    tpu.vector_store %arg22[%c86, %c0_55], %130 {strides = array<i32>} : memref<176x32xf32, #tpu.memory_space<vmem>>, vector<2x32xf32>,
    %c88 = arith.constant 88 : index
    %c0_56 = arith.constant 0 : index
    %271 = vector.load %arg22[%c88, %c0_56] : memref<176x32xf32, #tpu.memory_space<vmem>>, vector<2x32xf32>
    tpu.vector_store %arg22[%c88, %c0_56], %136 {strides = array<i32>} : memref<176x32xf32, #tpu.memory_space<vmem>>, vector<2x32xf32>,
    %c90 = arith.constant 90 : index
    %c0_57 = arith.constant 0 : index
    %272 = vector.load %arg22[%c90, %c0_57] : memref<176x32xf32, #tpu.memory_space<vmem>>, vector<2x32xf32>
    tpu.vector_store %arg22[%c90, %c0_57], %139 {strides = array<i32>} : memref<176x32xf32, #tpu.memory_space<vmem>>, vector<2x32xf32>,
    %c92 = arith.constant 92 : index
    %c0_58 = arith.constant 0 : index
    %273 = vector.load %arg22[%c92, %c0_58] : memref<176x32xf32, #tpu.memory_space<vmem>>, vector<2x32xf32>
    tpu.vector_store %arg22[%c92, %c0_58], %142 {strides = array<i32>} : memref<176x32xf32, #tpu.memory_space<vmem>>, vector<2x32xf32>,
    %c94 = arith.constant 94 : index
    %c0_59 = arith.constant 0 : index
    %274 = vector.load %arg22[%c94, %c0_59] : memref<176x32xf32, #tpu.memory_space<vmem>>, vector<2x32xf32>
    tpu.vector_store %arg22[%c94, %c0_59], %145 {strides = array<i32>} : memref<176x32xf32, #tpu.memory_space<vmem>>, vector<2x32xf32>,
    %c96 = arith.constant 96 : index
    %c0_60 = arith.constant 0 : index
    %275 = vector.load %arg22[%c96, %c0_60] : memref<176x32xf32, #tpu.memory_space<vmem>>, vector<2x32xf32>
    tpu.vector_store %arg22[%c96, %c0_60], %148 {strides = array<i32>} : memref<176x32xf32, #tpu.memory_space<vmem>>, vector<2x32xf32>,
    %c98 = arith.constant 98 : index
    %c0_61 = arith.constant 0 : index
    %276 = vector.load %arg22[%c98, %c0_61] : memref<176x32xf32, #tpu.memory_space<vmem>>, vector<2x32xf32>
    tpu.vector_store %arg22[%c98, %c0_61], %151 {strides = array<i32>} : memref<176x32xf32, #tpu.memory_space<vmem>>, vector<2x32xf32>,
    %c100 = arith.constant 100 : index
    %c0_62 = arith.constant 0 : index
    %277 = vector.load %arg22[%c100, %c0_62] : memref<176x32xf32, #tpu.memory_space<vmem>>, vector<2x32xf32>
    tpu.vector_store %arg22[%c100, %c0_62], %154 {strides = array<i32>} : memref<176x32xf32, #tpu.memory_space<vmem>>, vector<2x32xf32>,
    %c102 = arith.constant 102 : index
    %c0_63 = arith.constant 0 : index
    %278 = vector.load %arg22[%c102, %c0_63] : memref<176x32xf32, #tpu.memory_space<vmem>>, vector<2x32xf32>
    tpu.vector_store %arg22[%c102, %c0_63], %157 {strides = array<i32>} : memref<176x32xf32, #tpu.memory_space<vmem>>, vector<2x32xf32>,
    %c104 = arith.constant 104 : index
    %c0_64 = arith.constant 0 : index
    %279 = vector.load %arg22[%c104, %c0_64] : memref<176x32xf32, #tpu.memory_space<vmem>>, vector<2x32xf32>
    tpu.vector_store %arg22[%c104, %c0_64], %163 {strides = array<i32>} : memref<176x32xf32, #tpu.memory_space<vmem>>, vector<2x32xf32>,
    %c106 = arith.constant 106 : index
    %c0_65 = arith.constant 0 : index
    %280 = vector.load %arg22[%c106, %c0_65] : memref<176x32xf32, #tpu.memory_space<vmem>>, vector<2x32xf32>
    tpu.vector_store %arg22[%c106, %c0_65], %166 {strides = array<i32>} : memref<176x32xf32, #tpu.memory_space<vmem>>, vector<2x32xf32>,
    %c108 = arith.constant 108 : index
    %c0_66 = arith.constant 0 : index
    %281 = vector.load %arg22[%c108, %c0_66] : memref<176x32xf32, #tpu.memory_space<vmem>>, vector<2x32xf32>
    tpu.vector_store %arg22[%c108, %c0_66], %169 {strides = array<i32>} : memref<176x32xf32, #tpu.memory_space<vmem>>, vector<2x32xf32>,
    %c110 = arith.constant 110 : index
    %c0_67 = arith.constant 0 : index
    %282 = vector.load %arg22[%c110, %c0_67] : memref<176x32xf32, #tpu.memory_space<vmem>>, vector<2x32xf32>
    tpu.vector_store %arg22[%c110, %c0_67], %172 {strides = array<i32>} : memref<176x32xf32, #tpu.memory_space<vmem>>, vector<2x32xf32>,
    %c112 = arith.constant 112 : index
    %c0_68 = arith.constant 0 : index
    %283 = vector.load %arg22[%c112, %c0_68] : memref<176x32xf32, #tpu.memory_space<vmem>>, vector<2x32xf32>
    tpu.vector_store %arg22[%c112, %c0_68], %175 {strides = array<i32>} : memref<176x32xf32, #tpu.memory_space<vmem>>, vector<2x32xf32>,
    %c114 = arith.constant 114 : index
    %c0_69 = arith.constant 0 : index
    %284 = vector.load %arg22[%c114, %c0_69] : memref<176x32xf32, #tpu.memory_space<vmem>>, vector<2x32xf32>
    tpu.vector_store %arg22[%c114, %c0_69], %178 {strides = array<i32>} : memref<176x32xf32, #tpu.memory_space<vmem>>, vector<2x32xf32>,
    %c116 = arith.constant 116 : index
    %c0_70 = arith.constant 0 : index
    %285 = vector.load %arg22[%c116, %c0_70] : memref<176x32xf32, #tpu.memory_space<vmem>>, vector<2x32xf32>
    tpu.vector_store %arg22[%c116, %c0_70], %181 {strides = array<i32>} : memref<176x32xf32, #tpu.memory_space<vmem>>, vector<2x32xf32>,
    %c118 = arith.constant 118 : index
    %c0_71 = arith.constant 0 : index
    %286 = vector.load %arg22[%c118, %c0_71] : memref<176x32xf32, #tpu.memory_space<vmem>>, vector<2x32xf32>
    tpu.vector_store %arg22[%c118, %c0_71], %184 {strides = array<i32>} : memref<176x32xf32, #tpu.memory_space<vmem>>, vector<2x32xf32>,
    %c120 = arith.constant 120 : index
    %c0_72 = arith.constant 0 : index
    %287 = vector.load %arg22[%c120, %c0_72] : memref<176x32xf32, #tpu.memory_space<vmem>>, vector<2x32xf32>
    tpu.vector_store %arg22[%c120, %c0_72], %190 {strides = array<i32>} : memref<176x32xf32, #tpu.memory_space<vmem>>, vector<2x32xf32>,
    %c122 = arith.constant 122 : index
    %c0_73 = arith.constant 0 : index
    %288 = vector.load %arg22[%c122, %c0_73] : memref<176x32xf32, #tpu.memory_space<vmem>>, vector<2x32xf32>
    tpu.vector_store %arg22[%c122, %c0_73], %193 {strides = array<i32>} : memref<176x32xf32, #tpu.memory_space<vmem>>, vector<2x32xf32>,
    %c124 = arith.constant 124 : index
    %c0_74 = arith.constant 0 : index
    %289 = vector.load %arg22[%c124, %c0_74] : memref<176x32xf32, #tpu.memory_space<vmem>>, vector<2x32xf32>
    tpu.vector_store %arg22[%c124, %c0_74], %196 {strides = array<i32>} : memref<176x32xf32, #tpu.memory_space<vmem>>, vector<2x32xf32>,
    %c126 = arith.constant 126 : index
    %c0_75 = arith.constant 0 : index
    %290 = vector.load %arg22[%c126, %c0_75] : memref<176x32xf32, #tpu.memory_space<vmem>>, vector<2x32xf32>
    tpu.vector_store %arg22[%c126, %c0_75], %199 {strides = array<i32>} : memref<176x32xf32, #tpu.memory_space<vmem>>, vector<2x32xf32>,
    %c128 = arith.constant 128 : index
    %c0_76 = arith.constant 0 : index
    %291 = vector.load %arg22[%c128, %c0_76] : memref<176x32xf32, #tpu.memory_space<vmem>>, vector<2x32xf32>
    tpu.vector_store %arg22[%c128, %c0_76], %202 {strides = array<i32>} : memref<176x32xf32, #tpu.memory_space<vmem>>, vector<2x32xf32>,
    %c130 = arith.constant 130 : index
    %c0_77 = arith.constant 0 : index
    %292 = vector.load %arg22[%c130, %c0_77] : memref<176x32xf32, #tpu.memory_space<vmem>>, vector<2x32xf32>
    tpu.vector_store %arg22[%c130, %c0_77], %205 {strides = array<i32>} : memref<176x32xf32, #tpu.memory_space<vmem>>, vector<2x32xf32>,
    %c132 = arith.constant 132 : index
    %c0_78 = arith.constant 0 : index
    %293 = vector.load %arg22[%c132, %c0_78] : memref<176x32xf32, #tpu.memory_space<vmem>>, vector<2x32xf32>
    tpu.vector_store %arg22[%c132, %c0_78], %208 {strides = array<i32>} : memref<176x32xf32, #tpu.memory_space<vmem>>, vector<2x32xf32>,
    %c134 = arith.constant 134 : index
    %c0_79 = arith.constant 0 : index
    %294 = vector.load %arg22[%c134, %c0_79] : memref<176x32xf32, #tpu.memory_space<vmem>>, vector<2x32xf32>
    tpu.vector_store %arg22[%c134, %c0_79], %211 {strides = array<i32>} : memref<176x32xf32, #tpu.memory_space<vmem>>, vector<2x32xf32>,
    %c136 = arith.constant 136 : index
    %c0_80 = arith.constant 0 : index
    %295 = vector.load %arg22[%c136, %c0_80] : memref<176x32xf32, #tpu.memory_space<vmem>>, vector<2x32xf32>
    tpu.vector_store %arg22[%c136, %c0_80], %217 {strides = array<i32>} : memref<176x32xf32, #tpu.memory_space<vmem>>, vector<2x32xf32>,
    %c138 = arith.constant 138 : index
    %c0_81 = arith.constant 0 : index
    %296 = vector.load %arg22[%c138, %c0_81] : memref<176x32xf32, #tpu.memory_space<vmem>>, vector<2x32xf32>
    tpu.vector_store %arg22[%c138, %c0_81], %220 {strides = array<i32>} : memref<176x32xf32, #tpu.memory_space<vmem>>, vector<2x32xf32>,
    %c140 = arith.constant 140 : index
    %c0_82 = arith.constant 0 : index
    %297 = vector.load %arg22[%c140, %c0_82] : memref<176x32xf32, #tpu.memory_space<vmem>>, vector<2x32xf32>
    tpu.vector_store %arg22[%c140, %c0_82], %223 {strides = array<i32>} : memref<176x32xf32, #tpu.memory_space<vmem>>, vector<2x32xf32>,
    %c142 = arith.constant 142 : index
    %c0_83 = arith.constant 0 : index
    %298 = vector.load %arg22[%c142, %c0_83] : memref<176x32xf32, #tpu.memory_space<vmem>>, vector<2x32xf32>
    tpu.vector_store %arg22[%c142, %c0_83], %226 {strides = array<i32>} : memref<176x32xf32, #tpu.memory_space<vmem>>, vector<2x32xf32>,
    %c144 = arith.constant 144 : index
    %c0_84 = arith.constant 0 : index
    %299 = vector.load %arg22[%c144, %c0_84] : memref<176x32xf32, #tpu.memory_space<vmem>>, vector<2x32xf32>
    tpu.vector_store %arg22[%c144, %c0_84], %229 {strides = array<i32>} : memref<176x32xf32, #tpu.memory_space<vmem>>, vector<2x32xf32>,
    %c146 = arith.constant 146 : index
    %c0_85 = arith.constant 0 : index
    %300 = vector.load %arg22[%c146, %c0_85] : memref<176x32xf32, #tpu.memory_space<vmem>>, vector<2x32xf32>
    tpu.vector_store %arg22[%c146, %c0_85], %232 {strides = array<i32>} : memref<176x32xf32, #tpu.memory_space<vmem>>, vector<2x32xf32>,
    %c148 = arith.constant 148 : index
    %c0_86 = arith.constant 0 : index
    %301 = vector.load %arg22[%c148, %c0_86] : memref<176x32xf32, #tpu.memory_space<vmem>>, vector<2x32xf32>
    tpu.vector_store %arg22[%c148, %c0_86], %235 {strides = array<i32>} : memref<176x32xf32, #tpu.memory_space<vmem>>, vector<2x32xf32>,
    %c150 = arith.constant 150 : index
    %c0_87 = arith.constant 0 : index
    %302 = vector.load %arg22[%c150, %c0_87] : memref<176x32xf32, #tpu.memory_space<vmem>>, vector<2x32xf32>
    tpu.vector_store %arg22[%c150, %c0_87], %238 {strides = array<i32>} : memref<176x32xf32, #tpu.memory_space<vmem>>, vector<2x32xf32>,
    %c0_88 = arith.constant 0 : index
    %c0_89 = arith.constant 0 : index
    %303 = vector.load %arg5[%c0_88, %c0_89] : memref<128x1xf32, #tpu.memory_space<vmem>>, vector<128x1xf32>
    %cst_90 = arith.constant 0.000000e+00 : f32
    %304 = vector.broadcast %cst_90 : f32 to vector<128x64xf32>
    %c6 = arith.constant 6 : index
    %c0_91 = arith.constant 0 : index
    %305 = vector.load %arg22[%c6, %c0_91] : memref<176x32xf32, #tpu.memory_space<vmem>>, vector<128x32xf32>
    %cst_92 = arith.constant 1.000000e+00 : f32
    %306 = vector.broadcast %cst_92 : f32 to vector<128x1xf32>
    %307 = arith.cmpf oge, %303, %306 : vector<128x1xf32>
    %cst_93 = arith.constant 0.000000e+00 : f32
    %308 = vector.shape_cast %307 : vector<128x1xi1> to vector<128x1xi1>
    %309 = vector.broadcast %308 : vector<128x1xi1> to vector<128x32xi1>
    %310 = vector.broadcast %cst_93 : f32 to vector<128x32xf32>
    %311 = arith.select %309, %305, %310 : vector<128x32xi1>, vector<128x32xf32>
    %312 = arith.truncf %311 : vector<128x32xf32> to vector<128x32xbf16>
    %c0_94 = arith.constant 0 : index
    %c0_95 = arith.constant 0 : index
    %313 = vector.load %arg6[%c0_94, %c0_95] : memref<288x64xbf16, #tpu.memory_space<vmem>>, vector<32x64xbf16>
    %cst_96 = arith.constant dense<0.000000e+00> : vector<128x64xf32>
    %314 = tpu.matmul %312, %313, %cst_96 {dimension_numbers = #tpu.dot_dimension_numbers<[1], [0], [0], [1], [0, 0, 1, 1], [], []>} : vector<128x32xbf16>, vector<32x64xbf16>, vector<128x64xf32> -> vector<128x64xf32>
    %315 = arith.addf %304, %314 : vector<128x64xf32>
    %c22 = arith.constant 22 : index
    %c0_97 = arith.constant 0 : index
    %316 = vector.load %arg22[%c22, %c0_97] : memref<176x32xf32, #tpu.memory_space<vmem>>, vector<128x32xf32>
    %cst_98 = arith.constant 1.000000e+00 : f32
    %317 = vector.broadcast %cst_98 : f32 to vector<128x1xf32>
    %318 = arith.cmpf oge, %303, %317 : vector<128x1xf32>
    %cst_99 = arith.constant 0.000000e+00 : f32
    %319 = vector.shape_cast %318 : vector<128x1xi1> to vector<128x1xi1>
    %320 = vector.broadcast %319 : vector<128x1xi1> to vector<128x32xi1>
    %321 = vector.broadcast %cst_99 : f32 to vector<128x32xf32>
    %322 = arith.select %320, %316, %321 : vector<128x32xi1>, vector<128x32xf32>
    %323 = arith.truncf %322 : vector<128x32xf32> to vector<128x32xbf16>
    %c32_100 = arith.constant 32 : index
    %c0_101 = arith.constant 0 : index
    %324 = vector.load %arg6[%c32_100, %c0_101] : memref<288x64xbf16, #tpu.memory_space<vmem>>, vector<32x64xbf16>
    %cst_102 = arith.constant dense<0.000000e+00> : vector<128x64xf32>
    %325 = tpu.matmul %323, %324, %cst_102 {dimension_numbers = #tpu.dot_dimension_numbers<[1], [0], [0], [1], [0, 0, 1, 1], [], []>} : vector<128x32xbf16>, vector<32x64xbf16>, vector<128x64xf32> -> vector<128x64xf32>
    %326 = arith.addf %315, %325 : vector<128x64xf32>
    %c38_103 = arith.constant 38 : index
    %c0_104 = arith.constant 0 : index
    %327 = vector.load %arg22[%c38_103, %c0_104] : memref<176x32xf32, #tpu.memory_space<vmem>>, vector<128x32xf32>
    %cst_105 = arith.constant 1.000000e+00 : f32
    %328 = vector.broadcast %cst_105 : f32 to vector<128x1xf32>
    %329 = arith.cmpf oge, %303, %328 : vector<128x1xf32>
    %cst_106 = arith.constant 0.000000e+00 : f32
    %330 = vector.shape_cast %329 : vector<128x1xi1> to vector<128x1xi1>
    %331 = vector.broadcast %330 : vector<128x1xi1> to vector<128x32xi1>
    %332 = vector.broadcast %cst_106 : f32 to vector<128x32xf32>
    %333 = arith.select %331, %327, %332 : vector<128x32xi1>, vector<128x32xf32>
    %334 = arith.truncf %333 : vector<128x32xf32> to vector<128x32xbf16>
    %c64_107 = arith.constant 64 : index
    %c0_108 = arith.constant 0 : index
    %335 = vector.load %arg6[%c64_107, %c0_108] : memref<288x64xbf16, #tpu.memory_space<vmem>>, vector<32x64xbf16>
    %cst_109 = arith.constant dense<0.000000e+00> : vector<128x64xf32>
    %336 = tpu.matmul %334, %335, %cst_109 {dimension_numbers = #tpu.dot_dimension_numbers<[1], [0], [0], [1], [0, 0, 1, 1], [], []>} : vector<128x32xbf16>, vector<32x64xbf16>, vector<128x64xf32> -> vector<128x64xf32>
    %337 = arith.addf %326, %336 : vector<128x64xf32>
    %c8 = arith.constant 8 : index
    %c0_110 = arith.constant 0 : index
    %338 = vector.load %arg22[%c8, %c0_110] : memref<176x32xf32, #tpu.memory_space<vmem>>, vector<128x32xf32>
    %339 = arith.truncf %338 : vector<128x32xf32> to vector<128x32xbf16>
    %c96_111 = arith.constant 96 : index
    %c0_112 = arith.constant 0 : index
    %340 = vector.load %arg6[%c96_111, %c0_112] : memref<288x64xbf16, #tpu.memory_space<vmem>>, vector<32x64xbf16>
    %cst_113 = arith.constant dense<0.000000e+00> : vector<128x64xf32>
    %341 = tpu.matmul %339, %340, %cst_113 {dimension_numbers = #tpu.dot_dimension_numbers<[1], [0], [0], [1], [0, 0, 1, 1], [], []>} : vector<128x32xbf16>, vector<32x64xbf16>, vector<128x64xf32> -> vector<128x64xf32>
    %342 = arith.addf %337, %341 : vector<128x64xf32>
    %c24_114 = arith.constant 24 : index
    %c0_115 = arith.constant 0 : index
    %343 = vector.load %arg22[%c24_114, %c0_115] : memref<176x32xf32, #tpu.memory_space<vmem>>, vector<128x32xf32>
    %344 = arith.truncf %343 : vector<128x32xf32> to vector<128x32xbf16>
    %c128_116 = arith.constant 128 : index
    %c0_117 = arith.constant 0 : index
    %345 = vector.load %arg6[%c128_116, %c0_117] : memref<288x64xbf16, #tpu.memory_space<vmem>>, vector<32x64xbf16>
    %cst_118 = arith.constant dense<0.000000e+00> : vector<128x64xf32>
    %346 = tpu.matmul %344, %345, %cst_118 {dimension_numbers = #tpu.dot_dimension_numbers<[1], [0], [0], [1], [0, 0, 1, 1], [], []>} : vector<128x32xbf16>, vector<32x64xbf16>, vector<128x64xf32> -> vector<128x64xf32>
    %347 = arith.addf %342, %346 : vector<128x64xf32>
    %c40_119 = arith.constant 40 : index
    %c0_120 = arith.constant 0 : index
    %348 = vector.load %arg22[%c40_119, %c0_120] : memref<176x32xf32, #tpu.memory_space<vmem>>, vector<128x32xf32>
    %349 = arith.truncf %348 : vector<128x32xf32> to vector<128x32xbf16>
    %c160 = arith.constant 160 : index
    %c0_121 = arith.constant 0 : index
    %350 = vector.load %arg6[%c160, %c0_121] : memref<288x64xbf16, #tpu.memory_space<vmem>>, vector<32x64xbf16>
    %cst_122 = arith.constant dense<0.000000e+00> : vector<128x64xf32>
    %351 = tpu.matmul %349, %350, %cst_122 {dimension_numbers = #tpu.dot_dimension_numbers<[1], [0], [0], [1], [0, 0, 1, 1], [], []>} : vector<128x32xbf16>, vector<32x64xbf16>, vector<128x64xf32> -> vector<128x64xf32>
    %352 = arith.addf %347, %351 : vector<128x64xf32>
    %c10 = arith.constant 10 : index
    %c0_123 = arith.constant 0 : index
    %353 = vector.load %arg22[%c10, %c0_123] : memref<176x32xf32, #tpu.memory_space<vmem>>, vector<128x32xf32>
    %cst_124 = arith.constant 6.000000e+00 : f32
    %354 = vector.broadcast %cst_124 : f32 to vector<128x1xf32>
    %355 = arith.cmpf ole, %303, %354 : vector<128x1xf32>
    %cst_125 = arith.constant 0.000000e+00 : f32
    %356 = vector.shape_cast %355 : vector<128x1xi1> to vector<128x1xi1>
    %357 = vector.broadcast %356 : vector<128x1xi1> to vector<128x32xi1>
    %358 = vector.broadcast %cst_125 : f32 to vector<128x32xf32>
    %359 = arith.select %357, %353, %358 : vector<128x32xi1>, vector<128x32xf32>
    %360 = arith.truncf %359 : vector<128x32xf32> to vector<128x32xbf16>
    %c192 = arith.constant 192 : index
    %c0_126 = arith.constant 0 : index
    %361 = vector.load %arg6[%c192, %c0_126] : memref<288x64xbf16, #tpu.memory_space<vmem>>, vector<32x64xbf16>
    %cst_127 = arith.constant dense<0.000000e+00> : vector<128x64xf32>
    %362 = tpu.matmul %360, %361, %cst_127 {dimension_numbers = #tpu.dot_dimension_numbers<[1], [0], [0], [1], [0, 0, 1, 1], [], []>} : vector<128x32xbf16>, vector<32x64xbf16>, vector<128x64xf32> -> vector<128x64xf32>
    %363 = arith.addf %352, %362 : vector<128x64xf32>
    %c26_128 = arith.constant 26 : index
    %c0_129 = arith.constant 0 : index
    %364 = vector.load %arg22[%c26_128, %c0_129] : memref<176x32xf32, #tpu.memory_space<vmem>>, vector<128x32xf32>
    %cst_130 = arith.constant 6.000000e+00 : f32
    %365 = vector.broadcast %cst_130 : f32 to vector<128x1xf32>
    %366 = arith.cmpf ole, %303, %365 : vector<128x1xf32>
    %cst_131 = arith.constant 0.000000e+00 : f32
    %367 = vector.shape_cast %366 : vector<128x1xi1> to vector<128x1xi1>
    %368 = vector.broadcast %367 : vector<128x1xi1> to vector<128x32xi1>
    %369 = vector.broadcast %cst_131 : f32 to vector<128x32xf32>
    %370 = arith.select %368, %364, %369 : vector<128x32xi1>, vector<128x32xf32>
    %371 = arith.truncf %370 : vector<128x32xf32> to vector<128x32xbf16>
    %c224 = arith.constant 224 : index
    %c0_132 = arith.constant 0 : index
    %372 = vector.load %arg6[%c224, %c0_132] : memref<288x64xbf16, #tpu.memory_space<vmem>>, vector<32x64xbf16>
    %cst_133 = arith.constant dense<0.000000e+00> : vector<128x64xf32>
    %373 = tpu.matmul %371, %372, %cst_133 {dimension_numbers = #tpu.dot_dimension_numbers<[1], [0], [0], [1], [0, 0, 1, 1], [], []>} : vector<128x32xbf16>, vector<32x64xbf16>, vector<128x64xf32> -> vector<128x64xf32>
    %374 = arith.addf %363, %373 : vector<128x64xf32>
    %c42_134 = arith.constant 42 : index
    %c0_135 = arith.constant 0 : index
    %375 = vector.load %arg22[%c42_134, %c0_135] : memref<176x32xf32, #tpu.memory_space<vmem>>, vector<128x32xf32>
    %cst_136 = arith.constant 6.000000e+00 : f32
    %376 = vector.broadcast %cst_136 : f32 to vector<128x1xf32>
    %377 = arith.cmpf ole, %303, %376 : vector<128x1xf32>
    %cst_137 = arith.constant 0.000000e+00 : f32
    %378 = vector.shape_cast %377 : vector<128x1xi1> to vector<128x1xi1>
    %379 = vector.broadcast %378 : vector<128x1xi1> to vector<128x32xi1>
    %380 = vector.broadcast %cst_137 : f32 to vector<128x32xf32>
    %381 = arith.select %379, %375, %380 : vector<128x32xi1>, vector<128x32xf32>
    %382 = arith.truncf %381 : vector<128x32xf32> to vector<128x32xbf16>
    %c256 = arith.constant 256 : index
    %c0_138 = arith.constant 0 : index
    %383 = vector.load %arg6[%c256, %c0_138] : memref<288x64xbf16, #tpu.memory_space<vmem>>, vector<32x64xbf16>
    %cst_139 = arith.constant dense<0.000000e+00> : vector<128x64xf32>
    %384 = tpu.matmul %382, %383, %cst_139 {dimension_numbers = #tpu.dot_dimension_numbers<[1], [0], [0], [1], [0, 0, 1, 1], [], []>} : vector<128x32xbf16>, vector<32x64xbf16>, vector<128x64xf32> -> vector<128x64xf32>
    %385 = arith.addf %374, %384 : vector<128x64xf32>
    %c0_140 = arith.constant 0 : index
    %c0_141 = arith.constant 0 : index
    %386 = vector.load %arg7[%c0_140, %c0_141] : memref<1x64xf32, #tpu.memory_space<vmem>>, vector<1x64xf32>
    %387 = vector.broadcast %386 : vector<1x64xf32> to vector<128x64xf32>
    %388 = arith.mulf %385, %387 : vector<128x64xf32>
    %c0_142 = arith.constant 0 : index
    %c0_143 = arith.constant 0 : index
    %389 = vector.load %arg8[%c0_142, %c0_143] : memref<1x64xf32, #tpu.memory_space<vmem>>, vector<1x64xf32>
    %390 = vector.broadcast %389 : vector<1x64xf32> to vector<128x64xf32>
    %391 = arith.addf %388, %390 : vector<128x64xf32>
    %cst_144 = arith.constant 0.000000e+00 : f32
    %392 = vector.broadcast %cst_144 : f32 to vector<128x64xf32>
    %393 = arith.maximumf %391, %392 : vector<128x64xf32>
    %394 = vector.extract_strided_slice %393 {offsets = [0, 0], sizes = [16, 64], strides = [1, 1]} : vector<128x64xf32> to vector<16x64xf32>
    %395 = vector.extract_strided_slice %393 {offsets = [16, 0], sizes = [16, 64], strides = [1, 1]} : vector<128x64xf32> to vector<16x64xf32>
    %396 = arith.maximumf %394, %395 : vector<16x64xf32>
    %397 = vector.extract_strided_slice %396 {offsets = [0, 0], sizes = [2, 64], strides = [1, 1]} : vector<16x64xf32> to vector<2x64xf32>
    %398 = vector.extract_strided_slice %396 {offsets = [2, 0], sizes = [2, 64], strides = [1, 1]} : vector<16x64xf32> to vector<2x64xf32>
    %399 = arith.maximumf %397, %398 : vector<2x64xf32>
    %400 = vector.extract_strided_slice %396 {offsets = [4, 0], sizes = [2, 64], strides = [1, 1]} : vector<16x64xf32> to vector<2x64xf32>
    %401 = vector.extract_strided_slice %396 {offsets = [6, 0], sizes = [2, 64], strides = [1, 1]} : vector<16x64xf32> to vector<2x64xf32>
    %402 = arith.maximumf %400, %401 : vector<2x64xf32>
    %403 = vector.extract_strided_slice %396 {offsets = [8, 0], sizes = [2, 64], strides = [1, 1]} : vector<16x64xf32> to vector<2x64xf32>
    %404 = vector.extract_strided_slice %396 {offsets = [10, 0], sizes = [2, 64], strides = [1, 1]} : vector<16x64xf32> to vector<2x64xf32>
    %405 = arith.maximumf %403, %404 : vector<2x64xf32>
    %406 = vector.extract_strided_slice %396 {offsets = [12, 0], sizes = [2, 64], strides = [1, 1]} : vector<16x64xf32> to vector<2x64xf32>
    %407 = vector.extract_strided_slice %396 {offsets = [14, 0], sizes = [2, 64], strides = [1, 1]} : vector<16x64xf32> to vector<2x64xf32>
    %408 = arith.maximumf %406, %407 : vector<2x64xf32>
    %409 = vector.extract_strided_slice %393 {offsets = [32, 0], sizes = [16, 64], strides = [1, 1]} : vector<128x64xf32> to vector<16x64xf32>
    %410 = vector.extract_strided_slice %393 {offsets = [48, 0], sizes = [16, 64], strides = [1, 1]} : vector<128x64xf32> to vector<16x64xf32>
    %411 = arith.maximumf %409, %410 : vector<16x64xf32>
    %412 = vector.extract_strided_slice %411 {offsets = [0, 0], sizes = [2, 64], strides = [1, 1]} : vector<16x64xf32> to vector<2x64xf32>
    %413 = vector.extract_strided_slice %411 {offsets = [2, 0], sizes = [2, 64], strides = [1, 1]} : vector<16x64xf32> to vector<2x64xf32>
    %414 = arith.maximumf %412, %413 : vector<2x64xf32>
    %415 = vector.extract_strided_slice %411 {offsets = [4, 0], sizes = [2, 64], strides = [1, 1]} : vector<16x64xf32> to vector<2x64xf32>
    %416 = vector.extract_strided_slice %411 {offsets = [6, 0], sizes = [2, 64], strides = [1, 1]} : vector<16x64xf32> to vector<2x64xf32>
    %417 = arith.maximumf %415, %416 : vector<2x64xf32>
    %418 = vector.extract_strided_slice %411 {offsets = [8, 0], sizes = [2, 64], strides = [1, 1]} : vector<16x64xf32> to vector<2x64xf32>
    %419 = vector.extract_strided_slice %411 {offsets = [10, 0], sizes = [2, 64], strides = [1, 1]} : vector<16x64xf32> to vector<2x64xf32>
    %420 = arith.maximumf %418, %419 : vector<2x64xf32>
    %421 = vector.extract_strided_slice %411 {offsets = [12, 0], sizes = [2, 64], strides = [1, 1]} : vector<16x64xf32> to vector<2x64xf32>
    %422 = vector.extract_strided_slice %411 {offsets = [14, 0], sizes = [2, 64], strides = [1, 1]} : vector<16x64xf32> to vector<2x64xf32>
    %423 = arith.maximumf %421, %422 : vector<2x64xf32>
    %424 = vector.extract_strided_slice %393 {offsets = [64, 0], sizes = [16, 64], strides = [1, 1]} : vector<128x64xf32> to vector<16x64xf32>
    %425 = vector.extract_strided_slice %393 {offsets = [80, 0], sizes = [16, 64], strides = [1, 1]} : vector<128x64xf32> to vector<16x64xf32>
    %426 = arith.maximumf %424, %425 : vector<16x64xf32>
    %427 = vector.extract_strided_slice %426 {offsets = [0, 0], sizes = [2, 64], strides = [1, 1]} : vector<16x64xf32> to vector<2x64xf32>
    %428 = vector.extract_strided_slice %426 {offsets = [2, 0], sizes = [2, 64], strides = [1, 1]} : vector<16x64xf32> to vector<2x64xf32>
    %429 = arith.maximumf %427, %428 : vector<2x64xf32>
    %430 = vector.extract_strided_slice %426 {offsets = [4, 0], sizes = [2, 64], strides = [1, 1]} : vector<16x64xf32> to vector<2x64xf32>
    %431 = vector.extract_strided_slice %426 {offsets = [6, 0], sizes = [2, 64], strides = [1, 1]} : vector<16x64xf32> to vector<2x64xf32>
    %432 = arith.maximumf %430, %431 : vector<2x64xf32>
    %433 = vector.extract_strided_slice %426 {offsets = [8, 0], sizes = [2, 64], strides = [1, 1]} : vector<16x64xf32> to vector<2x64xf32>
    %434 = vector.extract_strided_slice %426 {offsets = [10, 0], sizes = [2, 64], strides = [1, 1]} : vector<16x64xf32> to vector<2x64xf32>
    %435 = arith.maximumf %433, %434 : vector<2x64xf32>
    %436 = vector.extract_strided_slice %426 {offsets = [12, 0], sizes = [2, 64], strides = [1, 1]} : vector<16x64xf32> to vector<2x64xf32>
    %437 = vector.extract_strided_slice %426 {offsets = [14, 0], sizes = [2, 64], strides = [1, 1]} : vector<16x64xf32> to vector<2x64xf32>
    %438 = arith.maximumf %436, %437 : vector<2x64xf32>
    %439 = vector.extract_strided_slice %393 {offsets = [96, 0], sizes = [16, 64], strides = [1, 1]} : vector<128x64xf32> to vector<16x64xf32>
    %440 = vector.extract_strided_slice %393 {offsets = [112, 0], sizes = [16, 64], strides = [1, 1]} : vector<128x64xf32> to vector<16x64xf32>
    %441 = arith.maximumf %439, %440 : vector<16x64xf32>
    %442 = vector.extract_strided_slice %441 {offsets = [0, 0], sizes = [2, 64], strides = [1, 1]} : vector<16x64xf32> to vector<2x64xf32>
    %443 = vector.extract_strided_slice %441 {offsets = [2, 0], sizes = [2, 64], strides = [1, 1]} : vector<16x64xf32> to vector<2x64xf32>
    %444 = arith.maximumf %442, %443 : vector<2x64xf32>
    %445 = vector.extract_strided_slice %441 {offsets = [4, 0], sizes = [2, 64], strides = [1, 1]} : vector<16x64xf32> to vector<2x64xf32>
    %446 = vector.extract_strided_slice %441 {offsets = [6, 0], sizes = [2, 64], strides = [1, 1]} : vector<16x64xf32> to vector<2x64xf32>
    %447 = arith.maximumf %445, %446 : vector<2x64xf32>
    %448 = vector.extract_strided_slice %441 {offsets = [8, 0], sizes = [2, 64], strides = [1, 1]} : vector<16x64xf32> to vector<2x64xf32>
    %449 = vector.extract_strided_slice %441 {offsets = [10, 0], sizes = [2, 64], strides = [1, 1]} : vector<16x64xf32> to vector<2x64xf32>
    %450 = arith.maximumf %448, %449 : vector<2x64xf32>
    %451 = vector.extract_strided_slice %441 {offsets = [12, 0], sizes = [2, 64], strides = [1, 1]} : vector<16x64xf32> to vector<2x64xf32>
    %452 = vector.extract_strided_slice %441 {offsets = [14, 0], sizes = [2, 64], strides = [1, 1]} : vector<16x64xf32> to vector<2x64xf32>
    %453 = arith.maximumf %451, %452 : vector<2x64xf32>
    %c16_145 = arith.constant 16 : index
    %c0_146 = arith.constant 0 : index
    %454 = vector.load %arg23[%c16_145, %c0_146] : memref<64x64xf32, #tpu.memory_space<vmem>>, vector<2x64xf32>
    tpu.vector_store %arg23[%c16_145, %c0_146], %399 {strides = array<i32>} : memref<64x64xf32, #tpu.memory_space<vmem>>, vector<2x64xf32>,
    %c18 = arith.constant 18 : index
    %c0_147 = arith.constant 0 : index
    %455 = vector.load %arg23[%c18, %c0_147] : memref<64x64xf32, #tpu.memory_space<vmem>>, vector<2x64xf32>
    tpu.vector_store %arg23[%c18, %c0_147], %402 {strides = array<i32>} : memref<64x64xf32, #tpu.memory_space<vmem>>, vector<2x64xf32>,
    %c20 = arith.constant 20 : index
    %c0_148 = arith.constant 0 : index
    %456 = vector.load %arg23[%c20, %c0_148] : memref<64x64xf32, #tpu.memory_space<vmem>>, vector<2x64xf32>
    tpu.vector_store %arg23[%c20, %c0_148], %405 {strides = array<i32>} : memref<64x64xf32, #tpu.memory_space<vmem>>, vector<2x64xf32>,
    %c22_149 = arith.constant 22 : index
    %c0_150 = arith.constant 0 : index
    %457 = vector.load %arg23[%c22_149, %c0_150] : memref<64x64xf32, #tpu.memory_space<vmem>>, vector<2x64xf32>
    tpu.vector_store %arg23[%c22_149, %c0_150], %408 {strides = array<i32>} : memref<64x64xf32, #tpu.memory_space<vmem>>, vector<2x64xf32>,
    %c24_151 = arith.constant 24 : index
    %c0_152 = arith.constant 0 : index
    %458 = vector.load %arg23[%c24_151, %c0_152] : memref<64x64xf32, #tpu.memory_space<vmem>>, vector<2x64xf32>
    tpu.vector_store %arg23[%c24_151, %c0_152], %414 {strides = array<i32>} : memref<64x64xf32, #tpu.memory_space<vmem>>, vector<2x64xf32>,
    %c26_153 = arith.constant 26 : index
    %c0_154 = arith.constant 0 : index
    %459 = vector.load %arg23[%c26_153, %c0_154] : memref<64x64xf32, #tpu.memory_space<vmem>>, vector<2x64xf32>
    tpu.vector_store %arg23[%c26_153, %c0_154], %417 {strides = array<i32>} : memref<64x64xf32, #tpu.memory_space<vmem>>, vector<2x64xf32>,
    %c28_155 = arith.constant 28 : index
    %c0_156 = arith.constant 0 : index
    %460 = vector.load %arg23[%c28_155, %c0_156] : memref<64x64xf32, #tpu.memory_space<vmem>>, vector<2x64xf32>
    tpu.vector_store %arg23[%c28_155, %c0_156], %420 {strides = array<i32>} : memref<64x64xf32, #tpu.memory_space<vmem>>, vector<2x64xf32>,
    %c30_157 = arith.constant 30 : index
    %c0_158 = arith.constant 0 : index
    %461 = vector.load %arg23[%c30_157, %c0_158] : memref<64x64xf32, #tpu.memory_space<vmem>>, vector<2x64xf32>
    tpu.vector_store %arg23[%c30_157, %c0_158], %423 {strides = array<i32>} : memref<64x64xf32, #tpu.memory_space<vmem>>, vector<2x64xf32>,
    %c32_159 = arith.constant 32 : index
    %c0_160 = arith.constant 0 : index
    %462 = vector.load %arg23[%c32_159, %c0_160] : memref<64x64xf32, #tpu.memory_space<vmem>>, vector<2x64xf32>
    tpu.vector_store %arg23[%c32_159, %c0_160], %429 {strides = array<i32>} : memref<64x64xf32, #tpu.memory_space<vmem>>, vector<2x64xf32>,
    %c34_161 = arith.constant 34 : index
    %c0_162 = arith.constant 0 : index
    %463 = vector.load %arg23[%c34_161, %c0_162] : memref<64x64xf32, #tpu.memory_space<vmem>>, vector<2x64xf32>
    tpu.vector_store %arg23[%c34_161, %c0_162], %432 {strides = array<i32>} : memref<64x64xf32, #tpu.memory_space<vmem>>, vector<2x64xf32>,
    %c36_163 = arith.constant 36 : index
    %c0_164 = arith.constant 0 : index
    %464 = vector.load %arg23[%c36_163, %c0_164] : memref<64x64xf32, #tpu.memory_space<vmem>>, vector<2x64xf32>
    tpu.vector_store %arg23[%c36_163, %c0_164], %435 {strides = array<i32>} : memref<64x64xf32, #tpu.memory_space<vmem>>, vector<2x64xf32>,
    %c38_165 = arith.constant 38 : index
    %c0_166 = arith.constant 0 : index
    %465 = vector.load %arg23[%c38_165, %c0_166] : memref<64x64xf32, #tpu.memory_space<vmem>>, vector<2x64xf32>
    tpu.vector_store %arg23[%c38_165, %c0_166], %438 {strides = array<i32>} : memref<64x64xf32, #tpu.memory_space<vmem>>, vector<2x64xf32>,
    %c40_167 = arith.constant 40 : index
    %c0_168 = arith.constant 0 : index
    %466 = vector.load %arg23[%c40_167, %c0_168] : memref<64x64xf32, #tpu.memory_space<vmem>>, vector<2x64xf32>
    tpu.vector_store %arg23[%c40_167, %c0_168], %444 {strides = array<i32>} : memref<64x64xf32, #tpu.memory_space<vmem>>, vector<2x64xf32>,
    %c42_169 = arith.constant 42 : index
    %c0_170 = arith.constant 0 : index
    %467 = vector.load %arg23[%c42_169, %c0_170] : memref<64x64xf32, #tpu.memory_space<vmem>>, vector<2x64xf32>
    tpu.vector_store %arg23[%c42_169, %c0_170], %447 {strides = array<i32>} : memref<64x64xf32, #tpu.memory_space<vmem>>, vector<2x64xf32>,
    %c44_171 = arith.constant 44 : index
    %c0_172 = arith.constant 0 : index
    %468 = vector.load %arg23[%c44_171, %c0_172] : memref<64x64xf32, #tpu.memory_space<vmem>>, vector<2x64xf32>
    tpu.vector_store %arg23[%c44_171, %c0_172], %450 {strides = array<i32>} : memref<64x64xf32, #tpu.memory_space<vmem>>, vector<2x64xf32>,
    %c46_173 = arith.constant 46 : index
    %c0_174 = arith.constant 0 : index
    %469 = vector.load %arg23[%c46_173, %c0_174] : memref<64x64xf32, #tpu.memory_space<vmem>>, vector<2x64xf32>
    tpu.vector_store %arg23[%c46_173, %c0_174], %453 {strides = array<i32>} : memref<64x64xf32, #tpu.memory_space<vmem>>, vector<2x64xf32>,
    %c0_175 = arith.constant 0 : index
    %c0_176 = arith.constant 0 : index
    %470 = vector.load %arg9[%c0_175, %c0_176] : memref<32x1xf32, #tpu.memory_space<vmem>>, vector<32x1xf32>
    %cst_177 = arith.constant 0.000000e+00 : f32
    %471 = vector.broadcast %cst_177 : f32 to vector<32x128xf32>
    %c6_178 = arith.constant 6 : index
    %c0_179 = arith.constant 0 : index
    %472 = vector.load %arg23[%c6_178, %c0_179] : memref<64x64xf32, #tpu.memory_space<vmem>>, vector<32x64xf32>
    %cst_180 = arith.constant 1.000000e+00 : f32
    %473 = vector.broadcast %cst_180 : f32 to vector<32x1xf32>
    %474 = arith.cmpf oge, %470, %473 : vector<32x1xf32>
    %cst_181 = arith.constant 0.000000e+00 : f32
    %475 = vector.shape_cast %474 : vector<32x1xi1> to vector<32x1xi1>
    %476 = vector.broadcast %475 : vector<32x1xi1> to vector<32x64xi1>
    %477 = vector.broadcast %cst_181 : f32 to vector<32x64xf32>
    %478 = arith.select %476, %472, %477 : vector<32x64xi1>, vector<32x64xf32>
    %479 = arith.truncf %478 : vector<32x64xf32> to vector<32x64xbf16>
    %c0_182 = arith.constant 0 : index
    %c0_183 = arith.constant 0 : index
    %480 = vector.load %arg10[%c0_182, %c0_183] : memref<576x128xbf16, #tpu.memory_space<vmem>>, vector<64x128xbf16>
    %cst_184 = arith.constant dense<0.000000e+00> : vector<32x128xf32>
    %481 = tpu.matmul %479, %480, %cst_184 {dimension_numbers = #tpu.dot_dimension_numbers<[1], [0], [0], [1], [0, 0, 1, 1], [], []>} : vector<32x64xbf16>, vector<64x128xbf16>, vector<32x128xf32> -> vector<32x128xf32>
    %482 = arith.addf %471, %481 : vector<32x128xf32>
    %c14 = arith.constant 14 : index
    %c0_185 = arith.constant 0 : index
    %483 = vector.load %arg23[%c14, %c0_185] : memref<64x64xf32, #tpu.memory_space<vmem>>, vector<32x64xf32>
    %cst_186 = arith.constant 1.000000e+00 : f32
    %484 = vector.broadcast %cst_186 : f32 to vector<32x1xf32>
    %485 = arith.cmpf oge, %470, %484 : vector<32x1xf32>
    %cst_187 = arith.constant 0.000000e+00 : f32
    %486 = vector.shape_cast %485 : vector<32x1xi1> to vector<32x1xi1>
    %487 = vector.broadcast %486 : vector<32x1xi1> to vector<32x64xi1>
    %488 = vector.broadcast %cst_187 : f32 to vector<32x64xf32>
    %489 = arith.select %487, %483, %488 : vector<32x64xi1>, vector<32x64xf32>
    %490 = arith.truncf %489 : vector<32x64xf32> to vector<32x64xbf16>
    %c64_188 = arith.constant 64 : index
    %c0_189 = arith.constant 0 : index
    %491 = vector.load %arg10[%c64_188, %c0_189] : memref<576x128xbf16, #tpu.memory_space<vmem>>, vector<64x128xbf16>
    %cst_190 = arith.constant dense<0.000000e+00> : vector<32x128xf32>
    %492 = tpu.matmul %490, %491, %cst_190 {dimension_numbers = #tpu.dot_dimension_numbers<[1], [0], [0], [1], [0, 0, 1, 1], [], []>} : vector<32x64xbf16>, vector<64x128xbf16>, vector<32x128xf32> -> vector<32x128xf32>
    %493 = arith.addf %482, %492 : vector<32x128xf32>
    %c22_191 = arith.constant 22 : index
    %c0_192 = arith.constant 0 : index
    %494 = vector.load %arg23[%c22_191, %c0_192] : memref<64x64xf32, #tpu.memory_space<vmem>>, vector<32x64xf32>
    %cst_193 = arith.constant 1.000000e+00 : f32
    %495 = vector.broadcast %cst_193 : f32 to vector<32x1xf32>
    %496 = arith.cmpf oge, %470, %495 : vector<32x1xf32>
    %cst_194 = arith.constant 0.000000e+00 : f32
    %497 = vector.shape_cast %496 : vector<32x1xi1> to vector<32x1xi1>
    %498 = vector.broadcast %497 : vector<32x1xi1> to vector<32x64xi1>
    %499 = vector.broadcast %cst_194 : f32 to vector<32x64xf32>
    %500 = arith.select %498, %494, %499 : vector<32x64xi1>, vector<32x64xf32>
    %501 = arith.truncf %500 : vector<32x64xf32> to vector<32x64xbf16>
    %c128_195 = arith.constant 128 : index
    %c0_196 = arith.constant 0 : index
    %502 = vector.load %arg10[%c128_195, %c0_196] : memref<576x128xbf16, #tpu.memory_space<vmem>>, vector<64x128xbf16>
    %cst_197 = arith.constant dense<0.000000e+00> : vector<32x128xf32>
    %503 = tpu.matmul %501, %502, %cst_197 {dimension_numbers = #tpu.dot_dimension_numbers<[1], [0], [0], [1], [0, 0, 1, 1], [], []>} : vector<32x64xbf16>, vector<64x128xbf16>, vector<32x128xf32> -> vector<32x128xf32>
    %504 = arith.addf %493, %503 : vector<32x128xf32>
    %c8_198 = arith.constant 8 : index
    %c0_199 = arith.constant 0 : index
    %505 = vector.load %arg23[%c8_198, %c0_199] : memref<64x64xf32, #tpu.memory_space<vmem>>, vector<32x64xf32>
    %506 = arith.truncf %505 : vector<32x64xf32> to vector<32x64xbf16>
    %c192_200 = arith.constant 192 : index
    %c0_201 = arith.constant 0 : index
    %507 = vector.load %arg10[%c192_200, %c0_201] : memref<576x128xbf16, #tpu.memory_space<vmem>>, vector<64x128xbf16>
    %cst_202 = arith.constant dense<0.000000e+00> : vector<32x128xf32>
    %508 = tpu.matmul %506, %507, %cst_202 {dimension_numbers = #tpu.dot_dimension_numbers<[1], [0], [0], [1], [0, 0, 1, 1], [], []>} : vector<32x64xbf16>, vector<64x128xbf16>, vector<32x128xf32> -> vector<32x128xf32>
    %509 = arith.addf %504, %508 : vector<32x128xf32>
    %c16_203 = arith.constant 16 : index
    %c0_204 = arith.constant 0 : index
    %510 = vector.load %arg23[%c16_203, %c0_204] : memref<64x64xf32, #tpu.memory_space<vmem>>, vector<32x64xf32>
    %511 = arith.truncf %510 : vector<32x64xf32> to vector<32x64xbf16>
    %c256_205 = arith.constant 256 : index
    %c0_206 = arith.constant 0 : index
    %512 = vector.load %arg10[%c256_205, %c0_206] : memref<576x128xbf16, #tpu.memory_space<vmem>>, vector<64x128xbf16>
    %cst_207 = arith.constant dense<0.000000e+00> : vector<32x128xf32>
    %513 = tpu.matmul %511, %512, %cst_207 {dimension_numbers = #tpu.dot_dimension_numbers<[1], [0], [0], [1], [0, 0, 1, 1], [], []>} : vector<32x64xbf16>, vector<64x128xbf16>, vector<32x128xf32> -> vector<32x128xf32>
    %514 = arith.addf %509, %513 : vector<32x128xf32>
    %c24_208 = arith.constant 24 : index
    %c0_209 = arith.constant 0 : index
    %515 = vector.load %arg23[%c24_208, %c0_209] : memref<64x64xf32, #tpu.memory_space<vmem>>, vector<32x64xf32>
    %516 = arith.truncf %515 : vector<32x64xf32> to vector<32x64xbf16>
    %c320 = arith.constant 320 : index
    %c0_210 = arith.constant 0 : index
    %517 = vector.load %arg10[%c320, %c0_210] : memref<576x128xbf16, #tpu.memory_space<vmem>>, vector<64x128xbf16>
    %cst_211 = arith.constant dense<0.000000e+00> : vector<32x128xf32>
    %518 = tpu.matmul %516, %517, %cst_211 {dimension_numbers = #tpu.dot_dimension_numbers<[1], [0], [0], [1], [0, 0, 1, 1], [], []>} : vector<32x64xbf16>, vector<64x128xbf16>, vector<32x128xf32> -> vector<32x128xf32>
    %519 = arith.addf %514, %518 : vector<32x128xf32>
    %c10_212 = arith.constant 10 : index
    %c0_213 = arith.constant 0 : index
    %520 = vector.load %arg23[%c10_212, %c0_213] : memref<64x64xf32, #tpu.memory_space<vmem>>, vector<32x64xf32>
    %cst_214 = arith.constant 2.000000e+00 : f32
    %521 = vector.broadcast %cst_214 : f32 to vector<32x1xf32>
    %522 = arith.cmpf ole, %470, %521 : vector<32x1xf32>
    %cst_215 = arith.constant 0.000000e+00 : f32
    %523 = vector.shape_cast %522 : vector<32x1xi1> to vector<32x1xi1>
    %524 = vector.broadcast %523 : vector<32x1xi1> to vector<32x64xi1>
    %525 = vector.broadcast %cst_215 : f32 to vector<32x64xf32>
    %526 = arith.select %524, %520, %525 : vector<32x64xi1>, vector<32x64xf32>
    %527 = arith.truncf %526 : vector<32x64xf32> to vector<32x64xbf16>
    %c384 = arith.constant 384 : index
    %c0_216 = arith.constant 0 : index
    %528 = vector.load %arg10[%c384, %c0_216] : memref<576x128xbf16, #tpu.memory_space<vmem>>, vector<64x128xbf16>
    %cst_217 = arith.constant dense<0.000000e+00> : vector<32x128xf32>
    %529 = tpu.matmul %527, %528, %cst_217 {dimension_numbers = #tpu.dot_dimension_numbers<[1], [0], [0], [1], [0, 0, 1, 1], [], []>} : vector<32x64xbf16>, vector<64x128xbf16>, vector<32x128xf32> -> vector<32x128xf32>
    %530 = arith.addf %519, %529 : vector<32x128xf32>
    %c18_218 = arith.constant 18 : index
    %c0_219 = arith.constant 0 : index
    %531 = vector.load %arg23[%c18_218, %c0_219] : memref<64x64xf32, #tpu.memory_space<vmem>>, vector<32x64xf32>
    %cst_220 = arith.constant 2.000000e+00 : f32
    %532 = vector.broadcast %cst_220 : f32 to vector<32x1xf32>
    %533 = arith.cmpf ole, %470, %532 : vector<32x1xf32>
    %cst_221 = arith.constant 0.000000e+00 : f32
    %534 = vector.shape_cast %533 : vector<32x1xi1> to vector<32x1xi1>
    %535 = vector.broadcast %534 : vector<32x1xi1> to vector<32x64xi1>
    %536 = vector.broadcast %cst_221 : f32 to vector<32x64xf32>
    %537 = arith.select %535, %531, %536 : vector<32x64xi1>, vector<32x64xf32>
    %538 = arith.truncf %537 : vector<32x64xf32> to vector<32x64xbf16>
    %c448 = arith.constant 448 : index
    %c0_222 = arith.constant 0 : index
    %539 = vector.load %arg10[%c448, %c0_222] : memref<576x128xbf16, #tpu.memory_space<vmem>>, vector<64x128xbf16>
    %cst_223 = arith.constant dense<0.000000e+00> : vector<32x128xf32>
    %540 = tpu.matmul %538, %539, %cst_223 {dimension_numbers = #tpu.dot_dimension_numbers<[1], [0], [0], [1], [0, 0, 1, 1], [], []>} : vector<32x64xbf16>, vector<64x128xbf16>, vector<32x128xf32> -> vector<32x128xf32>
    %541 = arith.addf %530, %540 : vector<32x128xf32>
    %c26_224 = arith.constant 26 : index
    %c0_225 = arith.constant 0 : index
    %542 = vector.load %arg23[%c26_224, %c0_225] : memref<64x64xf32, #tpu.memory_space<vmem>>, vector<32x64xf32>
    %cst_226 = arith.constant 2.000000e+00 : f32
    %543 = vector.broadcast %cst_226 : f32 to vector<32x1xf32>
    %544 = arith.cmpf ole, %470, %543 : vector<32x1xf32>
    %cst_227 = arith.constant 0.000000e+00 : f32
    %545 = vector.shape_cast %544 : vector<32x1xi1> to vector<32x1xi1>
    %546 = vector.broadcast %545 : vector<32x1xi1> to vector<32x64xi1>
    %547 = vector.broadcast %cst_227 : f32 to vector<32x64xf32>
    %548 = arith.select %546, %542, %547 : vector<32x64xi1>, vector<32x64xf32>
    %549 = arith.truncf %548 : vector<32x64xf32> to vector<32x64xbf16>
    %c512 = arith.constant 512 : index
    %c0_228 = arith.constant 0 : index
    %550 = vector.load %arg10[%c512, %c0_228] : memref<576x128xbf16, #tpu.memory_space<vmem>>, vector<64x128xbf16>
    %cst_229 = arith.constant dense<0.000000e+00> : vector<32x128xf32>
    %551 = tpu.matmul %549, %550, %cst_229 {dimension_numbers = #tpu.dot_dimension_numbers<[1], [0], [0], [1], [0, 0, 1, 1], [], []>} : vector<32x64xbf16>, vector<64x128xbf16>, vector<32x128xf32> -> vector<32x128xf32>
    %552 = arith.addf %541, %551 : vector<32x128xf32>
    %c0_230 = arith.constant 0 : index
    %c0_231 = arith.constant 0 : index
    %553 = vector.load %arg11[%c0_230, %c0_231] : memref<1x128xf32, #tpu.memory_space<vmem>>, vector<1x128xf32>
    %554 = vector.broadcast %553 : vector<1x128xf32> to vector<32x128xf32>
    %555 = arith.mulf %552, %554 : vector<32x128xf32>
    %c0_232 = arith.constant 0 : index
    %c0_233 = arith.constant 0 : index
    %556 = vector.load %arg12[%c0_232, %c0_233] : memref<1x128xf32, #tpu.memory_space<vmem>>, vector<1x128xf32>
    %557 = vector.broadcast %556 : vector<1x128xf32> to vector<32x128xf32>
    %558 = arith.addf %555, %557 : vector<32x128xf32>
    %cst_234 = arith.constant 0.000000e+00 : f32
    %559 = vector.broadcast %cst_234 : f32 to vector<32x128xf32>
    %560 = arith.maximumf %558, %559 : vector<32x128xf32>
    %561 = vector.extract_strided_slice %560 {offsets = [0, 0], sizes = [8, 128], strides = [1, 1]} : vector<32x128xf32> to vector<8x128xf32>
    %562 = vector.extract_strided_slice %560 {offsets = [8, 0], sizes = [8, 128], strides = [1, 1]} : vector<32x128xf32> to vector<8x128xf32>
    %563 = arith.maximumf %561, %562 : vector<8x128xf32>
    %564 = vector.extract_strided_slice %563 {offsets = [0, 0], sizes = [2, 128], strides = [1, 1]} : vector<8x128xf32> to vector<2x128xf32>
    %565 = vector.extract_strided_slice %563 {offsets = [2, 0], sizes = [2, 128], strides = [1, 1]} : vector<8x128xf32> to vector<2x128xf32>
    %566 = arith.maximumf %564, %565 : vector<2x128xf32>
    %567 = vector.extract_strided_slice %563 {offsets = [4, 0], sizes = [2, 128], strides = [1, 1]} : vector<8x128xf32> to vector<2x128xf32>
    %568 = vector.extract_strided_slice %563 {offsets = [6, 0], sizes = [2, 128], strides = [1, 1]} : vector<8x128xf32> to vector<2x128xf32>
    %569 = arith.maximumf %567, %568 : vector<2x128xf32>
    %570 = vector.extract_strided_slice %560 {offsets = [16, 0], sizes = [8, 128], strides = [1, 1]} : vector<32x128xf32> to vector<8x128xf32>
    %571 = vector.extract_strided_slice %560 {offsets = [24, 0], sizes = [8, 128], strides = [1, 1]} : vector<32x128xf32> to vector<8x128xf32>
    %572 = arith.maximumf %570, %571 : vector<8x128xf32>
    %573 = vector.extract_strided_slice %572 {offsets = [0, 0], sizes = [2, 128], strides = [1, 1]} : vector<8x128xf32> to vector<2x128xf32>
    %574 = vector.extract_strided_slice %572 {offsets = [2, 0], sizes = [2, 128], strides = [1, 1]} : vector<8x128xf32> to vector<2x128xf32>
    %575 = arith.maximumf %573, %574 : vector<2x128xf32>
    %576 = vector.extract_strided_slice %572 {offsets = [4, 0], sizes = [2, 128], strides = [1, 1]} : vector<8x128xf32> to vector<2x128xf32>
    %577 = vector.extract_strided_slice %572 {offsets = [6, 0], sizes = [2, 128], strides = [1, 1]} : vector<8x128xf32> to vector<2x128xf32>
    %578 = arith.maximumf %576, %577 : vector<2x128xf32>
    %c8_235 = arith.constant 8 : index
    %c0_236 = arith.constant 0 : index
    %579 = vector.load %arg24[%c8_235, %c0_236] : memref<24x128xf32, #tpu.memory_space<vmem>>, vector<2x128xf32>
    tpu.vector_store %arg24[%c8_235, %c0_236], %566 {strides = array<i32>} : memref<24x128xf32, #tpu.memory_space<vmem>>, vector<2x128xf32>,
    %c10_237 = arith.constant 10 : index
    %c0_238 = arith.constant 0 : index
    %580 = vector.load %arg24[%c10_237, %c0_238] : memref<24x128xf32, #tpu.memory_space<vmem>>, vector<2x128xf32>
    tpu.vector_store %arg24[%c10_237, %c0_238], %569 {strides = array<i32>} : memref<24x128xf32, #tpu.memory_space<vmem>>, vector<2x128xf32>,
    %c12 = arith.constant 12 : index
    %c0_239 = arith.constant 0 : index
    %581 = vector.load %arg24[%c12, %c0_239] : memref<24x128xf32, #tpu.memory_space<vmem>>, vector<2x128xf32>
    tpu.vector_store %arg24[%c12, %c0_239], %575 {strides = array<i32>} : memref<24x128xf32, #tpu.memory_space<vmem>>, vector<2x128xf32>,
    %c14_240 = arith.constant 14 : index
    %c0_241 = arith.constant 0 : index
    %582 = vector.load %arg24[%c14_240, %c0_241] : memref<24x128xf32, #tpu.memory_space<vmem>>, vector<2x128xf32>
    tpu.vector_store %arg24[%c14_240, %c0_241], %578 {strides = array<i32>} : memref<24x128xf32, #tpu.memory_space<vmem>>, vector<2x128xf32>,
    %c0_242 = arith.constant 0 : index
    %c0_243 = arith.constant 0 : index
    %583 = vector.load %arg13[%c0_242, %c0_243] : memref<8x1xf32, #tpu.memory_space<vmem>>, vector<8x1xf32>
    %cst_244 = arith.constant 0.000000e+00 : f32
    %584 = vector.broadcast %cst_244 : f32 to vector<8x256xf32>
    %c2 = arith.constant 2 : index
    %c0_245 = arith.constant 0 : index
    %585 = vector.load %arg24[%c2, %c0_245] : memref<24x128xf32, #tpu.memory_space<vmem>>, vector<8x128xf32>
    %cst_246 = arith.constant 1.000000e+00 : f32
    %586 = vector.broadcast %cst_246 : f32 to vector<8x1xf32>
    %587 = arith.cmpf oge, %583, %586 : vector<8x1xf32>
    %cst_247 = arith.constant 0.000000e+00 : f32
    %588 = vector.shape_cast %587 : vector<8x1xi1> to vector<8x1xi1>
    %589 = vector.broadcast %588 : vector<8x1xi1> to vector<8x128xi1>
    %590 = vector.broadcast %cst_247 : f32 to vector<8x128xf32>
    %591 = arith.select %589, %585, %590 : vector<8x128xi1>, vector<8x128xf32>
    %592 = arith.truncf %591 : vector<8x128xf32> to vector<8x128xbf16>
    %c0_248 = arith.constant 0 : index
    %c0_249 = arith.constant 0 : index
    %593 = vector.load %arg14[%c0_248, %c0_249] : memref<1152x256xbf16, #tpu.memory_space<vmem>>, vector<128x256xbf16>
    %cst_250 = arith.constant dense<0.000000e+00> : vector<8x256xf32>
    %594 = tpu.matmul %592, %593, %cst_250 {dimension_numbers = #tpu.dot_dimension_numbers<[1], [0], [0], [1], [0, 0, 1, 1], [], []>} : vector<8x128xbf16>, vector<128x256xbf16>, vector<8x256xf32> -> vector<8x256xf32>
    %595 = arith.addf %584, %594 : vector<8x256xf32>
    %c6_251 = arith.constant 6 : index
    %c0_252 = arith.constant 0 : index
    %596 = vector.load %arg24[%c6_251, %c0_252] : memref<24x128xf32, #tpu.memory_space<vmem>>, vector<8x128xf32>
    %cst_253 = arith.constant 1.000000e+00 : f32
    %597 = vector.broadcast %cst_253 : f32 to vector<8x1xf32>
    %598 = arith.cmpf oge, %583, %597 : vector<8x1xf32>
    %cst_254 = arith.constant 0.000000e+00 : f32
    %599 = vector.shape_cast %598 : vector<8x1xi1> to vector<8x1xi1>
    %600 = vector.broadcast %599 : vector<8x1xi1> to vector<8x128xi1>
    %601 = vector.broadcast %cst_254 : f32 to vector<8x128xf32>
    %602 = arith.select %600, %596, %601 : vector<8x128xi1>, vector<8x128xf32>
    %603 = arith.truncf %602 : vector<8x128xf32> to vector<8x128xbf16>
    %c128_255 = arith.constant 128 : index
    %c0_256 = arith.constant 0 : index
    %604 = vector.load %arg14[%c128_255, %c0_256] : memref<1152x256xbf16, #tpu.memory_space<vmem>>, vector<128x256xbf16>
    %cst_257 = arith.constant dense<0.000000e+00> : vector<8x256xf32>
    %605 = tpu.matmul %603, %604, %cst_257 {dimension_numbers = #tpu.dot_dimension_numbers<[1], [0], [0], [1], [0, 0, 1, 1], [], []>} : vector<8x128xbf16>, vector<128x256xbf16>, vector<8x256xf32> -> vector<8x256xf32>
    %606 = arith.addf %595, %605 : vector<8x256xf32>
    %c10_258 = arith.constant 10 : index
    %c0_259 = arith.constant 0 : index
    %607 = vector.load %arg24[%c10_258, %c0_259] : memref<24x128xf32, #tpu.memory_space<vmem>>, vector<8x128xf32>
    %cst_260 = arith.constant 1.000000e+00 : f32
    %608 = vector.broadcast %cst_260 : f32 to vector<8x1xf32>
    %609 = arith.cmpf oge, %583, %608 : vector<8x1xf32>
    %cst_261 = arith.constant 0.000000e+00 : f32
    %610 = vector.shape_cast %609 : vector<8x1xi1> to vector<8x1xi1>
    %611 = vector.broadcast %610 : vector<8x1xi1> to vector<8x128xi1>
    %612 = vector.broadcast %cst_261 : f32 to vector<8x128xf32>
    %613 = arith.select %611, %607, %612 : vector<8x128xi1>, vector<8x128xf32>
    %614 = arith.truncf %613 : vector<8x128xf32> to vector<8x128xbf16>
    %c256_262 = arith.constant 256 : index
    %c0_263 = arith.constant 0 : index
    %615 = vector.load %arg14[%c256_262, %c0_263] : memref<1152x256xbf16, #tpu.memory_space<vmem>>, vector<128x256xbf16>
    %cst_264 = arith.constant dense<0.000000e+00> : vector<8x256xf32>
    %616 = tpu.matmul %614, %615, %cst_264 {dimension_numbers = #tpu.dot_dimension_numbers<[1], [0], [0], [1], [0, 0, 1, 1], [], []>} : vector<8x128xbf16>, vector<128x256xbf16>, vector<8x256xf32> -> vector<8x256xf32>
    %617 = arith.addf %606, %616 : vector<8x256xf32>
    %c4 = arith.constant 4 : index
    %c0_265 = arith.constant 0 : index
    %618 = vector.load %arg24[%c4, %c0_265] : memref<24x128xf32, #tpu.memory_space<vmem>>, vector<8x128xf32>
    %619 = arith.truncf %618 : vector<8x128xf32> to vector<8x128xbf16>
    %c384_266 = arith.constant 384 : index
    %c0_267 = arith.constant 0 : index
    %620 = vector.load %arg14[%c384_266, %c0_267] : memref<1152x256xbf16, #tpu.memory_space<vmem>>, vector<128x256xbf16>
    %cst_268 = arith.constant dense<0.000000e+00> : vector<8x256xf32>
    %621 = tpu.matmul %619, %620, %cst_268 {dimension_numbers = #tpu.dot_dimension_numbers<[1], [0], [0], [1], [0, 0, 1, 1], [], []>} : vector<8x128xbf16>, vector<128x256xbf16>, vector<8x256xf32> -> vector<8x256xf32>
    %622 = arith.addf %617, %621 : vector<8x256xf32>
    %c8_269 = arith.constant 8 : index
    %c0_270 = arith.constant 0 : index
    %623 = vector.load %arg24[%c8_269, %c0_270] : memref<24x128xf32, #tpu.memory_space<vmem>>, vector<8x128xf32>
    %624 = arith.truncf %623 : vector<8x128xf32> to vector<8x128xbf16>
    %c512_271 = arith.constant 512 : index
    %c0_272 = arith.constant 0 : index
    %625 = vector.load %arg14[%c512_271, %c0_272] : memref<1152x256xbf16, #tpu.memory_space<vmem>>, vector<128x256xbf16>
    %cst_273 = arith.constant dense<0.000000e+00> : vector<8x256xf32>
    %626 = tpu.matmul %624, %625, %cst_273 {dimension_numbers = #tpu.dot_dimension_numbers<[1], [0], [0], [1], [0, 0, 1, 1], [], []>} : vector<8x128xbf16>, vector<128x256xbf16>, vector<8x256xf32> -> vector<8x256xf32>
    %627 = arith.addf %622, %626 : vector<8x256xf32>
    %c12_274 = arith.constant 12 : index
    %c0_275 = arith.constant 0 : index
    %628 = vector.load %arg24[%c12_274, %c0_275] : memref<24x128xf32, #tpu.memory_space<vmem>>, vector<8x128xf32>
    %629 = arith.truncf %628 : vector<8x128xf32> to vector<8x128xbf16>
    %c640 = arith.constant 640 : index
    %c0_276 = arith.constant 0 : index
    %630 = vector.load %arg14[%c640, %c0_276] : memref<1152x256xbf16, #tpu.memory_space<vmem>>, vector<128x256xbf16>
    %cst_277 = arith.constant dense<0.000000e+00> : vector<8x256xf32>
    %631 = tpu.matmul %629, %630, %cst_277 {dimension_numbers = #tpu.dot_dimension_numbers<[1], [0], [0], [1], [0, 0, 1, 1], [], []>} : vector<8x128xbf16>, vector<128x256xbf16>, vector<8x256xf32> -> vector<8x256xf32>
    %632 = arith.addf %627, %631 : vector<8x256xf32>
    %c6_278 = arith.constant 6 : index
    %c0_279 = arith.constant 0 : index
    %633 = vector.load %arg24[%c6_278, %c0_279] : memref<24x128xf32, #tpu.memory_space<vmem>>, vector<8x128xf32>
    %cst_280 = arith.constant 0.000000e+00 : f32
    %634 = vector.broadcast %cst_280 : f32 to vector<8x1xf32>
    %635 = arith.cmpf ole, %583, %634 : vector<8x1xf32>
    %cst_281 = arith.constant 0.000000e+00 : f32
    %636 = vector.shape_cast %635 : vector<8x1xi1> to vector<8x1xi1>
    %637 = vector.broadcast %636 : vector<8x1xi1> to vector<8x128xi1>
    %638 = vector.broadcast %cst_281 : f32 to vector<8x128xf32>
    %639 = arith.select %637, %633, %638 : vector<8x128xi1>, vector<8x128xf32>
    %640 = arith.truncf %639 : vector<8x128xf32> to vector<8x128xbf16>
    %c768 = arith.constant 768 : index
    %c0_282 = arith.constant 0 : index
    %641 = vector.load %arg14[%c768, %c0_282] : memref<1152x256xbf16, #tpu.memory_space<vmem>>, vector<128x256xbf16>
    %cst_283 = arith.constant dense<0.000000e+00> : vector<8x256xf32>
    %642 = tpu.matmul %640, %641, %cst_283 {dimension_numbers = #tpu.dot_dimension_numbers<[1], [0], [0], [1], [0, 0, 1, 1], [], []>} : vector<8x128xbf16>, vector<128x256xbf16>, vector<8x256xf32> -> vector<8x256xf32>
    %643 = arith.addf %632, %642 : vector<8x256xf32>
    %c10_284 = arith.constant 10 : index
    %c0_285 = arith.constant 0 : index
    %644 = vector.load %arg24[%c10_284, %c0_285] : memref<24x128xf32, #tpu.memory_space<vmem>>, vector<8x128xf32>
    %cst_286 = arith.constant 0.000000e+00 : f32
    %645 = vector.broadcast %cst_286 : f32 to vector<8x1xf32>
    %646 = arith.cmpf ole, %583, %645 : vector<8x1xf32>
    %cst_287 = arith.constant 0.000000e+00 : f32
    %647 = vector.shape_cast %646 : vector<8x1xi1> to vector<8x1xi1>
    %648 = vector.broadcast %647 : vector<8x1xi1> to vector<8x128xi1>
    %649 = vector.broadcast %cst_287 : f32 to vector<8x128xf32>
    %650 = arith.select %648, %644, %649 : vector<8x128xi1>, vector<8x128xf32>
    %651 = arith.truncf %650 : vector<8x128xf32> to vector<8x128xbf16>
    %c896 = arith.constant 896 : index
    %c0_288 = arith.constant 0 : index
    %652 = vector.load %arg14[%c896, %c0_288] : memref<1152x256xbf16, #tpu.memory_space<vmem>>, vector<128x256xbf16>
    %cst_289 = arith.constant dense<0.000000e+00> : vector<8x256xf32>
    %653 = tpu.matmul %651, %652, %cst_289 {dimension_numbers = #tpu.dot_dimension_numbers<[1], [0], [0], [1], [0, 0, 1, 1], [], []>} : vector<8x128xbf16>, vector<128x256xbf16>, vector<8x256xf32> -> vector<8x256xf32>
    %654 = arith.addf %643, %653 : vector<8x256xf32>
    %c14_290 = arith.constant 14 : index
    %c0_291 = arith.constant 0 : index
    %655 = vector.load %arg24[%c14_290, %c0_291] : memref<24x128xf32, #tpu.memory_space<vmem>>, vector<8x128xf32>
    %cst_292 = arith.constant 0.000000e+00 : f32
    %656 = vector.broadcast %cst_292 : f32 to vector<8x1xf32>
    %657 = arith.cmpf ole, %583, %656 : vector<8x1xf32>
    %cst_293 = arith.constant 0.000000e+00 : f32
    %658 = vector.shape_cast %657 : vector<8x1xi1> to vector<8x1xi1>
    %659 = vector.broadcast %658 : vector<8x1xi1> to vector<8x128xi1>
    %660 = vector.broadcast %cst_293 : f32 to vector<8x128xf32>
    %661 = arith.select %659, %655, %660 : vector<8x128xi1>, vector<8x128xf32>
    %662 = arith.truncf %661 : vector<8x128xf32> to vector<8x128xbf16>
    %c1024 = arith.constant 1024 : index
    %c0_294 = arith.constant 0 : index
    %663 = vector.load %arg14[%c1024, %c0_294] : memref<1152x256xbf16, #tpu.memory_space<vmem>>, vector<128x256xbf16>
    %cst_295 = arith.constant dense<0.000000e+00> : vector<8x256xf32>
    %664 = tpu.matmul %662, %663, %cst_295 {dimension_numbers = #tpu.dot_dimension_numbers<[1], [0], [0], [1], [0, 0, 1, 1], [], []>} : vector<8x128xbf16>, vector<128x256xbf16>, vector<8x256xf32> -> vector<8x256xf32>
    %665 = arith.addf %654, %664 : vector<8x256xf32>
    %c0_296 = arith.constant 0 : index
    %c0_297 = arith.constant 0 : index
    %666 = vector.load %arg15[%c0_296, %c0_297] : memref<1x256xf32, #tpu.memory_space<vmem>>, vector<1x256xf32>
    %667 = vector.broadcast %666 : vector<1x256xf32> to vector<8x256xf32>
    %668 = arith.mulf %665, %667 : vector<8x256xf32>
    %c0_298 = arith.constant 0 : index
    %c0_299 = arith.constant 0 : index
    %669 = vector.load %arg16[%c0_298, %c0_299] : memref<1x256xf32, #tpu.memory_space<vmem>>, vector<1x256xf32>
    %670 = vector.broadcast %669 : vector<1x256xf32> to vector<8x256xf32>
    %671 = arith.addf %668, %670 : vector<8x256xf32>
    %cst_300 = arith.constant 0.000000e+00 : f32
    %672 = vector.broadcast %cst_300 : f32 to vector<8x256xf32>
    %673 = arith.maximumf %671, %672 : vector<8x256xf32>
    %674 = vector.extract_strided_slice %673 {offsets = [0, 0], sizes = [4, 256], strides = [1, 1]} : vector<8x256xf32> to vector<4x256xf32>
    %675 = vector.extract_strided_slice %673 {offsets = [4, 0], sizes = [4, 256], strides = [1, 1]} : vector<8x256xf32> to vector<4x256xf32>
    %676 = arith.maximumf %674, %675 : vector<4x256xf32>
    %677 = vector.extract_strided_slice %676 {offsets = [0, 0], sizes = [2, 256], strides = [1, 1]} : vector<4x256xf32> to vector<2x256xf32>
    %678 = vector.extract_strided_slice %676 {offsets = [2, 0], sizes = [2, 256], strides = [1, 1]} : vector<4x256xf32> to vector<2x256xf32>
    %679 = arith.maximumf %677, %678 : vector<2x256xf32>
    %cst_301 = arith.constant 1.000000e+00 : f32
    %680 = vector.broadcast %cst_301 : f32 to vector<2x256xf32>
    %681 = arith.mulf %679, %680 : vector<2x256xf32>
    %682 = arith.truncf %681 : vector<2x256xf32> to vector<2x256xbf16>
    %c0_302 = arith.constant 0 : index
    %c0_303 = arith.constant 0 : index
    %683 = vector.load %arg17[%c0_302, %c0_303] : memref<256x128xbf16, #tpu.memory_space<vmem>>, vector<256x128xbf16>
    %cst_304 = arith.constant dense<0.000000e+00> : vector<2x128xf32>
    %684 = tpu.matmul %682, %683, %cst_304 {dimension_numbers = #tpu.dot_dimension_numbers<[1], [0], [0], [1], [0, 0, 1, 1], [], []>} : vector<2x256xbf16>, vector<256x128xbf16>, vector<2x128xf32> -> vector<2x128xf32>
    %c0_305 = arith.constant 0 : index
    %c0_306 = arith.constant 0 : index
    %685 = vector.load %arg18[%c0_305, %c0_306] : memref<1x128xf32, #tpu.memory_space<vmem>>, vector<1x128xf32>
    %686 = vector.broadcast %685 : vector<1x128xf32> to vector<2x128xf32>
    %687 = arith.addf %684, %686 : vector<2x128xf32>
    %cst_307 = arith.constant 0.000000e+00 : f32
    %688 = vector.broadcast %cst_307 : f32 to vector<2x128xf32>
    %689 = arith.maximumf %687, %688 : vector<2x128xf32>
    %690 = arith.truncf %689 : vector<2x128xf32> to vector<2x128xbf16>
    %c0_308 = arith.constant 0 : index
    %c0_309 = arith.constant 0 : index
    %691 = vector.load %arg19[%c0_308, %c0_309] : memref<128x128xbf16, #tpu.memory_space<vmem>>, vector<128x128xbf16>
    %cst_310 = arith.constant dense<0.000000e+00> : vector<2x128xf32>
    %692 = tpu.matmul %690, %691, %cst_310 {dimension_numbers = #tpu.dot_dimension_numbers<[1], [0], [0], [1], [0, 0, 1, 1], [], []>} : vector<2x128xbf16>, vector<128x128xbf16>, vector<2x128xf32> -> vector<2x128xf32>
    %c0_311 = arith.constant 0 : index
    %c0_312 = arith.constant 0 : index
    %693 = vector.load %arg20[%c0_311, %c0_312] : memref<1x128xf32, #tpu.memory_space<vmem>>, vector<1x128xf32>
    %694 = vector.broadcast %693 : vector<1x128xf32> to vector<2x128xf32>
    %695 = arith.addf %692, %694 : vector<2x128xf32>
    %c0_313 = arith.constant 0 : index
    %c0_314 = arith.constant 0 : index
    %696 = vector.load %arg21[%c0_313, %c0_314] : memref<2x128xf32, #tpu.memory_space<vmem>>, vector<2x128xf32>
    tpu.vector_store %arg21[%c0_313, %c0_314], %695 {strides = array<i32>} : memref<2x128xf32, #tpu.memory_space<vmem>>, vector<2x128xf32>,
    return
  }
  func.func @transform_0(%arg0: i32) -> (i32, i32) {
    %c0_i32 = arith.constant 0 : i32
    %c0_i32_0 = arith.constant 0 : i32
    return %arg0, %c0_i32 : i32, i32
  }
  func.func @transform_1(%arg0: i32) -> (i32, i32) {
    %c0_i32 = arith.constant 0 : i32
    %c0_i32_0 = arith.constant 0 : i32
    %c0_i32_1 = arith.constant 0 : i32
    return %c0_i32, %c0_i32_0 : i32, i32
  }
  func.func @transform_2(%arg0: i32) -> (i32, i32) {
    %c0_i32 = arith.constant 0 : i32
    %c0_i32_0 = arith.constant 0 : i32
    %c0_i32_1 = arith.constant 0 : i32
    return %c0_i32, %c0_i32_0 : i32, i32
  }
  func.func @transform_3(%arg0: i32) -> (i32, i32) {
    %c0_i32 = arith.constant 0 : i32
    %c0_i32_0 = arith.constant 0 : i32
    %c0_i32_1 = arith.constant 0 : i32
    return %c0_i32, %c0_i32_0 : i32, i32
  }
  func.func @transform_4(%arg0: i32) -> (i32, i32) {
    %c0_i32 = arith.constant 0 : i32
    %c0_i32_0 = arith.constant 0 : i32
    %c0_i32_1 = arith.constant 0 : i32
    return %c0_i32, %c0_i32_0 : i32, i32
  }
  func.func @transform_5(%arg0: i32) -> (i32, i32) {
    %c0_i32 = arith.constant 0 : i32
    %c0_i32_0 = arith.constant 0 : i32
    %c0_i32_1 = arith.constant 0 : i32
    return %c0_i32, %c0_i32_0 : i32, i32
  }
  func.func @transform_6(%arg0: i32) -> (i32, i32) {
    %c0_i32 = arith.constant 0 : i32
    %c0_i32_0 = arith.constant 0 : i32
    %c0_i32_1 = arith.constant 0 : i32
    return %c0_i32, %c0_i32_0 : i32, i32
  }
  func.func @transform_7(%arg0: i32) -> (i32, i32) {
    %c0_i32 = arith.constant 0 : i32
    %c0_i32_0 = arith.constant 0 : i32
    %c0_i32_1 = arith.constant 0 : i32
    return %c0_i32, %c0_i32_0 : i32, i32
  }
  func.func @transform_8(%arg0: i32) -> (i32, i32) {
    %c0_i32 = arith.constant 0 : i32
    %c0_i32_0 = arith.constant 0 : i32
    %c0_i32_1 = arith.constant 0 : i32
    return %c0_i32, %c0_i32_0 : i32, i32
  }
  func.func @transform_9(%arg0: i32) -> (i32, i32) {
    %c0_i32 = arith.constant 0 : i32
    %c0_i32_0 = arith.constant 0 : i32
    %c0_i32_1 = arith.constant 0 : i32
    return %c0_i32, %c0_i32_0 : i32, i32
  }
  func.func @transform_10(%arg0: i32) -> (i32, i32) {
    %c0_i32 = arith.constant 0 : i32
    %c0_i32_0 = arith.constant 0 : i32
    %c0_i32_1 = arith.constant 0 : i32
    return %c0_i32, %c0_i32_0 : i32, i32
  }
  func.func @transform_11(%arg0: i32) -> (i32, i32) {
    %c0_i32 = arith.constant 0 : i32
    %c0_i32_0 = arith.constant 0 : i32
    %c0_i32_1 = arith.constant 0 : i32
    return %c0_i32, %c0_i32_0 : i32, i32
  }
  func.func @transform_12(%arg0: i32) -> (i32, i32) {
    %c0_i32 = arith.constant 0 : i32
    %c0_i32_0 = arith.constant 0 : i32
    %c0_i32_1 = arith.constant 0 : i32
    return %c0_i32, %c0_i32_0 : i32, i32
  }
  func.func @transform_13(%arg0: i32) -> (i32, i32) {
    %c0_i32 = arith.constant 0 : i32
    %c0_i32_0 = arith.constant 0 : i32
    %c0_i32_1 = arith.constant 0 : i32
    return %c0_i32, %c0_i32_0 : i32, i32
  }
  func.func @transform_14(%arg0: i32) -> (i32, i32) {
    %c0_i32 = arith.constant 0 : i32
    %c0_i32_0 = arith.constant 0 : i32
    %c0_i32_1 = arith.constant 0 : i32
    return %c0_i32, %c0_i32_0 : i32, i32
  }
  func.func @transform_15(%arg0: i32) -> (i32, i32) {
    %c0_i32 = arith.constant 0 : i32
    %c0_i32_0 = arith.constant 0 : i32
    %c0_i32_1 = arith.constant 0 : i32
    return %c0_i32, %c0_i32_0 : i32, i32
  }
  func.func @transform_16(%arg0: i32) -> (i32, i32) {
    %c0_i32 = arith.constant 0 : i32
    %c0_i32_0 = arith.constant 0 : i32
    %c0_i32_1 = arith.constant 0 : i32
    return %c0_i32, %c0_i32_0 : i32, i32
  }
  func.func @transform_17(%arg0: i32) -> (i32, i32) {
    %c0_i32 = arith.constant 0 : i32
    %c0_i32_0 = arith.constant 0 : i32
    %c0_i32_1 = arith.constant 0 : i32
    return %c0_i32, %c0_i32_0 : i32, i32
  }
  func.func @transform_18(%arg0: i32) -> (i32, i32) {
    %c0_i32 = arith.constant 0 : i32
    %c0_i32_0 = arith.constant 0 : i32
    %c0_i32_1 = arith.constant 0 : i32
    return %c0_i32, %c0_i32_0 : i32, i32
  }
  func.func @transform_19(%arg0: i32) -> (i32, i32) {
    %c0_i32 = arith.constant 0 : i32
    %c0_i32_0 = arith.constant 0 : i32
    %c0_i32_1 = arith.constant 0 : i32
    return %c0_i32, %c0_i32_0 : i32, i32
  }
  func.func @transform_20(%arg0: i32) -> (i32, i32) {
    %c0_i32 = arith.constant 0 : i32
    %c0_i32_0 = arith.constant 0 : i32
    return %arg0, %c0_i32 : i32, i32
  }
}

</mosaic_0001>

<llo_original>
// kernel: tpu_custom_call.1
$region0: #{tpu_custom_call.1}
  #allocation0 [shape = 'u32[]', space=smem, size = 0x4, offset = 0x4, fixed_abs, tag = 'smem constant byte address 0x4 - core index']
  #allocation1 [shape = 'u32[144,128]{1,0:T(1,128)}', space=vmem, size = 0x12000, scoped, tag = 'internal scratch']
  #allocation2 [shape = 'f32[176,32]{1,0:T(8,128)}', space=vmem, size = 0x16000, scoped, tag = 'scratch operand']
  #allocation3 [shape = 'f32[64,64]{1,0:T(8,128)}', space=vmem, size = 0x8000, scoped, tag = 'scratch operand']
  #allocation4 [shape = 'f32[24,128]{1,0:T(8,128)}', space=vmem, size = 0x3000, scoped, tag = 'scratch operand']
  %s0 = inlined_call_operand.vmem [shape: bf16[512,32], index: 0, kind: input, shape index: {}]
  %s1 = inlined_call_operand.vmem [shape: bf16[32,32], index: 1, kind: input, shape index: {}]
  %s2 = inlined_call_operand.vmem [shape: f32[1,32], index: 2, kind: input, shape index: {}]
  %s3 = inlined_call_operand.vmem [shape: f32[1,32], index: 3, kind: input, shape index: {}]
  %s4 = inlined_call_operand.vmem [shape: f32[128,1], index: 4, kind: input, shape index: {}]
  %s5 = inlined_call_operand.vmem [shape: bf16[288,64], index: 5, kind: input, shape index: {}]
  %s6 = inlined_call_operand.vmem [shape: f32[1,64], index: 6, kind: input, shape index: {}]
  %s7 = inlined_call_operand.vmem [shape: f32[1,64], index: 7, kind: input, shape index: {}]
  %s8 = inlined_call_operand.vmem [shape: f32[32,1], index: 8, kind: input, shape index: {}]
  %s9 = inlined_call_operand.vmem [shape: bf16[576,128], index: 9, kind: input, shape index: {}]
  %s10 = inlined_call_operand.vmem [shape: f32[1,128], index: 10, kind: input, shape index: {}]
  %s11 = inlined_call_operand.vmem [shape: f32[1,128], index: 11, kind: input, shape index: {}]
  %s12 = inlined_call_operand.vmem [shape: f32[8,1], index: 12, kind: input, shape index: {}]
  %s13 = inlined_call_operand.hbm [shape: bf16[1152,256], index: 13, kind: input, shape index: {}]
  %s14 = inlined_call_operand.vmem [shape: f32[1,256], index: 14, kind: input, shape index: {}]
  %s15 = inlined_call_operand.vmem [shape: f32[1,256], index: 15, kind: input, shape index: {}]
  %s16 = inlined_call_operand.vmem [shape: bf16[256,128], index: 16, kind: input, shape index: {}]
  %s17 = inlined_call_operand.vmem [shape: f32[1,128], index: 17, kind: input, shape index: {}]
  %s18 = inlined_call_operand.vmem [shape: bf16[128,128], index: 18, kind: input, shape index: {}]
  %s19 = inlined_call_operand.vmem [shape: f32[1,128], index: 19, kind: input, shape index: {}]
  %s20 = inlined_call_operand.hbm [shape: f32[2,128], index: 20, kind: output, shape index: {}]
  %s21 = sld [smem:[#allocation0]]
  $region94: #{tpu_custom_call.1} parent=0
    _
  %s23 = ssub.s32 1, %s21
  %s24 = scalar_select 0, %s23, %s21
  $region1: #{tpu_custom_call.1} parent=0
    #allocation5 [shape = 'u8[589824]{0}', space=vmem, size = 0x90000, scoped, tag = 'input window, operand 13, single buffered']
    #allocation6 [shape = 's32[1]{0}', space=sflag, size = 0x4, scoped, tag = 'scoped memory for tpu_custom_call.1']
    #allocation7 [shape = 's32[1]{0}', space=sflag, size = 0x4, scoped, tag = 'scoped memory for tpu_custom_call.1']
    #allocation8 [shape = 'u8[1024]{0}', space=vmem, size = 0x400, scoped, tag = 'output window, operand 0, single buffered']
    %25 = vsyncpa [#allocation6], 0
    %26 = vsyncpa [#allocation7], 0
    // Predicated region
    $region2: #{tpu_custom_call.1} parent=1 // pred_check
      _
    $region3: #{tpu_custom_call.1} parent=1 // pred_check_branch
      %28 = sbr.rel (0) target = $region5
    $region4: #{tpu_custom_call.1} parent=1 // pred_region
      _
    $region5: #{tpu_custom_call.1} parent=1 // pred_fallthru
      _
    // Predicated region
    $region6: #{tpu_custom_call.1} parent=1 // pred_check
      _
    $region7: #{tpu_custom_call.1} parent=1 // pred_check_branch
      %30 = sbr.rel (0) target = $region9
    $region8: #{tpu_custom_call.1} parent=1 // pred_region
      _
    $region9: #{tpu_custom_call.1} parent=1 // pred_fallthru
      _
    // Predicated region
    $region10: #{tpu_custom_call.1} parent=1 // pred_check
      _
    $region11: #{tpu_custom_call.1} parent=1 // pred_check_branch
      %32 = sbr.rel (0) target = $region13
    $region12: #{tpu_custom_call.1} parent=1 // pred_region
      _
    $region13: #{tpu_custom_call.1} parent=1 // pred_fallthru
      _
    // Predicated region
    $region14: #{tpu_custom_call.1} parent=1 // pred_check
      _
    $region15: #{tpu_custom_call.1} parent=1 // pred_check_branch
      %34 = sbr.rel (0) target = $region17
    $region16: #{tpu_custom_call.1} parent=1 // pred_region
      _
    $region17: #{tpu_custom_call.1} parent=1 // pred_fallthru
      _
    // Predicated region
    $region18: #{tpu_custom_call.1} parent=1 // pred_check
      _
    $region19: #{tpu_custom_call.1} parent=1 // pred_check_branch
      %36 = sbr.rel (0) target = $region21
    $region20: #{tpu_custom_call.1} parent=1 // pred_region
      _
    $region21: #{tpu_custom_call.1} parent=1 // pred_fallthru
      _
    // Predicated region
    $region22: #{tpu_custom_call.1} parent=1 // pred_check
      _
    $region23: #{tpu_custom_call.1} parent=1 // pred_check_branch
      %38 = sbr.rel (0) target = $region25
    $region24: #{tpu_custom_call.1} parent=1 // pred_region
      _
    $region25: #{tpu_custom_call.1} parent=1 // pred_fallthru
      _
    // Predicated region
    $region26: #{tpu_custom_call.1} parent=1 // pred_check
      _
    $region27: #{tpu_custom_call.1} parent=1 // pred_check_branch
      %40 = sbr.rel (0) target = $region29
    $region28: #{tpu_custom_call.1} parent=1 // pred_region
      _
    $region29: #{tpu_custom_call.1} parent=1 // pred_fallthru
      _
    // Predicated region
    $region30: #{tpu_custom_call.1} parent=1 // pred_check
      _
    $region31: #{tpu_custom_call.1} parent=1 // pred_check_branch
      %42 = sbr.rel (0) target = $region33
    $region32: #{tpu_custom_call.1} parent=1 // pred_region
      _
    $region33: #{tpu_custom_call.1} parent=1 // pred_fallthru
      _
    // Predicated region
    $region34: #{tpu_custom_call.1} parent=1 // pred_check
      _
    $region35: #{tpu_custom_call.1} parent=1 // pred_check_branch
      %44 = sbr.rel (0) target = $region37
    $region36: #{tpu_custom_call.1} parent=1 // pred_region
      _
    $region37: #{tpu_custom_call.1} parent=1 // pred_fallthru
      _
    // Predicated region
    $region38: #{tpu_custom_call.1} parent=1 // pred_check
      _
    $region39: #{tpu_custom_call.1} parent=1 // pred_check_branch
      %46 = sbr.rel (0) target = $region41
    $region40: #{tpu_custom_call.1} parent=1 // pred_region
      _
    $region41: #{tpu_custom_call.1} parent=1 // pred_fallthru
      _
    // Predicated region
    $region42: #{tpu_custom_call.1} parent=1 // pred_check
      _
    $region43: #{tpu_custom_call.1} parent=1 // pred_check_branch
      %48 = sbr.rel (0) target = $region45
    $region44: #{tpu_custom_call.1} parent=1 // pred_region
      _
    $region45: #{tpu_custom_call.1} parent=1 // pred_fallthru
      _
    // Predicated region
    $region46: #{tpu_custom_call.1} parent=1 // pred_check
      _
    $region47: #{tpu_custom_call.1} parent=1 // pred_check_branch
      %50 = sbr.rel (0) target = $region49
    $region48: #{tpu_custom_call.1} parent=1 // pred_region
      _
    $region49: #{tpu_custom_call.1} parent=1 // pred_fallthru
      _
    // Predicated region
    $region50: #{tpu_custom_call.1} parent=1 // pred_check
      _
    $region51: #{tpu_custom_call.1} parent=1 // pred_check_branch
      %52 = sbr.rel (0) target = $region53
    $region52: #{tpu_custom_call.1} parent=1 // pred_region
      _
    $region53: #{tpu_custom_call.1} parent=1 // pred_fallthru
      _
    // Predicated region
    $region54: #{tpu_custom_call.1} parent=1 // pred_check
      _
    $region55: #{tpu_custom_call.1} parent=1 // pred_check_branch
      %54 = sbr.rel (0) target = $region57
    $region56: #{tpu_custom_call.1} parent=1 // pred_region
      %s56 = ssub.s32 18432, 18432
      %57 = vsyncadd [#allocation6], %s56
      %s58 = sshll.u32 [#allocation5], 4
      %s59 = int_to_ptr.vmem [resolvable:$true] %s58
      %64 = dma.hbm_to_vmem [thread:$0]  %s13, 18432, %s59, [#allocation6], 128, 128, 8
    $region57: #{tpu_custom_call.1} parent=1 // pred_fallthru
      _
    // Predicated region
    $region58: #{tpu_custom_call.1} parent=1 // pred_check
      _
    $region59: #{tpu_custom_call.1} parent=1 // pred_check_branch
      %66 = sbr.rel (0) target = $region61
    $region60: #{tpu_custom_call.1} parent=1 // pred_region
      _
    $region61: #{tpu_custom_call.1} parent=1 // pred_fallthru
      _
    // Predicated region
    $region62: #{tpu_custom_call.1} parent=1 // pred_check
      _
    $region63: #{tpu_custom_call.1} parent=1 // pred_check_branch
      %68 = sbr.rel (0) target = $region65
    $region64: #{tpu_custom_call.1} parent=1 // pred_region
      _
    $region65: #{tpu_custom_call.1} parent=1 // pred_fallthru
      _
    // Predicated region
    $region66: #{tpu_custom_call.1} parent=1 // pred_check
      _
    $region67: #{tpu_custom_call.1} parent=1 // pred_check_branch
      %70 = sbr.rel (0) target = $region69
    $region68: #{tpu_custom_call.1} parent=1 // pred_region
      _
    $region69: #{tpu_custom_call.1} parent=1 // pred_fallthru
      _
    // Predicated region
    $region70: #{tpu_custom_call.1} parent=1 // pred_check
      _
    $region71: #{tpu_custom_call.1} parent=1 // pred_check_branch
      %72 = sbr.rel (0) target = $region73
    $region72: #{tpu_custom_call.1} parent=1 // pred_region
      _
    $region73: #{tpu_custom_call.1} parent=1 // pred_fallthru
      _
    // Predicated region
    $region74: #{tpu_custom_call.1} parent=1 // pred_check
      _
    $region75: #{tpu_custom_call.1} parent=1 // pred_check_branch
      %74 = sbr.rel (0) target = $region77
    $region76: #{tpu_custom_call.1} parent=1 // pred_region
      _
    $region77: #{tpu_custom_call.1} parent=1 // pred_fallthru
      _
    // Predicated region
    $region78: #{tpu_custom_call.1} parent=1 // pred_check
      _
    $region79: #{tpu_custom_call.1} parent=1 // pred_check_branch
      %76 = sbr.rel (0) target = $region81
    $region80: #{tpu_custom_call.1} parent=1 // pred_region
      _
    $region81: #{tpu_custom_call.1} parent=1 // pred_fallthru
      _
    // Predicated region
    $region82: #{tpu_custom_call.1} parent=1 // pred_check
      _
    $region83: #{tpu_custom_call.1} parent=1 // pred_check_branch
      %78 = sbr.rel (0) target = $region85
    $region84: #{tpu_custom_call.1} parent=1 // pred_region
      %79 = dma.done [#allocation6], 18432
    $region85: #{tpu_custom_call.1} parent=1 // pred_fallthru
      _
    %vm81 = vcmask 261120
    %82 = vst.msk [vmem:[#allocation2] sm:$0xff] %vm81, 0.0
    %83 = vst.msk [vmem:[#allocation2 + $0x8] sm:$0xff] %vm81, 0.0
    %84 = vst.msk [vmem:[#allocation2 + $0x10] sm:$0xff] %vm81, 0.0
    %85 = vst.msk [vmem:[#allocation2 + $0x98] sm:$0xff] %vm81, 0.0
    %86 = vst.msk [vmem:[#allocation2 + $0xa0] sm:$0xff] %vm81, 0.0
    %87 = vst.msk [vmem:[#allocation2 + $0xa8] sm:$0xff] %vm81, 0.0
    %vm88 = vcmask 523264
    %89 = vst.msk [vmem:[#allocation3] sm:$0xff] %vm88, 0.0
    %90 = vst.msk [vmem:[#allocation3 + $0x8] sm:$0xff] %vm88, 0.0
    %91 = vst.msk [vmem:[#allocation3 + $0x30] sm:$0xff] %vm88, 0.0
    %92 = vst.msk [vmem:[#allocation3 + $0x38] sm:$0xff] %vm88, 0.0
    %93 = vst [vmem:[#allocation4] sm:$0xff] 0.0
    %94 = vst [vmem:[#allocation4 + $0x10] sm:$0xff] 0.0
    %v95 = vld [vmem:[%s0] sm:$0xf]
    %v96 = vld [vmem:[%s0 + $0x4] sm:$0xf]
    %v97 = vld [vmem:[%s0 + $0x8] sm:$0xf]
    %v98 = vld [vmem:[%s0 + $0xc] sm:$0xf]
    %v99 = vld [vmem:[%s0 + $0x10] sm:$0xf]
    %v100 = vld [vmem:[%s0 + $0x14] sm:$0xf]
    %v101 = vld [vmem:[%s0 + $0x18] sm:$0xf]
    %v102 = vld [vmem:[%s0 + $0x1c] sm:$0xf]
    %v103 = vld [vmem:[%s0 + $0x20] sm:$0xf]
    %v104 = vld [vmem:[%s0 + $0x24] sm:$0xf]
    %v105 = vld [vmem:[%s0 + $0x28] sm:$0xf]
    %v106 = vld [vmem:[%s0 + $0x2c] sm:$0xf]
    %v107 = vld [vmem:[%s0 + $0x30] sm:$0xf]
    %v108 = vld [vmem:[%s0 + $0x34] sm:$0xf]
    %v109 = vld [vmem:[%s0 + $0x38] sm:$0xf]
    %v110 = vld [vmem:[%s0 + $0x3c] sm:$0xf]
    %v111 = vld [vmem:[%s0 + $0x40] sm:$0xf]
    %v112 = vld [vmem:[%s0 + $0x44] sm:$0xf]
    %v113 = vld [vmem:[%s0 + $0x48] sm:$0xf]
    %v114 = vld [vmem:[%s0 + $0x4c] sm:$0xf]
    %v115 = vld [vmem:[%s0 + $0x50] sm:$0xf]
    %v116 = vld [vmem:[%s0 + $0x54] sm:$0xf]
    %v117 = vld [vmem:[%s0 + $0x58] sm:$0xf]
    %v118 = vld [vmem:[%s0 + $0x5c] sm:$0xf]
    %v119 = vld [vmem:[%s0 + $0x60] sm:$0xf]
    %v120 = vld [vmem:[%s0 + $0x64] sm:$0xf]
    %v121 = vld [vmem:[%s0 + $0x68] sm:$0xf]
    %v122 = vld [vmem:[%s0 + $0x6c] sm:$0xf]
    %v123 = vld [vmem:[%s0 + $0x70] sm:$0xf]
    %v124 = vld [vmem:[%s0 + $0x74] sm:$0xf]
    %v125 = vld [vmem:[%s0 + $0x78] sm:$0xf]
    %v126 = vld [vmem:[%s0 + $0x7c] sm:$0xf]
    %v127 = vld [vmem:[%s0 + $0x80] sm:$0xf]
    %v128 = vld [vmem:[%s0 + $0x84] sm:$0xf]
    %v129 = vld [vmem:[%s0 + $0x88] sm:$0xf]
    %v130 = vld [vmem:[%s0 + $0x8c] sm:$0xf]
    %v131 = vld [vmem:[%s0 + $0x90] sm:$0xf]
    %v132 = vld [vmem:[%s0 + $0x94] sm:$0xf]
    %v133 = vld [vmem:[%s0 + $0x98] sm:$0xf]
    %v134 = vld [vmem:[%s0 + $0x9c] sm:$0xf]
    %v135 = vld [vmem:[%s0 + $0xa0] sm:$0xf]
    %v136 = vld [vmem:[%s0 + $0xa4] sm:$0xf]
    %v137 = vld [vmem:[%s0 + $0xa8] sm:$0xf]
    %v138 = vld [vmem:[%s0 + $0xac] sm:$0xf]
    %v139 = vld [vmem:[%s0 + $0xb0] sm:$0xf]
    %v140 = vld [vmem:[%s0 + $0xb4] sm:$0xf]
    %v141 = vld [vmem:[%s0 + $0xb8] sm:$0xf]
    %v142 = vld [vmem:[%s0 + $0xbc] sm:$0xf]
    %v143 = vld [vmem:[%s0 + $0xc0] sm:$0xf]
    %v144 = vld [vmem:[%s0 + $0xc4] sm:$0xf]
    %v145 = vld [vmem:[%s0 + $0xc8] sm:$0xf]
    %v146 = vld [vmem:[%s0 + $0xcc] sm:$0xf]
    %v147 = vld [vmem:[%s0 + $0xd0] sm:$0xf]
    %v148 = vld [vmem:[%s0 + $0xd4] sm:$0xf]
    %v149 = vld [vmem:[%s0 + $0xd8] sm:$0xf]
    %v150 = vld [vmem:[%s0 + $0xdc] sm:$0xf]
    %v151 = vld [vmem:[%s0 + $0xe0] sm:$0xf]
    %v152 = vld [vmem:[%s0 + $0xe4] sm:$0xf]
    %v153 = vld [vmem:[%s0 + $0xe8] sm:$0xf]
    %v154 = vld [vmem:[%s0 + $0xec] sm:$0xf]
    %v155 = vld [vmem:[%s0 + $0xf0] sm:$0xf]
    %v156 = vld [vmem:[%s0 + $0xf4] sm:$0xf]
    %v157 = vld [vmem:[%s0 + $0xf8] sm:$0xf]
    %v158 = vld [vmem:[%s0 + $0xfc] sm:$0xf]
    %v159 = vld [vmem:[%s1] sm:$0xf]
    %v160 = vld [vmem:[%s1 + $0x4] sm:$0xf]
    %v161 = vld [vmem:[%s1 + $0x8] sm:$0xf]
    %v162 = vld [vmem:[%s1 + $0xc] sm:$0xf]
    %v227 = vunpack.c.l.b16 %v95
    %v228 = vunpack.c.l.b16 %v96
    %v229 = vunpack.c.l.b16 %v97
    %v230 = vunpack.c.l.b16 %v98
    %v231 = vunpack.c.l.b16 %v99
    %v232 = vunpack.c.l.b16 %v100
    %v233 = vunpack.c.l.b16 %v101
    %v234 = vunpack.c.l.b16 %v102
    %v235 = vunpack.c.l.b16 %v103
    %v236 = vunpack.c.l.b16 %v104
    %v237 = vunpack.c.l.b16 %v105
    %v238 = vunpack.c.l.b16 %v106
    %v239 = vunpack.c.l.b16 %v107
    %v240 = vunpack.c.l.b16 %v108
    %v241 = vunpack.c.l.b16 %v109
    %v242 = vunpack.c.l.b16 %v110
    %v243 = vunpack.c.l.b16 %v111
    %v244 = vunpack.c.l.b16 %v112
    %v245 = vunpack.c.l.b16 %v113
    %v246 = vunpack.c.l.b16 %v114
    %v247 = vunpack.c.l.b16 %v115
    %v248 = vunpack.c.l.b16 %v116
    %v249 = vunpack.c.l.b16 %v117
    %v250 = vunpack.c.l.b16 %v118
    %v251 = vunpack.c.l.b16 %v119
    %v252 = vunpack.c.l.b16 %v120
    %v253 = vunpack.c.l.b16 %v121
    %v254 = vunpack.c.l.b16 %v122
    %v255 = vunpack.c.l.b16 %v123
    %v256 = vunpack.c.l.b16 %v124
    %v257 = vunpack.c.l.b16 %v125
    %v258 = vunpack.c.l.b16 %v126
    %v259 = vunpack.c.l.b16 %v127
    %v260 = vunpack.c.l.b16 %v128
    %v261 = vunpack.c.l.b16 %v129
    %v262 = vunpack.c.l.b16 %v130
    %v263 = vunpack.c.l.b16 %v131
    %v264 = vunpack.c.l.b16 %v132
    %v265 = vunpack.c.l.b16 %v133
    %v266 = vunpack.c.l.b16 %v134
    %v267 = vunpack.c.l.b16 %v135
    %v268 = vunpack.c.l.b16 %v136
    %v269 = vunpack.c.l.b16 %v137
    %v270 = vunpack.c.l.b16 %v138
    %v271 = vunpack.c.l.b16 %v139
    %v272 = vunpack.c.l.b16 %v140
    %v273 = vunpack.c.l.b16 %v141
    %v274 = vunpack.c.l.b16 %v142
    %v275 = vunpack.c.l.b16 %v143
    %v276 = vunpack.c.l.b16 %v144
    %v277 = vunpack.c.l.b16 %v145
    %v278 = vunpack.c.l.b16 %v146
    %v279 = vunpack.c.l.b16 %v147
    %v280 = vunpack.c.l.b16 %v148
    %v281 = vunpack.c.l.b16 %v149
    %v282 = vunpack.c.l.b16 %v150
    %v283 = vunpack.c.l.b16 %v151
    %v284 = vunpack.c.l.b16 %v152
    %v285 = vunpack.c.l.b16 %v153
    %v286 = vunpack.c.l.b16 %v154
    %v287 = vunpack.c.l.b16 %v155
    %v288 = vunpack.c.l.b16 %v156
    %v289 = vunpack.c.l.b16 %v157
    %v290 = vunpack.c.l.b16 %v158
    %v291 = vpack.c.b16 %v228, %v227
    %v292 = vpack.c.b16 %v230, %v229
    %v293 = vpack.c.b16 %v232, %v231
    %v294 = vpack.c.b16 %v234, %v233
    %v295 = vpack.c.b16 %v236, %v235
    %v296 = vpack.c.b16 %v238, %v237
    %v297 = vpack.c.b16 %v240, %v239
    %v298 = vpack.c.b16 %v242, %v241
    %v299 = vpack.c.b16 %v244, %v243
    %v300 = vpack.c.b16 %v246, %v245
    %v301 = vpack.c.b16 %v248, %v247
    %v302 = vpack.c.b16 %v250, %v249
    %v303 = vpack.c.b16 %v252, %v251
    %v304 = vpack.c.b16 %v254, %v253
    %v305 = vpack.c.b16 %v256, %v255
    %v306 = vpack.c.b16 %v258, %v257
    %v307 = vpack.c.b16 %v260, %v259
    %v308 = vpack.c.b16 %v262, %v261
    %v309 = vpack.c.b16 %v264, %v263
    %v310 = vpack.c.b16 %v266, %v265
    %v311 = vpack.c.b16 %v268, %v267
    %v312 = vpack.c.b16 %v270, %v269
    %v313 = vpack.c.b16 %v272, %v271
    %v314 = vpack.c.b16 %v274, %v273
    %v315 = vpack.c.b16 %v276, %v275
    %v316 = vpack.c.b16 %v278, %v277
    %v317 = vpack.c.b16 %v280, %v279
    %v318 = vpack.c.b16 %v282, %v281
    %v319 = vpack.c.b16 %v284, %v283
    %v320 = vpack.c.b16 %v286, %v285
    %v321 = vpack.c.b16 %v288, %v287
    %v322 = vpack.c.b16 %v290, %v289
    %v327 = vunpack.c.l.b16 %v159
    %v328 = vunpack.c.l.b16 %v160
    %v329 = vunpack.c.l.b16 %v161
    %v330 = vunpack.c.l.b16 %v162
    %v331 = vpack.c.b16 %v328, %v327
    %v332 = vpack.c.b16 %v330, %v329
    %v336 = vsel %vm81, %v291, 0
    %v339 = vsel %vm81, %v292, 0
    %v342 = vsel %vm81, %v293, 0
    %v345 = vsel %vm81, %v294, 0
    %v348 = vsel %vm81, %v295, 0
    %v351 = vsel %vm81, %v296, 0
    %v354 = vsel %vm81, %v297, 0
    %v357 = vsel %vm81, %v298, 0
    %v360 = vsel %vm81, %v299, 0
    %v363 = vsel %vm81, %v300, 0
    %v366 = vsel %vm81, %v301, 0
    %v369 = vsel %vm81, %v302, 0
    %v372 = vsel %vm81, %v303, 0
    %v375 = vsel %vm81, %v304, 0
    %v378 = vsel %vm81, %v305, 0
    %v381 = vsel %vm81, %v306, 0
    %v384 = vsel %vm81, %v307, 0
    %v387 = vsel %vm81, %v308, 0
    %v390 = vsel %vm81, %v309, 0
    %v393 = vsel %vm81, %v310, 0
    %v396 = vsel %vm81, %v311, 0
    %v399 = vsel %vm81, %v312, 0
    %v402 = vsel %vm81, %v313, 0
    %v405 = vsel %vm81, %v314, 0
    %v408 = vsel %vm81, %v315, 0
    %v411 = vsel %vm81, %v316, 0
    %v414 = vsel %vm81, %v317, 0
    %v417 = vsel %vm81, %v318, 0
    %v420 = vsel %vm81, %v319, 0
    %v423 = vsel %vm81, %v320, 0
    %v426 = vsel %vm81, %v321, 0
    %v429 = vsel %vm81, %v322, 0
    %431 = vmatprep.subr.bf16.mxu0 0
    %432 = vmatpush1.bf16.msra.mxu0 %v331
    %433 = vmatprep.subr.bf16.mxu0 0
    %434 = vmatpush1.bf16.msra.mxu0 %v332
    %435 = vmatprep.subr.bf16.mxu0 0
    %436 = vmatpush1.bf16.msra.mxu0 0
    %437 = vmatprep.subr.bf16.mxu0 0
    %438 = vmatpush1.bf16.msra.mxu0 0
    %439 = vmatprep.subr.bf16.mxu0 0
    %440 = vmatpush1.bf16.msra.mxu0 0
    %441 = vmatprep.subr.bf16.mxu0 0
    %442 = vmatpush1.bf16.msra.mxu0 0
    %443 = vmatprep.subr.bf16.mxu0 0
    %444 = vmatpush1.bf16.msra.mxu0 0
    %445 = vmatprep.subr.bf16.mxu0 0
    %446 = vmatpush1.bf16.msra.mxu0 0
    %447 = vmatprep.subr.bf16.mxu0 0
    %448 = vmatpush1.bf16.msra.mxu0 0
    %449 = vmatprep.subr.bf16.mxu0 0
    %450 = vmatpush1.bf16.msra.mxu0 0
    %451 = vmatprep.subr.bf16.mxu0 0
    %452 = vmatpush1.bf16.msra.mxu0 0
    %453 = vmatprep.subr.bf16.mxu0 0
    %454 = vmatpush1.bf16.msra.mxu0 0
    %455 = vmatprep.subr.bf16.mxu0 0
    %456 = vmatpush1.bf16.msra.mxu0 0
    %457 = vmatprep.subr.bf16.mxu0 0
    %458 = vmatpush1.bf16.msra.mxu0 0
    %459 = vmatprep.subr.bf16.mxu0 0
    %460 = vmatpush1.bf16.msra.mxu0 0
    %461 = vmatprep.subr.bf16.mxu0 0
    %462 = vmatpush1.bf16.msra.mxu0 0
    %463 = vmatprep.mubr.bf16.mxu0 0
    %464 = vmatmul.mubr.bf16.gmra.mrb[0].mxu0 %v336
    %v465 = vpop.f32.mrb[0].mxu0
    %v466 = vadd.f32 0.0, %v465
    %v467 = vpop.f32.mrb[0].mxu0
    %v468 = vpop.f32.mrb[0].mxu0
    %v469 = vadd.f32 0.0, %v468
    %v470 = vpop.f32.mrb[0].mxu0
    %471 = vmatprep.mubr.bf16.mxu0 0
    %472 = vmatmul.mubr.bf16.gmra.mrb[0].mxu0 %v339
    %v473 = vpop.f32.mrb[0].mxu0
    %v474 = vadd.f32 0.0, %v473
    %v475 = vpop.f32.mrb[0].mxu0
    %v476 = vpop.f32.mrb[0].mxu0
    %v477 = vadd.f32 0.0, %v476
    %v478 = vpop.f32.mrb[0].mxu0
    %479 = vmatprep.mubr.bf16.mxu0 0
    %480 = vmatmul.mubr.bf16.gmra.mrb[0].mxu0 %v342
    %v481 = vpop.f32.mrb[0].mxu0
    %v482 = vadd.f32 0.0, %v481
    %v483 = vpop.f32.mrb[0].mxu0
    %v484 = vpop.f32.mrb[0].mxu0
    %v485 = vadd.f32 0.0, %v484
    %v486 = vpop.f32.mrb[0].mxu0
    %487 = vmatprep.mubr.bf16.mxu0 0
    %488 = vmatmul.mubr.bf16.gmra.mrb[0].mxu0 %v345
    %v489 = vpop.f32.mrb[0].mxu0
    %v490 = vadd.f32 0.0, %v489
    %v491 = vpop.f32.mrb[0].mxu0
    %v492 = vpop.f32.mrb[0].mxu0
    %v493 = vadd.f32 0.0, %v492
    %v494 = vpop.f32.mrb[0].mxu0
    %495 = vmatprep.mubr.bf16.mxu0 0
    %496 = vmatmul.mubr.bf16.gmra.mrb[0].mxu0 %v348
    %v497 = vpop.f32.mrb[0].mxu0
    %v498 = vadd.f32 0.0, %v497
    %v499 = vpop.f32.mrb[0].mxu0
    %v500 = vpop.f32.mrb[0].mxu0
    %v501 = vadd.f32 0.0, %v500
    %v502 = vpop.f32.mrb[0].mxu0
    %503 = vmatprep.mubr.bf16.mxu0 0
    %504 = vmatmul.mubr.bf16.gmra.mrb[0].mxu0 %v351
    %v505 = vpop.f32.mrb[0].mxu0
    %v506 = vadd.f32 0.0, %v505
    %v507 = vpop.f32.mrb[0].mxu0
    %v508 = vpop.f32.mrb[0].mxu0
    %v509 = vadd.f32 0.0, %v508
    %v510 = vpop.f32.mrb[0].mxu0
    %511 = vmatprep.mubr.bf16.mxu0 0
    %512 = vmatmul.mubr.bf16.gmra.mrb[0].mxu0 %v354
    %v513 = vpop.f32.mrb[0].mxu0
    %v514 = vadd.f32 0.0, %v513
    %v515 = vpop.f32.mrb[0].mxu0
    %v516 = vpop.f32.mrb[0].mxu0
    %v517 = vadd.f32 0.0, %v516
    %v518 = vpop.f32.mrb[0].mxu0
    %519 = vmatprep.mubr.bf16.mxu0 0
    %520 = vmatmul.mubr.bf16.gmra.mrb[0].mxu0 %v357
    %v521 = vpop.f32.mrb[0].mxu0
    %v522 = vadd.f32 0.0, %v521
    %v523 = vpop.f32.mrb[0].mxu0
    %v524 = vpop.f32.mrb[0].mxu0
    %v525 = vadd.f32 0.0, %v524
    %v526 = vpop.f32.mrb[0].mxu0
    %527 = vmatprep.mubr.bf16.mxu0 0
    %528 = vmatmul.mubr.bf16.gmra.mrb[0].mxu0 %v360
    %v529 = vpop.f32.mrb[0].mxu0
    %v530 = vadd.f32 0.0, %v529
    %v531 = vpop.f32.mrb[0].mxu0
    %v532 = vpop.f32.mrb[0].mxu0
    %v533 = vadd.f32 0.0, %v532
    %v534 = vpop.f32.mrb[0].mxu0
    %535 = vmatprep.mubr.bf16.mxu0 0
    %536 = vmatmul.mubr.bf16.gmra.mrb[0].mxu0 %v363
    %v537 = vpop.f32.mrb[0].mxu0
    %v538 = vadd.f32 0.0, %v537
    %v539 = vpop.f32.mrb[0].mxu0
    %v540 = vpop.f32.mrb[0].mxu0
    %v541 = vadd.f32 0.0, %v540
    %v542 = vpop.f32.mrb[0].mxu0
    %543 = vmatprep.mubr.bf16.mxu0 0
    %544 = vmatmul.mubr.bf16.gmra.mrb[0].mxu0 %v366
    %v545 = vpop.f32.mrb[0].mxu0
    %v546 = vadd.f32 0.0, %v545
    %v547 = vpop.f32.mrb[0].mxu0
    %v548 = vpop.f32.mrb[0].mxu0
    %v549 = vadd.f32 0.0, %v548
    %v550 = vpop.f32.mrb[0].mxu0
    %551 = vmatprep.mubr.bf16.mxu0 0
    %552 = vmatmul.mubr.bf16.gmra.mrb[0].mxu0 %v369
    %v553 = vpop.f32.mrb[0].mxu0
    %v554 = vadd.f32 0.0, %v553
    %v555 = vpop.f32.mrb[0].mxu0
    %v556 = vpop.f32.mrb[0].mxu0
    %v557 = vadd.f32 0.0, %v556
    %v558 = vpop.f32.mrb[0].mxu0
    %559 = vmatprep.mubr.bf16.mxu0 0
    %560 = vmatmul.mubr.bf16.gmra.mrb[0].mxu0 %v372
    %v561 = vpop.f32.mrb[0].mxu0
    %v562 = vadd.f32 0.0, %v561
    %v563 = vpop.f32.mrb[0].mxu0
    %v564 = vpop.f32.mrb[0].mxu0
    %v565 = vadd.f32 0.0, %v564
    %v566 = vpop.f32.mrb[0].mxu0
    %567 = vmatprep.mubr.bf16.mxu0 0
    %568 = vmatmul.mubr.bf16.gmra.mrb[0].mxu0 %v375
    %v569 = vpop.f32.mrb[0].mxu0
    %v570 = vadd.f32 0.0, %v569
    %v571 = vpop.f32.mrb[0].mxu0
    %v572 = vpop.f32.mrb[0].mxu0
    %v573 = vadd.f32 0.0, %v572
    %v574 = vpop.f32.mrb[0].mxu0
    %575 = vmatprep.mubr.bf16.mxu0 0
    %576 = vmatmul.mubr.bf16.gmra.mrb[0].mxu0 %v378
    %v577 = vpop.f32.mrb[0].mxu0
    %v578 = vadd.f32 0.0, %v577
    %v579 = vpop.f32.mrb[0].mxu0
    %v580 = vpop.f32.mrb[0].mxu0
    %v581 = vadd.f32 0.0, %v580
    %v582 = vpop.f32.mrb[0].mxu0
    %583 = vmatprep.mubr.bf16.mxu0 0
    %584 = vmatmul.mubr.bf16.gmra.mrb[0].mxu0 %v381
    %v585 = vpop.f32.mrb[0].mxu0
    %v586 = vadd.f32 0.0, %v585
    %v587 = vpop.f32.mrb[0].mxu0
    %v588 = vpop.f32.mrb[0].mxu0
    %v589 = vadd.f32 0.0, %v588
    %v590 = vpop.f32.mrb[0].mxu0
    %591 = vmatprep.mubr.bf16.mxu0 0
    %592 = vmatmul.mubr.bf16.gmra.mrb[0].mxu0 %v384
    %v593 = vpop.f32.mrb[0].mxu0
    %v594 = vadd.f32 0.0, %v593
    %v595 = vpop.f32.mrb[0].mxu0
    %v596 = vpop.f32.mrb[0].mxu0
    %v597 = vadd.f32 0.0, %v596
    %v598 = vpop.f32.mrb[0].mxu0
    %599 = vmatprep.mubr.bf16.mxu0 0
    %600 = vmatmul.mubr.bf16.gmra.mrb[0].mxu0 %v387
    %v601 = vpop.f32.mrb[0].mxu0
    %v602 = vadd.f32 0.0, %v601
    %v603 = vpop.f32.mrb[0].mxu0
    %v604 = vpop.f32.mrb[0].mxu0
    %v605 = vadd.f32 0.0, %v604
    %v606 = vpop.f32.mrb[0].mxu0
    %607 = vmatprep.mubr.bf16.mxu0 0
    %608 = vmatmul.mubr.bf16.gmra.mrb[0].mxu0 %v390
    %v609 = vpop.f32.mrb[0].mxu0
    %v610 = vadd.f32 0.0, %v609
    %v611 = vpop.f32.mrb[0].mxu0
    %v612 = vpop.f32.mrb[0].mxu0
    %v613 = vadd.f32 0.0, %v612
    %v614 = vpop.f32.mrb[0].mxu0
    %615 = vmatprep.mubr.bf16.mxu0 0
    %616 = vmatmul.mubr.bf16.gmra.mrb[0].mxu0 %v393
    %v617 = vpop.f32.mrb[0].mxu0
    %v618 = vadd.f32 0.0, %v617
    %v619 = vpop.f32.mrb[0].mxu0
    %v620 = vpop.f32.mrb[0].mxu0
    %v621 = vadd.f32 0.0, %v620
    %v622 = vpop.f32.mrb[0].mxu0
    %623 = vmatprep.mubr.bf16.mxu0 0
    %624 = vmatmul.mubr.bf16.gmra.mrb[0].mxu0 %v396
    %v625 = vpop.f32.mrb[0].mxu0
    %v626 = vadd.f32 0.0, %v625
    %v627 = vpop.f32.mrb[0].mxu0
    %v628 = vpop.f32.mrb[0].mxu0
    %v629 = vadd.f32 0.0, %v628
    %v630 = vpop.f32.mrb[0].mxu0
    %631 = vmatprep.mubr.bf16.mxu0 0
    %632 = vmatmul.mubr.bf16.gmra.mrb[0].mxu0 %v399
    %v633 = vpop.f32.mrb[0].mxu0
    %v634 = vadd.f32 0.0, %v633
    %v635 = vpop.f32.mrb[0].mxu0
    %v636 = vpop.f32.mrb[0].mxu0
    %v637 = vadd.f32 0.0, %v636
    %v638 = vpop.f32.mrb[0].mxu0
    %639 = vmatprep.mubr.bf16.mxu0 0
    %640 = vmatmul.mubr.bf16.gmra.mrb[0].mxu0 %v402
    %v641 = vpop.f32.mrb[0].mxu0
    %v642 = vadd.f32 0.0, %v641
    %v643 = vpop.f32.mrb[0].mxu0
    %v644 = vpop.f32.mrb[0].mxu0
    %v645 = vadd.f32 0.0, %v644
    %v646 = vpop.f32.mrb[0].mxu0
    %647 = vmatprep.mubr.bf16.mxu0 0
    %648 = vmatmul.mubr.bf16.gmra.mrb[0].mxu0 %v405
    %v649 = vpop.f32.mrb[0].mxu0
    %v650 = vadd.f32 0.0, %v649
    %v651 = vpop.f32.mrb[0].mxu0
    %v652 = vpop.f32.mrb[0].mxu0
    %v653 = vadd.f32 0.0, %v652
    %v654 = vpop.f32.mrb[0].mxu0
    %655 = vmatprep.mubr.bf16.mxu0 0
    %656 = vmatmul.mubr.bf16.gmra.mrb[0].mxu0 %v408
    %v657 = vpop.f32.mrb[0].mxu0
    %v658 = vadd.f32 0.0, %v657
    %v659 = vpop.f32.mrb[0].mxu0
    %v660 = vpop.f32.mrb[0].mxu0
    %v661 = vadd.f32 0.0, %v660
    %v662 = vpop.f32.mrb[0].mxu0
    %663 = vmatprep.mubr.bf16.mxu0 0
    %664 = vmatmul.mubr.bf16.gmra.mrb[0].mxu0 %v411
    %v665 = vpop.f32.mrb[0].mxu0
    %v666 = vadd.f32 0.0, %v665
    %v667 = vpop.f32.mrb[0].mxu0
    %v668 = vpop.f32.mrb[0].mxu0
    %v669 = vadd.f32 0.0, %v668
    %v670 = vpop.f32.mrb[0].mxu0
    %671 = vmatprep.mubr.bf16.mxu0 0
    %672 = vmatmul.mubr.bf16.gmra.mrb[0].mxu0 %v414
    %v673 = vpop.f32.mrb[0].mxu0
    %v674 = vadd.f32 0.0, %v673
    %v675 = vpop.f32.mrb[0].mxu0
    %v676 = vpop.f32.mrb[0].mxu0
    %v677 = vadd.f32 0.0, %v676
    %v678 = vpop.f32.mrb[0].mxu0
    %679 = vmatprep.mubr.bf16.mxu0 0
    %680 = vmatmul.mubr.bf16.gmra.mrb[0].mxu0 %v417
    %v681 = vpop.f32.mrb[0].mxu0
    %v682 = vadd.f32 0.0, %v681
    %v683 = vpop.f32.mrb[0].mxu0
    %v684 = vpop.f32.mrb[0].mxu0
    %v685 = vadd.f32 0.0, %v684
    %v686 = vpop.f32.mrb[0].mxu0
    %687 = vmatprep.mubr.bf16.mxu0 0
    %688 = vmatmul.mubr.bf16.gmra.mrb[0].mxu0 %v420
    %v689 = vpop.f32.mrb[0].mxu0
    %v690 = vadd.f32 0.0, %v689
    %v691 = vpop.f32.mrb[0].mxu0
    %v692 = vpop.f32.mrb[0].mxu0
    %v693 = vadd.f32 0.0, %v692
    %v694 = vpop.f32.mrb[0].mxu0
    %695 = vmatprep.mubr.bf16.mxu0 0
    %696 = vmatmul.mubr.bf16.gmra.mrb[0].mxu0 %v423
    %v697 = vpop.f32.mrb[0].mxu0
    %v698 = vadd.f32 0.0, %v697
    %v699 = vpop.f32.mrb[0].mxu0
    %v700 = vpop.f32.mrb[0].mxu0
    %v701 = vadd.f32 0.0, %v700
    %v702 = vpop.f32.mrb[0].mxu0
    %703 = vmatprep.mubr.bf16.mxu0 0
    %704 = vmatmul.mubr.bf16.gmra.mrb[0].mxu0 %v426
    %v705 = vpop.f32.mrb[0].mxu0
    %v706 = vadd.f32 0.0, %v705
    %v707 = vpop.f32.mrb[0].mxu0
    %v708 = vpop.f32.mrb[0].mxu0
    %v709 = vadd.f32 0.0, %v708
    %v710 = vpop.f32.mrb[0].mxu0
    %711 = vmatprep.mubr.bf16.mxu0 0
    %712 = vmatmul.mubr.bf16.gmra.mrb[0].mxu0 %v429
    %v713 = vpop.f32.mrb[0].mxu0
    %v714 = vadd.f32 0.0, %v713
    %v715 = vpop.f32.mrb[0].mxu0
    %v716 = vpop.f32.mrb[0].mxu0
    %v717 = vadd.f32 0.0, %v716
    %v718 = vpop.f32.mrb[0].mxu0
    %719 = vdwg.mxu0
    %v720 = vld [vmem:[%s2] sm:$0x1]
    %v722 = vlaneseq
    %v723 = vshrl.u32 %v722, 7
    %v724 = vsub.s32 0, %v723
    %v725 = vrot.slane %v720, %v724
    %v727 = vmul.f32 %v466, %v725
    %v728 = vmul.f32 %v469, %v725
    %v729 = vmul.f32 %v474, %v725
    %v730 = vmul.f32 %v477, %v725
    %v731 = vmul.f32 %v482, %v725
    %v732 = vmul.f32 %v485, %v725
    %v733 = vmul.f32 %v490, %v725
    %v734 = vmul.f32 %v493, %v725
    %v735 = vmul.f32 %v498, %v725
    %v736 = vmul.f32 %v501, %v725
    %v737 = vmul.f32 %v506, %v725
    %v738 = vmul.f32 %v509, %v725
    %v739 = vmul.f32 %v514, %v725
    %v740 = vmul.f32 %v517, %v725
    %v741 = vmul.f32 %v522, %v725
    %v742 = vmul.f32 %v525, %v725
    %v743 = vmul.f32 %v530, %v725
    %v744 = vmul.f32 %v533, %v725
    %v745 = vmul.f32 %v538, %v725
    %v746 = vmul.f32 %v541, %v725
    %v747 = vmul.f32 %v546, %v725
    %v748 = vmul.f32 %v549, %v725
    %v749 = vmul.f32 %v554, %v725
    %v750 = vmul.f32 %v557, %v725
    %v751 = vmul.f32 %v562, %v725
    %v752 = vmul.f32 %v565, %v725
    %v753 = vmul.f32 %v570, %v725
    %v754 = vmul.f32 %v573, %v725
    %v755 = vmul.f32 %v578, %v725
    %v756 = vmul.f32 %v581, %v725
    %v757 = vmul.f32 %v586, %v725
    %v758 = vmul.f32 %v589, %v725
    %v759 = vmul.f32 %v594, %v725
    %v760 = vmul.f32 %v597, %v725
    %v761 = vmul.f32 %v602, %v725
    %v762 = vmul.f32 %v605, %v725
    %v763 = vmul.f32 %v610, %v725
    %v764 = vmul.f32 %v613, %v725
    %v765 = vmul.f32 %v618, %v725
    %v766 = vmul.f32 %v621, %v725
    %v767 = vmul.f32 %v626, %v725
    %v768 = vmul.f32 %v629, %v725
    %v769 = vmul.f32 %v634, %v725
    %v770 = vmul.f32 %v637, %v725
    %v771 = vmul.f32 %v642, %v725
    %v772 = vmul.f32 %v645, %v725
    %v773 = vmul.f32 %v650, %v725
    %v774 = vmul.f32 %v653, %v725
    %v775 = vmul.f32 %v658, %v725
    %v776 = vmul.f32 %v661, %v725
    %v777 = vmul.f32 %v666, %v725
    %v778 = vmul.f32 %v669, %v725
    %v779 = vmul.f32 %v674, %v725
    %v780 = vmul.f32 %v677, %v725
    %v781 = vmul.f32 %v682, %v725
    %v782 = vmul.f32 %v685, %v725
    %v783 = vmul.f32 %v690, %v725
    %v784 = vmul.f32 %v693, %v725
    %v785 = vmul.f32 %v698, %v725
    %v786 = vmul.f32 %v701, %v725
    %v787 = vmul.f32 %v706, %v725
    %v788 = vmul.f32 %v709, %v725
    %v789 = vmul.f32 %v714, %v725
    %v790 = vmul.f32 %v717, %v725
    %v791 = vld [vmem:[%s3] sm:$0x1]
    %v793 = vlaneseq
    %v794 = vshrl.u32 %v793, 7
    %v795 = vsub.s32 0, %v794
    %v796 = vrot.slane %v791, %v795
    %v798 = vadd.f32 %v727, %v796
    %v799 = vadd.f32 %v728, %v796
    %v800 = vadd.f32 %v729, %v796
    %v801 = vadd.f32 %v730, %v796
    %v802 = vadd.f32 %v731, %v796
    %v803 = vadd.f32 %v732, %v796
    %v804 = vadd.f32 %v733, %v796
    %v805 = vadd.f32 %v734, %v796
    %v806 = vadd.f32 %v735, %v796
    %v807 = vadd.f32 %v736, %v796
    %v808 = vadd.f32 %v737, %v796
    %v809 = vadd.f32 %v738, %v796
    %v810 = vadd.f32 %v739, %v796
    %v811 = vadd.f32 %v740, %v796
    %v812 = vadd.f32 %v741, %v796
    %v813 = vadd.f32 %v742, %v796
    %v814 = vadd.f32 %v743, %v796
    %v815 = vadd.f32 %v744, %v796
    %v816 = vadd.f32 %v745, %v796
    %v817 = vadd.f32 %v746, %v796
    %v818 = vadd.f32 %v747, %v796
    %v819 = vadd.f32 %v748, %v796
    %v820 = vadd.f32 %v749, %v796
    %v821 = vadd.f32 %v750, %v796
    %v822 = vadd.f32 %v751, %v796
    %v823 = vadd.f32 %v752, %v796
    %v824 = vadd.f32 %v753, %v796
    %v825 = vadd.f32 %v754, %v796
    %v826 = vadd.f32 %v755, %v796
    %v827 = vadd.f32 %v756, %v796
    %v828 = vadd.f32 %v757, %v796
    %v829 = vadd.f32 %v758, %v796
    %v830 = vadd.f32 %v759, %v796
    %v831 = vadd.f32 %v760, %v796
    %v832 = vadd.f32 %v761, %v796
    %v833 = vadd.f32 %v762, %v796
    %v834 = vadd.f32 %v763, %v796
    %v835 = vadd.f32 %v764, %v796
    %v836 = vadd.f32 %v765, %v796
    %v837 = vadd.f32 %v766, %v796
    %v838 = vadd.f32 %v767, %v796
    %v839 = vadd.f32 %v768, %v796
    %v840 = vadd.f32 %v769, %v796
    %v841 = vadd.f32 %v770, %v796
    %v842 = vadd.f32 %v771, %v796
    %v843 = vadd.f32 %v772, %v796
    %v844 = vadd.f32 %v773, %v796
    %v845 = vadd.f32 %v774, %v796
    %v846 = vadd.f32 %v775, %v796
    %v847 = vadd.f32 %v776, %v796
    %v848 = vadd.f32 %v777, %v796
    %v849 = vadd.f32 %v778, %v796
    %v850 = vadd.f32 %v779, %v796
    %v851 = vadd.f32 %v780, %v796
    %v852 = vadd.f32 %v781, %v796
    %v853 = vadd.f32 %v782, %v796
    %v854 = vadd.f32 %v783, %v796
    %v855 = vadd.f32 %v784, %v796
    %v856 = vadd.f32 %v785, %v796
    %v857 = vadd.f32 %v786, %v796
    %v858 = vadd.f32 %v787, %v796
    %v859 = vadd.f32 %v788, %v796
    %v860 = vadd.f32 %v789, %v796
    %v861 = vadd.f32 %v790, %v796
    %v862 = vmax.f32 %v798, 0.0
    %v863 = vmax.f32 %v799, 0.0
    %v864 = vmax.f32 %v800, 0.0
    %v865 = vmax.f32 %v801, 0.0
    %v866 = vmax.f32 %v802, 0.0
    %v867 = vmax.f32 %v803, 0.0
    %v868 = vmax.f32 %v804, 0.0
    %v869 = vmax.f32 %v805, 0.0
    %v870 = vmax.f32 %v806, 0.0
    %v871 = vmax.f32 %v807, 0.0
    %v872 = vmax.f32 %v808, 0.0
    %v873 = vmax.f32 %v809, 0.0
    %v874 = vmax.f32 %v810, 0.0
    %v875 = vmax.f32 %v811, 0.0
    %v876 = vmax.f32 %v812, 0.0
    %v877 = vmax.f32 %v813, 0.0
    %v878 = vmax.f32 %v814, 0.0
    %v879 = vmax.f32 %v815, 0.0
    %v880 = vmax.f32 %v816, 0.0
    %v881 = vmax.f32 %v817, 0.0
    %v882 = vmax.f32 %v818, 0.0
    %v883 = vmax.f32 %v819, 0.0
    %v884 = vmax.f32 %v820, 0.0
    %v885 = vmax.f32 %v821, 0.0
    %v886 = vmax.f32 %v822, 0.0
    %v887 = vmax.f32 %v823, 0.0
    %v888 = vmax.f32 %v824, 0.0
    %v889 = vmax.f32 %v825, 0.0
    %v890 = vmax.f32 %v826, 0.0
    %v891 = vmax.f32 %v827, 0.0
    %v892 = vmax.f32 %v828, 0.0
    %v893 = vmax.f32 %v829, 0.0
    %v894 = vmax.f32 %v830, 0.0
    %v895 = vmax.f32 %v831, 0.0
    %v896 = vmax.f32 %v832, 0.0
    %v897 = vmax.f32 %v833, 0.0
    %v898 = vmax.f32 %v834, 0.0
    %v899 = vmax.f32 %v835, 0.0
    %v900 = vmax.f32 %v836, 0.0
    %v901 = vmax.f32 %v837, 0.0
    %v902 = vmax.f32 %v838, 0.0
    %v903 = vmax.f32 %v839, 0.0
    %v904 = vmax.f32 %v840, 0.0
    %v905 = vmax.f32 %v841, 0.0
    %v906 = vmax.f32 %v842, 0.0
    %v907 = vmax.f32 %v843, 0.0
    %v908 = vmax.f32 %v844, 0.0
    %v909 = vmax.f32 %v845, 0.0
    %v910 = vmax.f32 %v846, 0.0
    %v911 = vmax.f32 %v847, 0.0
    %v912 = vmax.f32 %v848, 0.0
    %v913 = vmax.f32 %v849, 0.0
    %v914 = vmax.f32 %v850, 0.0
    %v915 = vmax.f32 %v851, 0.0
    %v916 = vmax.f32 %v852, 0.0
    %v917 = vmax.f32 %v853, 0.0
    %v918 = vmax.f32 %v854, 0.0
    %v919 = vmax.f32 %v855, 0.0
    %v920 = vmax.f32 %v856, 0.0
    %v921 = vmax.f32 %v857, 0.0
    %v922 = vmax.f32 %v858, 0.0
    %v923 = vmax.f32 %v859, 0.0
    %v924 = vmax.f32 %v860, 0.0
    %v925 = vmax.f32 %v861, 0.0
    %v926 = vmax.f32 %v862, %v866
    %v927 = vmax.f32 %v863, %v867
    %v928 = vmax.f32 %v864, %v868
    %v929 = vmax.f32 %v865, %v869
    %v931 = vrot.slane %v926, 2
    %v933 = vmax.f32 %v926, %v931
    %v935 = vrot.slane %v927, 2
    %v937 = vmax.f32 %v927, %v935
    %v939 = vrot.slane %v928, 2
    %v941 = vmax.f32 %v928, %v939
    %v943 = vrot.slane %v929, 2
    %v945 = vmax.f32 %v929, %v943
    %v946 = vmax.f32 %v870, %v874
    %v947 = vmax.f32 %v871, %v875
    %v948 = vmax.f32 %v872, %v876
    %v949 = vmax.f32 %v873, %v877
    %v951 = vrot.slane %v946, 2
    %v953 = vmax.f32 %v946, %v951
    %v955 = vrot.slane %v947, 2
    %v957 = vmax.f32 %v947, %v955
    %v959 = vrot.slane %v948, 2
    %v961 = vmax.f32 %v948, %v959
    %v963 = vrot.slane %v949, 2
    %v965 = vmax.f32 %v949, %v963
    %v966 = vmax.f32 %v878, %v882
    %v967 = vmax.f32 %v879, %v883
    %v968 = vmax.f32 %v880, %v884
    %v969 = vmax.f32 %v881, %v885
    %v971 = vrot.slane %v966, 2
    %v973 = vmax.f32 %v966, %v971
    %v975 = vrot.slane %v967, 2
    %v977 = vmax.f32 %v967, %v975
    %v979 = vrot.slane %v968, 2
    %v981 = vmax.f32 %v968, %v979
    %v983 = vrot.slane %v969, 2
    %v985 = vmax.f32 %v969, %v983
    %v986 = vmax.f32 %v886, %v890
    %v987 = vmax.f32 %v887, %v891
    %v988 = vmax.f32 %v888, %v892
    %v989 = vmax.f32 %v889, %v893
    %v991 = vrot.slane %v986, 2
    %v993 = vmax.f32 %v986, %v991
    %v995 = vrot.slane %v987, 2
    %v997 = vmax.f32 %v987, %v995
    %v999 = vrot.slane %v988, 2
    %v1001 = vmax.f32 %v988, %v999
    %v1003 = vrot.slane %v989, 2
    %v1005 = vmax.f32 %v989, %v1003
    %v1006 = vmax.f32 %v894, %v898
    %v1007 = vmax.f32 %v895, %v899
    %v1008 = vmax.f32 %v896, %v900
    %v1009 = vmax.f32 %v897, %v901
    %v1011 = vrot.slane %v1006, 2
    %v1013 = vmax.f32 %v1006, %v1011
    %v1015 = vrot.slane %v1007, 2
    %v1017 = vmax.f32 %v1007, %v1015
    %v1019 = vrot.slane %v1008, 2
    %v1021 = vmax.f32 %v1008, %v1019
    %v1023 = vrot.slane %v1009, 2
    %v1025 = vmax.f32 %v1009, %v1023
    %v1026 = vmax.f32 %v902, %v906
    %v1027 = vmax.f32 %v903, %v907
    %v1028 = vmax.f32 %v904, %v908
    %v1029 = vmax.f32 %v905, %v909
    %v1031 = vrot.slane %v1026, 2
    %v1033 = vmax.f32 %v1026, %v1031
    %v1035 = vrot.slane %v1027, 2
    %v1037 = vmax.f32 %v1027, %v1035
    %v1039 = vrot.slane %v1028, 2
    %v1041 = vmax.f32 %v1028, %v1039
    %v1043 = vrot.slane %v1029, 2
    %v1045 = vmax.f32 %v1029, %v1043
    %v1046 = vmax.f32 %v910, %v914
    %v1047 = vmax.f32 %v911, %v915
    %v1048 = vmax.f32 %v912, %v916
    %v1049 = vmax.f32 %v913, %v917
    %v1051 = vrot.slane %v1046, 2
    %v1053 = vmax.f32 %v1046, %v1051
    %v1055 = vrot.slane %v1047, 2
    %v1057 = vmax.f32 %v1047, %v1055
    %v1059 = vrot.slane %v1048, 2
    %v1061 = vmax.f32 %v1048, %v1059
    %v1063 = vrot.slane %v1049, 2
    %v1065 = vmax.f32 %v1049, %v1063
    %v1066 = vmax.f32 %v918, %v922
    %v1067 = vmax.f32 %v919, %v923
    %v1068 = vmax.f32 %v920, %v924
    %v1069 = vmax.f32 %v921, %v925
    %v1071 = vrot.slane %v1066, 2
    %v1073 = vmax.f32 %v1066, %v1071
    %v1075 = vrot.slane %v1067, 2
    %v1077 = vmax.f32 %v1067, %v1075
    %v1079 = vrot.slane %v1068, 2
    %v1081 = vmax.f32 %v1068, %v1079
    %v1083 = vrot.slane %v1069, 2
    %v1085 = vmax.f32 %v1069, %v1083
    %vm1086 = vcmask 254976
    %1087 = vst.msk [vmem:[#allocation2 + $0x18] sm:$0x3] %vm1086, %v933
    %vm1088 = vcmask 259076
    %1089 = vst.msk [vmem:[#allocation2 + $0x16] sm:$0x30] %vm1088, %v933
    %1090 = vst.msk [vmem:[#allocation2 + $0x1c] sm:$0x3] %vm1086, %v937
    %1091 = vst.msk [vmem:[#allocation2 + $0x1a] sm:$0x30] %vm1088, %v937
    %1092 = vst.msk [vmem:[#allocation2 + $0x20] sm:$0x3] %vm1086, %v941
    %1093 = vst.msk [vmem:[#allocation2 + $0x1e] sm:$0x30] %vm1088, %v941
    %1094 = vst.msk [vmem:[#allocation2 + $0x24] sm:$0x3] %vm1086, %v945
    %1095 = vst.msk [vmem:[#allocation2 + $0x22] sm:$0x30] %vm1088, %v945
    %1096 = vst.msk [vmem:[#allocation2 + $0x28] sm:$0x3] %vm1086, %v953
    %1097 = vst.msk [vmem:[#allocation2 + $0x26] sm:$0x30] %vm1088, %v953
    %1098 = vst.msk [vmem:[#allocation2 + $0x2c] sm:$0x3] %vm1086, %v957
    %1099 = vst.msk [vmem:[#allocation2 + $0x2a] sm:$0x30] %vm1088, %v957
    %1100 = vst.msk [vmem:[#allocation2 + $0x30] sm:$0x3] %vm1086, %v961
    %1101 = vst.msk [vmem:[#allocation2 + $0x2e] sm:$0x30] %vm1088, %v961
    %1102 = vst.msk [vmem:[#allocation2 + $0x34] sm:$0x3] %vm1086, %v965
    %1103 = vst.msk [vmem:[#allocation2 + $0x32] sm:$0x30] %vm1088, %v965
    %1104 = vst.msk [vmem:[#allocation2 + $0x38] sm:$0x3] %vm1086, %v973
    %1105 = vst.msk [vmem:[#allocation2 + $0x36] sm:$0x30] %vm1088, %v973
    %1106 = vst.msk [vmem:[#allocation2 + $0x3c] sm:$0x3] %vm1086, %v977
    %1107 = vst.msk [vmem:[#allocation2 + $0x3a] sm:$0x30] %vm1088, %v977
    %1108 = vst.msk [vmem:[#allocation2 + $0x40] sm:$0x3] %vm1086, %v981
    %1109 = vst.msk [vmem:[#allocation2 + $0x3e] sm:$0x30] %vm1088, %v981
    %1110 = vst.msk [vmem:[#allocation2 + $0x44] sm:$0x3] %vm1086, %v985
    %1111 = vst.msk [vmem:[#allocation2 + $0x42] sm:$0x30] %vm1088, %v985
    %1112 = vst.msk [vmem:[#allocation2 + $0x48] sm:$0x3] %vm1086, %v993
    %1113 = vst.msk [vmem:[#allocation2 + $0x46] sm:$0x30] %vm1088, %v993
    %1114 = vst.msk [vmem:[#allocation2 + $0x4c] sm:$0x3] %vm1086, %v997
    %1115 = vst.msk [vmem:[#allocation2 + $0x4a] sm:$0x30] %vm1088, %v997
    %1116 = vst.msk [vmem:[#allocation2 + $0x50] sm:$0x3] %vm1086, %v1001
    %1117 = vst.msk [vmem:[#allocation2 + $0x4e] sm:$0x30] %vm1088, %v1001
    %1118 = vst.msk [vmem:[#allocation2 + $0x54] sm:$0x3] %vm1086, %v1005
    %1119 = vst.msk [vmem:[#allocation2 + $0x52] sm:$0x30] %vm1088, %v1005
    %1120 = vst.msk [vmem:[#allocation2 + $0x58] sm:$0x3] %vm1086, %v1013
    %1121 = vst.msk [vmem:[#allocation2 + $0x56] sm:$0x30] %vm1088, %v1013
    %1122 = vst.msk [vmem:[#allocation2 + $0x5c] sm:$0x3] %vm1086, %v1017
    %1123 = vst.msk [vmem:[#allocation2 + $0x5a] sm:$0x30] %vm1088, %v1017
    %1124 = vst.msk [vmem:[#allocation2 + $0x60] sm:$0x3] %vm1086, %v1021
    %1125 = vst.msk [vmem:[#allocation2 + $0x5e] sm:$0x30] %vm1088, %v1021
    %1126 = vst.msk [vmem:[#allocation2 + $0x64] sm:$0x3] %vm1086, %v1025
    %1127 = vst.msk [vmem:[#allocation2 + $0x62] sm:$0x30] %vm1088, %v1025
    %1128 = vst.msk [vmem:[#allocation2 + $0x68] sm:$0x3] %vm1086, %v1033
    %1129 = vst.msk [vmem:[#allocation2 + $0x66] sm:$0x30] %vm1088, %v1033
    %1130 = vst.msk [vmem:[#allocation2 + $0x6c] sm:$0x3] %vm1086, %v1037
    %1131 = vst.msk [vmem:[#allocation2 + $0x6a] sm:$0x30] %vm1088, %v1037
    %1132 = vst.msk [vmem:[#allocation2 + $0x70] sm:$0x3] %vm1086, %v1041
    %1133 = vst.msk [vmem:[#allocation2 + $0x6e] sm:$0x30] %vm1088, %v1041
    %1134 = vst.msk [vmem:[#allocation2 + $0x74] sm:$0x3] %vm1086, %v1045
    %1135 = vst.msk [vmem:[#allocation2 + $0x72] sm:$0x30] %vm1088, %v1045
    %1136 = vst.msk [vmem:[#allocation2 + $0x78] sm:$0x3] %vm1086, %v1053
    %1137 = vst.msk [vmem:[#allocation2 + $0x76] sm:$0x30] %vm1088, %v1053
    %1138 = vst.msk [vmem:[#allocation2 + $0x7c] sm:$0x3] %vm1086, %v1057
    %1139 = vst.msk [vmem:[#allocation2 + $0x7a] sm:$0x30] %vm1088, %v1057
    %1140 = vst.msk [vmem:[#allocation2 + $0x80] sm:$0x3] %vm1086, %v1061
    %1141 = vst.msk [vmem:[#allocation2 + $0x7e] sm:$0x30] %vm1088, %v1061
    %1142 = vst.msk [vmem:[#allocation2 + $0x84] sm:$0x3] %vm1086, %v1065
    %1143 = vst.msk [vmem:[#allocation2 + $0x82] sm:$0x30] %vm1088, %v1065
    %1144 = vst.msk [vmem:[#allocation2 + $0x88] sm:$0x3] %vm1086, %v1073
    %1145 = vst.msk [vmem:[#allocation2 + $0x86] sm:$0x30] %vm1088, %v1073
    %1146 = vst.msk [vmem:[#allocation2 + $0x8c] sm:$0x3] %vm1086, %v1077
    %1147 = vst.msk [vmem:[#allocation2 + $0x8a] sm:$0x30] %vm1088, %v1077
    %1148 = vst.msk [vmem:[#allocation2 + $0x90] sm:$0x3] %vm1086, %v1081
    %1149 = vst.msk [vmem:[#allocation2 + $0x8e] sm:$0x30] %vm1088, %v1081
    %1150 = vst.msk [vmem:[#allocation2 + $0x94] sm:$0x3] %vm1086, %v1085
    %1151 = vst.msk [vmem:[#allocation2 + $0x92] sm:$0x30] %vm1088, %v1085
    %v1152 = vld [vmem:[%s4] sm:$0xff]
    %v1153 = vld [vmem:[%s4 + $0x8] sm:$0xff]
    %v1154 = vld [vmem:[%s4 + $0x10] sm:$0xff]
    %v1155 = vld [vmem:[%s4 + $0x18] sm:$0xff]
    %v1156 = vld [vmem:[%s4 + $0x20] sm:$0xff]
    %v1157 = vld [vmem:[%s4 + $0x28] sm:$0xff]
    %v1158 = vld [vmem:[%s4 + $0x30] sm:$0xff]
    %v1159 = vld [vmem:[%s4 + $0x38] sm:$0xff]
    %v1160 = vld [vmem:[%s4 + $0x40] sm:$0xff]
    %v1161 = vld [vmem:[%s4 + $0x48] sm:$0xff]
    %v1162 = vld [vmem:[%s4 + $0x50] sm:$0xff]
    %v1163 = vld [vmem:[%s4 + $0x58] sm:$0xff]
    %v1164 = vld [vmem:[%s4 + $0x60] sm:$0xff]
    %v1165 = vld [vmem:[%s4 + $0x68] sm:$0xff]
    %v1166 = vld [vmem:[%s4 + $0x70] sm:$0xff]
    %v1167 = vld [vmem:[%s4 + $0x78] sm:$0xff]
    %v1168 = vld [vmem:[#allocation2 + $0x6] sm:$0xff]
    %v1169 = vld [vmem:[#allocation2 + $0xe] sm:$0xff]
    %v1170 = vld [vmem:[#allocation2 + $0x16] sm:$0xff]
    %v1171 = vld [vmem:[#allocation2 + $0x1e] sm:$0xff]
    %v1172 = vld [vmem:[#allocation2 + $0x26] sm:$0xff]
    %v1173 = vld [vmem:[#allocation2 + $0x2e] sm:$0xff]
    %v1174 = vld [vmem:[#allocation2 + $0x36] sm:$0xff]
    %v1175 = vld [vmem:[#allocation2 + $0x3e] sm:$0xff]
    %v1176 = vld [vmem:[#allocation2 + $0x46] sm:$0xff]
    %v1177 = vld [vmem:[#allocation2 + $0x4e] sm:$0xff]
    %v1178 = vld [vmem:[#allocation2 + $0x56] sm:$0xff]
    %v1179 = vld [vmem:[#allocation2 + $0x5e] sm:$0xff]
    %v1180 = vld [vmem:[#allocation2 + $0x66] sm:$0xff]
    %v1181 = vld [vmem:[#allocation2 + $0x6e] sm:$0xff]
    %v1182 = vld [vmem:[#allocation2 + $0x76] sm:$0xff]
    %v1183 = vld [vmem:[#allocation2 + $0x7e] sm:$0xff]
    %vm1184 = vcmp.ge.f32.partialorder %v1152, 1.0
    %vm1185 = vcmp.ge.f32.partialorder %v1153, 1.0
    %vm1186 = vcmp.ge.f32.partialorder %v1154, 1.0
    %vm1187 = vcmp.ge.f32.partialorder %v1155, 1.0
    %vm1188 = vcmp.ge.f32.partialorder %v1156, 1.0
    %vm1189 = vcmp.ge.f32.partialorder %v1157, 1.0
    %vm1190 = vcmp.ge.f32.partialorder %v1158, 1.0
    %vm1191 = vcmp.ge.f32.partialorder %v1159, 1.0
    %vm1192 = vcmp.ge.f32.partialorder %v1160, 1.0
    %vm1193 = vcmp.ge.f32.partialorder %v1161, 1.0
    %vm1194 = vcmp.ge.f32.partialorder %v1162, 1.0
    %vm1195 = vcmp.ge.f32.partialorder %v1163, 1.0
    %vm1196 = vcmp.ge.f32.partialorder %v1164, 1.0
    %vm1197 = vcmp.ge.f32.partialorder %v1165, 1.0
    %vm1198 = vcmp.ge.f32.partialorder %v1166, 1.0
    %vm1199 = vcmp.ge.f32.partialorder %v1167, 1.0
    %v1200 = vsel %vm1184, 1, 0
    %v1201 = vsel %vm1185, 1, 0
    %v1202 = vsel %vm1186, 1, 0
    %v1203 = vsel %vm1187, 1, 0
    %v1204 = vsel %vm1188, 1, 0
    %v1205 = vsel %vm1189, 1, 0
    %v1206 = vsel %vm1190, 1, 0
    %v1207 = vsel %vm1191, 1, 0
    %v1208 = vsel %vm1192, 1, 0
    %v1209 = vsel %vm1193, 1, 0
    %v1210 = vsel %vm1194, 1, 0
    %v1211 = vsel %vm1195, 1, 0
    %v1212 = vsel %vm1196, 1, 0
    %v1213 = vsel %vm1197, 1, 0
    %v1214 = vsel %vm1198, 1, 0
    %v1215 = vsel %vm1199, 1, 0
    %1216 = vset.pattern.permute.xlu0 0
    %1217 = vperm.xlu0 %1216, %v1200
    %v1218 = vpop.permute.xlu0 %1217
    %1219 = vset.pattern.permute.xlu0 0
    %1220 = vperm.xlu0 %1219, %v1201
    %v1221 = vpop.permute.xlu0 %1220
    %1222 = vset.pattern.permute.xlu0 0
    %1223 = vperm.xlu0 %1222, %v1202
    %v1224 = vpop.permute.xlu0 %1223
    %1225 = vset.pattern.permute.xlu0 0
    %1226 = vperm.xlu0 %1225, %v1203
    %v1227 = vpop.permute.xlu0 %1226
    %1228 = vset.pattern.permute.xlu0 0
    %1229 = vperm.xlu0 %1228, %v1204
    %v1230 = vpop.permute.xlu0 %1229
    %1231 = vset.pattern.permute.xlu0 0
    %1232 = vperm.xlu0 %1231, %v1205
    %v1233 = vpop.permute.xlu0 %1232
    %1234 = vset.pattern.permute.xlu0 0
    %1235 = vperm.xlu0 %1234, %v1206
    %v1236 = vpop.permute.xlu0 %1235
    %1237 = vset.pattern.permute.xlu0 0
    %1238 = vperm.xlu0 %1237, %v1207
    %v1239 = vpop.permute.xlu0 %1238
    %1240 = vset.pattern.permute.xlu0 0
    %1241 = vperm.xlu0 %1240, %v1208
    %v1242 = vpop.permute.xlu0 %1241
    %1243 = vset.pattern.permute.xlu0 0
    %1244 = vperm.xlu0 %1243, %v1209
    %v1245 = vpop.permute.xlu0 %1244
    %1246 = vset.pattern.permute.xlu0 0
    %1247 = vperm.xlu0 %1246, %v1210
    %v1248 = vpop.permute.xlu0 %1247
    %1249 = vset.pattern.permute.xlu0 0
    %1250 = vperm.xlu0 %1249, %v1211
    %v1251 = vpop.permute.xlu0 %1250
    %1252 = vset.pattern.permute.xlu0 0
    %1253 = vperm.xlu0 %1252, %v1212
    %v1254 = vpop.permute.xlu0 %1253
    %1255 = vset.pattern.permute.xlu0 0
    %1256 = vperm.xlu0 %1255, %v1213
    %v1257 = vpop.permute.xlu0 %1256
    %1258 = vset.pattern.permute.xlu0 0
    %1259 = vperm.xlu0 %1258, %v1214
    %v1260 = vpop.permute.xlu0 %1259
    %1261 = vset.pattern.permute.xlu0 0
    %1262 = vperm.xlu0 %1261, %v1215
    %v1263 = vpop.permute.xlu0 %1262
    %vm1264 = vcmp.eq.s32.totalorder %v1218, 1
    %vm1265 = vcmp.eq.s32.totalorder %v1221, 1
    %vm1266 = vcmp.eq.s32.totalorder %v1224, 1
    %vm1267 = vcmp.eq.s32.totalorder %v1227, 1
    %vm1268 = vcmp.eq.s32.totalorder %v1230, 1
    %vm1269 = vcmp.eq.s32.totalorder %v1233, 1
    %vm1270 = vcmp.eq.s32.totalorder %v1236, 1
    %vm1271 = vcmp.eq.s32.totalorder %v1239, 1
    %vm1272 = vcmp.eq.s32.totalorder %v1242, 1
    %vm1273 = vcmp.eq.s32.totalorder %v1245, 1
    %vm1274 = vcmp.eq.s32.totalorder %v1248, 1
    %vm1275 = vcmp.eq.s32.totalorder %v1251, 1
    %vm1276 = vcmp.eq.s32.totalorder %v1254, 1
    %vm1277 = vcmp.eq.s32.totalorder %v1257, 1
    %vm1278 = vcmp.eq.s32.totalorder %v1260, 1
    %vm1279 = vcmp.eq.s32.totalorder %v1263, 1
    %v1280 = vsel %vm1264, %v1168, 0.0
    %v1281 = vsel %vm1265, %v1169, 0.0
    %v1282 = vsel %vm1266, %v1170, 0.0
    %v1283 = vsel %vm1267, %v1171, 0.0
    %v1284 = vsel %vm1268, %v1172, 0.0
    %v1285 = vsel %vm1269, %v1173, 0.0
    %v1286 = vsel %vm1270, %v1174, 0.0
    %v1287 = vsel %vm1271, %v1175, 0.0
    %v1288 = vsel %vm1272, %v1176, 0.0
    %v1289 = vsel %vm1273, %v1177, 0.0
    %v1290 = vsel %vm1274, %v1178, 0.0
    %v1291 = vsel %vm1275, %v1179, 0.0
    %v1292 = vsel %vm1276, %v1180, 0.0
    %v1293 = vsel %vm1277, %v1181, 0.0
    %v1294 = vsel %vm1278, %v1182, 0.0
    %v1295 = vsel %vm1279, %v1183, 0.0
    %v1296 = vpack.c.bf16 %v1281, %v1280
    %v1297 = vpack.c.bf16 %v1283, %v1282
    %v1298 = vpack.c.bf16 %v1285, %v1284
    %v1299 = vpack.c.bf16 %v1287, %v1286
    %v1300 = vpack.c.bf16 %v1289, %v1288
    %v1301 = vpack.c.bf16 %v1291, %v1290
    %v1302 = vpack.c.bf16 %v1293, %v1292
    %v1303 = vpack.c.bf16 %v1295, %v1294
    %v1304 = vld [vmem:[%s5] sm:$0xf]
    %v1305 = vld [vmem:[%s5 + $0x4] sm:$0xf]
    %v1306 = vld [vmem:[%s5 + $0x8] sm:$0xf]
    %v1307 = vld [vmem:[%s5 + $0xc] sm:$0xf]
    %v1308 = vld [vmem:[#allocation2 + $0x16] sm:$0xff]
    %v1309 = vld [vmem:[#allocation2 + $0x1e] sm:$0xff]
    %v1310 = vld [vmem:[#allocation2 + $0x26] sm:$0xff]
    %v1311 = vld [vmem:[#allocation2 + $0x2e] sm:$0xff]
    %v1312 = vld [vmem:[#allocation2 + $0x36] sm:$0xff]
    %v1313 = vld [vmem:[#allocation2 + $0x3e] sm:$0xff]
    %v1314 = vld [vmem:[#allocation2 + $0x46] sm:$0xff]
    %v1315 = vld [vmem:[#allocation2 + $0x4e] sm:$0xff]
    %v1316 = vld [vmem:[#allocation2 + $0x56] sm:$0xff]
    %v1317 = vld [vmem:[#allocation2 + $0x5e] sm:$0xff]
    %v1318 = vld [vmem:[#allocation2 + $0x66] sm:$0xff]
    %v1319 = vld [vmem:[#allocation2 + $0x6e] sm:$0xff]
    %v1320 = vld [vmem:[#allocation2 + $0x76] sm:$0xff]
    %v1321 = vld [vmem:[#allocation2 + $0x7e] sm:$0xff]
    %v1322 = vld [vmem:[#allocation2 + $0x86] sm:$0xff]
    %v1323 = vld [vmem:[#allocation2 + $0x8e] sm:$0xff]
    %v1324 = vsel %vm1264, %v1308, 0.0
    %v1325 = vsel %vm1265, %v1309, 0.0
    %v1326 = vsel %vm1266, %v1310, 0.0
    %v1327 = vsel %vm1267, %v1311, 0.0
    %v1328 = vsel %vm1268, %v1312, 0.0
    %v1329 = vsel %vm1269, %v1313, 0.0
    %v1330 = vsel %vm1270, %v1314, 0.0
    %v1331 = vsel %vm1271, %v1315, 0.0
    %v1332 = vsel %vm1272, %v1316, 0.0
    %v1333 = vsel %vm1273, %v1317, 0.0
    %v1334 = vsel %vm1274, %v1318, 0.0
    %v1335 = vsel %vm1275, %v1319, 0.0
    %v1336 = vsel %vm1276, %v1320, 0.0
    %v1337 = vsel %vm1277, %v1321, 0.0
    %v1338 = vsel %vm1278, %v1322, 0.0
    %v1339 = vsel %vm1279, %v1323, 0.0
    %v1340 = vpack.c.bf16 %v1325, %v1324
    %v1341 = vpack.c.bf16 %v1327, %v1326
    %v1342 = vpack.c.bf16 %v1329, %v1328
    %v1343 = vpack.c.bf16 %v1331, %v1330
    %v1344 = vpack.c.bf16 %v1333, %v1332
    %v1345 = vpack.c.bf16 %v1335, %v1334
    %v1346 = vpack.c.bf16 %v1337, %v1336
    %v1347 = vpack.c.bf16 %v1339, %v1338
    %v1348 = vld [vmem:[%s5 + $0x10] sm:$0xf]
    %v1349 = vld [vmem:[%s5 + $0x14] sm:$0xf]
    %v1350 = vld [vmem:[%s5 + $0x18] sm:$0xf]
    %v1351 = vld [vmem:[%s5 + $0x1c] sm:$0xf]
    %v1356 = vunpack.c.l.b16 %v1348
    %v1357 = vunpack.c.l.b16 %v1349
    %v1358 = vunpack.c.l.b16 %v1350
    %v1359 = vunpack.c.l.b16 %v1351
    %v1360 = vpack.c.b16 %v1357, %v1356
    %v1361 = vpack.c.b16 %v1359, %v1358
    %v1365 = vsel %vm81, %v1340, 0
    %v1368 = vsel %vm81, %v1341, 0
    %v1371 = vsel %vm81, %v1342, 0
    %v1374 = vsel %vm81, %v1343, 0
    %v1377 = vsel %vm81, %v1344, 0
    %v1380 = vsel %vm81, %v1345, 0
    %v1383 = vsel %vm81, %v1346, 0
    %v1386 = vsel %vm81, %v1347, 0
    %1388 = vmatprep.subr.bf16.mxu0 0
    %1389 = vmatpush1.bf16.msra.mxu0 %v1360
    %1390 = vmatprep.subr.bf16.mxu0 0
    %1391 = vmatpush1.bf16.msra.mxu0 %v1361
    %1392 = vmatprep.subr.bf16.mxu0 0
    %1393 = vmatpush1.bf16.msra.mxu0 0
    %1394 = vmatprep.subr.bf16.mxu0 0
    %1395 = vmatpush1.bf16.msra.mxu0 0
    %1396 = vmatprep.subr.bf16.mxu0 0
    %1397 = vmatpush1.bf16.msra.mxu0 0
    %1398 = vmatprep.subr.bf16.mxu0 0
    %1399 = vmatpush1.bf16.msra.mxu0 0
    %1400 = vmatprep.subr.bf16.mxu0 0
    %1401 = vmatpush1.bf16.msra.mxu0 0
    %1402 = vmatprep.subr.bf16.mxu0 0
    %1403 = vmatpush1.bf16.msra.mxu0 0
    %1404 = vmatprep.subr.bf16.mxu0 0
    %1405 = vmatpush1.bf16.msra.mxu0 0
    %1406 = vmatprep.subr.bf16.mxu0 0
    %1407 = vmatpush1.bf16.msra.mxu0 0
    %1408 = vmatprep.subr.bf16.mxu0 0
    %1409 = vmatpush1.bf16.msra.mxu0 0
    %1410 = vmatprep.subr.bf16.mxu0 0
    %1411 = vmatpush1.bf16.msra.mxu0 0
    %1412 = vmatprep.subr.bf16.mxu0 0
    %1413 = vmatpush1.bf16.msra.mxu0 0
    %1414 = vmatprep.subr.bf16.mxu0 0
    %1415 = vmatpush1.bf16.msra.mxu0 0
    %1416 = vmatprep.subr.bf16.mxu0 0
    %1417 = vmatpush1.bf16.msra.mxu0 0
    %1418 = vmatprep.subr.bf16.mxu0 0
    %1419 = vmatpush1.bf16.msra.mxu0 0
    %1420 = vmatprep.mubr.bf16.mxu0 0
    %1421 = vmatmul.mubr.bf16.gmra.mrb[0].mxu0 %v1365
    %v1422 = vpop.f32.mrb[0].mxu0
    %v1423 = vadd.f32 0.0, %v1422
    %v1424 = vpop.f32.mrb[0].mxu0
    %v1425 = vpop.f32.mrb[0].mxu0
    %v1426 = vadd.f32 0.0, %v1425
    %v1427 = vpop.f32.mrb[0].mxu0
    %1428 = vmatprep.mubr.bf16.mxu0 0
    %1429 = vmatmul.mubr.bf16.gmra.mrb[0].mxu0 %v1368
    %v1430 = vpop.f32.mrb[0].mxu0
    %v1431 = vadd.f32 0.0, %v1430
    %v1432 = vpop.f32.mrb[0].mxu0
    %v1433 = vpop.f32.mrb[0].mxu0
    %v1434 = vadd.f32 0.0, %v1433
    %v1435 = vpop.f32.mrb[0].mxu0
    %1436 = vmatprep.mubr.bf16.mxu0 0
    %1437 = vmatmul.mubr.bf16.gmra.mrb[0].mxu0 %v1371
    %v1438 = vpop.f32.mrb[0].mxu0
    %v1439 = vadd.f32 0.0, %v1438
    %v1440 = vpop.f32.mrb[0].mxu0
    %v1441 = vpop.f32.mrb[0].mxu0
    %v1442 = vadd.f32 0.0, %v1441
    %v1443 = vpop.f32.mrb[0].mxu0
    %1444 = vmatprep.mubr.bf16.mxu0 0
    %1445 = vmatmul.mubr.bf16.gmra.mrb[0].mxu0 %v1374
    %v1446 = vpop.f32.mrb[0].mxu0
    %v1447 = vadd.f32 0.0, %v1446
    %v1448 = vpop.f32.mrb[0].mxu0
    %v1449 = vpop.f32.mrb[0].mxu0
    %v1450 = vadd.f32 0.0, %v1449
    %v1451 = vpop.f32.mrb[0].mxu0
    %1452 = vmatprep.mubr.bf16.mxu0 0
    %1453 = vmatmul.mubr.bf16.gmra.mrb[0].mxu0 %v1377
    %v1454 = vpop.f32.mrb[0].mxu0
    %v1455 = vadd.f32 0.0, %v1454
    %v1456 = vpop.f32.mrb[0].mxu0
    %v1457 = vpop.f32.mrb[0].mxu0
    %v1458 = vadd.f32 0.0, %v1457
    %v1459 = vpop.f32.mrb[0].mxu0
    %1460 = vmatprep.mubr.bf16.mxu0 0
    %1461 = vmatmul.mubr.bf16.gmra.mrb[0].mxu0 %v1380
    %v1462 = vpop.f32.mrb[0].mxu0
    %v1463 = vadd.f32 0.0, %v1462
    %v1464 = vpop.f32.mrb[0].mxu0
    %v1465 = vpop.f32.mrb[0].mxu0
    %v1466 = vadd.f32 0.0, %v1465
    %v1467 = vpop.f32.mrb[0].mxu0
    %1468 = vmatprep.mubr.bf16.mxu0 0
    %1469 = vmatmul.mubr.bf16.gmra.mrb[0].mxu0 %v1383
    %v1470 = vpop.f32.mrb[0].mxu0
    %v1471 = vadd.f32 0.0, %v1470
    %v1472 = vpop.f32.mrb[0].mxu0
    %v1473 = vpop.f32.mrb[0].mxu0
    %v1474 = vadd.f32 0.0, %v1473
    %v1475 = vpop.f32.mrb[0].mxu0
    %1476 = vmatprep.mubr.bf16.mxu0 0
    %1477 = vmatmul.mubr.bf16.gmra.mrb[0].mxu0 %v1386
    %v1478 = vpop.f32.mrb[0].mxu0
    %v1479 = vadd.f32 0.0, %v1478
    %v1480 = vpop.f32.mrb[0].mxu0
    %v1481 = vpop.f32.mrb[0].mxu0
    %v1482 = vadd.f32 0.0, %v1481
    %v1483 = vpop.f32.mrb[0].mxu0
    %1484 = vdwg.mxu0
    %v1489 = vunpack.c.l.b16 %v1304
    %v1490 = vunpack.c.l.b16 %v1305
    %v1491 = vunpack.c.l.b16 %v1306
    %v1492 = vunpack.c.l.b16 %v1307
    %v1493 = vpack.c.b16 %v1490, %v1489
    %v1494 = vpack.c.b16 %v1492, %v1491
    %v1498 = vsel %vm81, %v1296, 0
    %v1501 = vsel %vm81, %v1297, 0
    %v1504 = vsel %vm81, %v1298, 0
    %v1507 = vsel %vm81, %v1299, 0
    %v1510 = vsel %vm81, %v1300, 0
    %v1513 = vsel %vm81, %v1301, 0
    %v1516 = vsel %vm81, %v1302, 0
    %v1519 = vsel %vm81, %v1303, 0
    %1521 = vmatprep.subr.bf16.mxu0 0
    %1522 = vmatpush1.bf16.msra.mxu0 %v1493
    %1523 = vmatprep.subr.bf16.mxu0 0
    %1524 = vmatpush1.bf16.msra.mxu0 %v1494
    %1525 = vmatprep.subr.bf16.mxu0 0
    %1526 = vmatpush1.bf16.msra.mxu0 0
    %1527 = vmatprep.subr.bf16.mxu0 0
    %1528 = vmatpush1.bf16.msra.mxu0 0
    %1529 = vmatprep.subr.bf16.mxu0 0
    %1530 = vmatpush1.bf16.msra.mxu0 0
    %1531 = vmatprep.subr.bf16.mxu0 0
    %1532 = vmatpush1.bf16.msra.mxu0 0
    %1533 = vmatprep.subr.bf16.mxu0 0
    %1534 = vmatpush1.bf16.msra.mxu0 0
    %1535 = vmatprep.subr.bf16.mxu0 0
    %1536 = vmatpush1.bf16.msra.mxu0 0
    %1537 = vmatprep.subr.bf16.mxu0 0
    %1538 = vmatpush1.bf16.msra.mxu0 0
    %1539 = vmatprep.subr.bf16.mxu0 0
    %1540 = vmatpush1.bf16.msra.mxu0 0
    %1541 = vmatprep.subr.bf16.mxu0 0
    %1542 = vmatpush1.bf16.msra.mxu0 0
    %1543 = vmatprep.subr.bf16.mxu0 0
    %1544 = vmatpush1.bf16.msra.mxu0 0
    %1545 = vmatprep.subr.bf16.mxu0 0
    %1546 = vmatpush1.bf16.msra.mxu0 0
    %1547 = vmatprep.subr.bf16.mxu0 0
    %1548 = vmatpush1.bf16.msra.mxu0 0
    %1549 = vmatprep.subr.bf16.mxu0 0
    %1550 = vmatpush1.bf16.msra.mxu0 0
    %1551 = vmatprep.subr.bf16.mxu0 0
    %1552 = vmatpush1.bf16.msra.mxu0 0
    %1553 = vmatprep.mubr.bf16.mxu0 0
    %1554 = vmatmul.mubr.bf16.gmra.mrb[0].mxu0 %v1498
    %v1555 = vpop.f32.mrb[0].mxu0
    %v1556 = vadd.f32 %v1423, %v1555
    %v1557 = vpop.f32.mrb[0].mxu0
    %v1558 = vpop.f32.mrb[0].mxu0
    %v1559 = vadd.f32 %v1426, %v1558
    %v1560 = vpop.f32.mrb[0].mxu0
    %1561 = vmatprep.mubr.bf16.mxu0 0
    %1562 = vmatmul.mubr.bf16.gmra.mrb[0].mxu0 %v1501
    %v1563 = vpop.f32.mrb[0].mxu0
    %v1564 = vadd.f32 %v1431, %v1563
    %v1565 = vpop.f32.mrb[0].mxu0
    %v1566 = vpop.f32.mrb[0].mxu0
    %v1567 = vadd.f32 %v1434, %v1566
    %v1568 = vpop.f32.mrb[0].mxu0
    %1569 = vmatprep.mubr.bf16.mxu0 0
    %1570 = vmatmul.mubr.bf16.gmra.mrb[0].mxu0 %v1504
    %v1571 = vpop.f32.mrb[0].mxu0
    %v1572 = vadd.f32 %v1439, %v1571
    %v1573 = vpop.f32.mrb[0].mxu0
    %v1574 = vpop.f32.mrb[0].mxu0
    %v1575 = vadd.f32 %v1442, %v1574
    %v1576 = vpop.f32.mrb[0].mxu0
    %1577 = vmatprep.mubr.bf16.mxu0 0
    %1578 = vmatmul.mubr.bf16.gmra.mrb[0].mxu0 %v1507
    %v1579 = vpop.f32.mrb[0].mxu0
    %v1580 = vadd.f32 %v1447, %v1579
    %v1581 = vpop.f32.mrb[0].mxu0
    %v1582 = vpop.f32.mrb[0].mxu0
    %v1583 = vadd.f32 %v1450, %v1582
    %v1584 = vpop.f32.mrb[0].mxu0
    %1585 = vmatprep.mubr.bf16.mxu0 0
    %1586 = vmatmul.mubr.bf16.gmra.mrb[0].mxu0 %v1510
    %v1587 = vpop.f32.mrb[0].mxu0
    %v1588 = vadd.f32 %v1455, %v1587
    %v1589 = vpop.f32.mrb[0].mxu0
    %v1590 = vpop.f32.mrb[0].mxu0
    %v1591 = vadd.f32 %v1458, %v1590
    %v1592 = vpop.f32.mrb[0].mxu0
    %1593 = vmatprep.mubr.bf16.mxu0 0
    %1594 = vmatmul.mubr.bf16.gmra.mrb[0].mxu0 %v1513
    %v1595 = vpop.f32.mrb[0].mxu0
    %v1596 = vadd.f32 %v1463, %v1595
    %v1597 = vpop.f32.mrb[0].mxu0
    %v1598 = vpop.f32.mrb[0].mxu0
    %v1599 = vadd.f32 %v1466, %v1598
    %v1600 = vpop.f32.mrb[0].mxu0
    %1601 = vmatprep.mubr.bf16.mxu0 0
    %1602 = vmatmul.mubr.bf16.gmra.mrb[0].mxu0 %v1516
    %v1603 = vpop.f32.mrb[0].mxu0
    %v1604 = vadd.f32 %v1471, %v1603
    %v1605 = vpop.f32.mrb[0].mxu0
    %v1606 = vpop.f32.mrb[0].mxu0
    %v1607 = vadd.f32 %v1474, %v1606
    %v1608 = vpop.f32.mrb[0].mxu0
    %1609 = vmatprep.mubr.bf16.mxu0 0
    %1610 = vmatmul.mubr.bf16.gmra.mrb[0].mxu0 %v1519
    %v1611 = vpop.f32.mrb[0].mxu0
    %v1612 = vadd.f32 %v1479, %v1611
    %v1613 = vpop.f32.mrb[0].mxu0
    %v1614 = vpop.f32.mrb[0].mxu0
    %v1615 = vadd.f32 %v1482, %v1614
    %v1616 = vpop.f32.mrb[0].mxu0
    %1617 = vdwg.mxu0
    %v1618 = vld [vmem:[#allocation2 + $0x26] sm:$0xff]
    %v1619 = vld [vmem:[#allocation2 + $0x2e] sm:$0xff]
    %v1620 = vld [vmem:[#allocation2 + $0x36] sm:$0xff]
    %v1621 = vld [vmem:[#allocation2 + $0x3e] sm:$0xff]
    %v1622 = vld [vmem:[#allocation2 + $0x46] sm:$0xff]
    %v1623 = vld [vmem:[#allocation2 + $0x4e] sm:$0xff]
    %v1624 = vld [vmem:[#allocation2 + $0x56] sm:$0xff]
    %v1625 = vld [vmem:[#allocation2 + $0x5e] sm:$0xff]
    %v1626 = vld [vmem:[#allocation2 + $0x66] sm:$0xff]
    %v1627 = vld [vmem:[#allocation2 + $0x6e] sm:$0xff]
    %v1628 = vld [vmem:[#allocation2 + $0x76] sm:$0xff]
    %v1629 = vld [vmem:[#allocation2 + $0x7e] sm:$0xff]
    %v1630 = vld [vmem:[#allocation2 + $0x86] sm:$0xff]
    %v1631 = vld [vmem:[#allocation2 + $0x8e] sm:$0xff]
    %v1632 = vld [vmem:[#allocation2 + $0x96] sm:$0xff]
    %v1633 = vld [vmem:[#allocation2 + $0x9e] sm:$0xff]
    %v1634 = vsel %vm1264, %v1618, 0.0
    %v1635 = vsel %vm1265, %v1619, 0.0
    %v1636 = vsel %vm1266, %v1620, 0.0
    %v1637 = vsel %vm1267, %v1621, 0.0
    %v1638 = vsel %vm1268, %v1622, 0.0
    %v1639 = vsel %vm1269, %v1623, 0.0
    %v1640 = vsel %vm1270, %v1624, 0.0
    %v1641 = vsel %vm1271, %v1625, 0.0
    %v1642 = vsel %vm1272, %v1626, 0.0
    %v1643 = vsel %vm1273, %v1627, 0.0
    %v1644 = vsel %vm1274, %v1628, 0.0
    %v1645 = vsel %vm1275, %v1629, 0.0
    %v1646 = vsel %vm1276, %v1630, 0.0
    %v1647 = vsel %vm1277, %v1631, 0.0
    %v1648 = vsel %vm1278, %v1632, 0.0
    %v1649 = vsel %vm1279, %v1633, 0.0
    %v1650 = vpack.c.bf16 %v1635, %v1634
    %v1651 = vpack.c.bf16 %v1637, %v1636
    %v1652 = vpack.c.bf16 %v1639, %v1638
    %v1653 = vpack.c.bf16 %v1641, %v1640
    %v1654 = vpack.c.bf16 %v1643, %v1642
    %v1655 = vpack.c.bf16 %v1645, %v1644
    %v1656 = vpack.c.bf16 %v1647, %v1646
    %v1657 = vpack.c.bf16 %v1649, %v1648
    %v1658 = vld [vmem:[%s5 + $0x20] sm:$0xf]
    %v1659 = vld [vmem:[%s5 + $0x24] sm:$0xf]
    %v1660 = vld [vmem:[%s5 + $0x28] sm:$0xf]
    %v1661 = vld [vmem:[%s5 + $0x2c] sm:$0xf]
    %v1666 = vunpack.c.l.b16 %v1658
    %v1667 = vunpack.c.l.b16 %v1659
    %v1668 = vunpack.c.l.b16 %v1660
    %v1669 = vunpack.c.l.b16 %v1661
    %v1670 = vpack.c.b16 %v1667, %v1666
    %v1671 = vpack.c.b16 %v1669, %v1668
    %v1675 = vsel %vm81, %v1650, 0
    %v1678 = vsel %vm81, %v1651, 0
    %v1681 = vsel %vm81, %v1652, 0
    %v1684 = vsel %vm81, %v1653, 0
    %v1687 = vsel %vm81, %v1654, 0
    %v1690 = vsel %vm81, %v1655, 0
    %v1693 = vsel %vm81, %v1656, 0
    %v1696 = vsel %vm81, %v1657, 0
    %1698 = vmatprep.subr.bf16.mxu0 0
    %1699 = vmatpush1.bf16.msra.mxu0 %v1670
    %1700 = vmatprep.subr.bf16.mxu0 0
    %1701 = vmatpush1.bf16.msra.mxu0 %v1671
    %1702 = vmatprep.subr.bf16.mxu0 0
    %1703 = vmatpush1.bf16.msra.mxu0 0
    %1704 = vmatprep.subr.bf16.mxu0 0
    %1705 = vmatpush1.bf16.msra.mxu0 0
    %1706 = vmatprep.subr.bf16.mxu0 0
    %1707 = vmatpush1.bf16.msra.mxu0 0
    %1708 = vmatprep.subr.bf16.mxu0 0
    %1709 = vmatpush1.bf16.msra.mxu0 0
    %1710 = vmatprep.subr.bf16.mxu0 0
    %1711 = vmatpush1.bf16.msra.mxu0 0
    %1712 = vmatprep.subr.bf16.mxu0 0
    %1713 = vmatpush1.bf16.msra.mxu0 0
    %1714 = vmatprep.subr.bf16.mxu0 0
    %1715 = vmatpush1.bf16.msra.mxu0 0
    %1716 = vmatprep.subr.bf16.mxu0 0
    %1717 = vmatpush1.bf16.msra.mxu0 0
    %1718 = vmatprep.subr.bf16.mxu0 0
    %1719 = vmatpush1.bf16.msra.mxu0 0
    %1720 = vmatprep.subr.bf16.mxu0 0
    %1721 = vmatpush1.bf16.msra.mxu0 0
    %1722 = vmatprep.subr.bf16.mxu0 0
    %1723 = vmatpush1.bf16.msra.mxu0 0
    %1724 = vmatprep.subr.bf16.mxu0 0
    %1725 = vmatpush1.bf16.msra.mxu0 0
    %1726 = vmatprep.subr.bf16.mxu0 0
    %1727 = vmatpush1.bf16.msra.mxu0 0
    %1728 = vmatprep.subr.bf16.mxu0 0
    %1729 = vmatpush1.bf16.msra.mxu0 0
    %1730 = vmatprep.mubr.bf16.mxu0 0
    %1731 = vmatmul.mubr.bf16.gmra.mrb[0].mxu0 %v1675
    %v1732 = vpop.f32.mrb[0].mxu0
    %v1733 = vadd.f32 0.0, %v1732
    %v1734 = vpop.f32.mrb[0].mxu0
    %v1735 = vpop.f32.mrb[0].mxu0
    %v1736 = vadd.f32 0.0, %v1735
    %v1737 = vpop.f32.mrb[0].mxu0
    %1738 = vmatprep.mubr.bf16.mxu0 0
    %1739 = vmatmul.mubr.bf16.gmra.mrb[0].mxu0 %v1678
    %v1740 = vpop.f32.mrb[0].mxu0
    %v1741 = vadd.f32 0.0, %v1740
    %v1742 = vpop.f32.mrb[0].mxu0
    %v1743 = vpop.f32.mrb[0].mxu0
    %v1744 = vadd.f32 0.0, %v1743
    %v1745 = vpop.f32.mrb[0].mxu0
    %1746 = vmatprep.mubr.bf16.mxu0 0
    %1747 = vmatmul.mubr.bf16.gmra.mrb[0].mxu0 %v1681
    %v1748 = vpop.f32.mrb[0].mxu0
    %v1749 = vadd.f32 0.0, %v1748
    %v1750 = vpop.f32.mrb[0].mxu0
    %v1751 = vpop.f32.mrb[0].mxu0
    %v1752 = vadd.f32 0.0, %v1751
    %v1753 = vpop.f32.mrb[0].mxu0
    %1754 = vmatprep.mubr.bf16.mxu0 0
    %1755 = vmatmul.mubr.bf16.gmra.mrb[0].mxu0 %v1684
    %v1756 = vpop.f32.mrb[0].mxu0
    %v1757 = vadd.f32 0.0, %v1756
    %v1758 = vpop.f32.mrb[0].mxu0
    %v1759 = vpop.f32.mrb[0].mxu0
    %v1760 = vadd.f32 0.0, %v1759
    %v1761 = vpop.f32.mrb[0].mxu0
    %1762 = vmatprep.mubr.bf16.mxu0 0
    %1763 = vmatmul.mubr.bf16.gmra.mrb[0].mxu0 %v1687
    %v1764 = vpop.f32.mrb[0].mxu0
    %v1765 = vadd.f32 0.0, %v1764
    %v1766 = vpop.f32.mrb[0].mxu0
    %v1767 = vpop.f32.mrb[0].mxu0
    %v1768 = vadd.f32 0.0, %v1767
    %v1769 = vpop.f32.mrb[0].mxu0
    %1770 = vmatprep.mubr.bf16.mxu0 0
    %1771 = vmatmul.mubr.bf16.gmra.mrb[0].mxu0 %v1690
    %v1772 = vpop.f32.mrb[0].mxu0
    %v1773 = vadd.f32 0.0, %v1772
    %v1774 = vpop.f32.mrb[0].mxu0
    %v1775 = vpop.f32.mrb[0].mxu0
    %v1776 = vadd.f32 0.0, %v1775
    %v1777 = vpop.f32.mrb[0].mxu0
    %1778 = vmatprep.mubr.bf16.mxu0 0
    %1779 = vmatmul.mubr.bf16.gmra.mrb[0].mxu0 %v1693
    %v1780 = vpop.f32.mrb[0].mxu0
    %v1781 = vadd.f32 0.0, %v1780
    %v1782 = vpop.f32.mrb[0].mxu0
    %v1783 = vpop.f32.mrb[0].mxu0
    %v1784 = vadd.f32 0.0, %v1783
    %v1785 = vpop.f32.mrb[0].mxu0
    %1786 = vmatprep.mubr.bf16.mxu0 0
    %1787 = vmatmul.mubr.bf16.gmra.mrb[0].mxu0 %v1696
    %v1788 = vpop.f32.mrb[0].mxu0
    %v1789 = vadd.f32 0.0, %v1788
    %v1790 = vpop.f32.mrb[0].mxu0
    %v1791 = vpop.f32.mrb[0].mxu0
    %v1792 = vadd.f32 0.0, %v1791
    %v1793 = vpop.f32.mrb[0].mxu0
    %1794 = vdwg.mxu0
    %v1795 = vadd.f32 %v1556, %v1733
    %v1796 = vadd.f32 %v1559, %v1736
    %v1797 = vadd.f32 %v1564, %v1741
    %v1798 = vadd.f32 %v1567, %v1744
    %v1799 = vadd.f32 %v1572, %v1749
    %v1800 = vadd.f32 %v1575, %v1752
    %v1801 = vadd.f32 %v1580, %v1757
    %v1802 = vadd.f32 %v1583, %v1760
    %v1803 = vadd.f32 %v1588, %v1765
    %v1804 = vadd.f32 %v1591, %v1768
    %v1805 = vadd.f32 %v1596, %v1773
    %v1806 = vadd.f32 %v1599, %v1776
    %v1807 = vadd.f32 %v1604, %v1781
    %v1808 = vadd.f32 %v1607, %v1784
    %v1809 = vadd.f32 %v1612, %v1789
    %v1810 = vadd.f32 %v1615, %v1792
    %v1811 = vld [vmem:[#allocation2 + $0x8] sm:$0xff]
    %v1812 = vld [vmem:[#allocation2 + $0x10] sm:$0xff]
    %v1813 = vld [vmem:[#allocation2 + $0x18] sm:$0xff]
    %v1814 = vld [vmem:[#allocation2 + $0x20] sm:$0xff]
    %v1815 = vld [vmem:[#allocation2 + $0x28] sm:$0xff]
    %v1816 = vld [vmem:[#allocation2 + $0x30] sm:$0xff]
    %v1817 = vld [vmem:[#allocation2 + $0x38] sm:$0xff]
    %v1818 = vld [vmem:[#allocation2 + $0x40] sm:$0xff]
    %v1819 = vld [vmem:[#allocation2 + $0x48] sm:$0xff]
    %v1820 = vld [vmem:[#allocation2 + $0x50] sm:$0xff]
    %v1821 = vld [vmem:[#allocation2 + $0x58] sm:$0xff]
    %v1822 = vld [vmem:[#allocation2 + $0x60] sm:$0xff]
    %v1823 = vld [vmem:[#allocation2 + $0x68] sm:$0xff]
    %v1824 = vld [vmem:[#allocation2 + $0x70] sm:$0xff]
    %v1825 = vld [vmem:[#allocation2 + $0x78] sm:$0xff]
    %v1826 = vld [vmem:[#allocation2 + $0x80] sm:$0xff]
    %v1827 = vpack.c.bf16 %v1812, %v1811
    %v1828 = vpack.c.bf16 %v1814, %v1813
    %v1829 = vpack.c.bf16 %v1816, %v1815
    %v1830 = vpack.c.bf16 %v1818, %v1817
    %v1831 = vpack.c.bf16 %v1820, %v1819
    %v1832 = vpack.c.bf16 %v1822, %v1821
    %v1833 = vpack.c.bf16 %v1824, %v1823
    %v1834 = vpack.c.bf16 %v1826, %v1825
    %v1835 = vld [vmem:[%s5 + $0x30] sm:$0xf]
    %v1836 = vld [vmem:[%s5 + $0x34] sm:$0xf]
    %v1837 = vld [vmem:[%s5 + $0x38] sm:$0xf]
    %v1838 = vld [vmem:[%s5 + $0x3c] sm:$0xf]
    %v1843 = vunpack.c.l.b16 %v1835
    %v1844 = vunpack.c.l.b16 %v1836
    %v1845 = vunpack.c.l.b16 %v1837
    %v1846 = vunpack.c.l.b16 %v1838
    %v1847 = vpack.c.b16 %v1844, %v1843
    %v1848 = vpack.c.b16 %v1846, %v1845
    %v1852 = vsel %vm81, %v1827, 0
    %v1855 = vsel %vm81, %v1828, 0
    %v1858 = vsel %vm81, %v1829, 0
    %v1861 = vsel %vm81, %v1830, 0
    %v1864 = vsel %vm81, %v1831, 0
    %v1867 = vsel %vm81, %v1832, 0
    %v1870 = vsel %vm81, %v1833, 0
    %v1873 = vsel %vm81, %v1834, 0
    %1875 = vmatprep.subr.bf16.mxu0 0
    %1876 = vmatpush1.bf16.msra.mxu0 %v1847
    %1877 = vmatprep.subr.bf16.mxu0 0
    %1878 = vmatpush1.bf16.msra.mxu0 %v1848
    %1879 = vmatprep.subr.bf16.mxu0 0
    %1880 = vmatpush1.bf16.msra.mxu0 0
    %1881 = vmatprep.subr.bf16.mxu0 0
    %1882 = vmatpush1.bf16.msra.mxu0 0
    %1883 = vmatprep.subr.bf16.mxu0 0
    %1884 = vmatpush1.bf16.msra.mxu0 0
    %1885 = vmatprep.subr.bf16.mxu0 0
    %1886 = vmatpush1.bf16.msra.mxu0 0
    %1887 = vmatprep.subr.bf16.mxu0 0
    %1888 = vmatpush1.bf16.msra.mxu0 0
    %1889 = vmatprep.subr.bf16.mxu0 0
    %1890 = vmatpush1.bf16.msra.mxu0 0
    %1891 = vmatprep.subr.bf16.mxu0 0
    %1892 = vmatpush1.bf16.msra.mxu0 0
    %1893 = vmatprep.subr.bf16.mxu0 0
    %1894 = vmatpush1.bf16.msra.mxu0 0
    %1895 = vmatprep.subr.bf16.mxu0 0
    %1896 = vmatpush1.bf16.msra.mxu0 0
    %1897 = vmatprep.subr.bf16.mxu0 0
    %1898 = vmatpush1.bf16.msra.mxu0 0
    %1899 = vmatprep.subr.bf16.mxu0 0
    %1900 = vmatpush1.bf16.msra.mxu0 0
    %1901 = vmatprep.subr.bf16.mxu0 0
    %1902 = vmatpush1.bf16.msra.mxu0 0
    %1903 = vmatprep.subr.bf16.mxu0 0
    %1904 = vmatpush1.bf16.msra.mxu0 0
    %1905 = vmatprep.subr.bf16.mxu0 0
    %1906 = vmatpush1.bf16.msra.mxu0 0
    %1907 = vmatprep.mubr.bf16.mxu0 0
    %1908 = vmatmul.mubr.bf16.gmra.mrb[0].mxu0 %v1852
    %v1909 = vpop.f32.mrb[0].mxu0
    %v1910 = vadd.f32 0.0, %v1909
    %v1911 = vpop.f32.mrb[0].mxu0
    %v1912 = vpop.f32.mrb[0].mxu0
    %v1913 = vadd.f32 0.0, %v1912
    %v1914 = vpop.f32.mrb[0].mxu0
    %1915 = vmatprep.mubr.bf16.mxu0 0
    %1916 = vmatmul.mubr.bf16.gmra.mrb[0].mxu0 %v1855
    %v1917 = vpop.f32.mrb[0].mxu0
    %v1918 = vadd.f32 0.0, %v1917
    %v1919 = vpop.f32.mrb[0].mxu0
    %v1920 = vpop.f32.mrb[0].mxu0
    %v1921 = vadd.f32 0.0, %v1920
    %v1922 = vpop.f32.mrb[0].mxu0
    %1923 = vmatprep.mubr.bf16.mxu0 0
    %1924 = vmatmul.mubr.bf16.gmra.mrb[0].mxu0 %v1858
    %v1925 = vpop.f32.mrb[0].mxu0
    %v1926 = vadd.f32 0.0, %v1925
    %v1927 = vpop.f32.mrb[0].mxu0
    %v1928 = vpop.f32.mrb[0].mxu0
    %v1929 = vadd.f32 0.0, %v1928
    %v1930 = vpop.f32.mrb[0].mxu0
    %1931 = vmatprep.mubr.bf16.mxu0 0
    %1932 = vmatmul.mubr.bf16.gmra.mrb[0].mxu0 %v1861
    %v1933 = vpop.f32.mrb[0].mxu0
    %v1934 = vadd.f32 0.0, %v1933
    %v1935 = vpop.f32.mrb[0].mxu0
    %v1936 = vpop.f32.mrb[0].mxu0
    %v1937 = vadd.f32 0.0, %v1936
    %v1938 = vpop.f32.mrb[0].mxu0
    %1939 = vmatprep.mubr.bf16.mxu0 0
    %1940 = vmatmul.mubr.bf16.gmra.mrb[0].mxu0 %v1864
    %v1941 = vpop.f32.mrb[0].mxu0
    %v1942 = vadd.f32 0.0, %v1941
    %v1943 = vpop.f32.mrb[0].mxu0
    %v1944 = vpop.f32.mrb[0].mxu0
    %v1945 = vadd.f32 0.0, %v1944
    %v1946 = vpop.f32.mrb[0].mxu0
    %1947 = vmatprep.mubr.bf16.mxu0 0
    %1948 = vmatmul.mubr.bf16.gmra.mrb[0].mxu0 %v1867
    %v1949 = vpop.f32.mrb[0].mxu0
    %v1950 = vadd.f32 0.0, %v1949
    %v1951 = vpop.f32.mrb[0].mxu0
    %v1952 = vpop.f32.mrb[0].mxu0
    %v1953 = vadd.f32 0.0, %v1952
    %v1954 = vpop.f32.mrb[0].mxu0
    %1955 = vmatprep.mubr.bf16.mxu0 0
    %1956 = vmatmul.mubr.bf16.gmra.mrb[0].mxu0 %v1870
    %v1957 = vpop.f32.mrb[0].mxu0
    %v1958 = vadd.f32 0.0, %v1957
    %v1959 = vpop.f32.mrb[0].mxu0
    %v1960 = vpop.f32.mrb[0].mxu0
    %v1961 = vadd.f32 0.0, %v1960
    %v1962 = vpop.f32.mrb[0].mxu0
    %1963 = vmatprep.mubr.bf16.mxu0 0
    %1964 = vmatmul.mubr.bf16.gmra.mrb[0].mxu0 %v1873
    %v1965 = vpop.f32.mrb[0].mxu0
    %v1966 = vadd.f32 0.0, %v1965
    %v1967 = vpop.f32.mrb[0].mxu0
    %v1968 = vpop.f32.mrb[0].mxu0
    %v1969 = vadd.f32 0.0, %v1968
    %v1970 = vpop.f32.mrb[0].mxu0
    %1971 = vdwg.mxu0
    %v1972 = vadd.f32 %v1795, %v1910
    %v1973 = vadd.f32 %v1796, %v1913
    %v1974 = vadd.f32 %v1797, %v1918
    %v1975 = vadd.f32 %v1798, %v1921
    %v1976 = vadd.f32 %v1799, %v1926
    %v1977 = vadd.f32 %v1800, %v1929
    %v1978 = vadd.f32 %v1801, %v1934
    %v1979 = vadd.f32 %v1802, %v1937
    %v1980 = vadd.f32 %v1803, %v1942
    %v1981 = vadd.f32 %v1804, %v1945
    %v1982 = vadd.f32 %v1805, %v1950
    %v1983 = vadd.f32 %v1806, %v1953
    %v1984 = vadd.f32 %v1807, %v1958
    %v1985 = vadd.f32 %v1808, %v1961
    %v1986 = vadd.f32 %v1809, %v1966
    %v1987 = vadd.f32 %v1810, %v1969
    %v1988 = vld [vmem:[#allocation2 + $0x18] sm:$0xff]
    %v1989 = vld [vmem:[#allocation2 + $0x20] sm:$0xff]
    %v1990 = vld [vmem:[#allocation2 + $0x28] sm:$0xff]
    %v1991 = vld [vmem:[#allocation2 + $0x30] sm:$0xff]
    %v1992 = vld [vmem:[#allocation2 + $0x38] sm:$0xff]
    %v1993 = vld [vmem:[#allocation2 + $0x40] sm:$0xff]
    %v1994 = vld [vmem:[#allocation2 + $0x48] sm:$0xff]
    %v1995 = vld [vmem:[#allocation2 + $0x50] sm:$0xff]
    %v1996 = vld [vmem:[#allocation2 + $0x58] sm:$0xff]
    %v1997 = vld [vmem:[#allocation2 + $0x60] sm:$0xff]
    %v1998 = vld [vmem:[#allocation2 + $0x68] sm:$0xff]
    %v1999 = vld [vmem:[#allocation2 + $0x70] sm:$0xff]
    %v2000 = vld [vmem:[#allocation2 + $0x78] sm:$0xff]
    %v2001 = vld [vmem:[#allocation2 + $0x80] sm:$0xff]
    %v2002 = vld [vmem:[#allocation2 + $0x88] sm:$0xff]
    %v2003 = vld [vmem:[#allocation2 + $0x90] sm:$0xff]
    %v2004 = vpack.c.bf16 %v1989, %v1988
    %v2005 = vpack.c.bf16 %v1991, %v1990
    %v2006 = vpack.c.bf16 %v1993, %v1992
    %v2007 = vpack.c.bf16 %v1995, %v1994
    %v2008 = vpack.c.bf16 %v1997, %v1996
    %v2009 = vpack.c.bf16 %v1999, %v1998
    %v2010 = vpack.c.bf16 %v2001, %v2000
    %v2011 = vpack.c.bf16 %v2003, %v2002
    %v2012 = vld [vmem:[%s5 + $0x40] sm:$0xf]
    %v2013 = vld [vmem:[%s5 + $0x44] sm:$0xf]
    %v2014 = vld [vmem:[%s5 + $0x48] sm:$0xf]
    %v2015 = vld [vmem:[%s5 + $0x4c] sm:$0xf]
    %v2020 = vunpack.c.l.b16 %v2012
    %v2021 = vunpack.c.l.b16 %v2013
    %v2022 = vunpack.c.l.b16 %v2014
    %v2023 = vunpack.c.l.b16 %v2015
    %v2024 = vpack.c.b16 %v2021, %v2020
    %v2025 = vpack.c.b16 %v2023, %v2022
    %v2029 = vsel %vm81, %v2004, 0
    %v2032 = vsel %vm81, %v2005, 0
    %v2035 = vsel %vm81, %v2006, 0
    %v2038 = vsel %vm81, %v2007, 0
    %v2041 = vsel %vm81, %v2008, 0
    %v2044 = vsel %vm81, %v2009, 0
    %v2047 = vsel %vm81, %v2010, 0
    %v2050 = vsel %vm81, %v2011, 0
    %2052 = vmatprep.subr.bf16.mxu0 0
    %2053 = vmatpush1.bf16.msra.mxu0 %v2024
    %2054 = vmatprep.subr.bf16.mxu0 0
    %2055 = vmatpush1.bf16.msra.mxu0 %v2025
    %2056 = vmatprep.subr.bf16.mxu0 0
    %2057 = vmatpush1.bf16.msra.mxu0 0
    %2058 = vmatprep.subr.bf16.mxu0 0
    %2059 = vmatpush1.bf16.msra.mxu0 0
    %2060 = vmatprep.subr.bf16.mxu0 0
    %2061 = vmatpush1.bf16.msra.mxu0 0
    %2062 = vmatprep.subr.bf16.mxu0 0
    %2063 = vmatpush1.bf16.msra.mxu0 0
    %2064 = vmatprep.subr.bf16.mxu0 0
    %2065 = vmatpush1.bf16.msra.mxu0 0
    %2066 = vmatprep.subr.bf16.mxu0 0
    %2067 = vmatpush1.bf16.msra.mxu0 0
    %2068 = vmatprep.subr.bf16.mxu0 0
    %2069 = vmatpush1.bf16.msra.mxu0 0
    %2070 = vmatprep.subr.bf16.mxu0 0
    %2071 = vmatpush1.bf16.msra.mxu0 0
    %2072 = vmatprep.subr.bf16.mxu0 0
    %2073 = vmatpush1.bf16.msra.mxu0 0
    %2074 = vmatprep.subr.bf16.mxu0 0
    %2075 = vmatpush1.bf16.msra.mxu0 0
    %2076 = vmatprep.subr.bf16.mxu0 0
    %2077 = vmatpush1.bf16.msra.mxu0 0
    %2078 = vmatprep.subr.bf16.mxu0 0
    %2079 = vmatpush1.bf16.msra.mxu0 0
    %2080 = vmatprep.subr.bf16.mxu0 0
    %2081 = vmatpush1.bf16.msra.mxu0 0
    %2082 = vmatprep.subr.bf16.mxu0 0
    %2083 = vmatpush1.bf16.msra.mxu0 0
    %2084 = vmatprep.mubr.bf16.mxu0 0
    %2085 = vmatmul.mubr.bf16.gmra.mrb[0].mxu0 %v2029
    %v2086 = vpop.f32.mrb[0].mxu0
    %v2087 = vadd.f32 0.0, %v2086
    %v2088 = vpop.f32.mrb[0].mxu0
    %v2089 = vpop.f32.mrb[0].mxu0
    %v2090 = vadd.f32 0.0, %v2089
    %v2091 = vpop.f32.mrb[0].mxu0
    %2092 = vmatprep.mubr.bf16.mxu0 0
    %2093 = vmatmul.mubr.bf16.gmra.mrb[0].mxu0 %v2032
    %v2094 = vpop.f32.mrb[0].mxu0
    %v2095 = vadd.f32 0.0, %v2094
    %v2096 = vpop.f32.mrb[0].mxu0
    %v2097 = vpop.f32.mrb[0].mxu0
    %v2098 = vadd.f32 0.0, %v2097
    %v2099 = vpop.f32.mrb[0].mxu0
    %2100 = vmatprep.mubr.bf16.mxu0 0
    %2101 = vmatmul.mubr.bf16.gmra.mrb[0].mxu0 %v2035
    %v2102 = vpop.f32.mrb[0].mxu0
    %v2103 = vadd.f32 0.0, %v2102
    %v2104 = vpop.f32.mrb[0].mxu0
    %v2105 = vpop.f32.mrb[0].mxu0
    %v2106 = vadd.f32 0.0, %v2105
    %v2107 = vpop.f32.mrb[0].mxu0
    %2108 = vmatprep.mubr.bf16.mxu0 0
    %2109 = vmatmul.mubr.bf16.gmra.mrb[0].mxu0 %v2038
    %v2110 = vpop.f32.mrb[0].mxu0
    %v2111 = vadd.f32 0.0, %v2110
    %v2112 = vpop.f32.mrb[0].mxu0
    %v2113 = vpop.f32.mrb[0].mxu0
    %v2114 = vadd.f32 0.0, %v2113
    %v2115 = vpop.f32.mrb[0].mxu0
    %2116 = vmatprep.mubr.bf16.mxu0 0
    %2117 = vmatmul.mubr.bf16.gmra.mrb[0].mxu0 %v2041
    %v2118 = vpop.f32.mrb[0].mxu0
    %v2119 = vadd.f32 0.0, %v2118
    %v2120 = vpop.f32.mrb[0].mxu0
    %v2121 = vpop.f32.mrb[0].mxu0
    %v2122 = vadd.f32 0.0, %v2121
    %v2123 = vpop.f32.mrb[0].mxu0
    %2124 = vmatprep.mubr.bf16.mxu0 0
    %2125 = vmatmul.mubr.bf16.gmra.mrb[0].mxu0 %v2044
    %v2126 = vpop.f32.mrb[0].mxu0
    %v2127 = vadd.f32 0.0, %v2126
    %v2128 = vpop.f32.mrb[0].mxu0
    %v2129 = vpop.f32.mrb[0].mxu0
    %v2130 = vadd.f32 0.0, %v2129
    %v2131 = vpop.f32.mrb[0].mxu0
    %2132 = vmatprep.mubr.bf16.mxu0 0
    %2133 = vmatmul.mubr.bf16.gmra.mrb[0].mxu0 %v2047
    %v2134 = vpop.f32.mrb[0].mxu0
    %v2135 = vadd.f32 0.0, %v2134
    %v2136 = vpop.f32.mrb[0].mxu0
    %v2137 = vpop.f32.mrb[0].mxu0
    %v2138 = vadd.f32 0.0, %v2137
    %v2139 = vpop.f32.mrb[0].mxu0
    %2140 = vmatprep.mubr.bf16.mxu0 0
    %2141 = vmatmul.mubr.bf16.gmra.mrb[0].mxu0 %v2050
    %v2142 = vpop.f32.mrb[0].mxu0
    %v2143 = vadd.f32 0.0, %v2142
    %v2144 = vpop.f32.mrb[0].mxu0
    %v2145 = vpop.f32.mrb[0].mxu0
    %v2146 = vadd.f32 0.0, %v2145
    %v2147 = vpop.f32.mrb[0].mxu0
    %2148 = vdwg.mxu0
    %v2149 = vadd.f32 %v1972, %v2087
    %v2150 = vadd.f32 %v1973, %v2090
    %v2151 = vadd.f32 %v1974, %v2095
    %v2152 = vadd.f32 %v1975, %v2098
    %v2153 = vadd.f32 %v1976, %v2103
    %v2154 = vadd.f32 %v1977, %v2106
    %v2155 = vadd.f32 %v1978, %v2111
    %v2156 = vadd.f32 %v1979, %v2114
    %v2157 = vadd.f32 %v1980, %v2119
    %v2158 = vadd.f32 %v1981, %v2122
    %v2159 = vadd.f32 %v1982, %v2127
    %v2160 = vadd.f32 %v1983, %v2130
    %v2161 = vadd.f32 %v1984, %v2135
    %v2162 = vadd.f32 %v1985, %v2138
    %v2163 = vadd.f32 %v1986, %v2143
    %v2164 = vadd.f32 %v1987, %v2146
    %v2165 = vld [vmem:[#allocation2 + $0x28] sm:$0xff]
    %v2166 = vld [vmem:[#allocation2 + $0x30] sm:$0xff]
    %v2167 = vld [vmem:[#allocation2 + $0x38] sm:$0xff]
    %v2168 = vld [vmem:[#allocation2 + $0x40] sm:$0xff]
    %v2169 = vld [vmem:[#allocation2 + $0x48] sm:$0xff]
    %v2170 = vld [vmem:[#allocation2 + $0x50] sm:$0xff]
    %v2171 = vld [vmem:[#allocation2 + $0x58] sm:$0xff]
    %v2172 = vld [vmem:[#allocation2 + $0x60] sm:$0xff]
    %v2173 = vld [vmem:[#allocation2 + $0x68] sm:$0xff]
    %v2174 = vld [vmem:[#allocation2 + $0x70] sm:$0xff]
    %v2175 = vld [vmem:[#allocation2 + $0x78] sm:$0xff]
    %v2176 = vld [vmem:[#allocation2 + $0x80] sm:$0xff]
    %v2177 = vld [vmem:[#allocation2 + $0x88] sm:$0xff]
    %v2178 = vld [vmem:[#allocation2 + $0x90] sm:$0xff]
    %v2179 = vld [vmem:[#allocation2 + $0x98] sm:$0xff]
    %v2180 = vld [vmem:[#allocation2 + $0xa0] sm:$0xff]
    %v2181 = vpack.c.bf16 %v2166, %v2165
    %v2182 = vpack.c.bf16 %v2168, %v2167
    %v2183 = vpack.c.bf16 %v2170, %v2169
    %v2184 = vpack.c.bf16 %v2172, %v2171
    %v2185 = vpack.c.bf16 %v2174, %v2173
    %v2186 = vpack.c.bf16 %v2176, %v2175
    %v2187 = vpack.c.bf16 %v2178, %v2177
    %v2188 = vpack.c.bf16 %v2180, %v2179
    %v2189 = vld [vmem:[%s5 + $0x50] sm:$0xf]
    %v2190 = vld [vmem:[%s5 + $0x54] sm:$0xf]
    %v2191 = vld [vmem:[%s5 + $0x58] sm:$0xf]
    %v2192 = vld [vmem:[%s5 + $0x5c] sm:$0xf]
    %v2197 = vunpack.c.l.b16 %v2189
    %v2198 = vunpack.c.l.b16 %v2190
    %v2199 = vunpack.c.l.b16 %v2191
    %v2200 = vunpack.c.l.b16 %v2192
    %v2201 = vpack.c.b16 %v2198, %v2197
    %v2202 = vpack.c.b16 %v2200, %v2199
    %v2206 = vsel %vm81, %v2181, 0
    %v2209 = vsel %vm81, %v2182, 0
    %v2212 = vsel %vm81, %v2183, 0
    %v2215 = vsel %vm81, %v2184, 0
    %v2218 = vsel %vm81, %v2185, 0
    %v2221 = vsel %vm81, %v2186, 0
    %v2224 = vsel %vm81, %v2187, 0
    %v2227 = vsel %vm81, %v2188, 0
    %2229 = vmatprep.subr.bf16.mxu0 0
    %2230 = vmatpush1.bf16.msra.mxu0 %v2201
    %2231 = vmatprep.subr.bf16.mxu0 0
    %2232 = vmatpush1.bf16.msra.mxu0 %v2202
    %2233 = vmatprep.subr.bf16.mxu0 0
    %2234 = vmatpush1.bf16.msra.mxu0 0
    %2235 = vmatprep.subr.bf16.mxu0 0
    %2236 = vmatpush1.bf16.msra.mxu0 0
    %2237 = vmatprep.subr.bf16.mxu0 0
    %2238 = vmatpush1.bf16.msra.mxu0 0
    %2239 = vmatprep.subr.bf16.mxu0 0
    %2240 = vmatpush1.bf16.msra.mxu0 0
    %2241 = vmatprep.subr.bf16.mxu0 0
    %2242 = vmatpush1.bf16.msra.mxu0 0
    %2243 = vmatprep.subr.bf16.mxu0 0
    %2244 = vmatpush1.bf16.msra.mxu0 0
    %2245 = vmatprep.subr.bf16.mxu0 0
    %2246 = vmatpush1.bf16.msra.mxu0 0
    %2247 = vmatprep.subr.bf16.mxu0 0
    %2248 = vmatpush1.bf16.msra.mxu0 0
    %2249 = vmatprep.subr.bf16.mxu0 0
    %2250 = vmatpush1.bf16.msra.mxu0 0
    %2251 = vmatprep.subr.bf16.mxu0 0
    %2252 = vmatpush1.bf16.msra.mxu0 0
    %2253 = vmatprep.subr.bf16.mxu0 0
    %2254 = vmatpush1.bf16.msra.mxu0 0
    %2255 = vmatprep.subr.bf16.mxu0 0
    %2256 = vmatpush1.bf16.msra.mxu0 0
    %2257 = vmatprep.subr.bf16.mxu0 0
    %2258 = vmatpush1.bf16.msra.mxu0 0
    %2259 = vmatprep.subr.bf16.mxu0 0
    %2260 = vmatpush1.bf16.msra.mxu0 0
    %2261 = vmatprep.mubr.bf16.mxu0 0
    %2262 = vmatmul.mubr.bf16.gmra.mrb[0].mxu0 %v2206
    %v2263 = vpop.f32.mrb[0].mxu0
    %v2264 = vadd.f32 0.0, %v2263
    %v2265 = vpop.f32.mrb[0].mxu0
    %v2266 = vpop.f32.mrb[0].mxu0
    %v2267 = vadd.f32 0.0, %v2266
    %v2268 = vpop.f32.mrb[0].mxu0
    %2269 = vmatprep.mubr.bf16.mxu0 0
    %2270 = vmatmul.mubr.bf16.gmra.mrb[0].mxu0 %v2209
    %v2271 = vpop.f32.mrb[0].mxu0
    %v2272 = vadd.f32 0.0, %v2271
    %v2273 = vpop.f32.mrb[0].mxu0
    %v2274 = vpop.f32.mrb[0].mxu0
    %v2275 = vadd.f32 0.0, %v2274
    %v2276 = vpop.f32.mrb[0].mxu0
    %2277 = vmatprep.mubr.bf16.mxu0 0
    %2278 = vmatmul.mubr.bf16.gmra.mrb[0].mxu0 %v2212
    %v2279 = vpop.f32.mrb[0].mxu0
    %v2280 = vadd.f32 0.0, %v2279
    %v2281 = vpop.f32.mrb[0].mxu0
    %v2282 = vpop.f32.mrb[0].mxu0
    %v2283 = vadd.f32 0.0, %v2282
    %v2284 = vpop.f32.mrb[0].mxu0
    %2285 = vmatprep.mubr.bf16.mxu0 0
    %2286 = vmatmul.mubr.bf16.gmra.mrb[0].mxu0 %v2215
    %v2287 = vpop.f32.mrb[0].mxu0
    %v2288 = vadd.f32 0.0, %v2287
    %v2289 = vpop.f32.mrb[0].mxu0
    %v2290 = vpop.f32.mrb[0].mxu0
    %v2291 = vadd.f32 0.0, %v2290
    %v2292 = vpop.f32.mrb[0].mxu0
    %2293 = vmatprep.mubr.bf16.mxu0 0
    %2294 = vmatmul.mubr.bf16.gmra.mrb[0].mxu0 %v2218
    %v2295 = vpop.f32.mrb[0].mxu0
    %v2296 = vadd.f32 0.0, %v2295
    %v2297 = vpop.f32.mrb[0].mxu0
    %v2298 = vpop.f32.mrb[0].mxu0
    %v2299 = vadd.f32 0.0, %v2298
    %v2300 = vpop.f32.mrb[0].mxu0
    %2301 = vmatprep.mubr.bf16.mxu0 0
    %2302 = vmatmul.mubr.bf16.gmra.mrb[0].mxu0 %v2221
    %v2303 = vpop.f32.mrb[0].mxu0
    %v2304 = vadd.f32 0.0, %v2303
    %v2305 = vpop.f32.mrb[0].mxu0
    %v2306 = vpop.f32.mrb[0].mxu0
    %v2307 = vadd.f32 0.0, %v2306
    %v2308 = vpop.f32.mrb[0].mxu0
    %2309 = vmatprep.mubr.bf16.mxu0 0
    %2310 = vmatmul.mubr.bf16.gmra.mrb[0].mxu0 %v2224
    %v2311 = vpop.f32.mrb[0].mxu0
    %v2312 = vadd.f32 0.0, %v2311
    %v2313 = vpop.f32.mrb[0].mxu0
    %v2314 = vpop.f32.mrb[0].mxu0
    %v2315 = vadd.f32 0.0, %v2314
    %v2316 = vpop.f32.mrb[0].mxu0
    %2317 = vmatprep.mubr.bf16.mxu0 0
    %2318 = vmatmul.mubr.bf16.gmra.mrb[0].mxu0 %v2227
    %v2319 = vpop.f32.mrb[0].mxu0
    %v2320 = vadd.f32 0.0, %v2319
    %v2321 = vpop.f32.mrb[0].mxu0
    %v2322 = vpop.f32.mrb[0].mxu0
    %v2323 = vadd.f32 0.0, %v2322
    %v2324 = vpop.f32.mrb[0].mxu0
    %2325 = vdwg.mxu0
    %v2326 = vadd.f32 %v2149, %v2264
    %v2327 = vadd.f32 %v2150, %v2267
    %v2328 = vadd.f32 %v2151, %v2272
    %v2329 = vadd.f32 %v2152, %v2275
    %v2330 = vadd.f32 %v2153, %v2280
    %v2331 = vadd.f32 %v2154, %v2283
    %v2332 = vadd.f32 %v2155, %v2288
    %v2333 = vadd.f32 %v2156, %v2291
    %v2334 = vadd.f32 %v2157, %v2296
    %v2335 = vadd.f32 %v2158, %v2299
    %v2336 = vadd.f32 %v2159, %v2304
    %v2337 = vadd.f32 %v2160, %v2307
    %v2338 = vadd.f32 %v2161, %v2312
    %v2339 = vadd.f32 %v2162, %v2315
    %v2340 = vadd.f32 %v2163, %v2320
    %v2341 = vadd.f32 %v2164, %v2323
    %v2342 = vld [vmem:[#allocation2 + $0xa] sm:$0xff]
    %v2343 = vld [vmem:[#allocation2 + $0x12] sm:$0xff]
    %v2344 = vld [vmem:[#allocation2 + $0x1a] sm:$0xff]
    %v2345 = vld [vmem:[#allocation2 + $0x22] sm:$0xff]
    %v2346 = vld [vmem:[#allocation2 + $0x2a] sm:$0xff]
    %v2347 = vld [vmem:[#allocation2 + $0x32] sm:$0xff]
    %v2348 = vld [vmem:[#allocation2 + $0x3a] sm:$0xff]
    %v2349 = vld [vmem:[#allocation2 + $0x42] sm:$0xff]
    %v2350 = vld [vmem:[#allocation2 + $0x4a] sm:$0xff]
    %v2351 = vld [vmem:[#allocation2 + $0x52] sm:$0xff]
    %v2352 = vld [vmem:[#allocation2 + $0x5a] sm:$0xff]
    %v2353 = vld [vmem:[#allocation2 + $0x62] sm:$0xff]
    %v2354 = vld [vmem:[#allocation2 + $0x6a] sm:$0xff]
    %v2355 = vld [vmem:[#allocation2 + $0x72] sm:$0xff]
    %v2356 = vld [vmem:[#allocation2 + $0x7a] sm:$0xff]
    %v2357 = vld [vmem:[#allocation2 + $0x82] sm:$0xff]
    %vm2358 = vcmp.le.f32.partialorder %v1152, 6.0
    %vm2359 = vcmp.le.f32.partialorder %v1153, 6.0
    %vm2360 = vcmp.le.f32.partialorder %v1154, 6.0
    %vm2361 = vcmp.le.f32.partialorder %v1155, 6.0
    %vm2362 = vcmp.le.f32.partialorder %v1156, 6.0
    %vm2363 = vcmp.le.f32.partialorder %v1157, 6.0
    %vm2364 = vcmp.le.f32.partialorder %v1158, 6.0
    %vm2365 = vcmp.le.f32.partialorder %v1159, 6.0
    %vm2366 = vcmp.le.f32.partialorder %v1160, 6.0
    %vm2367 = vcmp.le.f32.partialorder %v1161, 6.0
    %vm2368 = vcmp.le.f32.partialorder %v1162, 6.0
    %vm2369 = vcmp.le.f32.partialorder %v1163, 6.0
    %vm2370 = vcmp.le.f32.partialorder %v1164, 6.0
    %vm2371 = vcmp.le.f32.partialorder %v1165, 6.0
    %vm2372 = vcmp.le.f32.partialorder %v1166, 6.0
    %vm2373 = vcmp.le.f32.partialorder %v1167, 6.0
    %v2374 = vsel %vm2358, 1, 0
    %v2375 = vsel %vm2359, 1, 0
    %v2376 = vsel %vm2360, 1, 0
    %v2377 = vsel %vm2361, 1, 0
    %v2378 = vsel %vm2362, 1, 0
    %v2379 = vsel %vm2363, 1, 0
    %v2380 = vsel %vm2364, 1, 0
    %v2381 = vsel %vm2365, 1, 0
    %v2382 = vsel %vm2366, 1, 0
    %v2383 = vsel %vm2367, 1, 0
    %v2384 = vsel %vm2368, 1, 0
    %v2385 = vsel %vm2369, 1, 0
    %v2386 = vsel %vm2370, 1, 0
    %v2387 = vsel %vm2371, 1, 0
    %v2388 = vsel %vm2372, 1, 0
    %v2389 = vsel %vm2373, 1, 0
    %2390 = vset.pattern.permute.xlu0 0
    %2391 = vperm.xlu0 %2390, %v2374
    %v2392 = vpop.permute.xlu0 %2391
    %2393 = vset.pattern.permute.xlu0 0
    %2394 = vperm.xlu0 %2393, %v2375
    %v2395 = vpop.permute.xlu0 %2394
    %2396 = vset.pattern.permute.xlu0 0
    %2397 = vperm.xlu0 %2396, %v2376
    %v2398 = vpop.permute.xlu0 %2397
    %2399 = vset.pattern.permute.xlu0 0
    %2400 = vperm.xlu0 %2399, %v2377
    %v2401 = vpop.permute.xlu0 %2400
    %2402 = vset.pattern.permute.xlu0 0
    %2403 = vperm.xlu0 %2402, %v2378
    %v2404 = vpop.permute.xlu0 %2403
    %2405 = vset.pattern.permute.xlu0 0
    %2406 = vperm.xlu0 %2405, %v2379
    %v2407 = vpop.permute.xlu0 %2406
    %2408 = vset.pattern.permute.xlu0 0
    %2409 = vperm.xlu0 %2408, %v2380
    %v2410 = vpop.permute.xlu0 %2409
    %2411 = vset.pattern.permute.xlu0 0
    %2412 = vperm.xlu0 %2411, %v2381
    %v2413 = vpop.permute.xlu0 %2412
    %2414 = vset.pattern.permute.xlu0 0
    %2415 = vperm.xlu0 %2414, %v2382
    %v2416 = vpop.permute.xlu0 %2415
    %2417 = vset.pattern.permute.xlu0 0
    %2418 = vperm.xlu0 %2417, %v2383
    %v2419 = vpop.permute.xlu0 %2418
    %2420 = vset.pattern.permute.xlu0 0
    %2421 = vperm.xlu0 %2420, %v2384
    %v2422 = vpop.permute.xlu0 %2421
    %2423 = vset.pattern.permute.xlu0 0
    %2424 = vperm.xlu0 %2423, %v2385
    %v2425 = vpop.permute.xlu0 %2424
    %2426 = vset.pattern.permute.xlu0 0
    %2427 = vperm.xlu0 %2426, %v2386
    %v2428 = vpop.permute.xlu0 %2427
    %2429 = vset.pattern.permute.xlu0 0
    %2430 = vperm.xlu0 %2429, %v2387
    %v2431 = vpop.permute.xlu0 %2430
    %2432 = vset.pattern.permute.xlu0 0
    %2433 = vperm.xlu0 %2432, %v2388
    %v2434 = vpop.permute.xlu0 %2433
    %2435 = vset.pattern.permute.xlu0 0
    %2436 = vperm.xlu0 %2435, %v2389
    %v2437 = vpop.permute.xlu0 %2436
    %vm2438 = vcmp.eq.s32.totalorder %v2392, 1
    %vm2439 = vcmp.eq.s32.totalorder %v2395, 1
    %vm2440 = vcmp.eq.s32.totalorder %v2398, 1
    %vm2441 = vcmp.eq.s32.totalorder %v2401, 1
    %vm2442 = vcmp.eq.s32.totalorder %v2404, 1
    %vm2443 = vcmp.eq.s32.totalorder %v2407, 1
    %vm2444 = vcmp.eq.s32.totalorder %v2410, 1
    %vm2445 = vcmp.eq.s32.totalorder %v2413, 1
    %vm2446 = vcmp.eq.s32.totalorder %v2416, 1
    %vm2447 = vcmp.eq.s32.totalorder %v2419, 1
    %vm2448 = vcmp.eq.s32.totalorder %v2422, 1
    %vm2449 = vcmp.eq.s32.totalorder %v2425, 1
    %vm2450 = vcmp.eq.s32.totalorder %v2428, 1
    %vm2451 = vcmp.eq.s32.totalorder %v2431, 1
    %vm2452 = vcmp.eq.s32.totalorder %v2434, 1
    %vm2453 = vcmp.eq.s32.totalorder %v2437, 1
    %v2454 = vsel %vm2438, %v2342, 0.0
    %v2455 = vsel %vm2439, %v2343, 0.0
    %v2456 = vsel %vm2440, %v2344, 0.0
    %v2457 = vsel %vm2441, %v2345, 0.0
    %v2458 = vsel %vm2442, %v2346, 0.0
    %v2459 = vsel %vm2443, %v2347, 0.0
    %v2460 = vsel %vm2444, %v2348, 0.0
    %v2461 = vsel %vm2445, %v2349, 0.0
    %v2462 = vsel %vm2446, %v2350, 0.0
    %v2463 = vsel %vm2447, %v2351, 0.0
    %v2464 = vsel %vm2448, %v2352, 0.0
    %v2465 = vsel %vm2449, %v2353, 0.0
    %v2466 = vsel %vm2450, %v2354, 0.0
    %v2467 = vsel %vm2451, %v2355, 0.0
    %v2468 = vsel %vm2452, %v2356, 0.0
    %v2469 = vsel %vm2453, %v2357, 0.0
    %v2470 = vpack.c.bf16 %v2455, %v2454
    %v2471 = vpack.c.bf16 %v2457, %v2456
    %v2472 = vpack.c.bf16 %v2459, %v2458
    %v2473 = vpack.c.bf16 %v2461, %v2460
    %v2474 = vpack.c.bf16 %v2463, %v2462
    %v2475 = vpack.c.bf16 %v2465, %v2464
    %v2476 = vpack.c.bf16 %v2467, %v2466
    %v2477 = vpack.c.bf16 %v2469, %v2468
    %v2478 = vld [vmem:[%s5 + $0x60] sm:$0xf]
    %v2479 = vld [vmem:[%s5 + $0x64] sm:$0xf]
    %v2480 = vld [vmem:[%s5 + $0x68] sm:$0xf]
    %v2481 = vld [vmem:[%s5 + $0x6c] sm:$0xf]
    %v2486 = vunpack.c.l.b16 %v2478
    %v2487 = vunpack.c.l.b16 %v2479
    %v2488 = vunpack.c.l.b16 %v2480
    %v2489 = vunpack.c.l.b16 %v2481
    %v2490 = vpack.c.b16 %v2487, %v2486
    %v2491 = vpack.c.b16 %v2489, %v2488
    %v2495 = vsel %vm81, %v2470, 0
    %v2498 = vsel %vm81, %v2471, 0
    %v2501 = vsel %vm81, %v2472, 0
    %v2504 = vsel %vm81, %v2473, 0
    %v2507 = vsel %vm81, %v2474, 0
    %v2510 = vsel %vm81, %v2475, 0
    %v2513 = vsel %vm81, %v2476, 0
    %v2516 = vsel %vm81, %v2477, 0
    %2518 = vmatprep.subr.bf16.mxu0 0
    %2519 = vmatpush1.bf16.msra.mxu0 %v2490
    %2520 = vmatprep.subr.bf16.mxu0 0
    %2521 = vmatpush1.bf16.msra.mxu0 %v2491
    %2522 = vmatprep.subr.bf16.mxu0 0
    %2523 = vmatpush1.bf16.msra.mxu0 0
    %2524 = vmatprep.subr.bf16.mxu0 0
    %2525 = vmatpush1.bf16.msra.mxu0 0
    %2526 = vmatprep.subr.bf16.mxu0 0
    %2527 = vmatpush1.bf16.msra.mxu0 0
    %2528 = vmatprep.subr.bf16.mxu0 0
    %2529 = vmatpush1.bf16.msra.mxu0 0
    %2530 = vmatprep.subr.bf16.mxu0 0
    %2531 = vmatpush1.bf16.msra.mxu0 0
    %2532 = vmatprep.subr.bf16.mxu0 0
    %2533 = vmatpush1.bf16.msra.mxu0 0
    %2534 = vmatprep.subr.bf16.mxu0 0
    %2535 = vmatpush1.bf16.msra.mxu0 0
    %2536 = vmatprep.subr.bf16.mxu0 0
    %2537 = vmatpush1.bf16.msra.mxu0 0
    %2538 = vmatprep.subr.bf16.mxu0 0
    %2539 = vmatpush1.bf16.msra.mxu0 0
    %2540 = vmatprep.subr.bf16.mxu0 0
    %2541 = vmatpush1.bf16.msra.mxu0 0
    %2542 = vmatprep.subr.bf16.mxu0 0
    %2543 = vmatpush1.bf16.msra.mxu0 0
    %2544 = vmatprep.subr.bf16.mxu0 0
    %2545 = vmatpush1.bf16.msra.mxu0 0
    %2546 = vmatprep.subr.bf16.mxu0 0
    %2547 = vmatpush1.bf16.msra.mxu0 0
    %2548 = vmatprep.subr.bf16.mxu0 0
    %2549 = vmatpush1.bf16.msra.mxu0 0
    %2550 = vmatprep.mubr.bf16.mxu0 0
    %2551 = vmatmul.mubr.bf16.gmra.mrb[0].mxu0 %v2495
    %v2552 = vpop.f32.mrb[0].mxu0
    %v2553 = vadd.f32 0.0, %v2552
    %v2554 = vpop.f32.mrb[0].mxu0
    %v2555 = vpop.f32.mrb[0].mxu0
    %v2556 = vadd.f32 0.0, %v2555
    %v2557 = vpop.f32.mrb[0].mxu0
    %2558 = vmatprep.mubr.bf16.mxu0 0
    %2559 = vmatmul.mubr.bf16.gmra.mrb[0].mxu0 %v2498
    %v2560 = vpop.f32.mrb[0].mxu0
    %v2561 = vadd.f32 0.0, %v2560
    %v2562 = vpop.f32.mrb[0].mxu0
    %v2563 = vpop.f32.mrb[0].mxu0
    %v2564 = vadd.f32 0.0, %v2563
    %v2565 = vpop.f32.mrb[0].mxu0
    %2566 = vmatprep.mubr.bf16.mxu0 0
    %2567 = vmatmul.mubr.bf16.gmra.mrb[0].mxu0 %v2501
    %v2568 = vpop.f32.mrb[0].mxu0
    %v2569 = vadd.f32 0.0, %v2568
    %v2570 = vpop.f32.mrb[0].mxu0
    %v2571 = vpop.f32.mrb[0].mxu0
    %v2572 = vadd.f32 0.0, %v2571
    %v2573 = vpop.f32.mrb[0].mxu0
    %2574 = vmatprep.mubr.bf16.mxu0 0
    %2575 = vmatmul.mubr.bf16.gmra.mrb[0].mxu0 %v2504
    %v2576 = vpop.f32.mrb[0].mxu0
    %v2577 = vadd.f32 0.0, %v2576
    %v2578 = vpop.f32.mrb[0].mxu0
    %v2579 = vpop.f32.mrb[0].mxu0
    %v2580 = vadd.f32 0.0, %v2579
    %v2581 = vpop.f32.mrb[0].mxu0
    %2582 = vmatprep.mubr.bf16.mxu0 0
    %2583 = vmatmul.mubr.bf16.gmra.mrb[0].mxu0 %v2507
    %v2584 = vpop.f32.mrb[0].mxu0
    %v2585 = vadd.f32 0.0, %v2584
    %v2586 = vpop.f32.mrb[0].mxu0
    %v2587 = vpop.f32.mrb[0].mxu0
    %v2588 = vadd.f32 0.0, %v2587
    %v2589 = vpop.f32.mrb[0].mxu0
    %2590 = vmatprep.mubr.bf16.mxu0 0
    %2591 = vmatmul.mubr.bf16.gmra.mrb[0].mxu0 %v2510
    %v2592 = vpop.f32.mrb[0].mxu0
    %v2593 = vadd.f32 0.0, %v2592
    %v2594 = vpop.f32.mrb[0].mxu0
    %v2595 = vpop.f32.mrb[0].mxu0
    %v2596 = vadd.f32 0.0, %v2595
    %v2597 = vpop.f32.mrb[0].mxu0
    %2598 = vmatprep.mubr.bf16.mxu0 0
    %2599 = vmatmul.mubr.bf16.gmra.mrb[0].mxu0 %v2513
    %v2600 = vpop.f32.mrb[0].mxu0
    %v2601 = vadd.f32 0.0, %v2600
    %v2602 = vpop.f32.mrb[0].mxu0
    %v2603 = vpop.f32.mrb[0].mxu0
    %v2604 = vadd.f32 0.0, %v2603
    %v2605 = vpop.f32.mrb[0].mxu0
    %2606 = vmatprep.mubr.bf16.mxu0 0
    %2607 = vmatmul.mubr.bf16.gmra.mrb[0].mxu0 %v2516
    %v2608 = vpop.f32.mrb[0].mxu0
    %v2609 = vadd.f32 0.0, %v2608
    %v2610 = vpop.f32.mrb[0].mxu0
    %v2611 = vpop.f32.mrb[0].mxu0
    %v2612 = vadd.f32 0.0, %v2611
    %v2613 = vpop.f32.mrb[0].mxu0
    %2614 = vdwg.mxu0
    %v2615 = vadd.f32 %v2326, %v2553
    %v2616 = vadd.f32 %v2327, %v2556
    %v2617 = vadd.f32 %v2328, %v2561
    %v2618 = vadd.f32 %v2329, %v2564
    %v2619 = vadd.f32 %v2330, %v2569
    %v2620 = vadd.f32 %v2331, %v2572
    %v2621 = vadd.f32 %v2332, %v2577
    %v2622 = vadd.f32 %v2333, %v2580
    %v2623 = vadd.f32 %v2334, %v2585
    %v2624 = vadd.f32 %v2335, %v2588
    %v2625 = vadd.f32 %v2336, %v2593
    %v2626 = vadd.f32 %v2337, %v2596
    %v2627 = vadd.f32 %v2338, %v2601
    %v2628 = vadd.f32 %v2339, %v2604
    %v2629 = vadd.f32 %v2340, %v2609
    %v2630 = vadd.f32 %v2341, %v2612
    %v2631 = vld [vmem:[#allocation2 + $0x1a] sm:$0xff]
    %v2632 = vld [vmem:[#allocation2 + $0x22] sm:$0xff]
    %v2633 = vld [vmem:[#allocation2 + $0x2a] sm:$0xff]
    %v2634 = vld [vmem:[#allocation2 + $0x32] sm:$0xff]
    %v2635 = vld [vmem:[#allocation2 + $0x3a] sm:$0xff]
    %v2636 = vld [vmem:[#allocation2 + $0x42] sm:$0xff]
    %v2637 = vld [vmem:[#allocation2 + $0x4a] sm:$0xff]
    %v2638 = vld [vmem:[#allocation2 + $0x52] sm:$0xff]
    %v2639 = vld [vmem:[#allocation2 + $0x5a] sm:$0xff]
    %v2640 = vld [vmem:[#allocation2 + $0x62] sm:$0xff]
    %v2641 = vld [vmem:[#allocation2 + $0x6a] sm:$0xff]
    %v2642 = vld [vmem:[#allocation2 + $0x72] sm:$0xff]
    %v2643 = vld [vmem:[#allocation2 + $0x7a] sm:$0xff]
    %v2644 = vld [vmem:[#allocation2 + $0x82] sm:$0xff]
    %v2645 = vld [vmem:[#allocation2 + $0x8a] sm:$0xff]
    %v2646 = vld [vmem:[#allocation2 + $0x92] sm:$0xff]
    %v2647 = vsel %vm2438, %v2631, 0.0
    %v2648 = vsel %vm2439, %v2632, 0.0
    %v2649 = vsel %vm2440, %v2633, 0.0
    %v2650 = vsel %vm2441, %v2634, 0.0
    %v2651 = vsel %vm2442, %v2635, 0.0
    %v2652 = vsel %vm2443, %v2636, 0.0
    %v2653 = vsel %vm2444, %v2637, 0.0
    %v2654 = vsel %vm2445, %v2638, 0.0
    %v2655 = vsel %vm2446, %v2639, 0.0
    %v2656 = vsel %vm2447, %v2640, 0.0
    %v2657 = vsel %vm2448, %v2641, 0.0
    %v2658 = vsel %vm2449, %v2642, 0.0
    %v2659 = vsel %vm2450, %v2643, 0.0
    %v2660 = vsel %vm2451, %v2644, 0.0
    %v2661 = vsel %vm2452, %v2645, 0.0
    %v2662 = vsel %vm2453, %v2646, 0.0
    %v2663 = vpack.c.bf16 %v2648, %v2647
    %v2664 = vpack.c.bf16 %v2650, %v2649
    %v2665 = vpack.c.bf16 %v2652, %v2651
    %v2666 = vpack.c.bf16 %v2654, %v2653
    %v2667 = vpack.c.bf16 %v2656, %v2655
    %v2668 = vpack.c.bf16 %v2658, %v2657
    %v2669 = vpack.c.bf16 %v2660, %v2659
    %v2670 = vpack.c.bf16 %v2662, %v2661
    %v2671 = vld [vmem:[%s5 + $0x70] sm:$0xf]
    %v2672 = vld [vmem:[%s5 + $0x74] sm:$0xf]
    %v2673 = vld [vmem:[%s5 + $0x78] sm:$0xf]
    %v2674 = vld [vmem:[%s5 + $0x7c] sm:$0xf]
    %v2679 = vunpack.c.l.b16 %v2671
    %v2680 = vunpack.c.l.b16 %v2672
    %v2681 = vunpack.c.l.b16 %v2673
    %v2682 = vunpack.c.l.b16 %v2674
    %v2683 = vpack.c.b16 %v2680, %v2679
    %v2684 = vpack.c.b16 %v2682, %v2681
    %v2688 = vsel %vm81, %v2663, 0
    %v2691 = vsel %vm81, %v2664, 0
    %v2694 = vsel %vm81, %v2665, 0
    %v2697 = vsel %vm81, %v2666, 0
    %v2700 = vsel %vm81, %v2667, 0
    %v2703 = vsel %vm81, %v2668, 0
    %v2706 = vsel %vm81, %v2669, 0
    %v2709 = vsel %vm81, %v2670, 0
    %2711 = vmatprep.subr.bf16.mxu0 0
    %2712 = vmatpush1.bf16.msra.mxu0 %v2683
    %2713 = vmatprep.subr.bf16.mxu0 0
    %2714 = vmatpush1.bf16.msra.mxu0 %v2684
    %2715 = vmatprep.subr.bf16.mxu0 0
    %2716 = vmatpush1.bf16.msra.mxu0 0
    %2717 = vmatprep.subr.bf16.mxu0 0
    %2718 = vmatpush1.bf16.msra.mxu0 0
    %2719 = vmatprep.subr.bf16.mxu0 0
    %2720 = vmatpush1.bf16.msra.mxu0 0
    %2721 = vmatprep.subr.bf16.mxu0 0
    %2722 = vmatpush1.bf16.msra.mxu0 0
    %2723 = vmatprep.subr.bf16.mxu0 0
    %2724 = vmatpush1.bf16.msra.mxu0 0
    %2725 = vmatprep.subr.bf16.mxu0 0
    %2726 = vmatpush1.bf16.msra.mxu0 0
    %2727 = vmatprep.subr.bf16.mxu0 0
    %2728 = vmatpush1.bf16.msra.mxu0 0
    %2729 = vmatprep.subr.bf16.mxu0 0
    %2730 = vmatpush1.bf16.msra.mxu0 0
    %2731 = vmatprep.subr.bf16.mxu0 0
    %2732 = vmatpush1.bf16.msra.mxu0 0
    %2733 = vmatprep.subr.bf16.mxu0 0
    %2734 = vmatpush1.bf16.msra.mxu0 0
    %2735 = vmatprep.subr.bf16.mxu0 0
    %2736 = vmatpush1.bf16.msra.mxu0 0
    %2737 = vmatprep.subr.bf16.mxu0 0
    %2738 = vmatpush1.bf16.msra.mxu0 0
    %2739 = vmatprep.subr.bf16.mxu0 0
    %2740 = vmatpush1.bf16.msra.mxu0 0
    %2741 = vmatprep.subr.bf16.mxu0 0
    %2742 = vmatpush1.bf16.msra.mxu0 0
    %2743 = vmatprep.mubr.bf16.mxu0 0
    %2744 = vmatmul.mubr.bf16.gmra.mrb[0].mxu0 %v2688
    %v2745 = vpop.f32.mrb[0].mxu0
    %v2746 = vadd.f32 0.0, %v2745
    %v2747 = vpop.f32.mrb[0].mxu0
    %v2748 = vpop.f32.mrb[0].mxu0
    %v2749 = vadd.f32 0.0, %v2748
    %v2750 = vpop.f32.mrb[0].mxu0
    %2751 = vmatprep.mubr.bf16.mxu0 0
    %2752 = vmatmul.mubr.bf16.gmra.mrb[0].mxu0 %v2691
    %v2753 = vpop.f32.mrb[0].mxu0
    %v2754 = vadd.f32 0.0, %v2753
    %v2755 = vpop.f32.mrb[0].mxu0
    %v2756 = vpop.f32.mrb[0].mxu0
    %v2757 = vadd.f32 0.0, %v2756
    %v2758 = vpop.f32.mrb[0].mxu0
    %2759 = vmatprep.mubr.bf16.mxu0 0
    %2760 = vmatmul.mubr.bf16.gmra.mrb[0].mxu0 %v2694
    %v2761 = vpop.f32.mrb[0].mxu0
    %v2762 = vadd.f32 0.0, %v2761
    %v2763 = vpop.f32.mrb[0].mxu0
    %v2764 = vpop.f32.mrb[0].mxu0
    %v2765 = vadd.f32 0.0, %v2764
    %v2766 = vpop.f32.mrb[0].mxu0
    %2767 = vmatprep.mubr.bf16.mxu0 0
    %2768 = vmatmul.mubr.bf16.gmra.mrb[0].mxu0 %v2697
    %v2769 = vpop.f32.mrb[0].mxu0
    %v2770 = vadd.f32 0.0, %v2769
    %v2771 = vpop.f32.mrb[0].mxu0
    %v2772 = vpop.f32.mrb[0].mxu0
    %v2773 = vadd.f32 0.0, %v2772
    %v2774 = vpop.f32.mrb[0].mxu0
    %2775 = vmatprep.mubr.bf16.mxu0 0
    %2776 = vmatmul.mubr.bf16.gmra.mrb[0].mxu0 %v2700
    %v2777 = vpop.f32.mrb[0].mxu0
    %v2778 = vadd.f32 0.0, %v2777
    %v2779 = vpop.f32.mrb[0].mxu0
    %v2780 = vpop.f32.mrb[0].mxu0
    %v2781 = vadd.f32 0.0, %v2780
    %v2782 = vpop.f32.mrb[0].mxu0
    %2783 = vmatprep.mubr.bf16.mxu0 0
    %2784 = vmatmul.mubr.bf16.gmra.mrb[0].mxu0 %v2703
    %v2785 = vpop.f32.mrb[0].mxu0
    %v2786 = vadd.f32 0.0, %v2785
    %v2787 = vpop.f32.mrb[0].mxu0
    %v2788 = vpop.f32.mrb[0].mxu0
    %v2789 = vadd.f32 0.0, %v2788
    %v2790 = vpop.f32.mrb[0].mxu0
    %2791 = vmatprep.mubr.bf16.mxu0 0
    %2792 = vmatmul.mubr.bf16.gmra.mrb[0].mxu0 %v2706
    %v2793 = vpop.f32.mrb[0].mxu0
    %v2794 = vadd.f32 0.0, %v2793
    %v2795 = vpop.f32.mrb[0].mxu0
    %v2796 = vpop.f32.mrb[0].mxu0
    %v2797 = vadd.f32 0.0, %v2796
    %v2798 = vpop.f32.mrb[0].mxu0
    %2799 = vmatprep.mubr.bf16.mxu0 0
    %2800 = vmatmul.mubr.bf16.gmra.mrb[0].mxu0 %v2709
    %v2801 = vpop.f32.mrb[0].mxu0
    %v2802 = vadd.f32 0.0, %v2801
    %v2803 = vpop.f32.mrb[0].mxu0
    %v2804 = vpop.f32.mrb[0].mxu0
    %v2805 = vadd.f32 0.0, %v2804
    %v2806 = vpop.f32.mrb[0].mxu0
    %2807 = vdwg.mxu0
    %v2808 = vadd.f32 %v2615, %v2746
    %v2809 = vadd.f32 %v2616, %v2749
    %v2810 = vadd.f32 %v2617, %v2754
    %v2811 = vadd.f32 %v2618, %v2757
    %v2812 = vadd.f32 %v2619, %v2762
    %v2813 = vadd.f32 %v2620, %v2765
    %v2814 = vadd.f32 %v2621, %v2770
    %v2815 = vadd.f32 %v2622, %v2773
    %v2816 = vadd.f32 %v2623, %v2778
    %v2817 = vadd.f32 %v2624, %v2781
    %v2818 = vadd.f32 %v2625, %v2786
    %v2819 = vadd.f32 %v2626, %v2789
    %v2820 = vadd.f32 %v2627, %v2794
    %v2821 = vadd.f32 %v2628, %v2797
    %v2822 = vadd.f32 %v2629, %v2802
    %v2823 = vadd.f32 %v2630, %v2805
    %v2824 = vld [vmem:[#allocation2 + $0x2a] sm:$0xff]
    %v2825 = vld [vmem:[#allocation2 + $0x32] sm:$0xff]
    %v2826 = vld [vmem:[#allocation2 + $0x3a] sm:$0xff]
    %v2827 = vld [vmem:[#allocation2 + $0x42] sm:$0xff]
    %v2828 = vld [vmem:[#allocation2 + $0x4a] sm:$0xff]
    %v2829 = vld [vmem:[#allocation2 + $0x52] sm:$0xff]
    %v2830 = vld [vmem:[#allocation2 + $0x5a] sm:$0xff]
    %v2831 = vld [vmem:[#allocation2 + $0x62] sm:$0xff]
    %v2832 = vld [vmem:[#allocation2 + $0x6a] sm:$0xff]
    %v2833 = vld [vmem:[#allocation2 + $0x72] sm:$0xff]
    %v2834 = vld [vmem:[#allocation2 + $0x7a] sm:$0xff]
    %v2835 = vld [vmem:[#allocation2 + $0x82] sm:$0xff]
    %v2836 = vld [vmem:[#allocation2 + $0x8a] sm:$0xff]
    %v2837 = vld [vmem:[#allocation2 + $0x92] sm:$0xff]
    %v2838 = vld [vmem:[#allocation2 + $0x9a] sm:$0xff]
    %v2839 = vld [vmem:[#allocation2 + $0xa2] sm:$0xff]
    %v2840 = vsel %vm2438, %v2824, 0.0
    %v2841 = vsel %vm2439, %v2825, 0.0
    %v2842 = vsel %vm2440, %v2826, 0.0
    %v2843 = vsel %vm2441, %v2827, 0.0
    %v2844 = vsel %vm2442, %v2828, 0.0
    %v2845 = vsel %vm2443, %v2829, 0.0
    %v2846 = vsel %vm2444, %v2830, 0.0
    %v2847 = vsel %vm2445, %v2831, 0.0
    %v2848 = vsel %vm2446, %v2832, 0.0
    %v2849 = vsel %vm2447, %v2833, 0.0
    %v2850 = vsel %vm2448, %v2834, 0.0
    %v2851 = vsel %vm2449, %v2835, 0.0
    %v2852 = vsel %vm2450, %v2836, 0.0
    %v2853 = vsel %vm2451, %v2837, 0.0
    %v2854 = vsel %vm2452, %v2838, 0.0
    %v2855 = vsel %vm2453, %v2839, 0.0
    %v2856 = vpack.c.bf16 %v2841, %v2840
    %v2857 = vpack.c.bf16 %v2843, %v2842
    %v2858 = vpack.c.bf16 %v2845, %v2844
    %v2859 = vpack.c.bf16 %v2847, %v2846
    %v2860 = vpack.c.bf16 %v2849, %v2848
    %v2861 = vpack.c.bf16 %v2851, %v2850
    %v2862 = vpack.c.bf16 %v2853, %v2852
    %v2863 = vpack.c.bf16 %v2855, %v2854
    %v2864 = vld [vmem:[%s5 + $0x80] sm:$0xf]
    %v2865 = vld [vmem:[%s5 + $0x84] sm:$0xf]
    %v2866 = vld [vmem:[%s5 + $0x88] sm:$0xf]
    %v2867 = vld [vmem:[%s5 + $0x8c] sm:$0xf]
    %v2872 = vunpack.c.l.b16 %v2864
    %v2873 = vunpack.c.l.b16 %v2865
    %v2874 = vunpack.c.l.b16 %v2866
    %v2875 = vunpack.c.l.b16 %v2867
    %v2876 = vpack.c.b16 %v2873, %v2872
    %v2877 = vpack.c.b16 %v2875, %v2874
    %v2881 = vsel %vm81, %v2856, 0
    %v2884 = vsel %vm81, %v2857, 0
    %v2887 = vsel %vm81, %v2858, 0
    %v2890 = vsel %vm81, %v2859, 0
    %v2893 = vsel %vm81, %v2860, 0
    %v2896 = vsel %vm81, %v2861, 0
    %v2899 = vsel %vm81, %v2862, 0
    %v2902 = vsel %vm81, %v2863, 0
    %2904 = vmatprep.subr.bf16.mxu0 0
    %2905 = vmatpush1.bf16.msra.mxu0 %v2876
    %2906 = vmatprep.subr.bf16.mxu0 0
    %2907 = vmatpush1.bf16.msra.mxu0 %v2877
    %2908 = vmatprep.subr.bf16.mxu0 0
    %2909 = vmatpush1.bf16.msra.mxu0 0
    %2910 = vmatprep.subr.bf16.mxu0 0
    %2911 = vmatpush1.bf16.msra.mxu0 0
    %2912 = vmatprep.subr.bf16.mxu0 0
    %2913 = vmatpush1.bf16.msra.mxu0 0
    %2914 = vmatprep.subr.bf16.mxu0 0
    %2915 = vmatpush1.bf16.msra.mxu0 0
    %2916 = vmatprep.subr.bf16.mxu0 0
    %2917 = vmatpush1.bf16.msra.mxu0 0
    %2918 = vmatprep.subr.bf16.mxu0 0
    %2919 = vmatpush1.bf16.msra.mxu0 0
    %2920 = vmatprep.subr.bf16.mxu0 0
    %2921 = vmatpush1.bf16.msra.mxu0 0
    %2922 = vmatprep.subr.bf16.mxu0 0
    %2923 = vmatpush1.bf16.msra.mxu0 0
    %2924 = vmatprep.subr.bf16.mxu0 0
    %2925 = vmatpush1.bf16.msra.mxu0 0
    %2926 = vmatprep.subr.bf16.mxu0 0
    %2927 = vmatpush1.bf16.msra.mxu0 0
    %2928 = vmatprep.subr.bf16.mxu0 0
    %2929 = vmatpush1.bf16.msra.mxu0 0
    %2930 = vmatprep.subr.bf16.mxu0 0
    %2931 = vmatpush1.bf16.msra.mxu0 0
    %2932 = vmatprep.subr.bf16.mxu0 0
    %2933 = vmatpush1.bf16.msra.mxu0 0
    %2934 = vmatprep.subr.bf16.mxu0 0
    %2935 = vmatpush1.bf16.msra.mxu0 0
    %2936 = vmatprep.mubr.bf16.mxu0 0
    %2937 = vmatmul.mubr.bf16.gmra.mrb[0].mxu0 %v2881
    %v2938 = vpop.f32.mrb[0].mxu0
    %v2939 = vadd.f32 0.0, %v2938
    %v2940 = vpop.f32.mrb[0].mxu0
    %v2941 = vpop.f32.mrb[0].mxu0
    %v2942 = vadd.f32 0.0, %v2941
    %v2943 = vpop.f32.mrb[0].mxu0
    %2944 = vmatprep.mubr.bf16.mxu0 0
    %2945 = vmatmul.mubr.bf16.gmra.mrb[0].mxu0 %v2884
    %v2946 = vpop.f32.mrb[0].mxu0
    %v2947 = vadd.f32 0.0, %v2946
    %v2948 = vpop.f32.mrb[0].mxu0
    %v2949 = vpop.f32.mrb[0].mxu0
    %v2950 = vadd.f32 0.0, %v2949
    %v2951 = vpop.f32.mrb[0].mxu0
    %2952 = vmatprep.mubr.bf16.mxu0 0
    %2953 = vmatmul.mubr.bf16.gmra.mrb[0].mxu0 %v2887
    %v2954 = vpop.f32.mrb[0].mxu0
    %v2955 = vadd.f32 0.0, %v2954
    %v2956 = vpop.f32.mrb[0].mxu0
    %v2957 = vpop.f32.mrb[0].mxu0
    %v2958 = vadd.f32 0.0, %v2957
    %v2959 = vpop.f32.mrb[0].mxu0
    %2960 = vmatprep.mubr.bf16.mxu0 0
    %2961 = vmatmul.mubr.bf16.gmra.mrb[0].mxu0 %v2890
    %v2962 = vpop.f32.mrb[0].mxu0
    %v2963 = vadd.f32 0.0, %v2962
    %v2964 = vpop.f32.mrb[0].mxu0
    %v2965 = vpop.f32.mrb[0].mxu0
    %v2966 = vadd.f32 0.0, %v2965
    %v2967 = vpop.f32.mrb[0].mxu0
    %2968 = vmatprep.mubr.bf16.mxu0 0
    %2969 = vmatmul.mubr.bf16.gmra.mrb[0].mxu0 %v2893
    %v2970 = vpop.f32.mrb[0].mxu0
    %v2971 = vadd.f32 0.0, %v2970
    %v2972 = vpop.f32.mrb[0].mxu0
    %v2973 = vpop.f32.mrb[0].mxu0
    %v2974 = vadd.f32 0.0, %v2973
    %v2975 = vpop.f32.mrb[0].mxu0
    %2976 = vmatprep.mubr.bf16.mxu0 0
    %2977 = vmatmul.mubr.bf16.gmra.mrb[0].mxu0 %v2896
    %v2978 = vpop.f32.mrb[0].mxu0
    %v2979 = vadd.f32 0.0, %v2978
    %v2980 = vpop.f32.mrb[0].mxu0
    %v2981 = vpop.f32.mrb[0].mxu0
    %v2982 = vadd.f32 0.0, %v2981
    %v2983 = vpop.f32.mrb[0].mxu0
    %2984 = vmatprep.mubr.bf16.mxu0 0
    %2985 = vmatmul.mubr.bf16.gmra.mrb[0].mxu0 %v2899
    %v2986 = vpop.f32.mrb[0].mxu0
    %v2987 = vadd.f32 0.0, %v2986
    %v2988 = vpop.f32.mrb[0].mxu0
    %v2989 = vpop.f32.mrb[0].mxu0
    %v2990 = vadd.f32 0.0, %v2989
    %v2991 = vpop.f32.mrb[0].mxu0
    %2992 = vmatprep.mubr.bf16.mxu0 0
    %2993 = vmatmul.mubr.bf16.gmra.mrb[0].mxu0 %v2902
    %v2994 = vpop.f32.mrb[0].mxu0
    %v2995 = vadd.f32 0.0, %v2994
    %v2996 = vpop.f32.mrb[0].mxu0
    %v2997 = vpop.f32.mrb[0].mxu0
    %v2998 = vadd.f32 0.0, %v2997
    %v2999 = vpop.f32.mrb[0].mxu0
    %3000 = vdwg.mxu0
    %v3001 = vadd.f32 %v2808, %v2939
    %v3002 = vadd.f32 %v2809, %v2942
    %v3003 = vadd.f32 %v2810, %v2947
    %v3004 = vadd.f32 %v2811, %v2950
    %v3005 = vadd.f32 %v2812, %v2955
    %v3006 = vadd.f32 %v2813, %v2958
    %v3007 = vadd.f32 %v2814, %v2963
    %v3008 = vadd.f32 %v2815, %v2966
    %v3009 = vadd.f32 %v2816, %v2971
    %v3010 = vadd.f32 %v2817, %v2974
    %v3011 = vadd.f32 %v2818, %v2979
    %v3012 = vadd.f32 %v2819, %v2982
    %v3013 = vadd.f32 %v2820, %v2987
    %v3014 = vadd.f32 %v2821, %v2990
    %v3015 = vadd.f32 %v2822, %v2995
    %v3016 = vadd.f32 %v2823, %v2998
    %v3017 = vld [vmem:[%s6] sm:$0x1]
    %v3019 = vlaneseq
    %v3020 = vshrl.u32 %v3019, 7
    %v3021 = vsub.s32 0, %v3020
    %v3022 = vrot.slane %v3017, %v3021
    %v3024 = vmul.f32 %v3001, %v3022
    %v3025 = vmul.f32 %v3002, %v3022
    %v3026 = vmul.f32 %v3003, %v3022
    %v3027 = vmul.f32 %v3004, %v3022
    %v3028 = vmul.f32 %v3005, %v3022
    %v3029 = vmul.f32 %v3006, %v3022
    %v3030 = vmul.f32 %v3007, %v3022
    %v3031 = vmul.f32 %v3008, %v3022
    %v3032 = vmul.f32 %v3009, %v3022
    %v3033 = vmul.f32 %v3010, %v3022
    %v3034 = vmul.f32 %v3011, %v3022
    %v3035 = vmul.f32 %v3012, %v3022
    %v3036 = vmul.f32 %v3013, %v3022
    %v3037 = vmul.f32 %v3014, %v3022
    %v3038 = vmul.f32 %v3015, %v3022
    %v3039 = vmul.f32 %v3016, %v3022
    %v3040 = vld [vmem:[%s7] sm:$0x1]
    %v3042 = vlaneseq
    %v3043 = vshrl.u32 %v3042, 7
    %v3044 = vsub.s32 0, %v3043
    %v3045 = vrot.slane %v3040, %v3044
    %v3047 = vadd.f32 %v3024, %v3045
    %v3048 = vadd.f32 %v3025, %v3045
    %v3049 = vadd.f32 %v3026, %v3045
    %v3050 = vadd.f32 %v3027, %v3045
    %v3051 = vadd.f32 %v3028, %v3045
    %v3052 = vadd.f32 %v3029, %v3045
    %v3053 = vadd.f32 %v3030, %v3045
    %v3054 = vadd.f32 %v3031, %v3045
    %v3055 = vadd.f32 %v3032, %v3045
    %v3056 = vadd.f32 %v3033, %v3045
    %v3057 = vadd.f32 %v3034, %v3045
    %v3058 = vadd.f32 %v3035, %v3045
    %v3059 = vadd.f32 %v3036, %v3045
    %v3060 = vadd.f32 %v3037, %v3045
    %v3061 = vadd.f32 %v3038, %v3045
    %v3062 = vadd.f32 %v3039, %v3045
    %v3063 = vmax.f32 %v3047, 0.0
    %v3064 = vmax.f32 %v3048, 0.0
    %v3065 = vmax.f32 %v3049, 0.0
    %v3066 = vmax.f32 %v3050, 0.0
    %v3067 = vmax.f32 %v3051, 0.0
    %v3068 = vmax.f32 %v3052, 0.0
    %v3069 = vmax.f32 %v3053, 0.0
    %v3070 = vmax.f32 %v3054, 0.0
    %v3071 = vmax.f32 %v3055, 0.0
    %v3072 = vmax.f32 %v3056, 0.0
    %v3073 = vmax.f32 %v3057, 0.0
    %v3074 = vmax.f32 %v3058, 0.0
    %v3075 = vmax.f32 %v3059, 0.0
    %v3076 = vmax.f32 %v3060, 0.0
    %v3077 = vmax.f32 %v3061, 0.0
    %v3078 = vmax.f32 %v3062, 0.0
    %v3079 = vmax.f32 %v3063, %v3065
    %v3080 = vmax.f32 %v3064, %v3066
    %v3082 = vrot.slane %v3079, 2
    %v3084 = vmax.f32 %v3079, %v3082
    %v3086 = vrot.slane %v3080, 2
    %v3088 = vmax.f32 %v3080, %v3086
    %v3089 = vmax.f32 %v3067, %v3069
    %v3090 = vmax.f32 %v3068, %v3070
    %v3092 = vrot.slane %v3089, 2
    %v3094 = vmax.f32 %v3089, %v3092
    %v3096 = vrot.slane %v3090, 2
    %v3098 = vmax.f32 %v3090, %v3096
    %v3099 = vmax.f32 %v3071, %v3073
    %v3100 = vmax.f32 %v3072, %v3074
    %v3102 = vrot.slane %v3099, 2
    %v3104 = vmax.f32 %v3099, %v3102
    %v3106 = vrot.slane %v3100, 2
    %v3108 = vmax.f32 %v3100, %v3106
    %v3109 = vmax.f32 %v3075, %v3077
    %v3110 = vmax.f32 %v3076, %v3078
    %v3112 = vrot.slane %v3109, 2
    %v3114 = vmax.f32 %v3109, %v3112
    %v3116 = vrot.slane %v3110, 2
    %v3118 = vmax.f32 %v3110, %v3116
    %vm3119 = vcmask 517120
    %3120 = vst.msk [vmem:[#allocation3 + $0x10] sm:$0x3] %vm3119, %v3084
    %vm3121 = vcmask 521220
    %3122 = vst.msk [vmem:[#allocation3 + $0xe] sm:$0x30] %vm3121, %v3084
    %3123 = vst.msk [vmem:[#allocation3 + $0x14] sm:$0x3] %vm3119, %v3088
    %3124 = vst.msk [vmem:[#allocation3 + $0x12] sm:$0x30] %vm3121, %v3088
    %3125 = vst.msk [vmem:[#allocation3 + $0x18] sm:$0x3] %vm3119, %v3094
    %3126 = vst.msk [vmem:[#allocation3 + $0x16] sm:$0x30] %vm3121, %v3094
    %3127 = vst.msk [vmem:[#allocation3 + $0x1c] sm:$0x3] %vm3119, %v3098
    %3128 = vst.msk [vmem:[#allocation3 + $0x1a] sm:$0x30] %vm3121, %v3098
    %3129 = vst.msk [vmem:[#allocation3 + $0x20] sm:$0x3] %vm3119, %v3104
    %3130 = vst.msk [vmem:[#allocation3 + $0x1e] sm:$0x30] %vm3121, %v3104
    %3131 = vst.msk [vmem:[#allocation3 + $0x24] sm:$0x3] %vm3119, %v3108
    %3132 = vst.msk [vmem:[#allocation3 + $0x22] sm:$0x30] %vm3121, %v3108
    %3133 = vst.msk [vmem:[#allocation3 + $0x28] sm:$0x3] %vm3119, %v3114
    %3134 = vst.msk [vmem:[#allocation3 + $0x26] sm:$0x30] %vm3121, %v3114
    %3135 = vst.msk [vmem:[#allocation3 + $0x2c] sm:$0x3] %vm3119, %v3118
    %3136 = vst.msk [vmem:[#allocation3 + $0x2a] sm:$0x30] %vm3121, %v3118
    %v3137 = vld [vmem:[%s8] sm:$0xff]
    %v3138 = vld [vmem:[%s8 + $0x8] sm:$0xff]
    %v3139 = vld [vmem:[%s8 + $0x10] sm:$0xff]
    %v3140 = vld [vmem:[%s8 + $0x18] sm:$0xff]
    %v3141 = vld [vmem:[#allocation3 + $0x6] sm:$0xff]
    %v3142 = vld [vmem:[#allocation3 + $0xe] sm:$0xff]
    %v3143 = vld [vmem:[#allocation3 + $0x16] sm:$0xff]
    %v3144 = vld [vmem:[#allocation3 + $0x1e] sm:$0xff]
    %vm3145 = vcmp.ge.f32.partialorder %v3137, 1.0
    %vm3146 = vcmp.ge.f32.partialorder %v3138, 1.0
    %vm3147 = vcmp.ge.f32.partialorder %v3139, 1.0
    %vm3148 = vcmp.ge.f32.partialorder %v3140, 1.0
    %v3149 = vsel %vm3145, 1, 0
    %v3150 = vsel %vm3146, 1, 0
    %v3151 = vsel %vm3147, 1, 0
    %v3152 = vsel %vm3148, 1, 0
    %3153 = vset.pattern.permute.xlu0 0
    %3154 = vperm.xlu0 %3153, %v3149
    %v3155 = vpop.permute.xlu0 %3154
    %3156 = vset.pattern.permute.xlu0 0
    %3157 = vperm.xlu0 %3156, %v3150
    %v3158 = vpop.permute.xlu0 %3157
    %3159 = vset.pattern.permute.xlu0 0
    %3160 = vperm.xlu0 %3159, %v3151
    %v3161 = vpop.permute.xlu0 %3160
    %3162 = vset.pattern.permute.xlu0 0
    %3163 = vperm.xlu0 %3162, %v3152
    %v3164 = vpop.permute.xlu0 %3163
    %vm3165 = vcmp.eq.s32.totalorder %v3155, 1
    %vm3166 = vcmp.eq.s32.totalorder %v3158, 1
    %vm3167 = vcmp.eq.s32.totalorder %v3161, 1
    %vm3168 = vcmp.eq.s32.totalorder %v3164, 1
    %v3169 = vsel %vm3165, %v3141, 0.0
    %v3170 = vsel %vm3166, %v3142, 0.0
    %v3171 = vsel %vm3167, %v3143, 0.0
    %v3172 = vsel %vm3168, %v3144, 0.0
    %v3173 = vpack.c.bf16 %v3170, %v3169
    %v3174 = vpack.c.bf16 %v3172, %v3171
    %v3175 = vld [vmem:[%s9] sm:$0xf]
    %v3176 = vld [vmem:[%s9 + $0x4] sm:$0xf]
    %v3177 = vld [vmem:[%s9 + $0x8] sm:$0xf]
    %v3178 = vld [vmem:[%s9 + $0xc] sm:$0xf]
    %v3179 = vld [vmem:[%s9 + $0x10] sm:$0xf]
    %v3180 = vld [vmem:[%s9 + $0x14] sm:$0xf]
    %v3181 = vld [vmem:[%s9 + $0x18] sm:$0xf]
    %v3182 = vld [vmem:[%s9 + $0x1c] sm:$0xf]
    %v3183 = vld [vmem:[#allocation3 + $0xe] sm:$0xff]
    %v3184 = vld [vmem:[#allocation3 + $0x16] sm:$0xff]
    %v3185 = vld [vmem:[#allocation3 + $0x1e] sm:$0xff]
    %v3186 = vld [vmem:[#allocation3 + $0x26] sm:$0xff]
    %v3187 = vsel %vm3165, %v3183, 0.0
    %v3188 = vsel %vm3166, %v3184, 0.0
    %v3189 = vsel %vm3167, %v3185, 0.0
    %v3190 = vsel %vm3168, %v3186, 0.0
    %v3191 = vpack.c.bf16 %v3188, %v3187
    %v3192 = vpack.c.bf16 %v3190, %v3189
    %v3193 = vld [vmem:[%s9 + $0x20] sm:$0xf]
    %v3194 = vld [vmem:[%s9 + $0x24] sm:$0xf]
    %v3195 = vld [vmem:[%s9 + $0x28] sm:$0xf]
    %v3196 = vld [vmem:[%s9 + $0x2c] sm:$0xf]
    %v3197 = vld [vmem:[%s9 + $0x30] sm:$0xf]
    %v3198 = vld [vmem:[%s9 + $0x34] sm:$0xf]
    %v3199 = vld [vmem:[%s9 + $0x38] sm:$0xf]
    %v3200 = vld [vmem:[%s9 + $0x3c] sm:$0xf]
    %v3209 = vunpack.c.l.b16 %v3193
    %v3210 = vunpack.c.l.b16 %v3194
    %v3211 = vunpack.c.l.b16 %v3195
    %v3212 = vunpack.c.l.b16 %v3196
    %v3213 = vunpack.c.l.b16 %v3197
    %v3214 = vunpack.c.l.b16 %v3198
    %v3215 = vunpack.c.l.b16 %v3199
    %v3216 = vunpack.c.l.b16 %v3200
    %v3217 = vpack.c.b16 %v3210, %v3209
    %v3218 = vpack.c.b16 %v3212, %v3211
    %v3219 = vpack.c.b16 %v3214, %v3213
    %v3220 = vpack.c.b16 %v3216, %v3215
    %v3226 = vsel %vm88, %v3191, 0
    %v3229 = vsel %vm88, %v3192, 0
    %3231 = vmatprep.subr.bf16.mxu0 0
    %3232 = vmatpush1.bf16.msra.mxu0 %v3217
    %3233 = vmatprep.subr.bf16.mxu0 0
    %3234 = vmatpush1.bf16.msra.mxu0 %v3218
    %3235 = vmatprep.subr.bf16.mxu0 0
    %3236 = vmatpush1.bf16.msra.mxu0 %v3219
    %3237 = vmatprep.subr.bf16.mxu0 0
    %3238 = vmatpush1.bf16.msra.mxu0 %v3220
    %3239 = vmatprep.subr.bf16.mxu0 0
    %3240 = vmatpush1.bf16.msra.mxu0 0
    %3241 = vmatprep.subr.bf16.mxu0 0
    %3242 = vmatpush1.bf16.msra.mxu0 0
    %3243 = vmatprep.subr.bf16.mxu0 0
    %3244 = vmatpush1.bf16.msra.mxu0 0
    %3245 = vmatprep.subr.bf16.mxu0 0
    %3246 = vmatpush1.bf16.msra.mxu0 0
    %3247 = vmatprep.subr.bf16.mxu0 0
    %3248 = vmatpush1.bf16.msra.mxu0 0
    %3249 = vmatprep.subr.bf16.mxu0 0
    %3250 = vmatpush1.bf16.msra.mxu0 0
    %3251 = vmatprep.subr.bf16.mxu0 0
    %3252 = vmatpush1.bf16.msra.mxu0 0
    %3253 = vmatprep.subr.bf16.mxu0 0
    %3254 = vmatpush1.bf16.msra.mxu0 0
    %3255 = vmatprep.subr.bf16.mxu0 0
    %3256 = vmatpush1.bf16.msra.mxu0 0
    %3257 = vmatprep.subr.bf16.mxu0 0
    %3258 = vmatpush1.bf16.msra.mxu0 0
    %3259 = vmatprep.subr.bf16.mxu0 0
    %3260 = vmatpush1.bf16.msra.mxu0 0
    %3261 = vmatprep.subr.bf16.mxu0 0
    %3262 = vmatpush1.bf16.msra.mxu0 0
    %3263 = vmatprep.mubr.bf16.mxu0 0
    %3264 = vmatmul.mubr.bf16.gmra.mrb[0].mxu0 %v3226
    %v3265 = vpop.f32.mrb[0].mxu0
    %v3266 = vadd.f32 0.0, %v3265
    %v3267 = vpop.f32.mrb[0].mxu0
    %v3268 = vpop.f32.mrb[0].mxu0
    %v3269 = vadd.f32 0.0, %v3268
    %v3270 = vpop.f32.mrb[0].mxu0
    %3271 = vmatprep.mubr.bf16.mxu0 0
    %3272 = vmatmul.mubr.bf16.gmra.mrb[0].mxu0 %v3229
    %v3273 = vpop.f32.mrb[0].mxu0
    %v3274 = vadd.f32 0.0, %v3273
    %v3275 = vpop.f32.mrb[0].mxu0
    %v3276 = vpop.f32.mrb[0].mxu0
    %v3277 = vadd.f32 0.0, %v3276
    %v3278 = vpop.f32.mrb[0].mxu0
    %3279 = vdwg.mxu0
    %v3288 = vunpack.c.l.b16 %v3175
    %v3289 = vunpack.c.l.b16 %v3176
    %v3290 = vunpack.c.l.b16 %v3177
    %v3291 = vunpack.c.l.b16 %v3178
    %v3292 = vunpack.c.l.b16 %v3179
    %v3293 = vunpack.c.l.b16 %v3180
    %v3294 = vunpack.c.l.b16 %v3181
    %v3295 = vunpack.c.l.b16 %v3182
    %v3296 = vpack.c.b16 %v3289, %v3288
    %v3297 = vpack.c.b16 %v3291, %v3290
    %v3298 = vpack.c.b16 %v3293, %v3292
    %v3299 = vpack.c.b16 %v3295, %v3294
    %v3305 = vsel %vm88, %v3173, 0
    %v3308 = vsel %vm88, %v3174, 0
    %3310 = vmatprep.subr.bf16.mxu0 0
    %3311 = vmatpush1.bf16.msra.mxu0 %v3296
    %3312 = vmatprep.subr.bf16.mxu0 0
    %3313 = vmatpush1.bf16.msra.mxu0 %v3297
    %3314 = vmatprep.subr.bf16.mxu0 0
    %3315 = vmatpush1.bf16.msra.mxu0 %v3298
    %3316 = vmatprep.subr.bf16.mxu0 0
    %3317 = vmatpush1.bf16.msra.mxu0 %v3299
    %3318 = vmatprep.subr.bf16.mxu0 0
    %3319 = vmatpush1.bf16.msra.mxu0 0
    %3320 = vmatprep.subr.bf16.mxu0 0
    %3321 = vmatpush1.bf16.msra.mxu0 0
    %3322 = vmatprep.subr.bf16.mxu0 0
    %3323 = vmatpush1.bf16.msra.mxu0 0
    %3324 = vmatprep.subr.bf16.mxu0 0
    %3325 = vmatpush1.bf16.msra.mxu0 0
    %3326 = vmatprep.subr.bf16.mxu0 0
    %3327 = vmatpush1.bf16.msra.mxu0 0
    %3328 = vmatprep.subr.bf16.mxu0 0
    %3329 = vmatpush1.bf16.msra.mxu0 0
    %3330 = vmatprep.subr.bf16.mxu0 0
    %3331 = vmatpush1.bf16.msra.mxu0 0
    %3332 = vmatprep.subr.bf16.mxu0 0
    %3333 = vmatpush1.bf16.msra.mxu0 0
    %3334 = vmatprep.subr.bf16.mxu0 0
    %3335 = vmatpush1.bf16.msra.mxu0 0
    %3336 = vmatprep.subr.bf16.mxu0 0
    %3337 = vmatpush1.bf16.msra.mxu0 0
    %3338 = vmatprep.subr.bf16.mxu0 0
    %3339 = vmatpush1.bf16.msra.mxu0 0
    %3340 = vmatprep.subr.bf16.mxu0 0
    %3341 = vmatpush1.bf16.msra.mxu0 0
    %3342 = vmatprep.mubr.bf16.mxu0 0
    %3343 = vmatmul.mubr.bf16.gmra.mrb[0].mxu0 %v3305
    %v3344 = vpop.f32.mrb[0].mxu0
    %v3345 = vadd.f32 %v3266, %v3344
    %v3346 = vpop.f32.mrb[0].mxu0
    %v3347 = vpop.f32.mrb[0].mxu0
    %v3348 = vadd.f32 %v3269, %v3347
    %v3349 = vpop.f32.mrb[0].mxu0
    %3350 = vmatprep.mubr.bf16.mxu0 0
    %3351 = vmatmul.mubr.bf16.gmra.mrb[0].mxu0 %v3308
    %v3352 = vpop.f32.mrb[0].mxu0
    %v3353 = vadd.f32 %v3274, %v3352
    %v3354 = vpop.f32.mrb[0].mxu0
    %v3355 = vpop.f32.mrb[0].mxu0
    %v3356 = vadd.f32 %v3277, %v3355
    %v3357 = vpop.f32.mrb[0].mxu0
    %3358 = vdwg.mxu0
    %v3359 = vld [vmem:[#allocation3 + $0x16] sm:$0xff]
    %v3360 = vld [vmem:[#allocation3 + $0x1e] sm:$0xff]
    %v3361 = vld [vmem:[#allocation3 + $0x26] sm:$0xff]
    %v3362 = vld [vmem:[#allocation3 + $0x2e] sm:$0xff]
    %v3363 = vsel %vm3165, %v3359, 0.0
    %v3364 = vsel %vm3166, %v3360, 0.0
    %v3365 = vsel %vm3167, %v3361, 0.0
    %v3366 = vsel %vm3168, %v3362, 0.0
    %v3367 = vpack.c.bf16 %v3364, %v3363
    %v3368 = vpack.c.bf16 %v3366, %v3365
    %v3369 = vld [vmem:[%s9 + $0x40] sm:$0xf]
    %v3370 = vld [vmem:[%s9 + $0x44] sm:$0xf]
    %v3371 = vld [vmem:[%s9 + $0x48] sm:$0xf]
    %v3372 = vld [vmem:[%s9 + $0x4c] sm:$0xf]
    %v3373 = vld [vmem:[%s9 + $0x50] sm:$0xf]
    %v3374 = vld [vmem:[%s9 + $0x54] sm:$0xf]
    %v3375 = vld [vmem:[%s9 + $0x58] sm:$0xf]
    %v3376 = vld [vmem:[%s9 + $0x5c] sm:$0xf]
    %v3385 = vunpack.c.l.b16 %v3369
    %v3386 = vunpack.c.l.b16 %v3370
    %v3387 = vunpack.c.l.b16 %v3371
    %v3388 = vunpack.c.l.b16 %v3372
    %v3389 = vunpack.c.l.b16 %v3373
    %v3390 = vunpack.c.l.b16 %v3374
    %v3391 = vunpack.c.l.b16 %v3375
    %v3392 = vunpack.c.l.b16 %v3376
    %v3393 = vpack.c.b16 %v3386, %v3385
    %v3394 = vpack.c.b16 %v3388, %v3387
    %v3395 = vpack.c.b16 %v3390, %v3389
    %v3396 = vpack.c.b16 %v3392, %v3391
    %v3402 = vsel %vm88, %v3367, 0
    %v3405 = vsel %vm88, %v3368, 0
    %3407 = vmatprep.subr.bf16.mxu0 0
    %3408 = vmatpush1.bf16.msra.mxu0 %v3393
    %3409 = vmatprep.subr.bf16.mxu0 0
    %3410 = vmatpush1.bf16.msra.mxu0 %v3394
    %3411 = vmatprep.subr.bf16.mxu0 0
    %3412 = vmatpush1.bf16.msra.mxu0 %v3395
    %3413 = vmatprep.subr.bf16.mxu0 0
    %3414 = vmatpush1.bf16.msra.mxu0 %v3396
    %3415 = vmatprep.subr.bf16.mxu0 0
    %3416 = vmatpush1.bf16.msra.mxu0 0
    %3417 = vmatprep.subr.bf16.mxu0 0
    %3418 = vmatpush1.bf16.msra.mxu0 0
    %3419 = vmatprep.subr.bf16.mxu0 0
    %3420 = vmatpush1.bf16.msra.mxu0 0
    %3421 = vmatprep.subr.bf16.mxu0 0
    %3422 = vmatpush1.bf16.msra.mxu0 0
    %3423 = vmatprep.subr.bf16.mxu0 0
    %3424 = vmatpush1.bf16.msra.mxu0 0
    %3425 = vmatprep.subr.bf16.mxu0 0
    %3426 = vmatpush1.bf16.msra.mxu0 0
    %3427 = vmatprep.subr.bf16.mxu0 0
    %3428 = vmatpush1.bf16.msra.mxu0 0
    %3429 = vmatprep.subr.bf16.mxu0 0
    %3430 = vmatpush1.bf16.msra.mxu0 0
    %3431 = vmatprep.subr.bf16.mxu0 0
    %3432 = vmatpush1.bf16.msra.mxu0 0
    %3433 = vmatprep.subr.bf16.mxu0 0
    %3434 = vmatpush1.bf16.msra.mxu0 0
    %3435 = vmatprep.subr.bf16.mxu0 0
    %3436 = vmatpush1.bf16.msra.mxu0 0
    %3437 = vmatprep.subr.bf16.mxu0 0
    %3438 = vmatpush1.bf16.msra.mxu0 0
    %3439 = vmatprep.mubr.bf16.mxu0 0
    %3440 = vmatmul.mubr.bf16.gmra.mrb[0].mxu0 %v3402
    %v3441 = vpop.f32.mrb[0].mxu0
    %v3442 = vadd.f32 0.0, %v3441
    %v3443 = vpop.f32.mrb[0].mxu0
    %v3444 = vpop.f32.mrb[0].mxu0
    %v3445 = vadd.f32 0.0, %v3444
    %v3446 = vpop.f32.mrb[0].mxu0
    %3447 = vmatprep.mubr.bf16.mxu0 0
    %3448 = vmatmul.mubr.bf16.gmra.mrb[0].mxu0 %v3405
    %v3449 = vpop.f32.mrb[0].mxu0
    %v3450 = vadd.f32 0.0, %v3449
    %v3451 = vpop.f32.mrb[0].mxu0
    %v3452 = vpop.f32.mrb[0].mxu0
    %v3453 = vadd.f32 0.0, %v3452
    %v3454 = vpop.f32.mrb[0].mxu0
    %3455 = vdwg.mxu0
    %v3456 = vadd.f32 %v3345, %v3442
    %v3457 = vadd.f32 %v3348, %v3445
    %v3458 = vadd.f32 %v3353, %v3450
    %v3459 = vadd.f32 %v3356, %v3453
    %v3460 = vld [vmem:[#allocation3 + $0x8] sm:$0xff]
    %v3461 = vld [vmem:[#allocation3 + $0x10] sm:$0xff]
    %v3462 = vld [vmem:[#allocation3 + $0x18] sm:$0xff]
    %v3463 = vld [vmem:[#allocation3 + $0x20] sm:$0xff]
    %v3464 = vpack.c.bf16 %v3461, %v3460
    %v3465 = vpack.c.bf16 %v3463, %v3462
    %v3466 = vld [vmem:[%s9 + $0x60] sm:$0xf]
    %v3467 = vld [vmem:[%s9 + $0x64] sm:$0xf]
    %v3468 = vld [vmem:[%s9 + $0x68] sm:$0xf]
    %v3469 = vld [vmem:[%s9 + $0x6c] sm:$0xf]
    %v3470 = vld [vmem:[%s9 + $0x70] sm:$0xf]
    %v3471 = vld [vmem:[%s9 + $0x74] sm:$0xf]
    %v3472 = vld [vmem:[%s9 + $0x78] sm:$0xf]
    %v3473 = vld [vmem:[%s9 + $0x7c] sm:$0xf]
    %v3482 = vunpack.c.l.b16 %v3466
    %v3483 = vunpack.c.l.b16 %v3467
    %v3484 = vunpack.c.l.b16 %v3468
    %v3485 = vunpack.c.l.b16 %v3469
    %v3486 = vunpack.c.l.b16 %v3470
    %v3487 = vunpack.c.l.b16 %v3471
    %v3488 = vunpack.c.l.b16 %v3472
    %v3489 = vunpack.c.l.b16 %v3473
    %v3490 = vpack.c.b16 %v3483, %v3482
    %v3491 = vpack.c.b16 %v3485, %v3484
    %v3492 = vpack.c.b16 %v3487, %v3486
    %v3493 = vpack.c.b16 %v3489, %v3488
    %v3499 = vsel %vm88, %v3464, 0
    %v3502 = vsel %vm88, %v3465, 0
    %3504 = vmatprep.subr.bf16.mxu0 0
    %3505 = vmatpush1.bf16.msra.mxu0 %v3490
    %3506 = vmatprep.subr.bf16.mxu0 0
    %3507 = vmatpush1.bf16.msra.mxu0 %v3491
    %3508 = vmatprep.subr.bf16.mxu0 0
    %3509 = vmatpush1.bf16.msra.mxu0 %v3492
    %3510 = vmatprep.subr.bf16.mxu0 0
    %3511 = vmatpush1.bf16.msra.mxu0 %v3493
    %3512 = vmatprep.subr.bf16.mxu0 0
    %3513 = vmatpush1.bf16.msra.mxu0 0
    %3514 = vmatprep.subr.bf16.mxu0 0
    %3515 = vmatpush1.bf16.msra.mxu0 0
    %3516 = vmatprep.subr.bf16.mxu0 0
    %3517 = vmatpush1.bf16.msra.mxu0 0
    %3518 = vmatprep.subr.bf16.mxu0 0
    %3519 = vmatpush1.bf16.msra.mxu0 0
    %3520 = vmatprep.subr.bf16.mxu0 0
    %3521 = vmatpush1.bf16.msra.mxu0 0
    %3522 = vmatprep.subr.bf16.mxu0 0
    %3523 = vmatpush1.bf16.msra.mxu0 0
    %3524 = vmatprep.subr.bf16.mxu0 0
    %3525 = vmatpush1.bf16.msra.mxu0 0
    %3526 = vmatprep.subr.bf16.mxu0 0
    %3527 = vmatpush1.bf16.msra.mxu0 0
    %3528 = vmatprep.subr.bf16.mxu0 0
    %3529 = vmatpush1.bf16.msra.mxu0 0
    %3530 = vmatprep.subr.bf16.mxu0 0
    %3531 = vmatpush1.bf16.msra.mxu0 0
    %3532 = vmatprep.subr.bf16.mxu0 0
    %3533 = vmatpush1.bf16.msra.mxu0 0
    %3534 = vmatprep.subr.bf16.mxu0 0
    %3535 = vmatpush1.bf16.msra.mxu0 0
    %3536 = vmatprep.mubr.bf16.mxu0 0
    %3537 = vmatmul.mubr.bf16.gmra.mrb[0].mxu0 %v3499
    %v3538 = vpop.f32.mrb[0].mxu0
    %v3539 = vadd.f32 0.0, %v3538
    %v3540 = vpop.f32.mrb[0].mxu0
    %v3541 = vpop.f32.mrb[0].mxu0
    %v3542 = vadd.f32 0.0, %v3541
    %v3543 = vpop.f32.mrb[0].mxu0
    %3544 = vmatprep.mubr.bf16.mxu0 0
    %3545 = vmatmul.mubr.bf16.gmra.mrb[0].mxu0 %v3502
    %v3546 = vpop.f32.mrb[0].mxu0
    %v3547 = vadd.f32 0.0, %v3546
    %v3548 = vpop.f32.mrb[0].mxu0
    %v3549 = vpop.f32.mrb[0].mxu0
    %v3550 = vadd.f32 0.0, %v3549
    %v3551 = vpop.f32.mrb[0].mxu0
    %3552 = vdwg.mxu0
    %v3553 = vadd.f32 %v3456, %v3539
    %v3554 = vadd.f32 %v3457, %v3542
    %v3555 = vadd.f32 %v3458, %v3547
    %v3556 = vadd.f32 %v3459, %v3550
    %v3557 = vld [vmem:[#allocation3 + $0x10] sm:$0xff]
    %v3558 = vld [vmem:[#allocation3 + $0x18] sm:$0xff]
    %v3559 = vld [vmem:[#allocation3 + $0x20] sm:$0xff]
    %v3560 = vld [vmem:[#allocation3 + $0x28] sm:$0xff]
    %v3561 = vpack.c.bf16 %v3558, %v3557
    %v3562 = vpack.c.bf16 %v3560, %v3559
    %v3563 = vld [vmem:[%s9 + $0x80] sm:$0xf]
    %v3564 = vld [vmem:[%s9 + $0x84] sm:$0xf]
    %v3565 = vld [vmem:[%s9 + $0x88] sm:$0xf]
    %v3566 = vld [vmem:[%s9 + $0x8c] sm:$0xf]
    %v3567 = vld [vmem:[%s9 + $0x90] sm:$0xf]
    %v3568 = vld [vmem:[%s9 + $0x94] sm:$0xf]
    %v3569 = vld [vmem:[%s9 + $0x98] sm:$0xf]
    %v3570 = vld [vmem:[%s9 + $0x9c] sm:$0xf]
    %v3579 = vunpack.c.l.b16 %v3563
    %v3580 = vunpack.c.l.b16 %v3564
    %v3581 = vunpack.c.l.b16 %v3565
    %v3582 = vunpack.c.l.b16 %v3566
    %v3583 = vunpack.c.l.b16 %v3567
    %v3584 = vunpack.c.l.b16 %v3568
    %v3585 = vunpack.c.l.b16 %v3569
    %v3586 = vunpack.c.l.b16 %v3570
    %v3587 = vpack.c.b16 %v3580, %v3579
    %v3588 = vpack.c.b16 %v3582, %v3581
    %v3589 = vpack.c.b16 %v3584, %v3583
    %v3590 = vpack.c.b16 %v3586, %v3585
    %v3596 = vsel %vm88, %v3561, 0
    %v3599 = vsel %vm88, %v3562, 0
    %3601 = vmatprep.subr.bf16.mxu0 0
    %3602 = vmatpush1.bf16.msra.mxu0 %v3587
    %3603 = vmatprep.subr.bf16.mxu0 0
    %3604 = vmatpush1.bf16.msra.mxu0 %v3588
    %3605 = vmatprep.subr.bf16.mxu0 0
    %3606 = vmatpush1.bf16.msra.mxu0 %v3589
    %3607 = vmatprep.subr.bf16.mxu0 0
    %3608 = vmatpush1.bf16.msra.mxu0 %v3590
    %3609 = vmatprep.subr.bf16.mxu0 0
    %3610 = vmatpush1.bf16.msra.mxu0 0
    %3611 = vmatprep.subr.bf16.mxu0 0
    %3612 = vmatpush1.bf16.msra.mxu0 0
    %3613 = vmatprep.subr.bf16.mxu0 0
    %3614 = vmatpush1.bf16.msra.mxu0 0
    %3615 = vmatprep.subr.bf16.mxu0 0
    %3616 = vmatpush1.bf16.msra.mxu0 0
    %3617 = vmatprep.subr.bf16.mxu0 0
    %3618 = vmatpush1.bf16.msra.mxu0 0
    %3619 = vmatprep.subr.bf16.mxu0 0
    %3620 = vmatpush1.bf16.msra.mxu0 0
    %3621 = vmatprep.subr.bf16.mxu0 0
    %3622 = vmatpush1.bf16.msra.mxu0 0
    %3623 = vmatprep.subr.bf16.mxu0 0
    %3624 = vmatpush1.bf16.msra.mxu0 0
    %3625 = vmatprep.subr.bf16.mxu0 0
    %3626 = vmatpush1.bf16.msra.mxu0 0
    %3627 = vmatprep.subr.bf16.mxu0 0
    %3628 = vmatpush1.bf16.msra.mxu0 0
    %3629 = vmatprep.subr.bf16.mxu0 0
    %3630 = vmatpush1.bf16.msra.mxu0 0
    %3631 = vmatprep.subr.bf16.mxu0 0
    %3632 = vmatpush1.bf16.msra.mxu0 0
    %3633 = vmatprep.mubr.bf16.mxu0 0
    %3634 = vmatmul.mubr.bf16.gmra.mrb[0].mxu0 %v3596
    %v3635 = vpop.f32.mrb[0].mxu0
    %v3636 = vadd.f32 0.0, %v3635
    %v3637 = vpop.f32.mrb[0].mxu0
    %v3638 = vpop.f32.mrb[0].mxu0
    %v3639 = vadd.f32 0.0, %v3638
    %v3640 = vpop.f32.mrb[0].mxu0
    %3641 = vmatprep.mubr.bf16.mxu0 0
    %3642 = vmatmul.mubr.bf16.gmra.mrb[0].mxu0 %v3599
    %v3643 = vpop.f32.mrb[0].mxu0
    %v3644 = vadd.f32 0.0, %v3643
    %v3645 = vpop.f32.mrb[0].mxu0
    %v3646 = vpop.f32.mrb[0].mxu0
    %v3647 = vadd.f32 0.0, %v3646
    %v3648 = vpop.f32.mrb[0].mxu0
    %3649 = vdwg.mxu0
    %v3650 = vadd.f32 %v3553, %v3636
    %v3651 = vadd.f32 %v3554, %v3639
    %v3652 = vadd.f32 %v3555, %v3644
    %v3653 = vadd.f32 %v3556, %v3647
    %v3654 = vld [vmem:[#allocation3 + $0x18] sm:$0xff]
    %v3655 = vld [vmem:[#allocation3 + $0x20] sm:$0xff]
    %v3656 = vld [vmem:[#allocation3 + $0x28] sm:$0xff]
    %v3657 = vld [vmem:[#allocation3 + $0x30] sm:$0xff]
    %v3658 = vpack.c.bf16 %v3655, %v3654
    %v3659 = vpack.c.bf16 %v3657, %v3656
    %v3660 = vld [vmem:[%s9 + $0xa0] sm:$0xf]
    %v3661 = vld [vmem:[%s9 + $0xa4] sm:$0xf]
    %v3662 = vld [vmem:[%s9 + $0xa8] sm:$0xf]
    %v3663 = vld [vmem:[%s9 + $0xac] sm:$0xf]
    %v3664 = vld [vmem:[%s9 + $0xb0] sm:$0xf]
    %v3665 = vld [vmem:[%s9 + $0xb4] sm:$0xf]
    %v3666 = vld [vmem:[%s9 + $0xb8] sm:$0xf]
    %v3667 = vld [vmem:[%s9 + $0xbc] sm:$0xf]
    %v3676 = vunpack.c.l.b16 %v3660
    %v3677 = vunpack.c.l.b16 %v3661
    %v3678 = vunpack.c.l.b16 %v3662
    %v3679 = vunpack.c.l.b16 %v3663
    %v3680 = vunpack.c.l.b16 %v3664
    %v3681 = vunpack.c.l.b16 %v3665
    %v3682 = vunpack.c.l.b16 %v3666
    %v3683 = vunpack.c.l.b16 %v3667
    %v3684 = vpack.c.b16 %v3677, %v3676
    %v3685 = vpack.c.b16 %v3679, %v3678
    %v3686 = vpack.c.b16 %v3681, %v3680
    %v3687 = vpack.c.b16 %v3683, %v3682
    %v3693 = vsel %vm88, %v3658, 0
    %v3696 = vsel %vm88, %v3659, 0
    %3698 = vmatprep.subr.bf16.mxu0 0
    %3699 = vmatpush1.bf16.msra.mxu0 %v3684
    %3700 = vmatprep.subr.bf16.mxu0 0
    %3701 = vmatpush1.bf16.msra.mxu0 %v3685
    %3702 = vmatprep.subr.bf16.mxu0 0
    %3703 = vmatpush1.bf16.msra.mxu0 %v3686
    %3704 = vmatprep.subr.bf16.mxu0 0
    %3705 = vmatpush1.bf16.msra.mxu0 %v3687
    %3706 = vmatprep.subr.bf16.mxu0 0
    %3707 = vmatpush1.bf16.msra.mxu0 0
    %3708 = vmatprep.subr.bf16.mxu0 0
    %3709 = vmatpush1.bf16.msra.mxu0 0
    %3710 = vmatprep.subr.bf16.mxu0 0
    %3711 = vmatpush1.bf16.msra.mxu0 0
    %3712 = vmatprep.subr.bf16.mxu0 0
    %3713 = vmatpush1.bf16.msra.mxu0 0
    %3714 = vmatprep.subr.bf16.mxu0 0
    %3715 = vmatpush1.bf16.msra.mxu0 0
    %3716 = vmatprep.subr.bf16.mxu0 0
    %3717 = vmatpush1.bf16.msra.mxu0 0
    %3718 = vmatprep.subr.bf16.mxu0 0
    %3719 = vmatpush1.bf16.msra.mxu0 0
    %3720 = vmatprep.subr.bf16.mxu0 0
    %3721 = vmatpush1.bf16.msra.mxu0 0
    %3722 = vmatprep.subr.bf16.mxu0 0
    %3723 = vmatpush1.bf16.msra.mxu0 0
    %3724 = vmatprep.subr.bf16.mxu0 0
    %3725 = vmatpush1.bf16.msra.mxu0 0
    %3726 = vmatprep.subr.bf16.mxu0 0
    %3727 = vmatpush1.bf16.msra.mxu0 0
    %3728 = vmatprep.subr.bf16.mxu0 0
    %3729 = vmatpush1.bf16.msra.mxu0 0
    %3730 = vmatprep.mubr.bf16.mxu0 0
    %3731 = vmatmul.mubr.bf16.gmra.mrb[0].mxu0 %v3693
    %v3732 = vpop.f32.mrb[0].mxu0
    %v3733 = vadd.f32 0.0, %v3732
    %v3734 = vpop.f32.mrb[0].mxu0
    %v3735 = vpop.f32.mrb[0].mxu0
    %v3736 = vadd.f32 0.0, %v3735
    %v3737 = vpop.f32.mrb[0].mxu0
    %3738 = vmatprep.mubr.bf16.mxu0 0
    %3739 = vmatmul.mubr.bf16.gmra.mrb[0].mxu0 %v3696
    %v3740 = vpop.f32.mrb[0].mxu0
    %v3741 = vadd.f32 0.0, %v3740
    %v3742 = vpop.f32.mrb[0].mxu0
    %v3743 = vpop.f32.mrb[0].mxu0
    %v3744 = vadd.f32 0.0, %v3743
    %v3745 = vpop.f32.mrb[0].mxu0
    %3746 = vdwg.mxu0
    %v3747 = vadd.f32 %v3650, %v3733
    %v3748 = vadd.f32 %v3651, %v3736
    %v3749 = vadd.f32 %v3652, %v3741
    %v3750 = vadd.f32 %v3653, %v3744
    %v3751 = vld [vmem:[#allocation3 + $0xa] sm:$0xff]
    %v3752 = vld [vmem:[#allocation3 + $0x12] sm:$0xff]
    %v3753 = vld [vmem:[#allocation3 + $0x1a] sm:$0xff]
    %v3754 = vld [vmem:[#allocation3 + $0x22] sm:$0xff]
    %vm3755 = vcmp.le.f32.partialorder %v3137, 2.0
    %vm3756 = vcmp.le.f32.partialorder %v3138, 2.0
    %vm3757 = vcmp.le.f32.partialorder %v3139, 2.0
    %vm3758 = vcmp.le.f32.partialorder %v3140, 2.0
    %v3759 = vsel %vm3755, 1, 0
    %v3760 = vsel %vm3756, 1, 0
    %v3761 = vsel %vm3757, 1, 0
    %v3762 = vsel %vm3758, 1, 0
    %3763 = vset.pattern.permute.xlu0 0
    %3764 = vperm.xlu0 %3763, %v3759
    %v3765 = vpop.permute.xlu0 %3764
    %3766 = vset.pattern.permute.xlu0 0
    %3767 = vperm.xlu0 %3766, %v3760
    %v3768 = vpop.permute.xlu0 %3767
    %3769 = vset.pattern.permute.xlu0 0
    %3770 = vperm.xlu0 %3769, %v3761
    %v3771 = vpop.permute.xlu0 %3770
    %3772 = vset.pattern.permute.xlu0 0
    %3773 = vperm.xlu0 %3772, %v3762
    %v3774 = vpop.permute.xlu0 %3773
    %vm3775 = vcmp.eq.s32.totalorder %v3765, 1
    %vm3776 = vcmp.eq.s32.totalorder %v3768, 1
    %vm3777 = vcmp.eq.s32.totalorder %v3771, 1
    %vm3778 = vcmp.eq.s32.totalorder %v3774, 1
    %v3779 = vsel %vm3775, %v3751, 0.0
    %v3780 = vsel %vm3776, %v3752, 0.0
    %v3781 = vsel %vm3777, %v3753, 0.0
    %v3782 = vsel %vm3778, %v3754, 0.0
    %v3783 = vpack.c.bf16 %v3780, %v3779
    %v3784 = vpack.c.bf16 %v3782, %v3781
    %v3785 = vld [vmem:[%s9 + $0xc0] sm:$0xf]
    %v3786 = vld [vmem:[%s9 + $0xc4] sm:$0xf]
    %v3787 = vld [vmem:[%s9 + $0xc8] sm:$0xf]
    %v3788 = vld [vmem:[%s9 + $0xcc] sm:$0xf]
    %v3789 = vld [vmem:[%s9 + $0xd0] sm:$0xf]
    %v3790 = vld [vmem:[%s9 + $0xd4] sm:$0xf]
    %v3791 = vld [vmem:[%s9 + $0xd8] sm:$0xf]
    %v3792 = vld [vmem:[%s9 + $0xdc] sm:$0xf]
    %v3801 = vunpack.c.l.b16 %v3785
    %v3802 = vunpack.c.l.b16 %v3786
    %v3803 = vunpack.c.l.b16 %v3787
    %v3804 = vunpack.c.l.b16 %v3788
    %v3805 = vunpack.c.l.b16 %v3789
    %v3806 = vunpack.c.l.b16 %v3790
    %v3807 = vunpack.c.l.b16 %v3791
    %v3808 = vunpack.c.l.b16 %v3792
    %v3809 = vpack.c.b16 %v3802, %v3801
    %v3810 = vpack.c.b16 %v3804, %v3803
    %v3811 = vpack.c.b16 %v3806, %v3805
    %v3812 = vpack.c.b16 %v3808, %v3807
    %v3818 = vsel %vm88, %v3783, 0
    %v3821 = vsel %vm88, %v3784, 0
    %3823 = vmatprep.subr.bf16.mxu0 0
    %3824 = vmatpush1.bf16.msra.mxu0 %v3809
    %3825 = vmatprep.subr.bf16.mxu0 0
    %3826 = vmatpush1.bf16.msra.mxu0 %v3810
    %3827 = vmatprep.subr.bf16.mxu0 0
    %3828 = vmatpush1.bf16.msra.mxu0 %v3811
    %3829 = vmatprep.subr.bf16.mxu0 0
    %3830 = vmatpush1.bf16.msra.mxu0 %v3812
    %3831 = vmatprep.subr.bf16.mxu0 0
    %3832 = vmatpush1.bf16.msra.mxu0 0
    %3833 = vmatprep.subr.bf16.mxu0 0
    %3834 = vmatpush1.bf16.msra.mxu0 0
    %3835 = vmatprep.subr.bf16.mxu0 0
    %3836 = vmatpush1.bf16.msra.mxu0 0
    %3837 = vmatprep.subr.bf16.mxu0 0
    %3838 = vmatpush1.bf16.msra.mxu0 0
    %3839 = vmatprep.subr.bf16.mxu0 0
    %3840 = vmatpush1.bf16.msra.mxu0 0
    %3841 = vmatprep.subr.bf16.mxu0 0
    %3842 = vmatpush1.bf16.msra.mxu0 0
    %3843 = vmatprep.subr.bf16.mxu0 0
    %3844 = vmatpush1.bf16.msra.mxu0 0
    %3845 = vmatprep.subr.bf16.mxu0 0
    %3846 = vmatpush1.bf16.msra.mxu0 0
    %3847 = vmatprep.subr.bf16.mxu0 0
    %3848 = vmatpush1.bf16.msra.mxu0 0
    %3849 = vmatprep.subr.bf16.mxu0 0
    %3850 = vmatpush1.bf16.msra.mxu0 0
    %3851 = vmatprep.subr.bf16.mxu0 0
    %3852 = vmatpush1.bf16.msra.mxu0 0
    %3853 = vmatprep.subr.bf16.mxu0 0
    %3854 = vmatpush1.bf16.msra.mxu0 0
    %3855 = vmatprep.mubr.bf16.mxu0 0
    %3856 = vmatmul.mubr.bf16.gmra.mrb[0].mxu0 %v3818
    %v3857 = vpop.f32.mrb[0].mxu0
    %v3858 = vadd.f32 0.0, %v3857
    %v3859 = vpop.f32.mrb[0].mxu0
    %v3860 = vpop.f32.mrb[0].mxu0
    %v3861 = vadd.f32 0.0, %v3860
    %v3862 = vpop.f32.mrb[0].mxu0
    %3863 = vmatprep.mubr.bf16.mxu0 0
    %3864 = vmatmul.mubr.bf16.gmra.mrb[0].mxu0 %v3821
    %v3865 = vpop.f32.mrb[0].mxu0
    %v3866 = vadd.f32 0.0, %v3865
    %v3867 = vpop.f32.mrb[0].mxu0
    %v3868 = vpop.f32.mrb[0].mxu0
    %v3869 = vadd.f32 0.0, %v3868
    %v3870 = vpop.f32.mrb[0].mxu0
    %3871 = vdwg.mxu0
    %v3872 = vadd.f32 %v3747, %v3858
    %v3873 = vadd.f32 %v3748, %v3861
    %v3874 = vadd.f32 %v3749, %v3866
    %v3875 = vadd.f32 %v3750, %v3869
    %v3876 = vld [vmem:[#allocation3 + $0x12] sm:$0xff]
    %v3877 = vld [vmem:[#allocation3 + $0x1a] sm:$0xff]
    %v3878 = vld [vmem:[#allocation3 + $0x22] sm:$0xff]
    %v3879 = vld [vmem:[#allocation3 + $0x2a] sm:$0xff]
    %v3880 = vsel %vm3775, %v3876, 0.0
    %v3881 = vsel %vm3776, %v3877, 0.0
    %v3882 = vsel %vm3777, %v3878, 0.0
    %v3883 = vsel %vm3778, %v3879, 0.0
    %v3884 = vpack.c.bf16 %v3881, %v3880
    %v3885 = vpack.c.bf16 %v3883, %v3882
    %v3886 = vld [vmem:[%s9 + $0xe0] sm:$0xf]
    %v3887 = vld [vmem:[%s9 + $0xe4] sm:$0xf]
    %v3888 = vld [vmem:[%s9 + $0xe8] sm:$0xf]
    %v3889 = vld [vmem:[%s9 + $0xec] sm:$0xf]
    %v3890 = vld [vmem:[%s9 + $0xf0] sm:$0xf]
    %v3891 = vld [vmem:[%s9 + $0xf4] sm:$0xf]
    %v3892 = vld [vmem:[%s9 + $0xf8] sm:$0xf]
    %v3893 = vld [vmem:[%s9 + $0xfc] sm:$0xf]
    %v3902 = vunpack.c.l.b16 %v3886
    %v3903 = vunpack.c.l.b16 %v3887
    %v3904 = vunpack.c.l.b16 %v3888
    %v3905 = vunpack.c.l.b16 %v3889
    %v3906 = vunpack.c.l.b16 %v3890
    %v3907 = vunpack.c.l.b16 %v3891
    %v3908 = vunpack.c.l.b16 %v3892
    %v3909 = vunpack.c.l.b16 %v3893
    %v3910 = vpack.c.b16 %v3903, %v3902
    %v3911 = vpack.c.b16 %v3905, %v3904
    %v3912 = vpack.c.b16 %v3907, %v3906
    %v3913 = vpack.c.b16 %v3909, %v3908
    %v3919 = vsel %vm88, %v3884, 0
    %v3922 = vsel %vm88, %v3885, 0
    %3924 = vmatprep.subr.bf16.mxu0 0
    %3925 = vmatpush1.bf16.msra.mxu0 %v3910
    %3926 = vmatprep.subr.bf16.mxu0 0
    %3927 = vmatpush1.bf16.msra.mxu0 %v3911
    %3928 = vmatprep.subr.bf16.mxu0 0
    %3929 = vmatpush1.bf16.msra.mxu0 %v3912
    %3930 = vmatprep.subr.bf16.mxu0 0
    %3931 = vmatpush1.bf16.msra.mxu0 %v3913
    %3932 = vmatprep.subr.bf16.mxu0 0
    %3933 = vmatpush1.bf16.msra.mxu0 0
    %3934 = vmatprep.subr.bf16.mxu0 0
    %3935 = vmatpush1.bf16.msra.mxu0 0
    %3936 = vmatprep.subr.bf16.mxu0 0
    %3937 = vmatpush1.bf16.msra.mxu0 0
    %3938 = vmatprep.subr.bf16.mxu0 0
    %3939 = vmatpush1.bf16.msra.mxu0 0
    %3940 = vmatprep.subr.bf16.mxu0 0
    %3941 = vmatpush1.bf16.msra.mxu0 0
    %3942 = vmatprep.subr.bf16.mxu0 0
    %3943 = vmatpush1.bf16.msra.mxu0 0
    %3944 = vmatprep.subr.bf16.mxu0 0
    %3945 = vmatpush1.bf16.msra.mxu0 0
    %3946 = vmatprep.subr.bf16.mxu0 0
    %3947 = vmatpush1.bf16.msra.mxu0 0
    %3948 = vmatprep.subr.bf16.mxu0 0
    %3949 = vmatpush1.bf16.msra.mxu0 0
    %3950 = vmatprep.subr.bf16.mxu0 0
    %3951 = vmatpush1.bf16.msra.mxu0 0
    %3952 = vmatprep.subr.bf16.mxu0 0
    %3953 = vmatpush1.bf16.msra.mxu0 0
    %3954 = vmatprep.subr.bf16.mxu0 0
    %3955 = vmatpush1.bf16.msra.mxu0 0
    %3956 = vmatprep.mubr.bf16.mxu0 0
    %3957 = vmatmul.mubr.bf16.gmra.mrb[0].mxu0 %v3919
    %v3958 = vpop.f32.mrb[0].mxu0
    %v3959 = vadd.f32 0.0, %v3958
    %v3960 = vpop.f32.mrb[0].mxu0
    %v3961 = vpop.f32.mrb[0].mxu0
    %v3962 = vadd.f32 0.0, %v3961
    %v3963 = vpop.f32.mrb[0].mxu0
    %3964 = vmatprep.mubr.bf16.mxu0 0
    %3965 = vmatmul.mubr.bf16.gmra.mrb[0].mxu0 %v3922
    %v3966 = vpop.f32.mrb[0].mxu0
    %v3967 = vadd.f32 0.0, %v3966
    %v3968 = vpop.f32.mrb[0].mxu0
    %v3969 = vpop.f32.mrb[0].mxu0
    %v3970 = vadd.f32 0.0, %v3969
    %v3971 = vpop.f32.mrb[0].mxu0
    %3972 = vdwg.mxu0
    %v3973 = vadd.f32 %v3872, %v3959
    %v3974 = vadd.f32 %v3873, %v3962
    %v3975 = vadd.f32 %v3874, %v3967
    %v3976 = vadd.f32 %v3875, %v3970
    %v3977 = vld [vmem:[#allocation3 + $0x1a] sm:$0xff]
    %v3978 = vld [vmem:[#allocation3 + $0x22] sm:$0xff]
    %v3979 = vld [vmem:[#allocation3 + $0x2a] sm:$0xff]
    %v3980 = vld [vmem:[#allocation3 + $0x32] sm:$0xff]
    %v3981 = vsel %vm3775, %v3977, 0.0
    %v3982 = vsel %vm3776, %v3978, 0.0
    %v3983 = vsel %vm3777, %v3979, 0.0
    %v3984 = vsel %vm3778, %v3980, 0.0
    %v3985 = vpack.c.bf16 %v3982, %v3981
    %v3986 = vpack.c.bf16 %v3984, %v3983
    %v3987 = vld [vmem:[%s9 + $0x100] sm:$0xf]
    %v3988 = vld [vmem:[%s9 + $0x104] sm:$0xf]
    %v3989 = vld [vmem:[%s9 + $0x108] sm:$0xf]
    %v3990 = vld [vmem:[%s9 + $0x10c] sm:$0xf]
    %v3991 = vld [vmem:[%s9 + $0x110] sm:$0xf]
    %v3992 = vld [vmem:[%s9 + $0x114] sm:$0xf]
    %v3993 = vld [vmem:[%s9 + $0x118] sm:$0xf]
    %v3994 = vld [vmem:[%s9 + $0x11c] sm:$0xf]
    %v4003 = vunpack.c.l.b16 %v3987
    %v4004 = vunpack.c.l.b16 %v3988
    %v4005 = vunpack.c.l.b16 %v3989
    %v4006 = vunpack.c.l.b16 %v3990
    %v4007 = vunpack.c.l.b16 %v3991
    %v4008 = vunpack.c.l.b16 %v3992
    %v4009 = vunpack.c.l.b16 %v3993
    %v4010 = vunpack.c.l.b16 %v3994
    %v4011 = vpack.c.b16 %v4004, %v4003
    %v4012 = vpack.c.b16 %v4006, %v4005
    %v4013 = vpack.c.b16 %v4008, %v4007
    %v4014 = vpack.c.b16 %v4010, %v4009
    %v4020 = vsel %vm88, %v3985, 0
    %v4023 = vsel %vm88, %v3986, 0
    %4025 = vmatprep.subr.bf16.mxu0 0
    %4026 = vmatpush1.bf16.msra.mxu0 %v4011
    %4027 = vmatprep.subr.bf16.mxu0 0
    %4028 = vmatpush1.bf16.msra.mxu0 %v4012
    %4029 = vmatprep.subr.bf16.mxu0 0
    %4030 = vmatpush1.bf16.msra.mxu0 %v4013
    %4031 = vmatprep.subr.bf16.mxu0 0
    %4032 = vmatpush1.bf16.msra.mxu0 %v4014
    %4033 = vmatprep.subr.bf16.mxu0 0
    %4034 = vmatpush1.bf16.msra.mxu0 0
    %4035 = vmatprep.subr.bf16.mxu0 0
    %4036 = vmatpush1.bf16.msra.mxu0 0
    %4037 = vmatprep.subr.bf16.mxu0 0
    %4038 = vmatpush1.bf16.msra.mxu0 0
    %4039 = vmatprep.subr.bf16.mxu0 0
    %4040 = vmatpush1.bf16.msra.mxu0 0
    %4041 = vmatprep.subr.bf16.mxu0 0
    %4042 = vmatpush1.bf16.msra.mxu0 0
    %4043 = vmatprep.subr.bf16.mxu0 0
    %4044 = vmatpush1.bf16.msra.mxu0 0
    %4045 = vmatprep.subr.bf16.mxu0 0
    %4046 = vmatpush1.bf16.msra.mxu0 0
    %4047 = vmatprep.subr.bf16.mxu0 0
    %4048 = vmatpush1.bf16.msra.mxu0 0
    %4049 = vmatprep.subr.bf16.mxu0 0
    %4050 = vmatpush1.bf16.msra.mxu0 0
    %4051 = vmatprep.subr.bf16.mxu0 0
    %4052 = vmatpush1.bf16.msra.mxu0 0
    %4053 = vmatprep.subr.bf16.mxu0 0
    %4054 = vmatpush1.bf16.msra.mxu0 0
    %4055 = vmatprep.subr.bf16.mxu0 0
    %4056 = vmatpush1.bf16.msra.mxu0 0
    %4057 = vmatprep.mubr.bf16.mxu0 0
    %4058 = vmatmul.mubr.bf16.gmra.mrb[0].mxu0 %v4020
    %v4059 = vpop.f32.mrb[0].mxu0
    %v4060 = vadd.f32 0.0, %v4059
    %v4061 = vpop.f32.mrb[0].mxu0
    %v4062 = vpop.f32.mrb[0].mxu0
    %v4063 = vadd.f32 0.0, %v4062
    %v4064 = vpop.f32.mrb[0].mxu0
    %4065 = vmatprep.mubr.bf16.mxu0 0
    %4066 = vmatmul.mubr.bf16.gmra.mrb[0].mxu0 %v4023
    %v4067 = vpop.f32.mrb[0].mxu0
    %v4068 = vadd.f32 0.0, %v4067
    %v4069 = vpop.f32.mrb[0].mxu0
    %v4070 = vpop.f32.mrb[0].mxu0
    %v4071 = vadd.f32 0.0, %v4070
    %v4072 = vpop.f32.mrb[0].mxu0
    %4073 = vdwg.mxu0
    %v4074 = vadd.f32 %v3973, %v4060
    %v4075 = vadd.f32 %v3974, %v4063
    %v4076 = vadd.f32 %v3975, %v4068
    %v4077 = vadd.f32 %v3976, %v4071
    %v4078 = vld [vmem:[%s10] sm:$0x1]
    %v4080 = vlaneseq
    %v4081 = vshrl.u32 %v4080, 7
    %v4082 = vsub.s32 0, %v4081
    %v4083 = vrot.slane %v4078, %v4082
    %v4085 = vmul.f32 %v4074, %v4083
    %v4086 = vmul.f32 %v4075, %v4083
    %v4087 = vmul.f32 %v4076, %v4083
    %v4088 = vmul.f32 %v4077, %v4083
    %v4089 = vld [vmem:[%s11] sm:$0x1]
    %v4091 = vlaneseq
    %v4092 = vshrl.u32 %v4091, 7
    %v4093 = vsub.s32 0, %v4092
    %v4094 = vrot.slane %v4089, %v4093
    %v4096 = vadd.f32 %v4085, %v4094
    %v4097 = vadd.f32 %v4086, %v4094
    %v4098 = vadd.f32 %v4087, %v4094
    %v4099 = vadd.f32 %v4088, %v4094
    %v4100 = vmax.f32 %v4096, 0.0
    %v4101 = vmax.f32 %v4097, 0.0
    %v4102 = vmax.f32 %v4098, 0.0
    %v4103 = vmax.f32 %v4099, 0.0
    %v4104 = vmax.f32 %v4100, %v4101
    %v4106 = vrot.slane %v4104, 2
    %v4108 = vmax.f32 %v4104, %v4106
    %v4109 = vmax.f32 %v4102, %v4103
    %v4111 = vrot.slane %v4109, 2
    %v4113 = vmax.f32 %v4109, %v4111
    %4114 = vst [vmem:[#allocation4 + $0x8] sm:$0x3] %v4108
    %4115 = vst [vmem:[#allocation4 + $0x6] sm:$0x30] %v4108
    %4116 = vst [vmem:[#allocation4 + $0xc] sm:$0x3] %v4113
    %4117 = vst [vmem:[#allocation4 + $0xa] sm:$0x30] %v4113
    %v4118 = vld [vmem:[%s12] sm:$0xff]
    %v4119 = vld [vmem:[#allocation4 + $0x2] sm:$0xff]
    %vm4120 = vcmp.ge.f32.partialorder %v4118, 1.0
    %v4121 = vsel %vm4120, 1, 0
    %4122 = vset.pattern.permute.xlu0 0
    %4123 = vperm.xlu0 %4122, %v4121
    %v4124 = vpop.permute.xlu0 %4123
    %vm4125 = vcmp.eq.s32.totalorder %v4124, 1
    %v4126 = vsel %vm4125, %v4119, 0.0
    %v4127 = vpack.c.bf16 %v4126, %v4126
    %v4128 = vld [vmem:[#allocation5] sm:$0xff]
    %v4129 = vld [vmem:[#allocation5 + $0x8] sm:$0xff]
    %v4130 = vld [vmem:[#allocation5 + $0x10] sm:$0xff]
    %v4131 = vld [vmem:[#allocation5 + $0x18] sm:$0xff]
    %v4132 = vld [vmem:[#allocation5 + $0x20] sm:$0xff]
    %v4133 = vld [vmem:[#allocation5 + $0x28] sm:$0xff]
    %v4134 = vld [vmem:[#allocation5 + $0x30] sm:$0xff]
    %v4135 = vld [vmem:[#allocation5 + $0x38] sm:$0xff]
    %v4136 = vld [vmem:[#allocation5 + $0x40] sm:$0xff]
    %v4137 = vld [vmem:[#allocation5 + $0x48] sm:$0xff]
    %v4138 = vld [vmem:[#allocation5 + $0x50] sm:$0xff]
    %v4139 = vld [vmem:[#allocation5 + $0x58] sm:$0xff]
    %v4140 = vld [vmem:[#allocation5 + $0x60] sm:$0xff]
    %v4141 = vld [vmem:[#allocation5 + $0x68] sm:$0xff]
    %v4142 = vld [vmem:[#allocation5 + $0x70] sm:$0xff]
    %v4143 = vld [vmem:[#allocation5 + $0x78] sm:$0xff]
    %v4144 = vld [vmem:[#allocation4 + $0x6] sm:$0xff]
    %v4145 = vsel %vm4125, %v4144, 0.0
    %v4146 = vpack.c.bf16 %v4145, %v4145
    %v4147 = vld [vmem:[#allocation5 + $0x80] sm:$0xff]
    %v4148 = vld [vmem:[#allocation5 + $0x88] sm:$0xff]
    %v4149 = vld [vmem:[#allocation5 + $0x90] sm:$0xff]
    %v4150 = vld [vmem:[#allocation5 + $0x98] sm:$0xff]
    %v4151 = vld [vmem:[#allocation5 + $0xa0] sm:$0xff]
    %v4152 = vld [vmem:[#allocation5 + $0xa8] sm:$0xff]
    %v4153 = vld [vmem:[#allocation5 + $0xb0] sm:$0xff]
    %v4154 = vld [vmem:[#allocation5 + $0xb8] sm:$0xff]
    %v4155 = vld [vmem:[#allocation5 + $0xc0] sm:$0xff]
    %v4156 = vld [vmem:[#allocation5 + $0xc8] sm:$0xff]
    %v4157 = vld [vmem:[#allocation5 + $0xd0] sm:$0xff]
    %v4158 = vld [vmem:[#allocation5 + $0xd8] sm:$0xff]
    %v4159 = vld [vmem:[#allocation5 + $0xe0] sm:$0xff]
    %v4160 = vld [vmem:[#allocation5 + $0xe8] sm:$0xff]
    %v4161 = vld [vmem:[#allocation5 + $0xf0] sm:$0xff]
    %v4162 = vld [vmem:[#allocation5 + $0xf8] sm:$0xff]
    %v4179 = vunpack.c.l.b16 %v4147
    %v4180 = vunpack.c.h.b16 %v4147
    %v4181 = vunpack.c.l.b16 %v4148
    %v4182 = vunpack.c.h.b16 %v4148
    %v4183 = vunpack.c.l.b16 %v4149
    %v4184 = vunpack.c.h.b16 %v4149
    %v4185 = vunpack.c.l.b16 %v4150
    %v4186 = vunpack.c.h.b16 %v4150
    %v4187 = vunpack.c.l.b16 %v4151
    %v4188 = vunpack.c.h.b16 %v4151
    %v4189 = vunpack.c.l.b16 %v4152
    %v4190 = vunpack.c.h.b16 %v4152
    %v4191 = vunpack.c.l.b16 %v4153
    %v4192 = vunpack.c.h.b16 %v4153
    %v4193 = vunpack.c.l.b16 %v4154
    %v4194 = vunpack.c.h.b16 %v4154
    %v4195 = vunpack.c.l.b16 %v4155
    %v4196 = vunpack.c.h.b16 %v4155
    %v4197 = vunpack.c.l.b16 %v4156
    %v4198 = vunpack.c.h.b16 %v4156
    %v4199 = vunpack.c.l.b16 %v4157
    %v4200 = vunpack.c.h.b16 %v4157
    %v4201 = vunpack.c.l.b16 %v4158
    %v4202 = vunpack.c.h.b16 %v4158
    %v4203 = vunpack.c.l.b16 %v4159
    %v4204 = vunpack.c.h.b16 %v4159
    %v4205 = vunpack.c.l.b16 %v4160
    %v4206 = vunpack.c.h.b16 %v4160
    %v4207 = vunpack.c.l.b16 %v4161
    %v4208 = vunpack.c.h.b16 %v4161
    %v4209 = vunpack.c.l.b16 %v4162
    %v4210 = vunpack.c.h.b16 %v4162
    %v4211 = vpack.c.b16 %v4181, %v4179
    %v4212 = vpack.c.b16 %v4182, %v4180
    %v4213 = vpack.c.b16 %v4185, %v4183
    %v4214 = vpack.c.b16 %v4186, %v4184
    %v4215 = vpack.c.b16 %v4189, %v4187
    %v4216 = vpack.c.b16 %v4190, %v4188
    %v4217 = vpack.c.b16 %v4193, %v4191
    %v4218 = vpack.c.b16 %v4194, %v4192
    %v4219 = vpack.c.b16 %v4197, %v4195
    %v4220 = vpack.c.b16 %v4198, %v4196
    %v4221 = vpack.c.b16 %v4201, %v4199
    %v4222 = vpack.c.b16 %v4202, %v4200
    %v4223 = vpack.c.b16 %v4205, %v4203
    %v4224 = vpack.c.b16 %v4206, %v4204
    %v4225 = vpack.c.b16 %v4209, %v4207
    %v4226 = vpack.c.b16 %v4210, %v4208
    %4243 = vmatprep.subr.bf16.mxu0 %v4212
    %4244 = vmatpush1.bf16.msra.mxu0 %v4211
    %4245 = vmatprep.subr.bf16.mxu0 %v4214
    %4246 = vmatpush1.bf16.msra.mxu0 %v4213
    %4247 = vmatprep.subr.bf16.mxu0 %v4216
    %4248 = vmatpush1.bf16.msra.mxu0 %v4215
    %4249 = vmatprep.subr.bf16.mxu0 %v4218
    %4250 = vmatpush1.bf16.msra.mxu0 %v4217
    %4251 = vmatprep.subr.bf16.mxu0 %v4220
    %4252 = vmatpush1.bf16.msra.mxu0 %v4219
    %4253 = vmatprep.subr.bf16.mxu0 %v4222
    %4254 = vmatpush1.bf16.msra.mxu0 %v4221
    %4255 = vmatprep.subr.bf16.mxu0 %v4224
    %4256 = vmatpush1.bf16.msra.mxu0 %v4223
    %4257 = vmatprep.subr.bf16.mxu0 %v4226
    %4258 = vmatpush1.bf16.msra.mxu0 %v4225
    %4259 = vmatprep.subr.bf16.mxu0 0
    %4260 = vmatpush1.bf16.msra.mxu0 0
    %4261 = vmatprep.subr.bf16.mxu0 0
    %4262 = vmatpush1.bf16.msra.mxu0 0
    %4263 = vmatprep.subr.bf16.mxu0 0
    %4264 = vmatpush1.bf16.msra.mxu0 0
    %4265 = vmatprep.subr.bf16.mxu0 0
    %4266 = vmatpush1.bf16.msra.mxu0 0
    %4267 = vmatprep.subr.bf16.mxu0 0
    %4268 = vmatpush1.bf16.msra.mxu0 0
    %4269 = vmatprep.subr.bf16.mxu0 0
    %4270 = vmatpush1.bf16.msra.mxu0 0
    %4271 = vmatprep.subr.bf16.mxu0 0
    %4272 = vmatpush1.bf16.msra.mxu0 0
    %4273 = vmatprep.subr.bf16.mxu0 0
    %4274 = vmatpush1.bf16.msra.mxu0 0
    %4275 = vmatprep.mubr.bf16.mxu0 0
    %4276 = vmatmul.mubr.bf16.gmra.mrb[0].mxu0 %v4146
    %v4277 = vpop.f32.mrb[0].mxu0
    %v4278 = vadd.f32 0.0, %v4277
    %v4279 = vpop.f32.mrb[0].mxu0
    %v4280 = vadd.f32 0.0, %v4279
    %v4281 = vpop.f32.mrb[0].mxu0
    %v4282 = vpop.f32.mrb[0].mxu0
    %4283 = vdwg.mxu0
    %v4300 = vunpack.c.l.b16 %v4128
    %v4301 = vunpack.c.h.b16 %v4128
    %v4302 = vunpack.c.l.b16 %v4129
    %v4303 = vunpack.c.h.b16 %v4129
    %v4304 = vunpack.c.l.b16 %v4130
    %v4305 = vunpack.c.h.b16 %v4130
    %v4306 = vunpack.c.l.b16 %v4131
    %v4307 = vunpack.c.h.b16 %v4131
    %v4308 = vunpack.c.l.b16 %v4132
    %v4309 = vunpack.c.h.b16 %v4132
    %v4310 = vunpack.c.l.b16 %v4133
    %v4311 = vunpack.c.h.b16 %v4133
    %v4312 = vunpack.c.l.b16 %v4134
    %v4313 = vunpack.c.h.b16 %v4134
    %v4314 = vunpack.c.l.b16 %v4135
    %v4315 = vunpack.c.h.b16 %v4135
    %v4316 = vunpack.c.l.b16 %v4136
    %v4317 = vunpack.c.h.b16 %v4136
    %v4318 = vunpack.c.l.b16 %v4137
    %v4319 = vunpack.c.h.b16 %v4137
    %v4320 = vunpack.c.l.b16 %v4138
    %v4321 = vunpack.c.h.b16 %v4138
    %v4322 = vunpack.c.l.b16 %v4139
    %v4323 = vunpack.c.h.b16 %v4139
    %v4324 = vunpack.c.l.b16 %v4140
    %v4325 = vunpack.c.h.b16 %v4140
    %v4326 = vunpack.c.l.b16 %v4141
    %v4327 = vunpack.c.h.b16 %v4141
    %v4328 = vunpack.c.l.b16 %v4142
    %v4329 = vunpack.c.h.b16 %v4142
    %v4330 = vunpack.c.l.b16 %v4143
    %v4331 = vunpack.c.h.b16 %v4143
    %v4332 = vpack.c.b16 %v4302, %v4300
    %v4333 = vpack.c.b16 %v4303, %v4301
    %v4334 = vpack.c.b16 %v4306, %v4304
    %v4335 = vpack.c.b16 %v4307, %v4305
    %v4336 = vpack.c.b16 %v4310, %v4308
    %v4337 = vpack.c.b16 %v4311, %v4309
    %v4338 = vpack.c.b16 %v4314, %v4312
    %v4339 = vpack.c.b16 %v4315, %v4313
    %v4340 = vpack.c.b16 %v4318, %v4316
    %v4341 = vpack.c.b16 %v4319, %v4317
    %v4342 = vpack.c.b16 %v4322, %v4320
    %v4343 = vpack.c.b16 %v4323, %v4321
    %v4344 = vpack.c.b16 %v4326, %v4324
    %v4345 = vpack.c.b16 %v4327, %v4325
    %v4346 = vpack.c.b16 %v4330, %v4328
    %v4347 = vpack.c.b16 %v4331, %v4329
    %4364 = vmatprep.subr.bf16.mxu0 %v4333
    %4365 = vmatpush1.bf16.msra.mxu0 %v4332
    %4366 = vmatprep.subr.bf16.mxu0 %v4335
    %4367 = vmatpush1.bf16.msra.mxu0 %v4334
    %4368 = vmatprep.subr.bf16.mxu0 %v4337
    %4369 = vmatpush1.bf16.msra.mxu0 %v4336
    %4370 = vmatprep.subr.bf16.mxu0 %v4339
    %4371 = vmatpush1.bf16.msra.mxu0 %v4338
    %4372 = vmatprep.subr.bf16.mxu0 %v4341
    %4373 = vmatpush1.bf16.msra.mxu0 %v4340
    %4374 = vmatprep.subr.bf16.mxu0 %v4343
    %4375 = vmatpush1.bf16.msra.mxu0 %v4342
    %4376 = vmatprep.subr.bf16.mxu0 %v4345
    %4377 = vmatpush1.bf16.msra.mxu0 %v4344
    %4378 = vmatprep.subr.bf16.mxu0 %v4347
    %4379 = vmatpush1.bf16.msra.mxu0 %v4346
    %4380 = vmatprep.subr.bf16.mxu0 0
    %4381 = vmatpush1.bf16.msra.mxu0 0
    %4382 = vmatprep.subr.bf16.mxu0 0
    %4383 = vmatpush1.bf16.msra.mxu0 0
    %4384 = vmatprep.subr.bf16.mxu0 0
    %4385 = vmatpush1.bf16.msra.mxu0 0
    %4386 = vmatprep.subr.bf16.mxu0 0
    %4387 = vmatpush1.bf16.msra.mxu0 0
    %4388 = vmatprep.subr.bf16.mxu0 0
    %4389 = vmatpush1.bf16.msra.mxu0 0
    %4390 = vmatprep.subr.bf16.mxu0 0
    %4391 = vmatpush1.bf16.msra.mxu0 0
    %4392 = vmatprep.subr.bf16.mxu0 0
    %4393 = vmatpush1.bf16.msra.mxu0 0
    %4394 = vmatprep.subr.bf16.mxu0 0
    %4395 = vmatpush1.bf16.msra.mxu0 0
    %4396 = vmatprep.mubr.bf16.mxu0 0
    %4397 = vmatmul.mubr.bf16.gmra.mrb[0].mxu0 %v4127
    %v4398 = vpop.f32.mrb[0].mxu0
    %v4399 = vadd.f32 %v4278, %v4398
    %v4400 = vpop.f32.mrb[0].mxu0
    %v4401 = vadd.f32 %v4280, %v4400
    %v4402 = vpop.f32.mrb[0].mxu0
    %v4403 = vpop.f32.mrb[0].mxu0
    %4404 = vdwg.mxu0
    %v4405 = vld [vmem:[#allocation4 + $0xa] sm:$0xff]
    %v4406 = vsel %vm4125, %v4405, 0.0
    %v4407 = vpack.c.bf16 %v4406, %v4406
    %v4408 = vld [vmem:[#allocation5 + $0x100] sm:$0xff]
    %v4409 = vld [vmem:[#allocation5 + $0x108] sm:$0xff]
    %v4410 = vld [vmem:[#allocation5 + $0x110] sm:$0xff]
    %v4411 = vld [vmem:[#allocation5 + $0x118] sm:$0xff]
    %v4412 = vld [vmem:[#allocation5 + $0x120] sm:$0xff]
    %v4413 = vld [vmem:[#allocation5 + $0x128] sm:$0xff]
    %v4414 = vld [vmem:[#allocation5 + $0x130] sm:$0xff]
    %v4415 = vld [vmem:[#allocation5 + $0x138] sm:$0xff]
    %v4416 = vld [vmem:[#allocation5 + $0x140] sm:$0xff]
    %v4417 = vld [vmem:[#allocation5 + $0x148] sm:$0xff]
    %v4418 = vld [vmem:[#allocation5 + $0x150] sm:$0xff]
    %v4419 = vld [vmem:[#allocation5 + $0x158] sm:$0xff]
    %v4420 = vld [vmem:[#allocation5 + $0x160] sm:$0xff]
    %v4421 = vld [vmem:[#allocation5 + $0x168] sm:$0xff]
    %v4422 = vld [vmem:[#allocation5 + $0x170] sm:$0xff]
    %v4423 = vld [vmem:[#allocation5 + $0x178] sm:$0xff]
    %v4440 = vunpack.c.l.b16 %v4408
    %v4441 = vunpack.c.h.b16 %v4408
    %v4442 = vunpack.c.l.b16 %v4409
    %v4443 = vunpack.c.h.b16 %v4409
    %v4444 = vunpack.c.l.b16 %v4410
    %v4445 = vunpack.c.h.b16 %v4410
    %v4446 = vunpack.c.l.b16 %v4411
    %v4447 = vunpack.c.h.b16 %v4411
    %v4448 = vunpack.c.l.b16 %v4412
    %v4449 = vunpack.c.h.b16 %v4412
    %v4450 = vunpack.c.l.b16 %v4413
    %v4451 = vunpack.c.h.b16 %v4413
    %v4452 = vunpack.c.l.b16 %v4414
    %v4453 = vunpack.c.h.b16 %v4414
    %v4454 = vunpack.c.l.b16 %v4415
    %v4455 = vunpack.c.h.b16 %v4415
    %v4456 = vunpack.c.l.b16 %v4416
    %v4457 = vunpack.c.h.b16 %v4416
    %v4458 = vunpack.c.l.b16 %v4417
    %v4459 = vunpack.c.h.b16 %v4417
    %v4460 = vunpack.c.l.b16 %v4418
    %v4461 = vunpack.c.h.b16 %v4418
    %v4462 = vunpack.c.l.b16 %v4419
    %v4463 = vunpack.c.h.b16 %v4419
    %v4464 = vunpack.c.l.b16 %v4420
    %v4465 = vunpack.c.h.b16 %v4420
    %v4466 = vunpack.c.l.b16 %v4421
    %v4467 = vunpack.c.h.b16 %v4421
    %v4468 = vunpack.c.l.b16 %v4422
    %v4469 = vunpack.c.h.b16 %v4422
    %v4470 = vunpack.c.l.b16 %v4423
    %v4471 = vunpack.c.h.b16 %v4423
    %v4472 = vpack.c.b16 %v4442, %v4440
    %v4473 = vpack.c.b16 %v4443, %v4441
    %v4474 = vpack.c.b16 %v4446, %v4444
    %v4475 = vpack.c.b16 %v4447, %v4445
    %v4476 = vpack.c.b16 %v4450, %v4448
    %v4477 = vpack.c.b16 %v4451, %v4449
    %v4478 = vpack.c.b16 %v4454, %v4452
    %v4479 = vpack.c.b16 %v4455, %v4453
    %v4480 = vpack.c.b16 %v4458, %v4456
    %v4481 = vpack.c.b16 %v4459, %v4457
    %v4482 = vpack.c.b16 %v4462, %v4460
    %v4483 = vpack.c.b16 %v4463, %v4461
    %v4484 = vpack.c.b16 %v4466, %v4464
    %v4485 = vpack.c.b16 %v4467, %v4465
    %v4486 = vpack.c.b16 %v4470, %v4468
    %v4487 = vpack.c.b16 %v4471, %v4469
    %4504 = vmatprep.subr.bf16.mxu0 %v4473
    %4505 = vmatpush1.bf16.msra.mxu0 %v4472
    %4506 = vmatprep.subr.bf16.mxu0 %v4475
    %4507 = vmatpush1.bf16.msra.mxu0 %v4474
    %4508 = vmatprep.subr.bf16.mxu0 %v4477
    %4509 = vmatpush1.bf16.msra.mxu0 %v4476
    %4510 = vmatprep.subr.bf16.mxu0 %v4479
    %4511 = vmatpush1.bf16.msra.mxu0 %v4478
    %4512 = vmatprep.subr.bf16.mxu0 %v4481
    %4513 = vmatpush1.bf16.msra.mxu0 %v4480
    %4514 = vmatprep.subr.bf16.mxu0 %v4483
    %4515 = vmatpush1.bf16.msra.mxu0 %v4482
    %4516 = vmatprep.subr.bf16.mxu0 %v4485
    %4517 = vmatpush1.bf16.msra.mxu0 %v4484
    %4518 = vmatprep.subr.bf16.mxu0 %v4487
    %4519 = vmatpush1.bf16.msra.mxu0 %v4486
    %4520 = vmatprep.subr.bf16.mxu0 0
    %4521 = vmatpush1.bf16.msra.mxu0 0
    %4522 = vmatprep.subr.bf16.mxu0 0
    %4523 = vmatpush1.bf16.msra.mxu0 0
    %4524 = vmatprep.subr.bf16.mxu0 0
    %4525 = vmatpush1.bf16.msra.mxu0 0
    %4526 = vmatprep.subr.bf16.mxu0 0
    %4527 = vmatpush1.bf16.msra.mxu0 0
    %4528 = vmatprep.subr.bf16.mxu0 0
    %4529 = vmatpush1.bf16.msra.mxu0 0
    %4530 = vmatprep.subr.bf16.mxu0 0
    %4531 = vmatpush1.bf16.msra.mxu0 0
    %4532 = vmatprep.subr.bf16.mxu0 0
    %4533 = vmatpush1.bf16.msra.mxu0 0
    %4534 = vmatprep.subr.bf16.mxu0 0
    %4535 = vmatpush1.bf16.msra.mxu0 0
    %4536 = vmatprep.mubr.bf16.mxu0 0
    %4537 = vmatmul.mubr.bf16.gmra.mrb[0].mxu0 %v4407
    %v4538 = vpop.f32.mrb[0].mxu0
    %v4539 = vadd.f32 0.0, %v4538
    %v4540 = vpop.f32.mrb[0].mxu0
    %v4541 = vadd.f32 0.0, %v4540
    %v4542 = vpop.f32.mrb[0].mxu0
    %v4543 = vpop.f32.mrb[0].mxu0
    %4544 = vdwg.mxu0
    %v4545 = vadd.f32 %v4399, %v4539
    %v4546 = vadd.f32 %v4401, %v4541
    %v4547 = vld [vmem:[#allocation4 + $0x4] sm:$0xff]
    %v4548 = vpack.c.bf16 %v4547, %v4547
    %v4549 = vld [vmem:[#allocation5 + $0x180] sm:$0xff]
    %v4550 = vld [vmem:[#allocation5 + $0x188] sm:$0xff]
    %v4551 = vld [vmem:[#allocation5 + $0x190] sm:$0xff]
    %v4552 = vld [vmem:[#allocation5 + $0x198] sm:$0xff]
    %v4553 = vld [vmem:[#allocation5 + $0x1a0] sm:$0xff]
    %v4554 = vld [vmem:[#allocation5 + $0x1a8] sm:$0xff]
    %v4555 = vld [vmem:[#allocation5 + $0x1b0] sm:$0xff]
    %v4556 = vld [vmem:[#allocation5 + $0x1b8] sm:$0xff]
    %v4557 = vld [vmem:[#allocation5 + $0x1c0] sm:$0xff]
    %v4558 = vld [vmem:[#allocation5 + $0x1c8] sm:$0xff]
    %v4559 = vld [vmem:[#allocation5 + $0x1d0] sm:$0xff]
    %v4560 = vld [vmem:[#allocation5 + $0x1d8] sm:$0xff]
    %v4561 = vld [vmem:[#allocation5 + $0x1e0] sm:$0xff]
    %v4562 = vld [vmem:[#allocation5 + $0x1e8] sm:$0xff]
    %v4563 = vld [vmem:[#allocation5 + $0x1f0] sm:$0xff]
    %v4564 = vld [vmem:[#allocation5 + $0x1f8] sm:$0xff]
    %v4581 = vunpack.c.l.b16 %v4549
    %v4582 = vunpack.c.h.b16 %v4549
    %v4583 = vunpack.c.l.b16 %v4550
    %v4584 = vunpack.c.h.b16 %v4550
    %v4585 = vunpack.c.l.b16 %v4551
    %v4586 = vunpack.c.h.b16 %v4551
    %v4587 = vunpack.c.l.b16 %v4552
    %v4588 = vunpack.c.h.b16 %v4552
    %v4589 = vunpack.c.l.b16 %v4553
    %v4590 = vunpack.c.h.b16 %v4553
    %v4591 = vunpack.c.l.b16 %v4554
    %v4592 = vunpack.c.h.b16 %v4554
    %v4593 = vunpack.c.l.b16 %v4555
    %v4594 = vunpack.c.h.b16 %v4555
    %v4595 = vunpack.c.l.b16 %v4556
    %v4596 = vunpack.c.h.b16 %v4556
    %v4597 = vunpack.c.l.b16 %v4557
    %v4598 = vunpack.c.h.b16 %v4557
    %v4599 = vunpack.c.l.b16 %v4558
    %v4600 = vunpack.c.h.b16 %v4558
    %v4601 = vunpack.c.l.b16 %v4559
    %v4602 = vunpack.c.h.b16 %v4559
    %v4603 = vunpack.c.l.b16 %v4560
    %v4604 = vunpack.c.h.b16 %v4560
    %v4605 = vunpack.c.l.b16 %v4561
    %v4606 = vunpack.c.h.b16 %v4561
    %v4607 = vunpack.c.l.b16 %v4562
    %v4608 = vunpack.c.h.b16 %v4562
    %v4609 = vunpack.c.l.b16 %v4563
    %v4610 = vunpack.c.h.b16 %v4563
    %v4611 = vunpack.c.l.b16 %v4564
    %v4612 = vunpack.c.h.b16 %v4564
    %v4613 = vpack.c.b16 %v4583, %v4581
    %v4614 = vpack.c.b16 %v4584, %v4582
    %v4615 = vpack.c.b16 %v4587, %v4585
    %v4616 = vpack.c.b16 %v4588, %v4586
    %v4617 = vpack.c.b16 %v4591, %v4589
    %v4618 = vpack.c.b16 %v4592, %v4590
    %v4619 = vpack.c.b16 %v4595, %v4593
    %v4620 = vpack.c.b16 %v4596, %v4594
    %v4621 = vpack.c.b16 %v4599, %v4597
    %v4622 = vpack.c.b16 %v4600, %v4598
    %v4623 = vpack.c.b16 %v4603, %v4601
    %v4624 = vpack.c.b16 %v4604, %v4602
    %v4625 = vpack.c.b16 %v4607, %v4605
    %v4626 = vpack.c.b16 %v4608, %v4606
    %v4627 = vpack.c.b16 %v4611, %v4609
    %v4628 = vpack.c.b16 %v4612, %v4610
    %4645 = vmatprep.subr.bf16.mxu0 %v4614
    %4646 = vmatpush1.bf16.msra.mxu0 %v4613
    %4647 = vmatprep.subr.bf16.mxu0 %v4616
    %4648 = vmatpush1.bf16.msra.mxu0 %v4615
    %4649 = vmatprep.subr.bf16.mxu0 %v4618
    %4650 = vmatpush1.bf16.msra.mxu0 %v4617
    %4651 = vmatprep.subr.bf16.mxu0 %v4620
    %4652 = vmatpush1.bf16.msra.mxu0 %v4619
    %4653 = vmatprep.subr.bf16.mxu0 %v4622
    %4654 = vmatpush1.bf16.msra.mxu0 %v4621
    %4655 = vmatprep.subr.bf16.mxu0 %v4624
    %4656 = vmatpush1.bf16.msra.mxu0 %v4623
    %4657 = vmatprep.subr.bf16.mxu0 %v4626
    %4658 = vmatpush1.bf16.msra.mxu0 %v4625
    %4659 = vmatprep.subr.bf16.mxu0 %v4628
    %4660 = vmatpush1.bf16.msra.mxu0 %v4627
    %4661 = vmatprep.subr.bf16.mxu0 0
    %4662 = vmatpush1.bf16.msra.mxu0 0
    %4663 = vmatprep.subr.bf16.mxu0 0
    %4664 = vmatpush1.bf16.msra.mxu0 0
    %4665 = vmatprep.subr.bf16.mxu0 0
    %4666 = vmatpush1.bf16.msra.mxu0 0
    %4667 = vmatprep.subr.bf16.mxu0 0
    %4668 = vmatpush1.bf16.msra.mxu0 0
    %4669 = vmatprep.subr.bf16.mxu0 0
    %4670 = vmatpush1.bf16.msra.mxu0 0
    %4671 = vmatprep.subr.bf16.mxu0 0
    %4672 = vmatpush1.bf16.msra.mxu0 0
    %4673 = vmatprep.subr.bf16.mxu0 0
    %4674 = vmatpush1.bf16.msra.mxu0 0
    %4675 = vmatprep.subr.bf16.mxu0 0
    %4676 = vmatpush1.bf16.msra.mxu0 0
    %4677 = vmatprep.mubr.bf16.mxu0 0
    %4678 = vmatmul.mubr.bf16.gmra.mrb[0].mxu0 %v4548
    %v4679 = vpop.f32.mrb[0].mxu0
    %v4680 = vadd.f32 0.0, %v4679
    %v4681 = vpop.f32.mrb[0].mxu0
    %v4682 = vadd.f32 0.0, %v4681
    %v4683 = vpop.f32.mrb[0].mxu0
    %v4684 = vpop.f32.mrb[0].mxu0
    %4685 = vdwg.mxu0
    %v4686 = vadd.f32 %v4545, %v4680
    %v4687 = vadd.f32 %v4546, %v4682
    %v4688 = vld [vmem:[#allocation4 + $0x8] sm:$0xff]
    %v4689 = vpack.c.bf16 %v4688, %v4688
    %v4690 = vld [vmem:[#allocation5 + $0x200] sm:$0xff]
    %v4691 = vld [vmem:[#allocation5 + $0x208] sm:$0xff]
    %v4692 = vld [vmem:[#allocation5 + $0x210] sm:$0xff]
    %v4693 = vld [vmem:[#allocation5 + $0x218] sm:$0xff]
    %v4694 = vld [vmem:[#allocation5 + $0x220] sm:$0xff]
    %v4695 = vld [vmem:[#allocation5 + $0x228] sm:$0xff]
    %v4696 = vld [vmem:[#allocation5 + $0x230] sm:$0xff]
    %v4697 = vld [vmem:[#allocation5 + $0x238] sm:$0xff]
    %v4698 = vld [vmem:[#allocation5 + $0x240] sm:$0xff]
    %v4699 = vld [vmem:[#allocation5 + $0x248] sm:$0xff]
    %v4700 = vld [vmem:[#allocation5 + $0x250] sm:$0xff]
    %v4701 = vld [vmem:[#allocation5 + $0x258] sm:$0xff]
    %v4702 = vld [vmem:[#allocation5 + $0x260] sm:$0xff]
    %v4703 = vld [vmem:[#allocation5 + $0x268] sm:$0xff]
    %v4704 = vld [vmem:[#allocation5 + $0x270] sm:$0xff]
    %v4705 = vld [vmem:[#allocation5 + $0x278] sm:$0xff]
    %v4722 = vunpack.c.l.b16 %v4690
    %v4723 = vunpack.c.h.b16 %v4690
    %v4724 = vunpack.c.l.b16 %v4691
    %v4725 = vunpack.c.h.b16 %v4691
    %v4726 = vunpack.c.l.b16 %v4692
    %v4727 = vunpack.c.h.b16 %v4692
    %v4728 = vunpack.c.l.b16 %v4693
    %v4729 = vunpack.c.h.b16 %v4693
    %v4730 = vunpack.c.l.b16 %v4694
    %v4731 = vunpack.c.h.b16 %v4694
    %v4732 = vunpack.c.l.b16 %v4695
    %v4733 = vunpack.c.h.b16 %v4695
    %v4734 = vunpack.c.l.b16 %v4696
    %v4735 = vunpack.c.h.b16 %v4696
    %v4736 = vunpack.c.l.b16 %v4697
    %v4737 = vunpack.c.h.b16 %v4697
    %v4738 = vunpack.c.l.b16 %v4698
    %v4739 = vunpack.c.h.b16 %v4698
    %v4740 = vunpack.c.l.b16 %v4699
    %v4741 = vunpack.c.h.b16 %v4699
    %v4742 = vunpack.c.l.b16 %v4700
    %v4743 = vunpack.c.h.b16 %v4700
    %v4744 = vunpack.c.l.b16 %v4701
    %v4745 = vunpack.c.h.b16 %v4701
    %v4746 = vunpack.c.l.b16 %v4702
    %v4747 = vunpack.c.h.b16 %v4702
    %v4748 = vunpack.c.l.b16 %v4703
    %v4749 = vunpack.c.h.b16 %v4703
    %v4750 = vunpack.c.l.b16 %v4704
    %v4751 = vunpack.c.h.b16 %v4704
    %v4752 = vunpack.c.l.b16 %v4705
    %v4753 = vunpack.c.h.b16 %v4705
    %v4754 = vpack.c.b16 %v4724, %v4722
    %v4755 = vpack.c.b16 %v4725, %v4723
    %v4756 = vpack.c.b16 %v4728, %v4726
    %v4757 = vpack.c.b16 %v4729, %v4727
    %v4758 = vpack.c.b16 %v4732, %v4730
    %v4759 = vpack.c.b16 %v4733, %v4731
    %v4760 = vpack.c.b16 %v4736, %v4734
    %v4761 = vpack.c.b16 %v4737, %v4735
    %v4762 = vpack.c.b16 %v4740, %v4738
    %v4763 = vpack.c.b16 %v4741, %v4739
    %v4764 = vpack.c.b16 %v4744, %v4742
    %v4765 = vpack.c.b16 %v4745, %v4743
    %v4766 = vpack.c.b16 %v4748, %v4746
    %v4767 = vpack.c.b16 %v4749, %v4747
    %v4768 = vpack.c.b16 %v4752, %v4750
    %v4769 = vpack.c.b16 %v4753, %v4751
    %4786 = vmatprep.subr.bf16.mxu0 %v4755
    %4787 = vmatpush1.bf16.msra.mxu0 %v4754
    %4788 = vmatprep.subr.bf16.mxu0 %v4757
    %4789 = vmatpush1.bf16.msra.mxu0 %v4756
    %4790 = vmatprep.subr.bf16.mxu0 %v4759
    %4791 = vmatpush1.bf16.msra.mxu0 %v4758
    %4792 = vmatprep.subr.bf16.mxu0 %v4761
    %4793 = vmatpush1.bf16.msra.mxu0 %v4760
    %4794 = vmatprep.subr.bf16.mxu0 %v4763
    %4795 = vmatpush1.bf16.msra.mxu0 %v4762
    %4796 = vmatprep.subr.bf16.mxu0 %v4765
    %4797 = vmatpush1.bf16.msra.mxu0 %v4764
    %4798 = vmatprep.subr.bf16.mxu0 %v4767
    %4799 = vmatpush1.bf16.msra.mxu0 %v4766
    %4800 = vmatprep.subr.bf16.mxu0 %v4769
    %4801 = vmatpush1.bf16.msra.mxu0 %v4768
    %4802 = vmatprep.subr.bf16.mxu0 0
    %4803 = vmatpush1.bf16.msra.mxu0 0
    %4804 = vmatprep.subr.bf16.mxu0 0
    %4805 = vmatpush1.bf16.msra.mxu0 0
    %4806 = vmatprep.subr.bf16.mxu0 0
    %4807 = vmatpush1.bf16.msra.mxu0 0
    %4808 = vmatprep.subr.bf16.mxu0 0
    %4809 = vmatpush1.bf16.msra.mxu0 0
    %4810 = vmatprep.subr.bf16.mxu0 0
    %4811 = vmatpush1.bf16.msra.mxu0 0
    %4812 = vmatprep.subr.bf16.mxu0 0
    %4813 = vmatpush1.bf16.msra.mxu0 0
    %4814 = vmatprep.subr.bf16.mxu0 0
    %4815 = vmatpush1.bf16.msra.mxu0 0
    %4816 = vmatprep.subr.bf16.mxu0 0
    %4817 = vmatpush1.bf16.msra.mxu0 0
    %4818 = vmatprep.mubr.bf16.mxu0 0
    %4819 = vmatmul.mubr.bf16.gmra.mrb[0].mxu0 %v4689
    %v4820 = vpop.f32.mrb[0].mxu0
    %v4821 = vadd.f32 0.0, %v4820
    %v4822 = vpop.f32.mrb[0].mxu0
    %v4823 = vadd.f32 0.0, %v4822
    %v4824 = vpop.f32.mrb[0].mxu0
    %v4825 = vpop.f32.mrb[0].mxu0
    %4826 = vdwg.mxu0
    %v4827 = vadd.f32 %v4686, %v4821
    %v4828 = vadd.f32 %v4687, %v4823
    %v4829 = vld [vmem:[#allocation4 + $0xc] sm:$0xff]
    %v4830 = vpack.c.bf16 %v4829, %v4829
    %v4831 = vld [vmem:[#allocation5 + $0x280] sm:$0xff]
    %v4832 = vld [vmem:[#allocation5 + $0x288] sm:$0xff]
    %v4833 = vld [vmem:[#allocation5 + $0x290] sm:$0xff]
    %v4834 = vld [vmem:[#allocation5 + $0x298] sm:$0xff]
    %v4835 = vld [vmem:[#allocation5 + $0x2a0] sm:$0xff]
    %v4836 = vld [vmem:[#allocation5 + $0x2a8] sm:$0xff]
    %v4837 = vld [vmem:[#allocation5 + $0x2b0] sm:$0xff]
    %v4838 = vld [vmem:[#allocation5 + $0x2b8] sm:$0xff]
    %v4839 = vld [vmem:[#allocation5 + $0x2c0] sm:$0xff]
    %v4840 = vld [vmem:[#allocation5 + $0x2c8] sm:$0xff]
    %v4841 = vld [vmem:[#allocation5 + $0x2d0] sm:$0xff]
    %v4842 = vld [vmem:[#allocation5 + $0x2d8] sm:$0xff]
    %v4843 = vld [vmem:[#allocation5 + $0x2e0] sm:$0xff]
    %v4844 = vld [vmem:[#allocation5 + $0x2e8] sm:$0xff]
    %v4845 = vld [vmem:[#allocation5 + $0x2f0] sm:$0xff]
    %v4846 = vld [vmem:[#allocation5 + $0x2f8] sm:$0xff]
    %v4863 = vunpack.c.l.b16 %v4831
    %v4864 = vunpack.c.h.b16 %v4831
    %v4865 = vunpack.c.l.b16 %v4832
    %v4866 = vunpack.c.h.b16 %v4832
    %v4867 = vunpack.c.l.b16 %v4833
    %v4868 = vunpack.c.h.b16 %v4833
    %v4869 = vunpack.c.l.b16 %v4834
    %v4870 = vunpack.c.h.b16 %v4834
    %v4871 = vunpack.c.l.b16 %v4835
    %v4872 = vunpack.c.h.b16 %v4835
    %v4873 = vunpack.c.l.b16 %v4836
    %v4874 = vunpack.c.h.b16 %v4836
    %v4875 = vunpack.c.l.b16 %v4837
    %v4876 = vunpack.c.h.b16 %v4837
    %v4877 = vunpack.c.l.b16 %v4838
    %v4878 = vunpack.c.h.b16 %v4838
    %v4879 = vunpack.c.l.b16 %v4839
    %v4880 = vunpack.c.h.b16 %v4839
    %v4881 = vunpack.c.l.b16 %v4840
    %v4882 = vunpack.c.h.b16 %v4840
    %v4883 = vunpack.c.l.b16 %v4841
    %v4884 = vunpack.c.h.b16 %v4841
    %v4885 = vunpack.c.l.b16 %v4842
    %v4886 = vunpack.c.h.b16 %v4842
    %v4887 = vunpack.c.l.b16 %v4843
    %v4888 = vunpack.c.h.b16 %v4843
    %v4889 = vunpack.c.l.b16 %v4844
    %v4890 = vunpack.c.h.b16 %v4844
    %v4891 = vunpack.c.l.b16 %v4845
    %v4892 = vunpack.c.h.b16 %v4845
    %v4893 = vunpack.c.l.b16 %v4846
    %v4894 = vunpack.c.h.b16 %v4846
    %v4895 = vpack.c.b16 %v4865, %v4863
    %v4896 = vpack.c.b16 %v4866, %v4864
    %v4897 = vpack.c.b16 %v4869, %v4867
    %v4898 = vpack.c.b16 %v4870, %v4868
    %v4899 = vpack.c.b16 %v4873, %v4871
    %v4900 = vpack.c.b16 %v4874, %v4872
    %v4901 = vpack.c.b16 %v4877, %v4875
    %v4902 = vpack.c.b16 %v4878, %v4876
    %v4903 = vpack.c.b16 %v4881, %v4879
    %v4904 = vpack.c.b16 %v4882, %v4880
    %v4905 = vpack.c.b16 %v4885, %v4883
    %v4906 = vpack.c.b16 %v4886, %v4884
    %v4907 = vpack.c.b16 %v4889, %v4887
    %v4908 = vpack.c.b16 %v4890, %v4888
    %v4909 = vpack.c.b16 %v4893, %v4891
    %v4910 = vpack.c.b16 %v4894, %v4892
    %4927 = vmatprep.subr.bf16.mxu0 %v4896
    %4928 = vmatpush1.bf16.msra.mxu0 %v4895
    %4929 = vmatprep.subr.bf16.mxu0 %v4898
    %4930 = vmatpush1.bf16.msra.mxu0 %v4897
    %4931 = vmatprep.subr.bf16.mxu0 %v4900
    %4932 = vmatpush1.bf16.msra.mxu0 %v4899
    %4933 = vmatprep.subr.bf16.mxu0 %v4902
    %4934 = vmatpush1.bf16.msra.mxu0 %v4901
    %4935 = vmatprep.subr.bf16.mxu0 %v4904
    %4936 = vmatpush1.bf16.msra.mxu0 %v4903
    %4937 = vmatprep.subr.bf16.mxu0 %v4906
    %4938 = vmatpush1.bf16.msra.mxu0 %v4905
    %4939 = vmatprep.subr.bf16.mxu0 %v4908
    %4940 = vmatpush1.bf16.msra.mxu0 %v4907
    %4941 = vmatprep.subr.bf16.mxu0 %v4910
    %4942 = vmatpush1.bf16.msra.mxu0 %v4909
    %4943 = vmatprep.subr.bf16.mxu0 0
    %4944 = vmatpush1.bf16.msra.mxu0 0
    %4945 = vmatprep.subr.bf16.mxu0 0
    %4946 = vmatpush1.bf16.msra.mxu0 0
    %4947 = vmatprep.subr.bf16.mxu0 0
    %4948 = vmatpush1.bf16.msra.mxu0 0
    %4949 = vmatprep.subr.bf16.mxu0 0
    %4950 = vmatpush1.bf16.msra.mxu0 0
    %4951 = vmatprep.subr.bf16.mxu0 0
    %4952 = vmatpush1.bf16.msra.mxu0 0
    %4953 = vmatprep.subr.bf16.mxu0 0
    %4954 = vmatpush1.bf16.msra.mxu0 0
    %4955 = vmatprep.subr.bf16.mxu0 0
    %4956 = vmatpush1.bf16.msra.mxu0 0
    %4957 = vmatprep.subr.bf16.mxu0 0
    %4958 = vmatpush1.bf16.msra.mxu0 0
    %4959 = vmatprep.mubr.bf16.mxu0 0
    %4960 = vmatmul.mubr.bf16.gmra.mrb[0].mxu0 %v4830
    %v4961 = vpop.f32.mrb[0].mxu0
    %v4962 = vadd.f32 0.0, %v4961
    %v4963 = vpop.f32.mrb[0].mxu0
    %v4964 = vadd.f32 0.0, %v4963
    %v4965 = vpop.f32.mrb[0].mxu0
    %v4966 = vpop.f32.mrb[0].mxu0
    %4967 = vdwg.mxu0
    %v4968 = vadd.f32 %v4827, %v4962
    %v4969 = vadd.f32 %v4828, %v4964
    %vm4970 = vcmp.le.f32.partialorder %v4118, 0.0
    %v4971 = vsel %vm4970, 1, 0
    %4972 = vset.pattern.permute.xlu0 0
    %4973 = vperm.xlu0 %4972, %v4971
    %v4974 = vpop.permute.xlu0 %4973
    %vm4975 = vcmp.eq.s32.totalorder %v4974, 1
    %v4976 = vsel %vm4975, %v4144, 0.0
    %v4977 = vpack.c.bf16 %v4976, %v4976
    %v4978 = vld [vmem:[#allocation5 + $0x300] sm:$0xff]
    %v4979 = vld [vmem:[#allocation5 + $0x308] sm:$0xff]
    %v4980 = vld [vmem:[#allocation5 + $0x310] sm:$0xff]
    %v4981 = vld [vmem:[#allocation5 + $0x318] sm:$0xff]
    %v4982 = vld [vmem:[#allocation5 + $0x320] sm:$0xff]
    %v4983 = vld [vmem:[#allocation5 + $0x328] sm:$0xff]
    %v4984 = vld [vmem:[#allocation5 + $0x330] sm:$0xff]
    %v4985 = vld [vmem:[#allocation5 + $0x338] sm:$0xff]
    %v4986 = vld [vmem:[#allocation5 + $0x340] sm:$0xff]
    %v4987 = vld [vmem:[#allocation5 + $0x348] sm:$0xff]
    %v4988 = vld [vmem:[#allocation5 + $0x350] sm:$0xff]
    %v4989 = vld [vmem:[#allocation5 + $0x358] sm:$0xff]
    %v4990 = vld [vmem:[#allocation5 + $0x360] sm:$0xff]
    %v4991 = vld [vmem:[#allocation5 + $0x368] sm:$0xff]
    %v4992 = vld [vmem:[#allocation5 + $0x370] sm:$0xff]
    %v4993 = vld [vmem:[#allocation5 + $0x378] sm:$0xff]
    %v5010 = vunpack.c.l.b16 %v4978
    %v5011 = vunpack.c.h.b16 %v4978
    %v5012 = vunpack.c.l.b16 %v4979
    %v5013 = vunpack.c.h.b16 %v4979
    %v5014 = vunpack.c.l.b16 %v4980
    %v5015 = vunpack.c.h.b16 %v4980
    %v5016 = vunpack.c.l.b16 %v4981
    %v5017 = vunpack.c.h.b16 %v4981
    %v5018 = vunpack.c.l.b16 %v4982
    %v5019 = vunpack.c.h.b16 %v4982
    %v5020 = vunpack.c.l.b16 %v4983
    %v5021 = vunpack.c.h.b16 %v4983
    %v5022 = vunpack.c.l.b16 %v4984
    %v5023 = vunpack.c.h.b16 %v4984
    %v5024 = vunpack.c.l.b16 %v4985
    %v5025 = vunpack.c.h.b16 %v4985
    %v5026 = vunpack.c.l.b16 %v4986
    %v5027 = vunpack.c.h.b16 %v4986
    %v5028 = vunpack.c.l.b16 %v4987
    %v5029 = vunpack.c.h.b16 %v4987
    %v5030 = vunpack.c.l.b16 %v4988
    %v5031 = vunpack.c.h.b16 %v4988
    %v5032 = vunpack.c.l.b16 %v4989
    %v5033 = vunpack.c.h.b16 %v4989
    %v5034 = vunpack.c.l.b16 %v4990
    %v5035 = vunpack.c.h.b16 %v4990
    %v5036 = vunpack.c.l.b16 %v4991
    %v5037 = vunpack.c.h.b16 %v4991
    %v5038 = vunpack.c.l.b16 %v4992
    %v5039 = vunpack.c.h.b16 %v4992
    %v5040 = vunpack.c.l.b16 %v4993
    %v5041 = vunpack.c.h.b16 %v4993
    %v5042 = vpack.c.b16 %v5012, %v5010
    %v5043 = vpack.c.b16 %v5013, %v5011
    %v5044 = vpack.c.b16 %v5016, %v5014
    %v5045 = vpack.c.b16 %v5017, %v5015
    %v5046 = vpack.c.b16 %v5020, %v5018
    %v5047 = vpack.c.b16 %v5021, %v5019
    %v5048 = vpack.c.b16 %v5024, %v5022
    %v5049 = vpack.c.b16 %v5025, %v5023
    %v5050 = vpack.c.b16 %v5028, %v5026
    %v5051 = vpack.c.b16 %v5029, %v5027
    %v5052 = vpack.c.b16 %v5032, %v5030
    %v5053 = vpack.c.b16 %v5033, %v5031
    %v5054 = vpack.c.b16 %v5036, %v5034
    %v5055 = vpack.c.b16 %v5037, %v5035
    %v5056 = vpack.c.b16 %v5040, %v5038
    %v5057 = vpack.c.b16 %v5041, %v5039
    %5074 = vmatprep.subr.bf16.mxu0 %v5043
    %5075 = vmatpush1.bf16.msra.mxu0 %v5042
    %5076 = vmatprep.subr.bf16.mxu0 %v5045
    %5077 = vmatpush1.bf16.msra.mxu0 %v5044
    %5078 = vmatprep.subr.bf16.mxu0 %v5047
    %5079 = vmatpush1.bf16.msra.mxu0 %v5046
    %5080 = vmatprep.subr.bf16.mxu0 %v5049
    %5081 = vmatpush1.bf16.msra.mxu0 %v5048
    %5082 = vmatprep.subr.bf16.mxu0 %v5051
    %5083 = vmatpush1.bf16.msra.mxu0 %v5050
    %5084 = vmatprep.subr.bf16.mxu0 %v5053
    %5085 = vmatpush1.bf16.msra.mxu0 %v5052
    %5086 = vmatprep.subr.bf16.mxu0 %v5055
    %5087 = vmatpush1.bf16.msra.mxu0 %v5054
    %5088 = vmatprep.subr.bf16.mxu0 %v5057
    %5089 = vmatpush1.bf16.msra.mxu0 %v5056
    %5090 = vmatprep.subr.bf16.mxu0 0
    %5091 = vmatpush1.bf16.msra.mxu0 0
    %5092 = vmatprep.subr.bf16.mxu0 0
    %5093 = vmatpush1.bf16.msra.mxu0 0
    %5094 = vmatprep.subr.bf16.mxu0 0
    %5095 = vmatpush1.bf16.msra.mxu0 0
    %5096 = vmatprep.subr.bf16.mxu0 0
    %5097 = vmatpush1.bf16.msra.mxu0 0
    %5098 = vmatprep.subr.bf16.mxu0 0
    %5099 = vmatpush1.bf16.msra.mxu0 0
    %5100 = vmatprep.subr.bf16.mxu0 0
    %5101 = vmatpush1.bf16.msra.mxu0 0
    %5102 = vmatprep.subr.bf16.mxu0 0
    %5103 = vmatpush1.bf16.msra.mxu0 0
    %5104 = vmatprep.subr.bf16.mxu0 0
    %5105 = vmatpush1.bf16.msra.mxu0 0
    %5106 = vmatprep.mubr.bf16.mxu0 0
    %5107 = vmatmul.mubr.bf16.gmra.mrb[0].mxu0 %v4977
    %v5108 = vpop.f32.mrb[0].mxu0
    %v5109 = vadd.f32 0.0, %v5108
    %v5110 = vpop.f32.mrb[0].mxu0
    %v5111 = vadd.f32 0.0, %v5110
    %v5112 = vpop.f32.mrb[0].mxu0
    %v5113 = vpop.f32.mrb[0].mxu0
    %5114 = vdwg.mxu0
    %v5115 = vadd.f32 %v4968, %v5109
    %v5116 = vadd.f32 %v4969, %v5111
    %v5117 = vsel %vm4975, %v4405, 0.0
    %v5118 = vpack.c.bf16 %v5117, %v5117
    %v5119 = vld [vmem:[#allocation5 + $0x380] sm:$0xff]
    %v5120 = vld [vmem:[#allocation5 + $0x388] sm:$0xff]
    %v5121 = vld [vmem:[#allocation5 + $0x390] sm:$0xff]
    %v5122 = vld [vmem:[#allocation5 + $0x398] sm:$0xff]
    %v5123 = vld [vmem:[#allocation5 + $0x3a0] sm:$0xff]
    %v5124 = vld [vmem:[#allocation5 + $0x3a8] sm:$0xff]
    %v5125 = vld [vmem:[#allocation5 + $0x3b0] sm:$0xff]
    %v5126 = vld [vmem:[#allocation5 + $0x3b8] sm:$0xff]
    %v5127 = vld [vmem:[#allocation5 + $0x3c0] sm:$0xff]
    %v5128 = vld [vmem:[#allocation5 + $0x3c8] sm:$0xff]
    %v5129 = vld [vmem:[#allocation5 + $0x3d0] sm:$0xff]
    %v5130 = vld [vmem:[#allocation5 + $0x3d8] sm:$0xff]
    %v5131 = vld [vmem:[#allocation5 + $0x3e0] sm:$0xff]
    %v5132 = vld [vmem:[#allocation5 + $0x3e8] sm:$0xff]
    %v5133 = vld [vmem:[#allocation5 + $0x3f0] sm:$0xff]
    %v5134 = vld [vmem:[#allocation5 + $0x3f8] sm:$0xff]
    %v5151 = vunpack.c.l.b16 %v5119
    %v5152 = vunpack.c.h.b16 %v5119
    %v5153 = vunpack.c.l.b16 %v5120
    %v5154 = vunpack.c.h.b16 %v5120
    %v5155 = vunpack.c.l.b16 %v5121
    %v5156 = vunpack.c.h.b16 %v5121
    %v5157 = vunpack.c.l.b16 %v5122
    %v5158 = vunpack.c.h.b16 %v5122
    %v5159 = vunpack.c.l.b16 %v5123
    %v5160 = vunpack.c.h.b16 %v5123
    %v5161 = vunpack.c.l.b16 %v5124
    %v5162 = vunpack.c.h.b16 %v5124
    %v5163 = vunpack.c.l.b16 %v5125
    %v5164 = vunpack.c.h.b16 %v5125
    %v5165 = vunpack.c.l.b16 %v5126
    %v5166 = vunpack.c.h.b16 %v5126
    %v5167 = vunpack.c.l.b16 %v5127
    %v5168 = vunpack.c.h.b16 %v5127
    %v5169 = vunpack.c.l.b16 %v5128
    %v5170 = vunpack.c.h.b16 %v5128
    %v5171 = vunpack.c.l.b16 %v5129
    %v5172 = vunpack.c.h.b16 %v5129
    %v5173 = vunpack.c.l.b16 %v5130
    %v5174 = vunpack.c.h.b16 %v5130
    %v5175 = vunpack.c.l.b16 %v5131
    %v5176 = vunpack.c.h.b16 %v5131
    %v5177 = vunpack.c.l.b16 %v5132
    %v5178 = vunpack.c.h.b16 %v5132
    %v5179 = vunpack.c.l.b16 %v5133
    %v5180 = vunpack.c.h.b16 %v5133
    %v5181 = vunpack.c.l.b16 %v5134
    %v5182 = vunpack.c.h.b16 %v5134
    %v5183 = vpack.c.b16 %v5153, %v5151
    %v5184 = vpack.c.b16 %v5154, %v5152
    %v5185 = vpack.c.b16 %v5157, %v5155
    %v5186 = vpack.c.b16 %v5158, %v5156
    %v5187 = vpack.c.b16 %v5161, %v5159
    %v5188 = vpack.c.b16 %v5162, %v5160
    %v5189 = vpack.c.b16 %v5165, %v5163
    %v5190 = vpack.c.b16 %v5166, %v5164
    %v5191 = vpack.c.b16 %v5169, %v5167
    %v5192 = vpack.c.b16 %v5170, %v5168
    %v5193 = vpack.c.b16 %v5173, %v5171
    %v5194 = vpack.c.b16 %v5174, %v5172
    %v5195 = vpack.c.b16 %v5177, %v5175
    %v5196 = vpack.c.b16 %v5178, %v5176
    %v5197 = vpack.c.b16 %v5181, %v5179
    %v5198 = vpack.c.b16 %v5182, %v5180
    %5215 = vmatprep.subr.bf16.mxu0 %v5184
    %5216 = vmatpush1.bf16.msra.mxu0 %v5183
    %5217 = vmatprep.subr.bf16.mxu0 %v5186
    %5218 = vmatpush1.bf16.msra.mxu0 %v5185
    %5219 = vmatprep.subr.bf16.mxu0 %v5188
    %5220 = vmatpush1.bf16.msra.mxu0 %v5187
    %5221 = vmatprep.subr.bf16.mxu0 %v5190
    %5222 = vmatpush1.bf16.msra.mxu0 %v5189
    %5223 = vmatprep.subr.bf16.mxu0 %v5192
    %5224 = vmatpush1.bf16.msra.mxu0 %v5191
    %5225 = vmatprep.subr.bf16.mxu0 %v5194
    %5226 = vmatpush1.bf16.msra.mxu0 %v5193
    %5227 = vmatprep.subr.bf16.mxu0 %v5196
    %5228 = vmatpush1.bf16.msra.mxu0 %v5195
    %5229 = vmatprep.subr.bf16.mxu0 %v5198
    %5230 = vmatpush1.bf16.msra.mxu0 %v5197
    %5231 = vmatprep.subr.bf16.mxu0 0
    %5232 = vmatpush1.bf16.msra.mxu0 0
    %5233 = vmatprep.subr.bf16.mxu0 0
    %5234 = vmatpush1.bf16.msra.mxu0 0
    %5235 = vmatprep.subr.bf16.mxu0 0
    %5236 = vmatpush1.bf16.msra.mxu0 0
    %5237 = vmatprep.subr.bf16.mxu0 0
    %5238 = vmatpush1.bf16.msra.mxu0 0
    %5239 = vmatprep.subr.bf16.mxu0 0
    %5240 = vmatpush1.bf16.msra.mxu0 0
    %5241 = vmatprep.subr.bf16.mxu0 0
    %5242 = vmatpush1.bf16.msra.mxu0 0
    %5243 = vmatprep.subr.bf16.mxu0 0
    %5244 = vmatpush1.bf16.msra.mxu0 0
    %5245 = vmatprep.subr.bf16.mxu0 0
    %5246 = vmatpush1.bf16.msra.mxu0 0
    %5247 = vmatprep.mubr.bf16.mxu0 0
    %5248 = vmatmul.mubr.bf16.gmra.mrb[0].mxu0 %v5118
    %v5249 = vpop.f32.mrb[0].mxu0
    %v5250 = vadd.f32 0.0, %v5249
    %v5251 = vpop.f32.mrb[0].mxu0
    %v5252 = vadd.f32 0.0, %v5251
    %v5253 = vpop.f32.mrb[0].mxu0
    %v5254 = vpop.f32.mrb[0].mxu0
    %5255 = vdwg.mxu0
    %v5256 = vadd.f32 %v5115, %v5250
    %v5257 = vadd.f32 %v5116, %v5252
    %v5258 = vld [vmem:[#allocation4 + $0xe] sm:$0xff]
    %v5259 = vsel %vm4975, %v5258, 0.0
    %v5260 = vpack.c.bf16 %v5259, %v5259
    %v5261 = vld [vmem:[#allocation5 + $0x400] sm:$0xff]
    %v5262 = vld [vmem:[#allocation5 + $0x408] sm:$0xff]
    %v5263 = vld [vmem:[#allocation5 + $0x410] sm:$0xff]
    %v5264 = vld [vmem:[#allocation5 + $0x418] sm:$0xff]
    %v5265 = vld [vmem:[#allocation5 + $0x420] sm:$0xff]
    %v5266 = vld [vmem:[#allocation5 + $0x428] sm:$0xff]
    %v5267 = vld [vmem:[#allocation5 + $0x430] sm:$0xff]
    %v5268 = vld [vmem:[#allocation5 + $0x438] sm:$0xff]
    %v5269 = vld [vmem:[#allocation5 + $0x440] sm:$0xff]
    %v5270 = vld [vmem:[#allocation5 + $0x448] sm:$0xff]
    %v5271 = vld [vmem:[#allocation5 + $0x450] sm:$0xff]
    %v5272 = vld [vmem:[#allocation5 + $0x458] sm:$0xff]
    %v5273 = vld [vmem:[#allocation5 + $0x460] sm:$0xff]
    %v5274 = vld [vmem:[#allocation5 + $0x468] sm:$0xff]
    %v5275 = vld [vmem:[#allocation5 + $0x470] sm:$0xff]
    %v5276 = vld [vmem:[#allocation5 + $0x478] sm:$0xff]
    %v5293 = vunpack.c.l.b16 %v5261
    %v5294 = vunpack.c.h.b16 %v5261
    %v5295 = vunpack.c.l.b16 %v5262
    %v5296 = vunpack.c.h.b16 %v5262
    %v5297 = vunpack.c.l.b16 %v5263
    %v5298 = vunpack.c.h.b16 %v5263
    %v5299 = vunpack.c.l.b16 %v5264
    %v5300 = vunpack.c.h.b16 %v5264
    %v5301 = vunpack.c.l.b16 %v5265
    %v5302 = vunpack.c.h.b16 %v5265
    %v5303 = vunpack.c.l.b16 %v5266
    %v5304 = vunpack.c.h.b16 %v5266
    %v5305 = vunpack.c.l.b16 %v5267
    %v5306 = vunpack.c.h.b16 %v5267
    %v5307 = vunpack.c.l.b16 %v5268
    %v5308 = vunpack.c.h.b16 %v5268
    %v5309 = vunpack.c.l.b16 %v5269
    %v5310 = vunpack.c.h.b16 %v5269
    %v5311 = vunpack.c.l.b16 %v5270
    %v5312 = vunpack.c.h.b16 %v5270
    %v5313 = vunpack.c.l.b16 %v5271
    %v5314 = vunpack.c.h.b16 %v5271
    %v5315 = vunpack.c.l.b16 %v5272
    %v5316 = vunpack.c.h.b16 %v5272
    %v5317 = vunpack.c.l.b16 %v5273
    %v5318 = vunpack.c.h.b16 %v5273
    %v5319 = vunpack.c.l.b16 %v5274
    %v5320 = vunpack.c.h.b16 %v5274
    %v5321 = vunpack.c.l.b16 %v5275
    %v5322 = vunpack.c.h.b16 %v5275
    %v5323 = vunpack.c.l.b16 %v5276
    %v5324 = vunpack.c.h.b16 %v5276
    %v5325 = vpack.c.b16 %v5295, %v5293
    %v5326 = vpack.c.b16 %v5296, %v5294
    %v5327 = vpack.c.b16 %v5299, %v5297
    %v5328 = vpack.c.b16 %v5300, %v5298
    %v5329 = vpack.c.b16 %v5303, %v5301
    %v5330 = vpack.c.b16 %v5304, %v5302
    %v5331 = vpack.c.b16 %v5307, %v5305
    %v5332 = vpack.c.b16 %v5308, %v5306
    %v5333 = vpack.c.b16 %v5311, %v5309
    %v5334 = vpack.c.b16 %v5312, %v5310
    %v5335 = vpack.c.b16 %v5315, %v5313
    %v5336 = vpack.c.b16 %v5316, %v5314
    %v5337 = vpack.c.b16 %v5319, %v5317
    %v5338 = vpack.c.b16 %v5320, %v5318
    %v5339 = vpack.c.b16 %v5323, %v5321
    %v5340 = vpack.c.b16 %v5324, %v5322
    %5357 = vmatprep.subr.bf16.mxu0 %v5326
    %5358 = vmatpush1.bf16.msra.mxu0 %v5325
    %5359 = vmatprep.subr.bf16.mxu0 %v5328
    %5360 = vmatpush1.bf16.msra.mxu0 %v5327
    %5361 = vmatprep.subr.bf16.mxu0 %v5330
    %5362 = vmatpush1.bf16.msra.mxu0 %v5329
    %5363 = vmatprep.subr.bf16.mxu0 %v5332
    %5364 = vmatpush1.bf16.msra.mxu0 %v5331
    %5365 = vmatprep.subr.bf16.mxu0 %v5334
    %5366 = vmatpush1.bf16.msra.mxu0 %v5333
    %5367 = vmatprep.subr.bf16.mxu0 %v5336
    %5368 = vmatpush1.bf16.msra.mxu0 %v5335
    %5369 = vmatprep.subr.bf16.mxu0 %v5338
    %5370 = vmatpush1.bf16.msra.mxu0 %v5337
    %5371 = vmatprep.subr.bf16.mxu0 %v5340
    %5372 = vmatpush1.bf16.msra.mxu0 %v5339
    %5373 = vmatprep.subr.bf16.mxu0 0
    %5374 = vmatpush1.bf16.msra.mxu0 0
    %5375 = vmatprep.subr.bf16.mxu0 0
    %5376 = vmatpush1.bf16.msra.mxu0 0
    %5377 = vmatprep.subr.bf16.mxu0 0
    %5378 = vmatpush1.bf16.msra.mxu0 0
    %5379 = vmatprep.subr.bf16.mxu0 0
    %5380 = vmatpush1.bf16.msra.mxu0 0
    %5381 = vmatprep.subr.bf16.mxu0 0
    %5382 = vmatpush1.bf16.msra.mxu0 0
    %5383 = vmatprep.subr.bf16.mxu0 0
    %5384 = vmatpush1.bf16.msra.mxu0 0
    %5385 = vmatprep.subr.bf16.mxu0 0
    %5386 = vmatpush1.bf16.msra.mxu0 0
    %5387 = vmatprep.subr.bf16.mxu0 0
    %5388 = vmatpush1.bf16.msra.mxu0 0
    %5389 = vmatprep.mubr.bf16.mxu0 0
    %5390 = vmatmul.mubr.bf16.gmra.mrb[0].mxu0 %v5260
    %v5391 = vpop.f32.mrb[0].mxu0
    %v5392 = vadd.f32 0.0, %v5391
    %v5393 = vpop.f32.mrb[0].mxu0
    %v5394 = vadd.f32 0.0, %v5393
    %v5395 = vpop.f32.mrb[0].mxu0
    %v5396 = vpop.f32.mrb[0].mxu0
    %5397 = vdwg.mxu0
    %v5398 = vadd.f32 %v5256, %v5392
    %v5399 = vadd.f32 %v5257, %v5394
    %v5400 = vld [vmem:[%s14] sm:$0x3]
    %v5402 = vlaneseq
    %v5403 = vshrl.u32 %v5402, 7
    %v5404 = vsub.s32 0, %v5403
    %v5405 = vrot.slane %v5400, %v5404
    %v5406 = vlaneseq
    %v5407 = vshrl.u32 %v5406, 7
    %v5408 = vsub.s32 1, %v5407
    %v5409 = vrot.slane %v5400, %v5408
    %v5412 = vmul.f32 %v5398, %v5405
    %v5413 = vmul.f32 %v5399, %v5409
    %v5414 = vld [vmem:[%s15] sm:$0x3]
    %v5416 = vlaneseq
    %v5417 = vshrl.u32 %v5416, 7
    %v5418 = vsub.s32 0, %v5417
    %v5419 = vrot.slane %v5414, %v5418
    %v5420 = vlaneseq
    %v5421 = vshrl.u32 %v5420, 7
    %v5422 = vsub.s32 1, %v5421
    %v5423 = vrot.slane %v5414, %v5422
    %v5426 = vadd.f32 %v5412, %v5419
    %v5427 = vadd.f32 %v5413, %v5423
    %v5428 = vmax.f32 %v5426, 0.0
    %v5429 = vmax.f32 %v5427, 0.0
    %v5432 = vrot.slane %v5428, 4
    %v5433 = vrot.slane %v5429, 4
    %v5436 = vmax.f32 %v5428, %v5432
    %v5437 = vmax.f32 %v5429, %v5433
    %v5440 = vrot.slane %v5436, 2
    %v5441 = vrot.slane %v5437, 2
    %v5444 = vmax.f32 %v5436, %v5440
    %v5445 = vmax.f32 %v5437, %v5441
    %v5446 = vpack.c.bf16 %v5444, %v5444
    %v5447 = vpack.c.bf16 %v5445, %v5445
    %v5448 = vld [vmem:[%s16] sm:$0xf]
    %v5449 = vld [vmem:[%s16 + $0x4] sm:$0xf]
    %v5450 = vld [vmem:[%s16 + $0x8] sm:$0xf]
    %v5451 = vld [vmem:[%s16 + $0xc] sm:$0xf]
    %v5452 = vld [vmem:[%s16 + $0x10] sm:$0xf]
    %v5453 = vld [vmem:[%s16 + $0x14] sm:$0xf]
    %v5454 = vld [vmem:[%s16 + $0x18] sm:$0xf]
    %v5455 = vld [vmem:[%s16 + $0x1c] sm:$0xf]
    %v5456 = vld [vmem:[%s16 + $0x20] sm:$0xf]
    %v5457 = vld [vmem:[%s16 + $0x24] sm:$0xf]
    %v5458 = vld [vmem:[%s16 + $0x28] sm:$0xf]
    %v5459 = vld [vmem:[%s16 + $0x2c] sm:$0xf]
    %v5460 = vld [vmem:[%s16 + $0x30] sm:$0xf]
    %v5461 = vld [vmem:[%s16 + $0x34] sm:$0xf]
    %v5462 = vld [vmem:[%s16 + $0x38] sm:$0xf]
    %v5463 = vld [vmem:[%s16 + $0x3c] sm:$0xf]
    %v5464 = vld [vmem:[%s16 + $0x40] sm:$0xf]
    %v5465 = vld [vmem:[%s16 + $0x44] sm:$0xf]
    %v5466 = vld [vmem:[%s16 + $0x48] sm:$0xf]
    %v5467 = vld [vmem:[%s16 + $0x4c] sm:$0xf]
    %v5468 = vld [vmem:[%s16 + $0x50] sm:$0xf]
    %v5469 = vld [vmem:[%s16 + $0x54] sm:$0xf]
    %v5470 = vld [vmem:[%s16 + $0x58] sm:$0xf]
    %v5471 = vld [vmem:[%s16 + $0x5c] sm:$0xf]
    %v5472 = vld [vmem:[%s16 + $0x60] sm:$0xf]
    %v5473 = vld [vmem:[%s16 + $0x64] sm:$0xf]
    %v5474 = vld [vmem:[%s16 + $0x68] sm:$0xf]
    %v5475 = vld [vmem:[%s16 + $0x6c] sm:$0xf]
    %v5476 = vld [vmem:[%s16 + $0x70] sm:$0xf]
    %v5477 = vld [vmem:[%s16 + $0x74] sm:$0xf]
    %v5478 = vld [vmem:[%s16 + $0x78] sm:$0xf]
    %v5479 = vld [vmem:[%s16 + $0x7c] sm:$0xf]
    %v5480 = vld [vmem:[%s17] sm:$0x1]
    %v5482 = vlaneseq
    %v5483 = vshrl.u32 %v5482, 7
    %v5484 = vsub.s32 0, %v5483
    %v5485 = vrot.slane %v5480, %v5484
    %v5519 = vunpack.c.l.b16 %v5448
    %v5520 = vunpack.c.l.b16 %v5449
    %v5521 = vunpack.c.l.b16 %v5450
    %v5522 = vunpack.c.l.b16 %v5451
    %v5523 = vunpack.c.l.b16 %v5452
    %v5524 = vunpack.c.l.b16 %v5453
    %v5525 = vunpack.c.l.b16 %v5454
    %v5526 = vunpack.c.l.b16 %v5455
    %v5527 = vunpack.c.l.b16 %v5456
    %v5528 = vunpack.c.l.b16 %v5457
    %v5529 = vunpack.c.l.b16 %v5458
    %v5530 = vunpack.c.l.b16 %v5459
    %v5531 = vunpack.c.l.b16 %v5460
    %v5532 = vunpack.c.l.b16 %v5461
    %v5533 = vunpack.c.l.b16 %v5462
    %v5534 = vunpack.c.l.b16 %v5463
    %v5535 = vunpack.c.l.b16 %v5464
    %v5536 = vunpack.c.l.b16 %v5465
    %v5537 = vunpack.c.l.b16 %v5466
    %v5538 = vunpack.c.l.b16 %v5467
    %v5539 = vunpack.c.l.b16 %v5468
    %v5540 = vunpack.c.l.b16 %v5469
    %v5541 = vunpack.c.l.b16 %v5470
    %v5542 = vunpack.c.l.b16 %v5471
    %v5543 = vunpack.c.l.b16 %v5472
    %v5544 = vunpack.c.l.b16 %v5473
    %v5545 = vunpack.c.l.b16 %v5474
    %v5546 = vunpack.c.l.b16 %v5475
    %v5547 = vunpack.c.l.b16 %v5476
    %v5548 = vunpack.c.l.b16 %v5477
    %v5549 = vunpack.c.l.b16 %v5478
    %v5550 = vunpack.c.l.b16 %v5479
    %v5551 = vpack.c.b16 %v5520, %v5519
    %v5552 = vpack.c.b16 %v5522, %v5521
    %v5553 = vpack.c.b16 %v5524, %v5523
    %v5554 = vpack.c.b16 %v5526, %v5525
    %v5555 = vpack.c.b16 %v5528, %v5527
    %v5556 = vpack.c.b16 %v5530, %v5529
    %v5557 = vpack.c.b16 %v5532, %v5531
    %v5558 = vpack.c.b16 %v5534, %v5533
    %v5559 = vpack.c.b16 %v5536, %v5535
    %v5560 = vpack.c.b16 %v5538, %v5537
    %v5561 = vpack.c.b16 %v5540, %v5539
    %v5562 = vpack.c.b16 %v5542, %v5541
    %v5563 = vpack.c.b16 %v5544, %v5543
    %v5564 = vpack.c.b16 %v5546, %v5545
    %v5565 = vpack.c.b16 %v5548, %v5547
    %v5566 = vpack.c.b16 %v5550, %v5549
    %5583 = vmatprep.subr.bf16.mxu0 0
    %5584 = vmatpush1.bf16.msra.mxu0 %v5551
    %5585 = vmatprep.subr.bf16.mxu0 0
    %5586 = vmatpush1.bf16.msra.mxu0 %v5552
    %5587 = vmatprep.subr.bf16.mxu0 0
    %5588 = vmatpush1.bf16.msra.mxu0 %v5553
    %5589 = vmatprep.subr.bf16.mxu0 0
    %5590 = vmatpush1.bf16.msra.mxu0 %v5554
    %5591 = vmatprep.subr.bf16.mxu0 0
    %5592 = vmatpush1.bf16.msra.mxu0 %v5555
    %5593 = vmatprep.subr.bf16.mxu0 0
    %5594 = vmatpush1.bf16.msra.mxu0 %v5556
    %5595 = vmatprep.subr.bf16.mxu0 0
    %5596 = vmatpush1.bf16.msra.mxu0 %v5557
    %5597 = vmatprep.subr.bf16.mxu0 0
    %5598 = vmatpush1.bf16.msra.mxu0 %v5558
    %5599 = vmatprep.subr.bf16.mxu0 0
    %5600 = vmatpush1.bf16.msra.mxu0 %v5559
    %5601 = vmatprep.subr.bf16.mxu0 0
    %5602 = vmatpush1.bf16.msra.mxu0 %v5560
    %5603 = vmatprep.subr.bf16.mxu0 0
    %5604 = vmatpush1.bf16.msra.mxu0 %v5561
    %5605 = vmatprep.subr.bf16.mxu0 0
    %5606 = vmatpush1.bf16.msra.mxu0 %v5562
    %5607 = vmatprep.subr.bf16.mxu0 0
    %5608 = vmatpush1.bf16.msra.mxu0 %v5563
    %5609 = vmatprep.subr.bf16.mxu0 0
    %5610 = vmatpush1.bf16.msra.mxu0 %v5564
    %5611 = vmatprep.subr.bf16.mxu0 0
    %5612 = vmatpush1.bf16.msra.mxu0 %v5565
    %5613 = vmatprep.subr.bf16.mxu0 0
    %5614 = vmatpush1.bf16.msra.mxu0 %v5566
    %5615 = vmatprep.mubr.bf16.mxu0 %v5447
    %5616 = vmatmul.mubr.bf16.gmra.mrb[0].mxu0 %v5446
    %v5617 = vpop.f32.mrb[0].mxu0
    %v5618 = vadd.f32 %v5485, %v5617
    %v5619 = vpop.f32.mrb[0].mxu0
    %v5620 = vpop.f32.mrb[0].mxu0
    %v5621 = vpop.f32.mrb[0].mxu0
    %5622 = vdwg.mxu0
    %v5623 = vmax.f32 %v5618, 0.0
    %v5624 = vpack.c.bf16 %v5623, %v5623
    %v5625 = vld [vmem:[%s18] sm:$0xf]
    %v5626 = vld [vmem:[%s18 + $0x4] sm:$0xf]
    %v5627 = vld [vmem:[%s18 + $0x8] sm:$0xf]
    %v5628 = vld [vmem:[%s18 + $0xc] sm:$0xf]
    %v5629 = vld [vmem:[%s18 + $0x10] sm:$0xf]
    %v5630 = vld [vmem:[%s18 + $0x14] sm:$0xf]
    %v5631 = vld [vmem:[%s18 + $0x18] sm:$0xf]
    %v5632 = vld [vmem:[%s18 + $0x1c] sm:$0xf]
    %v5633 = vld [vmem:[%s18 + $0x20] sm:$0xf]
    %v5634 = vld [vmem:[%s18 + $0x24] sm:$0xf]
    %v5635 = vld [vmem:[%s18 + $0x28] sm:$0xf]
    %v5636 = vld [vmem:[%s18 + $0x2c] sm:$0xf]
    %v5637 = vld [vmem:[%s18 + $0x30] sm:$0xf]
    %v5638 = vld [vmem:[%s18 + $0x34] sm:$0xf]
    %v5639 = vld [vmem:[%s18 + $0x38] sm:$0xf]
    %v5640 = vld [vmem:[%s18 + $0x3c] sm:$0xf]
    %v5641 = vld [vmem:[%s19] sm:$0x1]
    %v5643 = vlaneseq
    %v5644 = vshrl.u32 %v5643, 7
    %v5645 = vsub.s32 0, %v5644
    %v5646 = vrot.slane %v5641, %v5645
    %v5664 = vunpack.c.l.b16 %v5625
    %v5665 = vunpack.c.l.b16 %v5626
    %v5666 = vunpack.c.l.b16 %v5627
    %v5667 = vunpack.c.l.b16 %v5628
    %v5668 = vunpack.c.l.b16 %v5629
    %v5669 = vunpack.c.l.b16 %v5630
    %v5670 = vunpack.c.l.b16 %v5631
    %v5671 = vunpack.c.l.b16 %v5632
    %v5672 = vunpack.c.l.b16 %v5633
    %v5673 = vunpack.c.l.b16 %v5634
    %v5674 = vunpack.c.l.b16 %v5635
    %v5675 = vunpack.c.l.b16 %v5636
    %v5676 = vunpack.c.l.b16 %v5637
    %v5677 = vunpack.c.l.b16 %v5638
    %v5678 = vunpack.c.l.b16 %v5639
    %v5679 = vunpack.c.l.b16 %v5640
    %v5680 = vpack.c.b16 %v5665, %v5664
    %v5681 = vpack.c.b16 %v5667, %v5666
    %v5682 = vpack.c.b16 %v5669, %v5668
    %v5683 = vpack.c.b16 %v5671, %v5670
    %v5684 = vpack.c.b16 %v5673, %v5672
    %v5685 = vpack.c.b16 %v5675, %v5674
    %v5686 = vpack.c.b16 %v5677, %v5676
    %v5687 = vpack.c.b16 %v5679, %v5678
    %5696 = vmatprep.subr.bf16.mxu0 0
    %5697 = vmatpush1.bf16.msra.mxu0 %v5680
    %5698 = vmatprep.subr.bf16.mxu0 0
    %5699 = vmatpush1.bf16.msra.mxu0 %v5681
    %5700 = vmatprep.subr.bf16.mxu0 0
    %5701 = vmatpush1.bf16.msra.mxu0 %v5682
    %5702 = vmatprep.subr.bf16.mxu0 0
    %5703 = vmatpush1.bf16.msra.mxu0 %v5683
    %5704 = vmatprep.subr.bf16.mxu0 0
    %5705 = vmatpush1.bf16.msra.mxu0 %v5684
    %5706 = vmatprep.subr.bf16.mxu0 0
    %5707 = vmatpush1.bf16.msra.mxu0 %v5685
    %5708 = vmatprep.subr.bf16.mxu0 0
    %5709 = vmatpush1.bf16.msra.mxu0 %v5686
    %5710 = vmatprep.subr.bf16.mxu0 0
    %5711 = vmatpush1.bf16.msra.mxu0 %v5687
    %5712 = vmatprep.subr.bf16.mxu0 0
    %5713 = vmatpush1.bf16.msra.mxu0 0
    %5714 = vmatprep.subr.bf16.mxu0 0
    %5715 = vmatpush1.bf16.msra.mxu0 0
    %5716 = vmatprep.subr.bf16.mxu0 0
    %5717 = vmatpush1.bf16.msra.mxu0 0
    %5718 = vmatprep.subr.bf16.mxu0 0
    %5719 = vmatpush1.bf16.msra.mxu0 0
    %5720 = vmatprep.subr.bf16.mxu0 0
    %5721 = vmatpush1.bf16.msra.mxu0 0
    %5722 = vmatprep.subr.bf16.mxu0 0
    %5723 = vmatpush1.bf16.msra.mxu0 0
    %5724 = vmatprep.subr.bf16.mxu0 0
    %5725 = vmatpush1.bf16.msra.mxu0 0
    %5726 = vmatprep.subr.bf16.mxu0 0
    %5727 = vmatpush1.bf16.msra.mxu0 0
    %5728 = vmatprep.mubr.bf16.mxu0 0
    %5729 = vmatmul.mubr.bf16.gmra.mrb[0].mxu0 %v5624
    %v5730 = vpop.f32.mrb[0].mxu0
    %v5731 = vadd.f32 %v5646, %v5730
    %v5732 = vpop.f32.mrb[0].mxu0
    %v5733 = vpop.f32.mrb[0].mxu0
    %v5734 = vpop.f32.mrb[0].mxu0
    %5735 = vdwg.mxu0
    %5736 = vst [vmem:[#allocation8] sm:$0x3] %v5731
    // Predicated region
    $region86: #{tpu_custom_call.1} parent=1 // pred_check
      _
    $region87: #{tpu_custom_call.1} parent=1 // pred_check_branch
      %5738 = sbr.rel (0) target = $region89
    $region88: #{tpu_custom_call.1} parent=1 // pred_region
      %s5740 = ssub.s32 32, 32
      %5741 = vsyncadd [#allocation7], %s5740
      %s5743 = sshll.u32 [#allocation8], 4
      %s5744 = int_to_ptr.vmem [resolvable:$true] %s5743
      %5746 = dma.vmem_to_hbm [thread:$0]  %s5744, 32, %s20, [#allocation7]
    $region89: #{tpu_custom_call.1} parent=1 // pred_fallthru
      _
    // Predicated region
    $region90: #{tpu_custom_call.1} parent=1 // pred_check
      _
    $region91: #{tpu_custom_call.1} parent=1 // pred_check_branch
      %5748 = sbr.rel (0) target = $region93
    $region92: #{tpu_custom_call.1} parent=1 // pred_region
      %5749 = dma.done [#allocation7], 32
    $region93: #{tpu_custom_call.1} parent=1 // pred_fallthru
      _
    %5750 = vsyncpa [#allocation6], 1
    %5751 = vsyncpa [#allocation7], 1

</llo_original>
